<compile_context>
chip_gen: v6e
topology: v6e:2x2x1
jax: 0.10.0
libtpu: 0.0.40
codegen_flags: <defaults>
</compile_context>

<pallas_src>
import functools

import jax
import jax.numpy as jnp
from jax.experimental import pallas as pl
from jax.experimental.pallas import tpu as pltpu

_LANE = 128       # TPU vreg lane width; the time axis is chunked by this


def _round_up(n, m):
  return ((n + m - 1) // m) * m


def _deepmb_kernel(inv_sos_ref, dist_ref, sig_ref, out_ref, *,
                   samples_offset, t_valid, inv_denom):
  # inv_sos_ref: (B,) f32, SMEM                    -- 1 / speed-of-sound per batch
  # dist_ref   : (e_pad, hw_tile) f32, VMEM        -- transducer-pixel distances * fs
  # sig_ref    : (B*e_pad/8, 128, 8*t_chunks) f32, VMEM -- packed sinogram,
  #              [b*n_eblk + eb, l, es*t_chunks + c] = x[b, 0, eb*8+es, c*128+l]
  #              (constant index_map -> resident; DMA'd from HBM exactly once)
  # out_ref    : (B, hw_tile) f32, VMEM            -- one image tile, all batches
  B = out_ref.shape[0]
  hw_tile = dist_ref.shape[1]
  n_eblk = sig_ref.shape[0] // B
  t_chunks = sig_ref.shape[2] // 8

  # Sublane iota over the within-chunk time-lane axis (hoisted out of all loops).
  l_iota = jax.lax.broadcasted_iota(jnp.int32, (_LANE, hw_tile), 0)

  for b in range(B):            # static; the dist tile is reused for every batch
    inv_sos = inv_sos_ref[b]

    def eblk_body(eb, acc, b=b):
      # acc[l, p] accumulates, over transducer elements, the gathered sample of
      # pixel p whose within-chunk time lane was l (element sum done first on
      # the VPU; one cross-sublane reduce per (batch, tile) happens below).
      ebase = pl.multiple_of(eb * 8, 8)
      d_blk = dist_ref[pl.ds(ebase, 8), :]                        # (8, hw_tile)
      idx = jnp.round(d_blk * inv_sos).astype(jnp.int32) - samples_offset
      idx = jnp.clip(idx, 0, t_valid - 1)                         # (8, hw_tile)
      sig_blk = sig_ref[b * n_eblk + eb]                          # (128, 8*t_chunks)
      for es in range(8):                                         # static unroll
        # Wanted sample of pixel p sits at time idx[p] = c*128 + l, i.e.
        # rel[l, p] == c*128: one subtract, then per chunk a scalar compare +
        # select.  Exact f32 selection -- no MXU one-hot, no f32 mask multiply.
        rel = idx[es:es + 1, :] - l_iota                          # (128, hw_tile)
        sel = jnp.zeros((_LANE, hw_tile), jnp.float32)
        for c in range(t_chunks):                                 # static
          k = es * t_chunks + c
          col = sig_blk[:, k:k + 1]                               # (128, 1)
          sel = jnp.where(rel == c * _LANE, col, sel)
        acc = acc + sel
      return acc

    acc = jax.lax.fori_loop(0, n_eblk, eblk_body,
                            jnp.zeros((_LANE, hw_tile), jnp.float32))
    # SumChannels (divide by NB_ELEMENTS) + AbsActivation; lane-dense store.
    out_ref[b, :] = jnp.abs(acc.sum(axis=0)) * inv_denom


def make_deepmb_forward(transducer_pixel_distances, *,
                        scanner_sampling_frequency, samples_offset,
                        hw_tile=512):
  """Builds the fused forward(x, sos) for a fixed scanner geometry.

  The distance preprocessing (scale by fs, flatten the image, pad) is hoisted
  here and runs once -- it is static per scanner geometry (at production scale
  a ~177 MB array that must not be rebuilt on every call).
  """
  E, H, W = transducer_pixel_distances.shape
  HW = H * W
  hw_tile = min(int(hw_tile), _round_up(HW, _LANE))
  assert hw_tile % _LANE == 0
  hw_pad = _round_up(HW, hw_tile)
  e_pad = _round_up(E, 8)
  n_eblk = e_pad // 8
  inv_denom = 1.0 / float(E)            # SumChannels uses NB_ELEMENTS == E

  dist_fs = (jnp.asarray(transducer_pixel_distances, jnp.float32).reshape(E, HW)
             * jnp.float32(scanner_sampling_frequency))
  # Padded pixels are sliced off at the end; padded element rows gather from
  # zero-padded sinogram rows and contribute nothing to the channel sum.
  dist_fs = jnp.pad(dist_fs, ((0, e_pad - E), (0, hw_pad - HW)))
  dist_fs = jax.device_put(dist_fs)

  @jax.jit
  def _forward(dist_fs, x, sos):
    B, C, Ex, T = x.shape
    assert C == 1 and Ex == E
    t_pad = _round_up(T, _LANE)
    t_chunks = t_pad // _LANE

    # net_sig = IdentityFunction().  Pack the sinogram so that, per transducer
    # element, the 128 within-chunk time samples land on sublanes and the
    # (element-in-block, chunk) pair lands on lanes: the per-pixel index math,
    # the selects and the output store then all stay lane-oriented with no
    # in-kernel transposes, and the resident VMEM block stays dense.
    sig = x[:, 0].astype(jnp.float32)
    sig = jnp.pad(sig, ((0, 0), (0, e_pad - E), (0, t_pad - T)))
    sig = sig.reshape(B, n_eblk, 8, t_chunks, _LANE).transpose(0, 1, 4, 2, 3)
    sig = sig.reshape(B * n_eblk, _LANE, 8 * t_chunks)

    inv_sos = 1.0 / sos.astype(jnp.float32)

    kernel = functools.partial(
        _deepmb_kernel,
        samples_offset=int(samples_offset),
        t_valid=int(T),
        inv_denom=inv_denom)

    out = pl.pallas_call(
        kernel,
        out_shape=jax.ShapeDtypeStruct((B, hw_pad), jnp.float32),
        grid=(hw_pad // hw_tile,),
        in_specs=[
            pl.BlockSpec(memory_space=pltpu.MemorySpace.SMEM),     # inv_sos (B,)
            pl.BlockSpec((e_pad, hw_tile), lambda m: (0, m)),      # dist * fs
            pl.BlockSpec((B * n_eblk, _LANE, 8 * t_chunks),
                         lambda m: (0, 0, 0)),                     # resident sinogram
        ],
        out_specs=pl.BlockSpec((B, hw_tile), lambda m: (0, m)),
        compiler_params=pltpu.CompilerParams(
            # Single image-tile axis, fully parallel -> v7x can split it
            # across its two TensorCores even at B=1.
            dimension_semantics=("parallel",)),
    )(inv_sos, dist_fs, sig)

    # SumChannels + AbsActivation already applied in-kernel; strip padding.
    return out[:, :HW].reshape(B, 1, H, W)

  return lambda x, sos: _forward(dist_fs, x, sos)


def deepmb_reference(x, sos, dist, *, fs, samples_offset):
  """Pure-JAX reference of the same forward pass (same index arithmetic)."""
  B = x.shape[0]
  E, H, W = dist.shape
  T = x.shape[-1]
  dist_fs = dist.reshape(E, H * W).astype(jnp.float32) * jnp.float32(fs)
  inv_sos = 1.0 / sos.astype(jnp.float32)                         # (B,)
  idx = jnp.round(dist_fs[None] * inv_sos[:, None, None]).astype(jnp.int32)
  idx = jnp.clip(idx - samples_offset, 0, T - 1)                  # (B, E, HW)
  sig = x[:, 0].astype(jnp.float32)                               # (B, E, T)
  gathered = jnp.take_along_axis(sig, idx, axis=2)                # (B, E, HW)
  out = jnp.abs(jnp.sum(gathered, axis=1) / E)                    # (B, HW)
  return out.reshape(B, 1, H, W)


if __name__ == "__main__":
  key = jax.random.PRNGKey(0)
  k1, k2, k3 = jax.random.split(key, 3)

  # Small synthetic problem (production DeepMB: E~256, T~2030, 416x416 image).
  # T=500 exercises the T padding (-> 512) and the 4-chunk select; E=16
  # exercises the in-kernel element-block loop; H*W=256 exercises the image
  # tiling / padding path (hw_tile clamps to 256 here).
  B, E, T, H, W = 2, 16, 500, 16, 16
  scanner_sampling_frequency = 4.0e7          # Hz
  samples_offset = 4
  sos_nominal = 1500.0                        # m/s

  max_dist = (T + samples_offset - 1) * sos_nominal / scanner_sampling_frequency
  transducer_pixel_distances = jax.random.uniform(
      k1, (E, H, W), jnp.float32, minval=0.0, maxval=max_dist)
  x = jax.random.normal(k2, (B, 1, E, T), jnp.float32)            # sinogram
  sos = sos_nominal + 20.0 * jax.random.normal(k3, (B,), jnp.float32)

  forward = make_deepmb_forward(
      transducer_pixel_distances,
      scanner_sampling_frequency=scanner_sampling_frequency,
      samples_offset=samples_offset)

  out = forward(x, sos)
  out = jax.block_until_ready(out)

  ref = deepmb_reference(
      x, sos, transducer_pixel_distances,
      fs=scanner_sampling_frequency, samples_offset=samples_offset)

  assert out.shape == (B, 1, H, W), out.shape
  err = float(jnp.max(jnp.abs(out - ref)))
  assert jnp.allclose(out, ref, rtol=1e-4, atol=1e-4), err
  print("KERNEL_OK")
</pallas_src>

<mosaic_0001>
module attributes {stable_mosaic.version = 11 : i64} {
  func.func @_deepmb_kernel(%arg0: i32, %arg1: memref<2xf32, #tpu.memory_space<smem>>, %arg2: memref<16x256xf32, #tpu.memory_space<vmem>>, %arg3: memref<4x128x32xf32, #tpu.memory_space<vmem>>, %arg4: memref<2x256xf32, #tpu.memory_space<vmem>>) attributes {dimension_semantics = [#tpu.dimension_semantics<parallel>], iteration_bounds = array<i64: 1>, scalar_prefetch = 0 : i64, scratch_operands = 0 : i64, tpu.core_type = #tpu.core_type<tc>, window_params = [{transform_indices = @transform_0, window_bounds = array<i64: 2>}, {transform_indices = @transform_1, window_bounds = array<i64: 16, 256>}, {pipeline_mode = #tpu.pipeline_mode<synchronous>, transform_indices = @transform_2, window_bounds = array<i64: 4, 128, 32>}, {transform_indices = @transform_3, window_bounds = array<i64: 2, 256>}]} {
    %0 = tpu.iota {dimensions = array<i32: 0>} : vector<128x256xi32>
    %c0 = arith.constant 0 : index
    %1 = memref.load %arg1[%c0] : memref<2xf32, #tpu.memory_space<smem>>
    %cst = arith.constant 0.000000e+00 : f32
    %2 = vector.broadcast %cst : f32 to vector<128x256xf32>
    %c0_i32 = arith.constant 0 : i32
    %c2_i32 = arith.constant 2 : i32
    %3 = arith.addi %c0_i32, %c2_i32 : i32
    %c1_i32 = arith.constant 1 : i32
    %4 = scf.for %arg5 = %c0_i32 to %3 step %c1_i32 iter_args(%arg6 = %2) -> (vector<128x256xf32>)  : i32 {
      %c8_i32 = arith.constant 8 : i32
      %23 = arith.muli %arg5, %c8_i32 : i32
      %24 = tpu.assume_multiple %23, 8 : i32
      %25 = arith.index_cast %24 : i32 to index
      %c0_14 = arith.constant 0 : index
      %26 = vector.load %arg2[%25, %c0_14] : memref<16x256xf32, #tpu.memory_space<vmem>>, vector<8x256xf32>
      %27 = vector.broadcast %1 : f32 to vector<8x256xf32>
      %28 = arith.mulf %26, %27 : vector<8x256xf32>
      %29 = math.roundeven %28 : vector<8x256xf32>
      %30 = arith.fptosi %29 : vector<8x256xf32> to vector<8x256xi32>
      %c4_i32 = arith.constant 4 : i32
      %31 = vector.broadcast %c4_i32 : i32 to vector<8x256xi32>
      %32 = arith.subi %30, %31 : vector<8x256xi32>
      %c0_i32_15 = arith.constant 0 : i32
      %c499_i32 = arith.constant 499 : i32
      %33 = vector.broadcast %c0_i32_15 : i32 to vector<8x256xi32>
      %34 = arith.maxsi %33, %32 : vector<8x256xi32>
      %35 = vector.broadcast %c499_i32 : i32 to vector<8x256xi32>
      %36 = arith.minsi %35, %34 : vector<8x256xi32>
      %c0_i32_16 = arith.constant 0 : i32
      %37 = arith.addi %c0_i32_16, %arg5 : i32
      %38 = arith.index_cast %37 : i32 to index
      %c0_17 = arith.constant 0 : index
      %c0_18 = arith.constant 0 : index
      %39 = vector.load %arg3[%38, %c0_17, %c0_18] : memref<4x128x32xf32, #tpu.memory_space<vmem>>, vector<1x128x32xf32>
      %40 = vector.shape_cast %39 : vector<1x128x32xf32> to vector<128x32xf32>
      %41 = vector.extract_strided_slice %36 {offsets = [0, 0], sizes = [1, 256], strides = [1, 1]} : vector<8x256xi32> to vector<1x256xi32>
      %42 = vector.broadcast %41 : vector<1x256xi32> to vector<128x256xi32>
      %43 = arith.subi %42, %0 : vector<128x256xi32>
      %cst_19 = arith.constant 0.000000e+00 : f32
      %44 = vector.broadcast %cst_19 : f32 to vector<128x256xf32>
      %45 = vector.extract_strided_slice %40 {offsets = [0, 0], sizes = [128, 1], strides = [1, 1]} : vector<128x32xf32> to vector<128x1xf32>
      %c0_i32_20 = arith.constant 0 : i32
      %46 = vector.broadcast %c0_i32_20 : i32 to vector<128x256xi32>
      %47 = arith.cmpi eq, %43, %46 : vector<128x256xi32>
      %48 = vector.shape_cast %45 : vector<128x1xf32> to vector<128x1xf32>
      %49 = vector.broadcast %48 : vector<128x1xf32> to vector<128x256xf32>
      %50 = arith.select %47, %49, %44 : vector<128x256xi1>, vector<128x256xf32>
      %51 = vector.extract_strided_slice %40 {offsets = [0, 1], sizes = [128, 1], strides = [1, 1]} : vector<128x32xf32> to vector<128x1xf32>
      %c128_i32 = arith.constant 128 : i32
      %52 = vector.broadcast %c128_i32 : i32 to vector<128x256xi32>
      %53 = arith.cmpi eq, %43, %52 : vector<128x256xi32>
      %54 = vector.shape_cast %51 : vector<128x1xf32> to vector<128x1xf32>
      %55 = vector.broadcast %54 : vector<128x1xf32> to vector<128x256xf32>
      %56 = arith.select %53, %55, %50 : vector<128x256xi1>, vector<128x256xf32>
      %57 = vector.extract_strided_slice %40 {offsets = [0, 2], sizes = [128, 1], strides = [1, 1]} : vector<128x32xf32> to vector<128x1xf32>
      %c256_i32 = arith.constant 256 : i32
      %58 = vector.broadcast %c256_i32 : i32 to vector<128x256xi32>
      %59 = arith.cmpi eq, %43, %58 : vector<128x256xi32>
      %60 = vector.shape_cast %57 : vector<128x1xf32> to vector<128x1xf32>
      %61 = vector.broadcast %60 : vector<128x1xf32> to vector<128x256xf32>
      %62 = arith.select %59, %61, %56 : vector<128x256xi1>, vector<128x256xf32>
      %63 = vector.extract_strided_slice %40 {offsets = [0, 3], sizes = [128, 1], strides = [1, 1]} : vector<128x32xf32> to vector<128x1xf32>
      %c384_i32 = arith.constant 384 : i32
      %64 = vector.broadcast %c384_i32 : i32 to vector<128x256xi32>
      %65 = arith.cmpi eq, %43, %64 : vector<128x256xi32>
      %66 = vector.shape_cast %63 : vector<128x1xf32> to vector<128x1xf32>
      %67 = vector.broadcast %66 : vector<128x1xf32> to vector<128x256xf32>
      %68 = arith.select %65, %67, %62 : vector<128x256xi1>, vector<128x256xf32>
      %69 = arith.addf %arg6, %68 : vector<128x256xf32>
      %70 = vector.extract_strided_slice %36 {offsets = [1, 0], sizes = [1, 256], strides = [1, 1]} : vector<8x256xi32> to vector<1x256xi32>
      %71 = vector.broadcast %70 : vector<1x256xi32> to vector<128x256xi32>
      %72 = arith.subi %71, %0 : vector<128x256xi32>
      %cst_21 = arith.constant 0.000000e+00 : f32
      %73 = vector.broadcast %cst_21 : f32 to vector<128x256xf32>
      %74 = vector.extract_strided_slice %40 {offsets = [0, 4], sizes = [128, 1], strides = [1, 1]} : vector<128x32xf32> to vector<128x1xf32>
      %c0_i32_22 = arith.constant 0 : i32
      %75 = vector.broadcast %c0_i32_22 : i32 to vector<128x256xi32>
      %76 = arith.cmpi eq, %72, %75 : vector<128x256xi32>
      %77 = vector.shape_cast %74 : vector<128x1xf32> to vector<128x1xf32>
      %78 = vector.broadcast %77 : vector<128x1xf32> to vector<128x256xf32>
      %79 = arith.select %76, %78, %73 : vector<128x256xi1>, vector<128x256xf32>
      %80 = vector.extract_strided_slice %40 {offsets = [0, 5], sizes = [128, 1], strides = [1, 1]} : vector<128x32xf32> to vector<128x1xf32>
      %c128_i32_23 = arith.constant 128 : i32
      %81 = vector.broadcast %c128_i32_23 : i32 to vector<128x256xi32>
      %82 = arith.cmpi eq, %72, %81 : vector<128x256xi32>
      %83 = vector.shape_cast %80 : vector<128x1xf32> to vector<128x1xf32>
      %84 = vector.broadcast %83 : vector<128x1xf32> to vector<128x256xf32>
      %85 = arith.select %82, %84, %79 : vector<128x256xi1>, vector<128x256xf32>
      %86 = vector.extract_strided_slice %40 {offsets = [0, 6], sizes = [128, 1], strides = [1, 1]} : vector<128x32xf32> to vector<128x1xf32>
      %c256_i32_24 = arith.constant 256 : i32
      %87 = vector.broadcast %c256_i32_24 : i32 to vector<128x256xi32>
      %88 = arith.cmpi eq, %72, %87 : vector<128x256xi32>
      %89 = vector.shape_cast %86 : vector<128x1xf32> to vector<128x1xf32>
      %90 = vector.broadcast %89 : vector<128x1xf32> to vector<128x256xf32>
      %91 = arith.select %88, %90, %85 : vector<128x256xi1>, vector<128x256xf32>
      %92 = vector.extract_strided_slice %40 {offsets = [0, 7], sizes = [128, 1], strides = [1, 1]} : vector<128x32xf32> to vector<128x1xf32>
      %c384_i32_25 = arith.constant 384 : i32
      %93 = vector.broadcast %c384_i32_25 : i32 to vector<128x256xi32>
      %94 = arith.cmpi eq, %72, %93 : vector<128x256xi32>
      %95 = vector.shape_cast %92 : vector<128x1xf32> to vector<128x1xf32>
      %96 = vector.broadcast %95 : vector<128x1xf32> to vector<128x256xf32>
      %97 = arith.select %94, %96, %91 : vector<128x256xi1>, vector<128x256xf32>
      %98 = arith.addf %69, %97 : vector<128x256xf32>
      %99 = vector.extract_strided_slice %36 {offsets = [2, 0], sizes = [1, 256], strides = [1, 1]} : vector<8x256xi32> to vector<1x256xi32>
      %100 = vector.broadcast %99 : vector<1x256xi32> to vector<128x256xi32>
      %101 = arith.subi %100, %0 : vector<128x256xi32>
      %cst_26 = arith.constant 0.000000e+00 : f32
      %102 = vector.broadcast %cst_26 : f32 to vector<128x256xf32>
      %103 = vector.extract_strided_slice %40 {offsets = [0, 8], sizes = [128, 1], strides = [1, 1]} : vector<128x32xf32> to vector<128x1xf32>
      %c0_i32_27 = arith.constant 0 : i32
      %104 = vector.broadcast %c0_i32_27 : i32 to vector<128x256xi32>
      %105 = arith.cmpi eq, %101, %104 : vector<128x256xi32>
      %106 = vector.shape_cast %103 : vector<128x1xf32> to vector<128x1xf32>
      %107 = vector.broadcast %106 : vector<128x1xf32> to vector<128x256xf32>
      %108 = arith.select %105, %107, %102 : vector<128x256xi1>, vector<128x256xf32>
      %109 = vector.extract_strided_slice %40 {offsets = [0, 9], sizes = [128, 1], strides = [1, 1]} : vector<128x32xf32> to vector<128x1xf32>
      %c128_i32_28 = arith.constant 128 : i32
      %110 = vector.broadcast %c128_i32_28 : i32 to vector<128x256xi32>
      %111 = arith.cmpi eq, %101, %110 : vector<128x256xi32>
      %112 = vector.shape_cast %109 : vector<128x1xf32> to vector<128x1xf32>
      %113 = vector.broadcast %112 : vector<128x1xf32> to vector<128x256xf32>
      %114 = arith.select %111, %113, %108 : vector<128x256xi1>, vector<128x256xf32>
      %115 = vector.extract_strided_slice %40 {offsets = [0, 10], sizes = [128, 1], strides = [1, 1]} : vector<128x32xf32> to vector<128x1xf32>
      %c256_i32_29 = arith.constant 256 : i32
      %116 = vector.broadcast %c256_i32_29 : i32 to vector<128x256xi32>
      %117 = arith.cmpi eq, %101, %116 : vector<128x256xi32>
      %118 = vector.shape_cast %115 : vector<128x1xf32> to vector<128x1xf32>
      %119 = vector.broadcast %118 : vector<128x1xf32> to vector<128x256xf32>
      %120 = arith.select %117, %119, %114 : vector<128x256xi1>, vector<128x256xf32>
      %121 = vector.extract_strided_slice %40 {offsets = [0, 11], sizes = [128, 1], strides = [1, 1]} : vector<128x32xf32> to vector<128x1xf32>
      %c384_i32_30 = arith.constant 384 : i32
      %122 = vector.broadcast %c384_i32_30 : i32 to vector<128x256xi32>
      %123 = arith.cmpi eq, %101, %122 : vector<128x256xi32>
      %124 = vector.shape_cast %121 : vector<128x1xf32> to vector<128x1xf32>
      %125 = vector.broadcast %124 : vector<128x1xf32> to vector<128x256xf32>
      %126 = arith.select %123, %125, %120 : vector<128x256xi1>, vector<128x256xf32>
      %127 = arith.addf %98, %126 : vector<128x256xf32>
      %128 = vector.extract_strided_slice %36 {offsets = [3, 0], sizes = [1, 256], strides = [1, 1]} : vector<8x256xi32> to vector<1x256xi32>
      %129 = vector.broadcast %128 : vector<1x256xi32> to vector<128x256xi32>
      %130 = arith.subi %129, %0 : vector<128x256xi32>
      %cst_31 = arith.constant 0.000000e+00 : f32
      %131 = vector.broadcast %cst_31 : f32 to vector<128x256xf32>
      %132 = vector.extract_strided_slice %40 {offsets = [0, 12], sizes = [128, 1], strides = [1, 1]} : vector<128x32xf32> to vector<128x1xf32>
      %c0_i32_32 = arith.constant 0 : i32
      %133 = vector.broadcast %c0_i32_32 : i32 to vector<128x256xi32>
      %134 = arith.cmpi eq, %130, %133 : vector<128x256xi32>
      %135 = vector.shape_cast %132 : vector<128x1xf32> to vector<128x1xf32>
      %136 = vector.broadcast %135 : vector<128x1xf32> to vector<128x256xf32>
      %137 = arith.select %134, %136, %131 : vector<128x256xi1>, vector<128x256xf32>
      %138 = vector.extract_strided_slice %40 {offsets = [0, 13], sizes = [128, 1], strides = [1, 1]} : vector<128x32xf32> to vector<128x1xf32>
      %c128_i32_33 = arith.constant 128 : i32
      %139 = vector.broadcast %c128_i32_33 : i32 to vector<128x256xi32>
      %140 = arith.cmpi eq, %130, %139 : vector<128x256xi32>
      %141 = vector.shape_cast %138 : vector<128x1xf32> to vector<128x1xf32>
      %142 = vector.broadcast %141 : vector<128x1xf32> to vector<128x256xf32>
      %143 = arith.select %140, %142, %137 : vector<128x256xi1>, vector<128x256xf32>
      %144 = vector.extract_strided_slice %40 {offsets = [0, 14], sizes = [128, 1], strides = [1, 1]} : vector<128x32xf32> to vector<128x1xf32>
      %c256_i32_34 = arith.constant 256 : i32
      %145 = vector.broadcast %c256_i32_34 : i32 to vector<128x256xi32>
      %146 = arith.cmpi eq, %130, %145 : vector<128x256xi32>
      %147 = vector.shape_cast %144 : vector<128x1xf32> to vector<128x1xf32>
      %148 = vector.broadcast %147 : vector<128x1xf32> to vector<128x256xf32>
      %149 = arith.select %146, %148, %143 : vector<128x256xi1>, vector<128x256xf32>
      %150 = vector.extract_strided_slice %40 {offsets = [0, 15], sizes = [128, 1], strides = [1, 1]} : vector<128x32xf32> to vector<128x1xf32>
      %c384_i32_35 = arith.constant 384 : i32
      %151 = vector.broadcast %c384_i32_35 : i32 to vector<128x256xi32>
      %152 = arith.cmpi eq, %130, %151 : vector<128x256xi32>
      %153 = vector.shape_cast %150 : vector<128x1xf32> to vector<128x1xf32>
      %154 = vector.broadcast %153 : vector<128x1xf32> to vector<128x256xf32>
      %155 = arith.select %152, %154, %149 : vector<128x256xi1>, vector<128x256xf32>
      %156 = arith.addf %127, %155 : vector<128x256xf32>
      %157 = vector.extract_strided_slice %36 {offsets = [4, 0], sizes = [1, 256], strides = [1, 1]} : vector<8x256xi32> to vector<1x256xi32>
      %158 = vector.broadcast %157 : vector<1x256xi32> to vector<128x256xi32>
      %159 = arith.subi %158, %0 : vector<128x256xi32>
      %cst_36 = arith.constant 0.000000e+00 : f32
      %160 = vector.broadcast %cst_36 : f32 to vector<128x256xf32>
      %161 = vector.extract_strided_slice %40 {offsets = [0, 16], sizes = [128, 1], strides = [1, 1]} : vector<128x32xf32> to vector<128x1xf32>
      %c0_i32_37 = arith.constant 0 : i32
      %162 = vector.broadcast %c0_i32_37 : i32 to vector<128x256xi32>
      %163 = arith.cmpi eq, %159, %162 : vector<128x256xi32>
      %164 = vector.shape_cast %161 : vector<128x1xf32> to vector<128x1xf32>
      %165 = vector.broadcast %164 : vector<128x1xf32> to vector<128x256xf32>
      %166 = arith.select %163, %165, %160 : vector<128x256xi1>, vector<128x256xf32>
      %167 = vector.extract_strided_slice %40 {offsets = [0, 17], sizes = [128, 1], strides = [1, 1]} : vector<128x32xf32> to vector<128x1xf32>
      %c128_i32_38 = arith.constant 128 : i32
      %168 = vector.broadcast %c128_i32_38 : i32 to vector<128x256xi32>
      %169 = arith.cmpi eq, %159, %168 : vector<128x256xi32>
      %170 = vector.shape_cast %167 : vector<128x1xf32> to vector<128x1xf32>
      %171 = vector.broadcast %170 : vector<128x1xf32> to vector<128x256xf32>
      %172 = arith.select %169, %171, %166 : vector<128x256xi1>, vector<128x256xf32>
      %173 = vector.extract_strided_slice %40 {offsets = [0, 18], sizes = [128, 1], strides = [1, 1]} : vector<128x32xf32> to vector<128x1xf32>
      %c256_i32_39 = arith.constant 256 : i32
      %174 = vector.broadcast %c256_i32_39 : i32 to vector<128x256xi32>
      %175 = arith.cmpi eq, %159, %174 : vector<128x256xi32>
      %176 = vector.shape_cast %173 : vector<128x1xf32> to vector<128x1xf32>
      %177 = vector.broadcast %176 : vector<128x1xf32> to vector<128x256xf32>
      %178 = arith.select %175, %177, %172 : vector<128x256xi1>, vector<128x256xf32>
      %179 = vector.extract_strided_slice %40 {offsets = [0, 19], sizes = [128, 1], strides = [1, 1]} : vector<128x32xf32> to vector<128x1xf32>
      %c384_i32_40 = arith.constant 384 : i32
      %180 = vector.broadcast %c384_i32_40 : i32 to vector<128x256xi32>
      %181 = arith.cmpi eq, %159, %180 : vector<128x256xi32>
      %182 = vector.shape_cast %179 : vector<128x1xf32> to vector<128x1xf32>
      %183 = vector.broadcast %182 : vector<128x1xf32> to vector<128x256xf32>
      %184 = arith.select %181, %183, %178 : vector<128x256xi1>, vector<128x256xf32>
      %185 = arith.addf %156, %184 : vector<128x256xf32>
      %186 = vector.extract_strided_slice %36 {offsets = [5, 0], sizes = [1, 256], strides = [1, 1]} : vector<8x256xi32> to vector<1x256xi32>
      %187 = vector.broadcast %186 : vector<1x256xi32> to vector<128x256xi32>
      %188 = arith.subi %187, %0 : vector<128x256xi32>
      %cst_41 = arith.constant 0.000000e+00 : f32
      %189 = vector.broadcast %cst_41 : f32 to vector<128x256xf32>
      %190 = vector.extract_strided_slice %40 {offsets = [0, 20], sizes = [128, 1], strides = [1, 1]} : vector<128x32xf32> to vector<128x1xf32>
      %c0_i32_42 = arith.constant 0 : i32
      %191 = vector.broadcast %c0_i32_42 : i32 to vector<128x256xi32>
      %192 = arith.cmpi eq, %188, %191 : vector<128x256xi32>
      %193 = vector.shape_cast %190 : vector<128x1xf32> to vector<128x1xf32>
      %194 = vector.broadcast %193 : vector<128x1xf32> to vector<128x256xf32>
      %195 = arith.select %192, %194, %189 : vector<128x256xi1>, vector<128x256xf32>
      %196 = vector.extract_strided_slice %40 {offsets = [0, 21], sizes = [128, 1], strides = [1, 1]} : vector<128x32xf32> to vector<128x1xf32>
      %c128_i32_43 = arith.constant 128 : i32
      %197 = vector.broadcast %c128_i32_43 : i32 to vector<128x256xi32>
      %198 = arith.cmpi eq, %188, %197 : vector<128x256xi32>
      %199 = vector.shape_cast %196 : vector<128x1xf32> to vector<128x1xf32>
      %200 = vector.broadcast %199 : vector<128x1xf32> to vector<128x256xf32>
      %201 = arith.select %198, %200, %195 : vector<128x256xi1>, vector<128x256xf32>
      %202 = vector.extract_strided_slice %40 {offsets = [0, 22], sizes = [128, 1], strides = [1, 1]} : vector<128x32xf32> to vector<128x1xf32>
      %c256_i32_44 = arith.constant 256 : i32
      %203 = vector.broadcast %c256_i32_44 : i32 to vector<128x256xi32>
      %204 = arith.cmpi eq, %188, %203 : vector<128x256xi32>
      %205 = vector.shape_cast %202 : vector<128x1xf32> to vector<128x1xf32>
      %206 = vector.broadcast %205 : vector<128x1xf32> to vector<128x256xf32>
      %207 = arith.select %204, %206, %201 : vector<128x256xi1>, vector<128x256xf32>
      %208 = vector.extract_strided_slice %40 {offsets = [0, 23], sizes = [128, 1], strides = [1, 1]} : vector<128x32xf32> to vector<128x1xf32>
      %c384_i32_45 = arith.constant 384 : i32
      %209 = vector.broadcast %c384_i32_45 : i32 to vector<128x256xi32>
      %210 = arith.cmpi eq, %188, %209 : vector<128x256xi32>
      %211 = vector.shape_cast %208 : vector<128x1xf32> to vector<128x1xf32>
      %212 = vector.broadcast %211 : vector<128x1xf32> to vector<128x256xf32>
      %213 = arith.select %210, %212, %207 : vector<128x256xi1>, vector<128x256xf32>
      %214 = arith.addf %185, %213 : vector<128x256xf32>
      %215 = vector.extract_strided_slice %36 {offsets = [6, 0], sizes = [1, 256], strides = [1, 1]} : vector<8x256xi32> to vector<1x256xi32>
      %216 = vector.broadcast %215 : vector<1x256xi32> to vector<128x256xi32>
      %217 = arith.subi %216, %0 : vector<128x256xi32>
      %cst_46 = arith.constant 0.000000e+00 : f32
      %218 = vector.broadcast %cst_46 : f32 to vector<128x256xf32>
      %219 = vector.extract_strided_slice %40 {offsets = [0, 24], sizes = [128, 1], strides = [1, 1]} : vector<128x32xf32> to vector<128x1xf32>
      %c0_i32_47 = arith.constant 0 : i32
      %220 = vector.broadcast %c0_i32_47 : i32 to vector<128x256xi32>
      %221 = arith.cmpi eq, %217, %220 : vector<128x256xi32>
      %222 = vector.shape_cast %219 : vector<128x1xf32> to vector<128x1xf32>
      %223 = vector.broadcast %222 : vector<128x1xf32> to vector<128x256xf32>
      %224 = arith.select %221, %223, %218 : vector<128x256xi1>, vector<128x256xf32>
      %225 = vector.extract_strided_slice %40 {offsets = [0, 25], sizes = [128, 1], strides = [1, 1]} : vector<128x32xf32> to vector<128x1xf32>
      %c128_i32_48 = arith.constant 128 : i32
      %226 = vector.broadcast %c128_i32_48 : i32 to vector<128x256xi32>
      %227 = arith.cmpi eq, %217, %226 : vector<128x256xi32>
      %228 = vector.shape_cast %225 : vector<128x1xf32> to vector<128x1xf32>
      %229 = vector.broadcast %228 : vector<128x1xf32> to vector<128x256xf32>
      %230 = arith.select %227, %229, %224 : vector<128x256xi1>, vector<128x256xf32>
      %231 = vector.extract_strided_slice %40 {offsets = [0, 26], sizes = [128, 1], strides = [1, 1]} : vector<128x32xf32> to vector<128x1xf32>
      %c256_i32_49 = arith.constant 256 : i32
      %232 = vector.broadcast %c256_i32_49 : i32 to vector<128x256xi32>
      %233 = arith.cmpi eq, %217, %232 : vector<128x256xi32>
      %234 = vector.shape_cast %231 : vector<128x1xf32> to vector<128x1xf32>
      %235 = vector.broadcast %234 : vector<128x1xf32> to vector<128x256xf32>
      %236 = arith.select %233, %235, %230 : vector<128x256xi1>, vector<128x256xf32>
      %237 = vector.extract_strided_slice %40 {offsets = [0, 27], sizes = [128, 1], strides = [1, 1]} : vector<128x32xf32> to vector<128x1xf32>
      %c384_i32_50 = arith.constant 384 : i32
      %238 = vector.broadcast %c384_i32_50 : i32 to vector<128x256xi32>
      %239 = arith.cmpi eq, %217, %238 : vector<128x256xi32>
      %240 = vector.shape_cast %237 : vector<128x1xf32> to vector<128x1xf32>
      %241 = vector.broadcast %240 : vector<128x1xf32> to vector<128x256xf32>
      %242 = arith.select %239, %241, %236 : vector<128x256xi1>, vector<128x256xf32>
      %243 = arith.addf %214, %242 : vector<128x256xf32>
      %244 = vector.extract_strided_slice %36 {offsets = [7, 0], sizes = [1, 256], strides = [1, 1]} : vector<8x256xi32> to vector<1x256xi32>
      %245 = vector.broadcast %244 : vector<1x256xi32> to vector<128x256xi32>
      %246 = arith.subi %245, %0 : vector<128x256xi32>
      %cst_51 = arith.constant 0.000000e+00 : f32
      %247 = vector.broadcast %cst_51 : f32 to vector<128x256xf32>
      %248 = vector.extract_strided_slice %40 {offsets = [0, 28], sizes = [128, 1], strides = [1, 1]} : vector<128x32xf32> to vector<128x1xf32>
      %c0_i32_52 = arith.constant 0 : i32
      %249 = vector.broadcast %c0_i32_52 : i32 to vector<128x256xi32>
      %250 = arith.cmpi eq, %246, %249 : vector<128x256xi32>
      %251 = vector.shape_cast %248 : vector<128x1xf32> to vector<128x1xf32>
      %252 = vector.broadcast %251 : vector<128x1xf32> to vector<128x256xf32>
      %253 = arith.select %250, %252, %247 : vector<128x256xi1>, vector<128x256xf32>
      %254 = vector.extract_strided_slice %40 {offsets = [0, 29], sizes = [128, 1], strides = [1, 1]} : vector<128x32xf32> to vector<128x1xf32>
      %c128_i32_53 = arith.constant 128 : i32
      %255 = vector.broadcast %c128_i32_53 : i32 to vector<128x256xi32>
      %256 = arith.cmpi eq, %246, %255 : vector<128x256xi32>
      %257 = vector.shape_cast %254 : vector<128x1xf32> to vector<128x1xf32>
      %258 = vector.broadcast %257 : vector<128x1xf32> to vector<128x256xf32>
      %259 = arith.select %256, %258, %253 : vector<128x256xi1>, vector<128x256xf32>
      %260 = vector.extract_strided_slice %40 {offsets = [0, 30], sizes = [128, 1], strides = [1, 1]} : vector<128x32xf32> to vector<128x1xf32>
      %c256_i32_54 = arith.constant 256 : i32
      %261 = vector.broadcast %c256_i32_54 : i32 to vector<128x256xi32>
      %262 = arith.cmpi eq, %246, %261 : vector<128x256xi32>
      %263 = vector.shape_cast %260 : vector<128x1xf32> to vector<128x1xf32>
      %264 = vector.broadcast %263 : vector<128x1xf32> to vector<128x256xf32>
      %265 = arith.select %262, %264, %259 : vector<128x256xi1>, vector<128x256xf32>
      %266 = vector.extract_strided_slice %40 {offsets = [0, 31], sizes = [128, 1], strides = [1, 1]} : vector<128x32xf32> to vector<128x1xf32>
      %c384_i32_55 = arith.constant 384 : i32
      %267 = vector.broadcast %c384_i32_55 : i32 to vector<128x256xi32>
      %268 = arith.cmpi eq, %246, %267 : vector<128x256xi32>
      %269 = vector.shape_cast %266 : vector<128x1xf32> to vector<128x1xf32>
      %270 = vector.broadcast %269 : vector<128x1xf32> to vector<128x256xf32>
      %271 = arith.select %268, %270, %265 : vector<128x256xi1>, vector<128x256xf32>
      %272 = arith.addf %243, %271 : vector<128x256xf32>
      scf.yield %272 : vector<128x256xf32>
    }
    %c2_i32_0 = arith.constant 2 : i32
    %cst_1 = arith.constant dense<0.000000e+00> : vector<256xf32>
    %5 = vector.multi_reduction <add>, %4, %cst_1 [0] : vector<128x256xf32> to vector<256xf32>
    %6 = math.absf %5 : vector<256xf32>
    %cst_2 = arith.constant 6.250000e-02 : f32
    %7 = vector.broadcast %cst_2 : f32 to vector<256xf32>
    %8 = arith.mulf %6, %7 : vector<256xf32>
    %c0_3 = arith.constant 0 : index
    %c0_4 = arith.constant 0 : index
    %9 = vector.load %arg4[%c0_3, %c0_4] : memref<2x256xf32, #tpu.memory_space<vmem>>, vector<1x256xf32>
    %10 = vector.shape_cast %9 : vector<1x256xf32> to vector<256xf32>
    %11 = vector.shape_cast %8 : vector<256xf32> to vector<1x256xf32>
    tpu.vector_store %arg4[%c0_3, %c0_4], %11 {strides = array<i32>} : memref<2x256xf32, #tpu.memory_space<vmem>>, vector<1x256xf32>,
    %c1 = arith.constant 1 : index
    %12 = memref.load %arg1[%c1] : memref<2xf32, #tpu.memory_space<smem>>
    %cst_5 = arith.constant 0.000000e+00 : f32
    %13 = vector.broadcast %cst_5 : f32 to vector<128x256xf32>
    %c0_i32_6 = arith.constant 0 : i32
    %c2_i32_7 = arith.constant 2 : i32
    %14 = arith.addi %c0_i32_6, %c2_i32_7 : i32
    %c1_i32_8 = arith.constant 1 : i32
    %15 = scf.for %arg5 = %c0_i32_6 to %14 step %c1_i32_8 iter_args(%arg6 = %13) -> (vector<128x256xf32>)  : i32 {
      %c8_i32 = arith.constant 8 : i32
      %23 = arith.muli %arg5, %c8_i32 : i32
      %24 = tpu.assume_multiple %23, 8 : i32
      %25 = arith.index_cast %24 : i32 to index
      %c0_14 = arith.constant 0 : index
      %26 = vector.load %arg2[%25, %c0_14] : memref<16x256xf32, #tpu.memory_space<vmem>>, vector<8x256xf32>
      %27 = vector.broadcast %12 : f32 to vector<8x256xf32>
      %28 = arith.mulf %26, %27 : vector<8x256xf32>
      %29 = math.roundeven %28 : vector<8x256xf32>
      %30 = arith.fptosi %29 : vector<8x256xf32> to vector<8x256xi32>
      %c4_i32 = arith.constant 4 : i32
      %31 = vector.broadcast %c4_i32 : i32 to vector<8x256xi32>
      %32 = arith.subi %30, %31 : vector<8x256xi32>
      %c0_i32_15 = arith.constant 0 : i32
      %c499_i32 = arith.constant 499 : i32
      %33 = vector.broadcast %c0_i32_15 : i32 to vector<8x256xi32>
      %34 = arith.maxsi %33, %32 : vector<8x256xi32>
      %35 = vector.broadcast %c499_i32 : i32 to vector<8x256xi32>
      %36 = arith.minsi %35, %34 : vector<8x256xi32>
      %c2_i32_16 = arith.constant 2 : i32
      %37 = arith.addi %c2_i32_16, %arg5 : i32
      %38 = arith.index_cast %37 : i32 to index
      %c0_17 = arith.constant 0 : index
      %c0_18 = arith.constant 0 : index
      %39 = vector.load %arg3[%38, %c0_17, %c0_18] : memref<4x128x32xf32, #tpu.memory_space<vmem>>, vector<1x128x32xf32>
      %40 = vector.shape_cast %39 : vector<1x128x32xf32> to vector<128x32xf32>
      %41 = vector.extract_strided_slice %36 {offsets = [0, 0], sizes = [1, 256], strides = [1, 1]} : vector<8x256xi32> to vector<1x256xi32>
      %42 = vector.broadcast %41 : vector<1x256xi32> to vector<128x256xi32>
      %43 = arith.subi %42, %0 : vector<128x256xi32>
      %cst_19 = arith.constant 0.000000e+00 : f32
      %44 = vector.broadcast %cst_19 : f32 to vector<128x256xf32>
      %45 = vector.extract_strided_slice %40 {offsets = [0, 0], sizes = [128, 1], strides = [1, 1]} : vector<128x32xf32> to vector<128x1xf32>
      %c0_i32_20 = arith.constant 0 : i32
      %46 = vector.broadcast %c0_i32_20 : i32 to vector<128x256xi32>
      %47 = arith.cmpi eq, %43, %46 : vector<128x256xi32>
      %48 = vector.shape_cast %45 : vector<128x1xf32> to vector<128x1xf32>
      %49 = vector.broadcast %48 : vector<128x1xf32> to vector<128x256xf32>
      %50 = arith.select %47, %49, %44 : vector<128x256xi1>, vector<128x256xf32>
      %51 = vector.extract_strided_slice %40 {offsets = [0, 1], sizes = [128, 1], strides = [1, 1]} : vector<128x32xf32> to vector<128x1xf32>
      %c128_i32 = arith.constant 128 : i32
      %52 = vector.broadcast %c128_i32 : i32 to vector<128x256xi32>
      %53 = arith.cmpi eq, %43, %52 : vector<128x256xi32>
      %54 = vector.shape_cast %51 : vector<128x1xf32> to vector<128x1xf32>
      %55 = vector.broadcast %54 : vector<128x1xf32> to vector<128x256xf32>
      %56 = arith.select %53, %55, %50 : vector<128x256xi1>, vector<128x256xf32>
      %57 = vector.extract_strided_slice %40 {offsets = [0, 2], sizes = [128, 1], strides = [1, 1]} : vector<128x32xf32> to vector<128x1xf32>
      %c256_i32 = arith.constant 256 : i32
      %58 = vector.broadcast %c256_i32 : i32 to vector<128x256xi32>
      %59 = arith.cmpi eq, %43, %58 : vector<128x256xi32>
      %60 = vector.shape_cast %57 : vector<128x1xf32> to vector<128x1xf32>
      %61 = vector.broadcast %60 : vector<128x1xf32> to vector<128x256xf32>
      %62 = arith.select %59, %61, %56 : vector<128x256xi1>, vector<128x256xf32>
      %63 = vector.extract_strided_slice %40 {offsets = [0, 3], sizes = [128, 1], strides = [1, 1]} : vector<128x32xf32> to vector<128x1xf32>
      %c384_i32 = arith.constant 384 : i32
      %64 = vector.broadcast %c384_i32 : i32 to vector<128x256xi32>
      %65 = arith.cmpi eq, %43, %64 : vector<128x256xi32>
      %66 = vector.shape_cast %63 : vector<128x1xf32> to vector<128x1xf32>
      %67 = vector.broadcast %66 : vector<128x1xf32> to vector<128x256xf32>
      %68 = arith.select %65, %67, %62 : vector<128x256xi1>, vector<128x256xf32>
      %69 = arith.addf %arg6, %68 : vector<128x256xf32>
      %70 = vector.extract_strided_slice %36 {offsets = [1, 0], sizes = [1, 256], strides = [1, 1]} : vector<8x256xi32> to vector<1x256xi32>
      %71 = vector.broadcast %70 : vector<1x256xi32> to vector<128x256xi32>
      %72 = arith.subi %71, %0 : vector<128x256xi32>
      %cst_21 = arith.constant 0.000000e+00 : f32
      %73 = vector.broadcast %cst_21 : f32 to vector<128x256xf32>
      %74 = vector.extract_strided_slice %40 {offsets = [0, 4], sizes = [128, 1], strides = [1, 1]} : vector<128x32xf32> to vector<128x1xf32>
      %c0_i32_22 = arith.constant 0 : i32
      %75 = vector.broadcast %c0_i32_22 : i32 to vector<128x256xi32>
      %76 = arith.cmpi eq, %72, %75 : vector<128x256xi32>
      %77 = vector.shape_cast %74 : vector<128x1xf32> to vector<128x1xf32>
      %78 = vector.broadcast %77 : vector<128x1xf32> to vector<128x256xf32>
      %79 = arith.select %76, %78, %73 : vector<128x256xi1>, vector<128x256xf32>
      %80 = vector.extract_strided_slice %40 {offsets = [0, 5], sizes = [128, 1], strides = [1, 1]} : vector<128x32xf32> to vector<128x1xf32>
      %c128_i32_23 = arith.constant 128 : i32
      %81 = vector.broadcast %c128_i32_23 : i32 to vector<128x256xi32>
      %82 = arith.cmpi eq, %72, %81 : vector<128x256xi32>
      %83 = vector.shape_cast %80 : vector<128x1xf32> to vector<128x1xf32>
      %84 = vector.broadcast %83 : vector<128x1xf32> to vector<128x256xf32>
      %85 = arith.select %82, %84, %79 : vector<128x256xi1>, vector<128x256xf32>
      %86 = vector.extract_strided_slice %40 {offsets = [0, 6], sizes = [128, 1], strides = [1, 1]} : vector<128x32xf32> to vector<128x1xf32>
      %c256_i32_24 = arith.constant 256 : i32
      %87 = vector.broadcast %c256_i32_24 : i32 to vector<128x256xi32>
      %88 = arith.cmpi eq, %72, %87 : vector<128x256xi32>
      %89 = vector.shape_cast %86 : vector<128x1xf32> to vector<128x1xf32>
      %90 = vector.broadcast %89 : vector<128x1xf32> to vector<128x256xf32>
      %91 = arith.select %88, %90, %85 : vector<128x256xi1>, vector<128x256xf32>
      %92 = vector.extract_strided_slice %40 {offsets = [0, 7], sizes = [128, 1], strides = [1, 1]} : vector<128x32xf32> to vector<128x1xf32>
      %c384_i32_25 = arith.constant 384 : i32
      %93 = vector.broadcast %c384_i32_25 : i32 to vector<128x256xi32>
      %94 = arith.cmpi eq, %72, %93 : vector<128x256xi32>
      %95 = vector.shape_cast %92 : vector<128x1xf32> to vector<128x1xf32>
      %96 = vector.broadcast %95 : vector<128x1xf32> to vector<128x256xf32>
      %97 = arith.select %94, %96, %91 : vector<128x256xi1>, vector<128x256xf32>
      %98 = arith.addf %69, %97 : vector<128x256xf32>
      %99 = vector.extract_strided_slice %36 {offsets = [2, 0], sizes = [1, 256], strides = [1, 1]} : vector<8x256xi32> to vector<1x256xi32>
      %100 = vector.broadcast %99 : vector<1x256xi32> to vector<128x256xi32>
      %101 = arith.subi %100, %0 : vector<128x256xi32>
      %cst_26 = arith.constant 0.000000e+00 : f32
      %102 = vector.broadcast %cst_26 : f32 to vector<128x256xf32>
      %103 = vector.extract_strided_slice %40 {offsets = [0, 8], sizes = [128, 1], strides = [1, 1]} : vector<128x32xf32> to vector<128x1xf32>
      %c0_i32_27 = arith.constant 0 : i32
      %104 = vector.broadcast %c0_i32_27 : i32 to vector<128x256xi32>
      %105 = arith.cmpi eq, %101, %104 : vector<128x256xi32>
      %106 = vector.shape_cast %103 : vector<128x1xf32> to vector<128x1xf32>
      %107 = vector.broadcast %106 : vector<128x1xf32> to vector<128x256xf32>
      %108 = arith.select %105, %107, %102 : vector<128x256xi1>, vector<128x256xf32>
      %109 = vector.extract_strided_slice %40 {offsets = [0, 9], sizes = [128, 1], strides = [1, 1]} : vector<128x32xf32> to vector<128x1xf32>
      %c128_i32_28 = arith.constant 128 : i32
      %110 = vector.broadcast %c128_i32_28 : i32 to vector<128x256xi32>
      %111 = arith.cmpi eq, %101, %110 : vector<128x256xi32>
      %112 = vector.shape_cast %109 : vector<128x1xf32> to vector<128x1xf32>
      %113 = vector.broadcast %112 : vector<128x1xf32> to vector<128x256xf32>
      %114 = arith.select %111, %113, %108 : vector<128x256xi1>, vector<128x256xf32>
      %115 = vector.extract_strided_slice %40 {offsets = [0, 10], sizes = [128, 1], strides = [1, 1]} : vector<128x32xf32> to vector<128x1xf32>
      %c256_i32_29 = arith.constant 256 : i32
      %116 = vector.broadcast %c256_i32_29 : i32 to vector<128x256xi32>
      %117 = arith.cmpi eq, %101, %116 : vector<128x256xi32>
      %118 = vector.shape_cast %115 : vector<128x1xf32> to vector<128x1xf32>
      %119 = vector.broadcast %118 : vector<128x1xf32> to vector<128x256xf32>
      %120 = arith.select %117, %119, %114 : vector<128x256xi1>, vector<128x256xf32>
      %121 = vector.extract_strided_slice %40 {offsets = [0, 11], sizes = [128, 1], strides = [1, 1]} : vector<128x32xf32> to vector<128x1xf32>
      %c384_i32_30 = arith.constant 384 : i32
      %122 = vector.broadcast %c384_i32_30 : i32 to vector<128x256xi32>
      %123 = arith.cmpi eq, %101, %122 : vector<128x256xi32>
      %124 = vector.shape_cast %121 : vector<128x1xf32> to vector<128x1xf32>
      %125 = vector.broadcast %124 : vector<128x1xf32> to vector<128x256xf32>
      %126 = arith.select %123, %125, %120 : vector<128x256xi1>, vector<128x256xf32>
      %127 = arith.addf %98, %126 : vector<128x256xf32>
      %128 = vector.extract_strided_slice %36 {offsets = [3, 0], sizes = [1, 256], strides = [1, 1]} : vector<8x256xi32> to vector<1x256xi32>
      %129 = vector.broadcast %128 : vector<1x256xi32> to vector<128x256xi32>
      %130 = arith.subi %129, %0 : vector<128x256xi32>
      %cst_31 = arith.constant 0.000000e+00 : f32
      %131 = vector.broadcast %cst_31 : f32 to vector<128x256xf32>
      %132 = vector.extract_strided_slice %40 {offsets = [0, 12], sizes = [128, 1], strides = [1, 1]} : vector<128x32xf32> to vector<128x1xf32>
      %c0_i32_32 = arith.constant 0 : i32
      %133 = vector.broadcast %c0_i32_32 : i32 to vector<128x256xi32>
      %134 = arith.cmpi eq, %130, %133 : vector<128x256xi32>
      %135 = vector.shape_cast %132 : vector<128x1xf32> to vector<128x1xf32>
      %136 = vector.broadcast %135 : vector<128x1xf32> to vector<128x256xf32>
      %137 = arith.select %134, %136, %131 : vector<128x256xi1>, vector<128x256xf32>
      %138 = vector.extract_strided_slice %40 {offsets = [0, 13], sizes = [128, 1], strides = [1, 1]} : vector<128x32xf32> to vector<128x1xf32>
      %c128_i32_33 = arith.constant 128 : i32
      %139 = vector.broadcast %c128_i32_33 : i32 to vector<128x256xi32>
      %140 = arith.cmpi eq, %130, %139 : vector<128x256xi32>
      %141 = vector.shape_cast %138 : vector<128x1xf32> to vector<128x1xf32>
      %142 = vector.broadcast %141 : vector<128x1xf32> to vector<128x256xf32>
      %143 = arith.select %140, %142, %137 : vector<128x256xi1>, vector<128x256xf32>
      %144 = vector.extract_strided_slice %40 {offsets = [0, 14], sizes = [128, 1], strides = [1, 1]} : vector<128x32xf32> to vector<128x1xf32>
      %c256_i32_34 = arith.constant 256 : i32
      %145 = vector.broadcast %c256_i32_34 : i32 to vector<128x256xi32>
      %146 = arith.cmpi eq, %130, %145 : vector<128x256xi32>
      %147 = vector.shape_cast %144 : vector<128x1xf32> to vector<128x1xf32>
      %148 = vector.broadcast %147 : vector<128x1xf32> to vector<128x256xf32>
      %149 = arith.select %146, %148, %143 : vector<128x256xi1>, vector<128x256xf32>
      %150 = vector.extract_strided_slice %40 {offsets = [0, 15], sizes = [128, 1], strides = [1, 1]} : vector<128x32xf32> to vector<128x1xf32>
      %c384_i32_35 = arith.constant 384 : i32
      %151 = vector.broadcast %c384_i32_35 : i32 to vector<128x256xi32>
      %152 = arith.cmpi eq, %130, %151 : vector<128x256xi32>
      %153 = vector.shape_cast %150 : vector<128x1xf32> to vector<128x1xf32>
      %154 = vector.broadcast %153 : vector<128x1xf32> to vector<128x256xf32>
      %155 = arith.select %152, %154, %149 : vector<128x256xi1>, vector<128x256xf32>
      %156 = arith.addf %127, %155 : vector<128x256xf32>
      %157 = vector.extract_strided_slice %36 {offsets = [4, 0], sizes = [1, 256], strides = [1, 1]} : vector<8x256xi32> to vector<1x256xi32>
      %158 = vector.broadcast %157 : vector<1x256xi32> to vector<128x256xi32>
      %159 = arith.subi %158, %0 : vector<128x256xi32>
      %cst_36 = arith.constant 0.000000e+00 : f32
      %160 = vector.broadcast %cst_36 : f32 to vector<128x256xf32>
      %161 = vector.extract_strided_slice %40 {offsets = [0, 16], sizes = [128, 1], strides = [1, 1]} : vector<128x32xf32> to vector<128x1xf32>
      %c0_i32_37 = arith.constant 0 : i32
      %162 = vector.broadcast %c0_i32_37 : i32 to vector<128x256xi32>
      %163 = arith.cmpi eq, %159, %162 : vector<128x256xi32>
      %164 = vector.shape_cast %161 : vector<128x1xf32> to vector<128x1xf32>
      %165 = vector.broadcast %164 : vector<128x1xf32> to vector<128x256xf32>
      %166 = arith.select %163, %165, %160 : vector<128x256xi1>, vector<128x256xf32>
      %167 = vector.extract_strided_slice %40 {offsets = [0, 17], sizes = [128, 1], strides = [1, 1]} : vector<128x32xf32> to vector<128x1xf32>
      %c128_i32_38 = arith.constant 128 : i32
      %168 = vector.broadcast %c128_i32_38 : i32 to vector<128x256xi32>
      %169 = arith.cmpi eq, %159, %168 : vector<128x256xi32>
      %170 = vector.shape_cast %167 : vector<128x1xf32> to vector<128x1xf32>
      %171 = vector.broadcast %170 : vector<128x1xf32> to vector<128x256xf32>
      %172 = arith.select %169, %171, %166 : vector<128x256xi1>, vector<128x256xf32>
      %173 = vector.extract_strided_slice %40 {offsets = [0, 18], sizes = [128, 1], strides = [1, 1]} : vector<128x32xf32> to vector<128x1xf32>
      %c256_i32_39 = arith.constant 256 : i32
      %174 = vector.broadcast %c256_i32_39 : i32 to vector<128x256xi32>
      %175 = arith.cmpi eq, %159, %174 : vector<128x256xi32>
      %176 = vector.shape_cast %173 : vector<128x1xf32> to vector<128x1xf32>
      %177 = vector.broadcast %176 : vector<128x1xf32> to vector<128x256xf32>
      %178 = arith.select %175, %177, %172 : vector<128x256xi1>, vector<128x256xf32>
      %179 = vector.extract_strided_slice %40 {offsets = [0, 19], sizes = [128, 1], strides = [1, 1]} : vector<128x32xf32> to vector<128x1xf32>
      %c384_i32_40 = arith.constant 384 : i32
      %180 = vector.broadcast %c384_i32_40 : i32 to vector<128x256xi32>
      %181 = arith.cmpi eq, %159, %180 : vector<128x256xi32>
      %182 = vector.shape_cast %179 : vector<128x1xf32> to vector<128x1xf32>
      %183 = vector.broadcast %182 : vector<128x1xf32> to vector<128x256xf32>
      %184 = arith.select %181, %183, %178 : vector<128x256xi1>, vector<128x256xf32>
      %185 = arith.addf %156, %184 : vector<128x256xf32>
      %186 = vector.extract_strided_slice %36 {offsets = [5, 0], sizes = [1, 256], strides = [1, 1]} : vector<8x256xi32> to vector<1x256xi32>
      %187 = vector.broadcast %186 : vector<1x256xi32> to vector<128x256xi32>
      %188 = arith.subi %187, %0 : vector<128x256xi32>
      %cst_41 = arith.constant 0.000000e+00 : f32
      %189 = vector.broadcast %cst_41 : f32 to vector<128x256xf32>
      %190 = vector.extract_strided_slice %40 {offsets = [0, 20], sizes = [128, 1], strides = [1, 1]} : vector<128x32xf32> to vector<128x1xf32>
      %c0_i32_42 = arith.constant 0 : i32
      %191 = vector.broadcast %c0_i32_42 : i32 to vector<128x256xi32>
      %192 = arith.cmpi eq, %188, %191 : vector<128x256xi32>
      %193 = vector.shape_cast %190 : vector<128x1xf32> to vector<128x1xf32>
      %194 = vector.broadcast %193 : vector<128x1xf32> to vector<128x256xf32>
      %195 = arith.select %192, %194, %189 : vector<128x256xi1>, vector<128x256xf32>
      %196 = vector.extract_strided_slice %40 {offsets = [0, 21], sizes = [128, 1], strides = [1, 1]} : vector<128x32xf32> to vector<128x1xf32>
      %c128_i32_43 = arith.constant 128 : i32
      %197 = vector.broadcast %c128_i32_43 : i32 to vector<128x256xi32>
      %198 = arith.cmpi eq, %188, %197 : vector<128x256xi32>
      %199 = vector.shape_cast %196 : vector<128x1xf32> to vector<128x1xf32>
      %200 = vector.broadcast %199 : vector<128x1xf32> to vector<128x256xf32>
      %201 = arith.select %198, %200, %195 : vector<128x256xi1>, vector<128x256xf32>
      %202 = vector.extract_strided_slice %40 {offsets = [0, 22], sizes = [128, 1], strides = [1, 1]} : vector<128x32xf32> to vector<128x1xf32>
      %c256_i32_44 = arith.constant 256 : i32
      %203 = vector.broadcast %c256_i32_44 : i32 to vector<128x256xi32>
      %204 = arith.cmpi eq, %188, %203 : vector<128x256xi32>
      %205 = vector.shape_cast %202 : vector<128x1xf32> to vector<128x1xf32>
      %206 = vector.broadcast %205 : vector<128x1xf32> to vector<128x256xf32>
      %207 = arith.select %204, %206, %201 : vector<128x256xi1>, vector<128x256xf32>
      %208 = vector.extract_strided_slice %40 {offsets = [0, 23], sizes = [128, 1], strides = [1, 1]} : vector<128x32xf32> to vector<128x1xf32>
      %c384_i32_45 = arith.constant 384 : i32
      %209 = vector.broadcast %c384_i32_45 : i32 to vector<128x256xi32>
      %210 = arith.cmpi eq, %188, %209 : vector<128x256xi32>
      %211 = vector.shape_cast %208 : vector<128x1xf32> to vector<128x1xf32>
      %212 = vector.broadcast %211 : vector<128x1xf32> to vector<128x256xf32>
      %213 = arith.select %210, %212, %207 : vector<128x256xi1>, vector<128x256xf32>
      %214 = arith.addf %185, %213 : vector<128x256xf32>
      %215 = vector.extract_strided_slice %36 {offsets = [6, 0], sizes = [1, 256], strides = [1, 1]} : vector<8x256xi32> to vector<1x256xi32>
      %216 = vector.broadcast %215 : vector<1x256xi32> to vector<128x256xi32>
      %217 = arith.subi %216, %0 : vector<128x256xi32>
      %cst_46 = arith.constant 0.000000e+00 : f32
      %218 = vector.broadcast %cst_46 : f32 to vector<128x256xf32>
      %219 = vector.extract_strided_slice %40 {offsets = [0, 24], sizes = [128, 1], strides = [1, 1]} : vector<128x32xf32> to vector<128x1xf32>
      %c0_i32_47 = arith.constant 0 : i32
      %220 = vector.broadcast %c0_i32_47 : i32 to vector<128x256xi32>
      %221 = arith.cmpi eq, %217, %220 : vector<128x256xi32>
      %222 = vector.shape_cast %219 : vector<128x1xf32> to vector<128x1xf32>
      %223 = vector.broadcast %222 : vector<128x1xf32> to vector<128x256xf32>
      %224 = arith.select %221, %223, %218 : vector<128x256xi1>, vector<128x256xf32>
      %225 = vector.extract_strided_slice %40 {offsets = [0, 25], sizes = [128, 1], strides = [1, 1]} : vector<128x32xf32> to vector<128x1xf32>
      %c128_i32_48 = arith.constant 128 : i32
      %226 = vector.broadcast %c128_i32_48 : i32 to vector<128x256xi32>
      %227 = arith.cmpi eq, %217, %226 : vector<128x256xi32>
      %228 = vector.shape_cast %225 : vector<128x1xf32> to vector<128x1xf32>
      %229 = vector.broadcast %228 : vector<128x1xf32> to vector<128x256xf32>
      %230 = arith.select %227, %229, %224 : vector<128x256xi1>, vector<128x256xf32>
      %231 = vector.extract_strided_slice %40 {offsets = [0, 26], sizes = [128, 1], strides = [1, 1]} : vector<128x32xf32> to vector<128x1xf32>
      %c256_i32_49 = arith.constant 256 : i32
      %232 = vector.broadcast %c256_i32_49 : i32 to vector<128x256xi32>
      %233 = arith.cmpi eq, %217, %232 : vector<128x256xi32>
      %234 = vector.shape_cast %231 : vector<128x1xf32> to vector<128x1xf32>
      %235 = vector.broadcast %234 : vector<128x1xf32> to vector<128x256xf32>
      %236 = arith.select %233, %235, %230 : vector<128x256xi1>, vector<128x256xf32>
      %237 = vector.extract_strided_slice %40 {offsets = [0, 27], sizes = [128, 1], strides = [1, 1]} : vector<128x32xf32> to vector<128x1xf32>
      %c384_i32_50 = arith.constant 384 : i32
      %238 = vector.broadcast %c384_i32_50 : i32 to vector<128x256xi32>
      %239 = arith.cmpi eq, %217, %238 : vector<128x256xi32>
      %240 = vector.shape_cast %237 : vector<128x1xf32> to vector<128x1xf32>
      %241 = vector.broadcast %240 : vector<128x1xf32> to vector<128x256xf32>
      %242 = arith.select %239, %241, %236 : vector<128x256xi1>, vector<128x256xf32>
      %243 = arith.addf %214, %242 : vector<128x256xf32>
      %244 = vector.extract_strided_slice %36 {offsets = [7, 0], sizes = [1, 256], strides = [1, 1]} : vector<8x256xi32> to vector<1x256xi32>
      %245 = vector.broadcast %244 : vector<1x256xi32> to vector<128x256xi32>
      %246 = arith.subi %245, %0 : vector<128x256xi32>
      %cst_51 = arith.constant 0.000000e+00 : f32
      %247 = vector.broadcast %cst_51 : f32 to vector<128x256xf32>
      %248 = vector.extract_strided_slice %40 {offsets = [0, 28], sizes = [128, 1], strides = [1, 1]} : vector<128x32xf32> to vector<128x1xf32>
      %c0_i32_52 = arith.constant 0 : i32
      %249 = vector.broadcast %c0_i32_52 : i32 to vector<128x256xi32>
      %250 = arith.cmpi eq, %246, %249 : vector<128x256xi32>
      %251 = vector.shape_cast %248 : vector<128x1xf32> to vector<128x1xf32>
      %252 = vector.broadcast %251 : vector<128x1xf32> to vector<128x256xf32>
      %253 = arith.select %250, %252, %247 : vector<128x256xi1>, vector<128x256xf32>
      %254 = vector.extract_strided_slice %40 {offsets = [0, 29], sizes = [128, 1], strides = [1, 1]} : vector<128x32xf32> to vector<128x1xf32>
      %c128_i32_53 = arith.constant 128 : i32
      %255 = vector.broadcast %c128_i32_53 : i32 to vector<128x256xi32>
      %256 = arith.cmpi eq, %246, %255 : vector<128x256xi32>
      %257 = vector.shape_cast %254 : vector<128x1xf32> to vector<128x1xf32>
      %258 = vector.broadcast %257 : vector<128x1xf32> to vector<128x256xf32>
      %259 = arith.select %256, %258, %253 : vector<128x256xi1>, vector<128x256xf32>
      %260 = vector.extract_strided_slice %40 {offsets = [0, 30], sizes = [128, 1], strides = [1, 1]} : vector<128x32xf32> to vector<128x1xf32>
      %c256_i32_54 = arith.constant 256 : i32
      %261 = vector.broadcast %c256_i32_54 : i32 to vector<128x256xi32>
      %262 = arith.cmpi eq, %246, %261 : vector<128x256xi32>
      %263 = vector.shape_cast %260 : vector<128x1xf32> to vector<128x1xf32>
      %264 = vector.broadcast %263 : vector<128x1xf32> to vector<128x256xf32>
      %265 = arith.select %262, %264, %259 : vector<128x256xi1>, vector<128x256xf32>
      %266 = vector.extract_strided_slice %40 {offsets = [0, 31], sizes = [128, 1], strides = [1, 1]} : vector<128x32xf32> to vector<128x1xf32>
      %c384_i32_55 = arith.constant 384 : i32
      %267 = vector.broadcast %c384_i32_55 : i32 to vector<128x256xi32>
      %268 = arith.cmpi eq, %246, %267 : vector<128x256xi32>
      %269 = vector.shape_cast %266 : vector<128x1xf32> to vector<128x1xf32>
      %270 = vector.broadcast %269 : vector<128x1xf32> to vector<128x256xf32>
      %271 = arith.select %268, %270, %265 : vector<128x256xi1>, vector<128x256xf32>
      %272 = arith.addf %243, %271 : vector<128x256xf32>
      scf.yield %272 : vector<128x256xf32>
    }
    %c2_i32_9 = arith.constant 2 : i32
    %cst_10 = arith.constant dense<0.000000e+00> : vector<256xf32>
    %16 = vector.multi_reduction <add>, %15, %cst_10 [0] : vector<128x256xf32> to vector<256xf32>
    %17 = math.absf %16 : vector<256xf32>
    %cst_11 = arith.constant 6.250000e-02 : f32
    %18 = vector.broadcast %cst_11 : f32 to vector<256xf32>
    %19 = arith.mulf %17, %18 : vector<256xf32>
    %c1_12 = arith.constant 1 : index
    %c0_13 = arith.constant 0 : index
    %20 = vector.load %arg4[%c1_12, %c0_13] : memref<2x256xf32, #tpu.memory_space<vmem>>, vector<1x256xf32>
    %21 = vector.shape_cast %20 : vector<1x256xf32> to vector<256xf32>
    %22 = vector.shape_cast %19 : vector<256xf32> to vector<1x256xf32>
    tpu.vector_store %arg4[%c1_12, %c0_13], %22 {strides = array<i32>} : memref<2x256xf32, #tpu.memory_space<vmem>>, vector<1x256xf32>,
    return
  }
  func.func @transform_0(%arg0: i32) -> i32 {
    %c0_i32 = arith.constant 0 : i32
    %c0_i32_0 = arith.constant 0 : i32
    return %c0_i32 : i32
  }
  func.func @transform_1(%arg0: i32) -> (i32, i32) {
    %c0_i32 = arith.constant 0 : i32
    %c0_i32_0 = arith.constant 0 : i32
    return %c0_i32, %arg0 : i32, i32
  }
  func.func @transform_2(%arg0: i32) -> (i32, i32, i32) {
    %c0_i32 = arith.constant 0 : i32
    %c0_i32_0 = arith.constant 0 : i32
    %c0_i32_1 = arith.constant 0 : i32
    %c0_i32_2 = arith.constant 0 : i32
    return %c0_i32, %c0_i32_0, %c0_i32_1 : i32, i32, i32
  }
  func.func @transform_3(%arg0: i32) -> (i32, i32) {
    %c0_i32 = arith.constant 0 : i32
    %c0_i32_0 = arith.constant 0 : i32
    return %c0_i32, %arg0 : i32, i32
  }
}

</mosaic_0001>

<llo_original>
// kernel: _forward.1
$region0: #{_forward.1}
  #allocation0 [shape = 'u32[]', space=smem, size = 0x4, offset = 0x4, fixed_abs, tag = 'smem constant byte address 0x4 - core index']
  #allocation1 [shape = 'u32[144,128]{1,0:T(1,128)}', space=vmem, size = 0x12000, scoped, tag = 'internal scratch']
  %s0 = inlined_call_operand.vmem [shape: f32[2], index: 0, kind: input, shape index: {}]
  %s1 = inlined_call_operand.vmem [shape: f32[16,256], index: 1, kind: input, shape index: {}]
  %s2 = inlined_call_operand.vmem [shape: f32[4,128,32], index: 2, kind: input, shape index: {}]
  %s3 = inlined_call_operand.vmem [shape: f32[2,256], index: 3, kind: output, shape index: {}]
  %s4 = sld [smem:[#allocation0]]
  $region40: #{_forward.1} parent=0
    _
  %s6 = ssub.s32 1, %s4
  %s7 = scalar_select 0, %s6, %s4
  $region1: #{_forward.1} parent=0
    #allocation2 [shape = 'u8[512]{0}', space=smem, size = 0x200, scoped, tag = 'input window, operand 0, single buffered']
    #allocation3 [shape = 's32[1]{0}', space=sflag, size = 0x4, scoped, tag = 'scoped memory for _forward.1']
    %8 = vsyncpa [#allocation3], 0
    // Predicated region
    $region2: #{_forward.1} parent=1 // pred_check
      _
    $region3: #{_forward.1} parent=1 // pred_check_branch
      %10 = sbr.rel (0) target = $region5
    $region4: #{_forward.1} parent=1 // pred_region
      %s12 = ssub.s32 16, 16
      %13 = vsyncadd [#allocation3], %s12
      %s15 = sshll.u32 %s0, 4
      %s16 = int_to_ptr.vmem [resolvable:$true] %s15
      %18 = dma.vmem_to_smem %s16, 16, [#allocation2], [#allocation3]
    $region5: #{_forward.1} parent=1 // pred_fallthru
      _
    // Predicated region
    $region6: #{_forward.1} parent=1 // pred_check
      _
    $region7: #{_forward.1} parent=1 // pred_check_branch
      %20 = sbr.rel (0) target = $region9
    $region8: #{_forward.1} parent=1 // pred_region
      _
    $region9: #{_forward.1} parent=1 // pred_fallthru
      _
    // Predicated region
    $region10: #{_forward.1} parent=1 // pred_check
      _
    $region11: #{_forward.1} parent=1 // pred_check_branch
      %22 = sbr.rel (0) target = $region13
    $region12: #{_forward.1} parent=1 // pred_region
      _
    $region13: #{_forward.1} parent=1 // pred_fallthru
      _
    // Predicated region
    $region14: #{_forward.1} parent=1 // pred_check
      _
    $region15: #{_forward.1} parent=1 // pred_check_branch
      %24 = sbr.rel (0) target = $region17
    $region16: #{_forward.1} parent=1 // pred_region
      %25 = dma.done [#allocation3], 16
    $region17: #{_forward.1} parent=1 // pred_fallthru
      _
    %26 = sfence
    %v27 = vlaneseq
    %v28 = vshrl.u32 %v27, 7
    %v29 = vadd.s32 %v28, 8
    %v30 = vadd.s32 %v28, 16
    %v31 = vadd.s32 %v28, 24
    %v32 = vadd.s32 %v28, 32
    %v33 = vadd.s32 %v28, 40
    %v34 = vadd.s32 %v28, 48
    %v35 = vadd.s32 %v28, 56
    %v36 = vadd.s32 %v28, 64
    %v37 = vadd.s32 %v28, 72
    %v38 = vadd.s32 %v28, 80
    %v39 = vadd.s32 %v28, 88
    %v40 = vadd.s32 %v28, 96
    %v41 = vadd.s32 %v28, 104
    %v42 = vadd.s32 %v28, 112
    %v43 = vadd.s32 %v28, 120
    %s44 = sld [smem:[#allocation2]]
    loop: start=0, step=1, limit=2
    $region18: #{_forward.1} parent=1 // loop_pre_header
      _
    $region19: #{_forward.1} parent=1 // loop_header
      %s46 = sphi 0, %s50
      %p47 = scmp.ge.s32.totalorder %s46, 2
      %v51 = vphi 0.0, %v4780
      %v52 = vphi 0.0, %v4781
      %v53 = vphi 0.0, %v4782
      %v54 = vphi 0.0, %v4783
      %v55 = vphi 0.0, %v4784
      %v56 = vphi 0.0, %v4785
      %v57 = vphi 0.0, %v4786
      %v58 = vphi 0.0, %v4787
      %v59 = vphi 0.0, %v4788
      %v60 = vphi 0.0, %v4789
      %v61 = vphi 0.0, %v4790
      %v62 = vphi 0.0, %v4791
      %v63 = vphi 0.0, %v4792
      %v64 = vphi 0.0, %v4793
      %v65 = vphi 0.0, %v4794
      %v66 = vphi 0.0, %v4795
      %v67 = vphi 0.0, %v4796
      %v68 = vphi 0.0, %v4797
      %v69 = vphi 0.0, %v4798
      %v70 = vphi 0.0, %v4799
      %v71 = vphi 0.0, %v4800
      %v72 = vphi 0.0, %v4801
      %v73 = vphi 0.0, %v4802
      %v74 = vphi 0.0, %v4803
      %v75 = vphi 0.0, %v4804
      %v76 = vphi 0.0, %v4805
      %v77 = vphi 0.0, %v4806
      %v78 = vphi 0.0, %v4807
      %v79 = vphi 0.0, %v4808
      %v80 = vphi 0.0, %v4809
      %v81 = vphi 0.0, %v4810
      %v82 = vphi 0.0, %v4811
    $region20: #{_forward.1} parent=1 // loop_header_branch
      %49 = sbr.rel (%p47) target = $region24
    $region21: #{_forward.1} parent=1 // loop_body
      %s83 = smul.u32 %s46, 8
      %s84 = sshra.s32 %s83, 3
      %s85 = sand.u32 %s83, 7
      %s86 = smul.u32 %s84, 2
      %s87 = smul.addr %s86, 8
      %s88 = scalar_lea.vmem %s1, %s87
      %v89 = vld [vmem:[%s88] sm:$0xff]
      %v90 = vld [vmem:[%s88 + $0x8] sm:$0xff]
      %v91 = vstv %s44
      %v92 = vmul.f32 %v89, %v91
      %v93 = vmul.f32 %v90, %v91
      %v94 = vcvt.f32.s32.ties.to.even %v92
      %v95 = vcvt.f32.s32.ties.to.even %v93
      %v96 = vsub.s32 %v94, 4
      %v97 = vsub.s32 %v95, 4
      %vm98 = vcmp.gt.s32.totalorder %v96, 0
      %v99 = vsel %vm98, %v96, 0
      %vm100 = vcmp.gt.s32.totalorder %v97, 0
      %v101 = vsel %vm100, %v97, 0
      %vm102 = vcmp.lt.s32.totalorder %v99, 499
      %v103 = vsel %vm102, %v99, 499
      %vm104 = vcmp.lt.s32.totalorder %v101, 499
      %v105 = vsel %vm104, %v101, 499
      %s106 = smul.u32 %s46, 128
      %s107 = scalar_lea.vmem %s2, %s106
      %v108 = vld [vmem:[%s107] sm:$0xff]
      %v109 = vld [vmem:[%s107 + $0x8] sm:$0xff]
      %v110 = vld [vmem:[%s107 + $0x10] sm:$0xff]
      %v111 = vld [vmem:[%s107 + $0x18] sm:$0xff]
      %v112 = vld [vmem:[%s107 + $0x20] sm:$0xff]
      %v113 = vld [vmem:[%s107 + $0x28] sm:$0xff]
      %v114 = vld [vmem:[%s107 + $0x30] sm:$0xff]
      %v115 = vld [vmem:[%s107 + $0x38] sm:$0xff]
      %v116 = vld [vmem:[%s107 + $0x40] sm:$0xff]
      %v117 = vld [vmem:[%s107 + $0x48] sm:$0xff]
      %v118 = vld [vmem:[%s107 + $0x50] sm:$0xff]
      %v119 = vld [vmem:[%s107 + $0x58] sm:$0xff]
      %v120 = vld [vmem:[%s107 + $0x60] sm:$0xff]
      %v121 = vld [vmem:[%s107 + $0x68] sm:$0xff]
      %v122 = vld [vmem:[%s107 + $0x70] sm:$0xff]
      %v123 = vld [vmem:[%s107 + $0x78] sm:$0xff]
      %v124 = vlaneseq
      %v125 = vshrl.u32 %v124, 7
      %v126 = vsub.s32 0, %v125
      %v127 = vrot.slane %v103, %v126
      %v128 = vlaneseq
      %v129 = vshrl.u32 %v128, 7
      %v130 = vsub.s32 0, %v129
      %v131 = vrot.slane %v105, %v130
      %v132 = vsub.s32 %v127, %v28
      %v133 = vsub.s32 %v131, %v28
      %v134 = vsub.s32 %v127, %v29
      %v135 = vsub.s32 %v131, %v29
      %v136 = vsub.s32 %v127, %v30
      %v137 = vsub.s32 %v131, %v30
      %v138 = vsub.s32 %v127, %v31
      %v139 = vsub.s32 %v131, %v31
      %v140 = vsub.s32 %v127, %v32
      %v141 = vsub.s32 %v131, %v32
      %v142 = vsub.s32 %v127, %v33
      %v143 = vsub.s32 %v131, %v33
      %v144 = vsub.s32 %v127, %v34
      %v145 = vsub.s32 %v131, %v34
      %v146 = vsub.s32 %v127, %v35
      %v147 = vsub.s32 %v131, %v35
      %v148 = vsub.s32 %v127, %v36
      %v149 = vsub.s32 %v131, %v36
      %v150 = vsub.s32 %v127, %v37
      %v151 = vsub.s32 %v131, %v37
      %v152 = vsub.s32 %v127, %v38
      %v153 = vsub.s32 %v131, %v38
      %v154 = vsub.s32 %v127, %v39
      %v155 = vsub.s32 %v131, %v39
      %v156 = vsub.s32 %v127, %v40
      %v157 = vsub.s32 %v131, %v40
      %v158 = vsub.s32 %v127, %v41
      %v159 = vsub.s32 %v131, %v41
      %v160 = vsub.s32 %v127, %v42
      %v161 = vsub.s32 %v131, %v42
      %v162 = vsub.s32 %v127, %v43
      %v163 = vsub.s32 %v131, %v43
      %vm164 = vcmp.eq.s32.totalorder %v132, 0
      %vm165 = vcmp.eq.s32.totalorder %v133, 0
      %vm166 = vcmp.eq.s32.totalorder %v134, 0
      %vm167 = vcmp.eq.s32.totalorder %v135, 0
      %vm168 = vcmp.eq.s32.totalorder %v136, 0
      %vm169 = vcmp.eq.s32.totalorder %v137, 0
      %vm170 = vcmp.eq.s32.totalorder %v138, 0
      %vm171 = vcmp.eq.s32.totalorder %v139, 0
      %vm172 = vcmp.eq.s32.totalorder %v140, 0
      %vm173 = vcmp.eq.s32.totalorder %v141, 0
      %vm174 = vcmp.eq.s32.totalorder %v142, 0
      %vm175 = vcmp.eq.s32.totalorder %v143, 0
      %vm176 = vcmp.eq.s32.totalorder %v144, 0
      %vm177 = vcmp.eq.s32.totalorder %v145, 0
      %vm178 = vcmp.eq.s32.totalorder %v146, 0
      %vm179 = vcmp.eq.s32.totalorder %v147, 0
      %vm180 = vcmp.eq.s32.totalorder %v148, 0
      %vm181 = vcmp.eq.s32.totalorder %v149, 0
      %vm182 = vcmp.eq.s32.totalorder %v150, 0
      %vm183 = vcmp.eq.s32.totalorder %v151, 0
      %vm184 = vcmp.eq.s32.totalorder %v152, 0
      %vm185 = vcmp.eq.s32.totalorder %v153, 0
      %vm186 = vcmp.eq.s32.totalorder %v154, 0
      %vm187 = vcmp.eq.s32.totalorder %v155, 0
      %vm188 = vcmp.eq.s32.totalorder %v156, 0
      %vm189 = vcmp.eq.s32.totalorder %v157, 0
      %vm190 = vcmp.eq.s32.totalorder %v158, 0
      %vm191 = vcmp.eq.s32.totalorder %v159, 0
      %vm192 = vcmp.eq.s32.totalorder %v160, 0
      %vm193 = vcmp.eq.s32.totalorder %v161, 0
      %vm194 = vcmp.eq.s32.totalorder %v162, 0
      %vm195 = vcmp.eq.s32.totalorder %v163, 0
      %197 = vset.pattern.permute.xlu0 0
      %198 = vperm.xlu0 %197, %v108
      %v199 = vpop.permute.xlu0 %198
      %202 = vset.pattern.permute.xlu0 0
      %203 = vperm.xlu0 %202, %v109
      %v204 = vpop.permute.xlu0 %203
      %207 = vset.pattern.permute.xlu0 0
      %208 = vperm.xlu0 %207, %v110
      %v209 = vpop.permute.xlu0 %208
      %212 = vset.pattern.permute.xlu0 0
      %213 = vperm.xlu0 %212, %v111
      %v214 = vpop.permute.xlu0 %213
      %217 = vset.pattern.permute.xlu0 0
      %218 = vperm.xlu0 %217, %v112
      %v219 = vpop.permute.xlu0 %218
      %222 = vset.pattern.permute.xlu0 0
      %223 = vperm.xlu0 %222, %v113
      %v224 = vpop.permute.xlu0 %223
      %227 = vset.pattern.permute.xlu0 0
      %228 = vperm.xlu0 %227, %v114
      %v229 = vpop.permute.xlu0 %228
      %232 = vset.pattern.permute.xlu0 0
      %233 = vperm.xlu0 %232, %v115
      %v234 = vpop.permute.xlu0 %233
      %237 = vset.pattern.permute.xlu0 0
      %238 = vperm.xlu0 %237, %v116
      %v239 = vpop.permute.xlu0 %238
      %242 = vset.pattern.permute.xlu0 0
      %243 = vperm.xlu0 %242, %v117
      %v244 = vpop.permute.xlu0 %243
      %247 = vset.pattern.permute.xlu0 0
      %248 = vperm.xlu0 %247, %v118
      %v249 = vpop.permute.xlu0 %248
      %252 = vset.pattern.permute.xlu0 0
      %253 = vperm.xlu0 %252, %v119
      %v254 = vpop.permute.xlu0 %253
      %257 = vset.pattern.permute.xlu0 0
      %258 = vperm.xlu0 %257, %v120
      %v259 = vpop.permute.xlu0 %258
      %262 = vset.pattern.permute.xlu0 0
      %263 = vperm.xlu0 %262, %v121
      %v264 = vpop.permute.xlu0 %263
      %267 = vset.pattern.permute.xlu0 0
      %268 = vperm.xlu0 %267, %v122
      %v269 = vpop.permute.xlu0 %268
      %272 = vset.pattern.permute.xlu0 0
      %273 = vperm.xlu0 %272, %v123
      %v274 = vpop.permute.xlu0 %273
      %v276 = vsel %vm164, %v199, 0.0
      %v277 = vsel %vm165, %v199, 0.0
      %v278 = vsel %vm166, %v204, 0.0
      %v279 = vsel %vm167, %v204, 0.0
      %v280 = vsel %vm168, %v209, 0.0
      %v281 = vsel %vm169, %v209, 0.0
      %v282 = vsel %vm170, %v214, 0.0
      %v283 = vsel %vm171, %v214, 0.0
      %v284 = vsel %vm172, %v219, 0.0
      %v285 = vsel %vm173, %v219, 0.0
      %v286 = vsel %vm174, %v224, 0.0
      %v287 = vsel %vm175, %v224, 0.0
      %v288 = vsel %vm176, %v229, 0.0
      %v289 = vsel %vm177, %v229, 0.0
      %v290 = vsel %vm178, %v234, 0.0
      %v291 = vsel %vm179, %v234, 0.0
      %v292 = vsel %vm180, %v239, 0.0
      %v293 = vsel %vm181, %v239, 0.0
      %v294 = vsel %vm182, %v244, 0.0
      %v295 = vsel %vm183, %v244, 0.0
      %v296 = vsel %vm184, %v249, 0.0
      %v297 = vsel %vm185, %v249, 0.0
      %v298 = vsel %vm186, %v254, 0.0
      %v299 = vsel %vm187, %v254, 0.0
      %v300 = vsel %vm188, %v259, 0.0
      %v301 = vsel %vm189, %v259, 0.0
      %v302 = vsel %vm190, %v264, 0.0
      %v303 = vsel %vm191, %v264, 0.0
      %v304 = vsel %vm192, %v269, 0.0
      %v305 = vsel %vm193, %v269, 0.0
      %v306 = vsel %vm194, %v274, 0.0
      %v307 = vsel %vm195, %v274, 0.0
      %vm308 = vcmp.eq.s32.totalorder %v132, 128
      %vm309 = vcmp.eq.s32.totalorder %v133, 128
      %vm310 = vcmp.eq.s32.totalorder %v134, 128
      %vm311 = vcmp.eq.s32.totalorder %v135, 128
      %vm312 = vcmp.eq.s32.totalorder %v136, 128
      %vm313 = vcmp.eq.s32.totalorder %v137, 128
      %vm314 = vcmp.eq.s32.totalorder %v138, 128
      %vm315 = vcmp.eq.s32.totalorder %v139, 128
      %vm316 = vcmp.eq.s32.totalorder %v140, 128
      %vm317 = vcmp.eq.s32.totalorder %v141, 128
      %vm318 = vcmp.eq.s32.totalorder %v142, 128
      %vm319 = vcmp.eq.s32.totalorder %v143, 128
      %vm320 = vcmp.eq.s32.totalorder %v144, 128
      %vm321 = vcmp.eq.s32.totalorder %v145, 128
      %vm322 = vcmp.eq.s32.totalorder %v146, 128
      %vm323 = vcmp.eq.s32.totalorder %v147, 128
      %vm324 = vcmp.eq.s32.totalorder %v148, 128
      %vm325 = vcmp.eq.s32.totalorder %v149, 128
      %vm326 = vcmp.eq.s32.totalorder %v150, 128
      %vm327 = vcmp.eq.s32.totalorder %v151, 128
      %vm328 = vcmp.eq.s32.totalorder %v152, 128
      %vm329 = vcmp.eq.s32.totalorder %v153, 128
      %vm330 = vcmp.eq.s32.totalorder %v154, 128
      %vm331 = vcmp.eq.s32.totalorder %v155, 128
      %vm332 = vcmp.eq.s32.totalorder %v156, 128
      %vm333 = vcmp.eq.s32.totalorder %v157, 128
      %vm334 = vcmp.eq.s32.totalorder %v158, 128
      %vm335 = vcmp.eq.s32.totalorder %v159, 128
      %vm336 = vcmp.eq.s32.totalorder %v160, 128
      %vm337 = vcmp.eq.s32.totalorder %v161, 128
      %vm338 = vcmp.eq.s32.totalorder %v162, 128
      %vm339 = vcmp.eq.s32.totalorder %v163, 128
      %340 = vset.pattern.permute.xlu0 1
      %341 = vperm.xlu0 %340, %v108
      %v342 = vpop.permute.xlu0 %341
      %344 = vset.pattern.permute.xlu0 1
      %345 = vperm.xlu0 %344, %v109
      %v346 = vpop.permute.xlu0 %345
      %348 = vset.pattern.permute.xlu0 1
      %349 = vperm.xlu0 %348, %v110
      %v350 = vpop.permute.xlu0 %349
      %352 = vset.pattern.permute.xlu0 1
      %353 = vperm.xlu0 %352, %v111
      %v354 = vpop.permute.xlu0 %353
      %356 = vset.pattern.permute.xlu0 1
      %357 = vperm.xlu0 %356, %v112
      %v358 = vpop.permute.xlu0 %357
      %360 = vset.pattern.permute.xlu0 1
      %361 = vperm.xlu0 %360, %v113
      %v362 = vpop.permute.xlu0 %361
      %364 = vset.pattern.permute.xlu0 1
      %365 = vperm.xlu0 %364, %v114
      %v366 = vpop.permute.xlu0 %365
      %368 = vset.pattern.permute.xlu0 1
      %369 = vperm.xlu0 %368, %v115
      %v370 = vpop.permute.xlu0 %369
      %372 = vset.pattern.permute.xlu0 1
      %373 = vperm.xlu0 %372, %v116
      %v374 = vpop.permute.xlu0 %373
      %376 = vset.pattern.permute.xlu0 1
      %377 = vperm.xlu0 %376, %v117
      %v378 = vpop.permute.xlu0 %377
      %380 = vset.pattern.permute.xlu0 1
      %381 = vperm.xlu0 %380, %v118
      %v382 = vpop.permute.xlu0 %381
      %384 = vset.pattern.permute.xlu0 1
      %385 = vperm.xlu0 %384, %v119
      %v386 = vpop.permute.xlu0 %385
      %388 = vset.pattern.permute.xlu0 1
      %389 = vperm.xlu0 %388, %v120
      %v390 = vpop.permute.xlu0 %389
      %392 = vset.pattern.permute.xlu0 1
      %393 = vperm.xlu0 %392, %v121
      %v394 = vpop.permute.xlu0 %393
      %396 = vset.pattern.permute.xlu0 1
      %397 = vperm.xlu0 %396, %v122
      %v398 = vpop.permute.xlu0 %397
      %400 = vset.pattern.permute.xlu0 1
      %401 = vperm.xlu0 %400, %v123
      %v402 = vpop.permute.xlu0 %401
      %v404 = vsel %vm308, %v342, %v276
      %v405 = vsel %vm309, %v342, %v277
      %v406 = vsel %vm310, %v346, %v278
      %v407 = vsel %vm311, %v346, %v279
      %v408 = vsel %vm312, %v350, %v280
      %v409 = vsel %vm313, %v350, %v281
      %v410 = vsel %vm314, %v354, %v282
      %v411 = vsel %vm315, %v354, %v283
      %v412 = vsel %vm316, %v358, %v284
      %v413 = vsel %vm317, %v358, %v285
      %v414 = vsel %vm318, %v362, %v286
      %v415 = vsel %vm319, %v362, %v287
      %v416 = vsel %vm320, %v366, %v288
      %v417 = vsel %vm321, %v366, %v289
      %v418 = vsel %vm322, %v370, %v290
      %v419 = vsel %vm323, %v370, %v291
      %v420 = vsel %vm324, %v374, %v292
      %v421 = vsel %vm325, %v374, %v293
      %v422 = vsel %vm326, %v378, %v294
      %v423 = vsel %vm327, %v378, %v295
      %v424 = vsel %vm328, %v382, %v296
      %v425 = vsel %vm329, %v382, %v297
      %v426 = vsel %vm330, %v386, %v298
      %v427 = vsel %vm331, %v386, %v299
      %v428 = vsel %vm332, %v390, %v300
      %v429 = vsel %vm333, %v390, %v301
      %v430 = vsel %vm334, %v394, %v302
      %v431 = vsel %vm335, %v394, %v303
      %v432 = vsel %vm336, %v398, %v304
      %v433 = vsel %vm337, %v398, %v305
      %v434 = vsel %vm338, %v402, %v306
      %v435 = vsel %vm339, %v402, %v307
      %vm436 = vcmp.eq.s32.totalorder %v132, 256
      %vm437 = vcmp.eq.s32.totalorder %v133, 256
      %vm438 = vcmp.eq.s32.totalorder %v134, 256
      %vm439 = vcmp.eq.s32.totalorder %v135, 256
      %vm440 = vcmp.eq.s32.totalorder %v136, 256
      %vm441 = vcmp.eq.s32.totalorder %v137, 256
      %vm442 = vcmp.eq.s32.totalorder %v138, 256
      %vm443 = vcmp.eq.s32.totalorder %v139, 256
      %vm444 = vcmp.eq.s32.totalorder %v140, 256
      %vm445 = vcmp.eq.s32.totalorder %v141, 256
      %vm446 = vcmp.eq.s32.totalorder %v142, 256
      %vm447 = vcmp.eq.s32.totalorder %v143, 256
      %vm448 = vcmp.eq.s32.totalorder %v144, 256
      %vm449 = vcmp.eq.s32.totalorder %v145, 256
      %vm450 = vcmp.eq.s32.totalorder %v146, 256
      %vm451 = vcmp.eq.s32.totalorder %v147, 256
      %vm452 = vcmp.eq.s32.totalorder %v148, 256
      %vm453 = vcmp.eq.s32.totalorder %v149, 256
      %vm454 = vcmp.eq.s32.totalorder %v150, 256
      %vm455 = vcmp.eq.s32.totalorder %v151, 256
      %vm456 = vcmp.eq.s32.totalorder %v152, 256
      %vm457 = vcmp.eq.s32.totalorder %v153, 256
      %vm458 = vcmp.eq.s32.totalorder %v154, 256
      %vm459 = vcmp.eq.s32.totalorder %v155, 256
      %vm460 = vcmp.eq.s32.totalorder %v156, 256
      %vm461 = vcmp.eq.s32.totalorder %v157, 256
      %vm462 = vcmp.eq.s32.totalorder %v158, 256
      %vm463 = vcmp.eq.s32.totalorder %v159, 256
      %vm464 = vcmp.eq.s32.totalorder %v160, 256
      %vm465 = vcmp.eq.s32.totalorder %v161, 256
      %vm466 = vcmp.eq.s32.totalorder %v162, 256
      %vm467 = vcmp.eq.s32.totalorder %v163, 256
      %468 = vset.pattern.permute.xlu0 2
      %469 = vperm.xlu0 %468, %v108
      %v470 = vpop.permute.xlu0 %469
      %472 = vset.pattern.permute.xlu0 2
      %473 = vperm.xlu0 %472, %v109
      %v474 = vpop.permute.xlu0 %473
      %476 = vset.pattern.permute.xlu0 2
      %477 = vperm.xlu0 %476, %v110
      %v478 = vpop.permute.xlu0 %477
      %480 = vset.pattern.permute.xlu0 2
      %481 = vperm.xlu0 %480, %v111
      %v482 = vpop.permute.xlu0 %481
      %484 = vset.pattern.permute.xlu0 2
      %485 = vperm.xlu0 %484, %v112
      %v486 = vpop.permute.xlu0 %485
      %488 = vset.pattern.permute.xlu0 2
      %489 = vperm.xlu0 %488, %v113
      %v490 = vpop.permute.xlu0 %489
      %492 = vset.pattern.permute.xlu0 2
      %493 = vperm.xlu0 %492, %v114
      %v494 = vpop.permute.xlu0 %493
      %496 = vset.pattern.permute.xlu0 2
      %497 = vperm.xlu0 %496, %v115
      %v498 = vpop.permute.xlu0 %497
      %500 = vset.pattern.permute.xlu0 2
      %501 = vperm.xlu0 %500, %v116
      %v502 = vpop.permute.xlu0 %501
      %504 = vset.pattern.permute.xlu0 2
      %505 = vperm.xlu0 %504, %v117
      %v506 = vpop.permute.xlu0 %505
      %508 = vset.pattern.permute.xlu0 2
      %509 = vperm.xlu0 %508, %v118
      %v510 = vpop.permute.xlu0 %509
      %512 = vset.pattern.permute.xlu0 2
      %513 = vperm.xlu0 %512, %v119
      %v514 = vpop.permute.xlu0 %513
      %516 = vset.pattern.permute.xlu0 2
      %517 = vperm.xlu0 %516, %v120
      %v518 = vpop.permute.xlu0 %517
      %520 = vset.pattern.permute.xlu0 2
      %521 = vperm.xlu0 %520, %v121
      %v522 = vpop.permute.xlu0 %521
      %524 = vset.pattern.permute.xlu0 2
      %525 = vperm.xlu0 %524, %v122
      %v526 = vpop.permute.xlu0 %525
      %528 = vset.pattern.permute.xlu0 2
      %529 = vperm.xlu0 %528, %v123
      %v530 = vpop.permute.xlu0 %529
      %v532 = vsel %vm436, %v470, %v404
      %v533 = vsel %vm437, %v470, %v405
      %v534 = vsel %vm438, %v474, %v406
      %v535 = vsel %vm439, %v474, %v407
      %v536 = vsel %vm440, %v478, %v408
      %v537 = vsel %vm441, %v478, %v409
      %v538 = vsel %vm442, %v482, %v410
      %v539 = vsel %vm443, %v482, %v411
      %v540 = vsel %vm444, %v486, %v412
      %v541 = vsel %vm445, %v486, %v413
      %v542 = vsel %vm446, %v490, %v414
      %v543 = vsel %vm447, %v490, %v415
      %v544 = vsel %vm448, %v494, %v416
      %v545 = vsel %vm449, %v494, %v417
      %v546 = vsel %vm450, %v498, %v418
      %v547 = vsel %vm451, %v498, %v419
      %v548 = vsel %vm452, %v502, %v420
      %v549 = vsel %vm453, %v502, %v421
      %v550 = vsel %vm454, %v506, %v422
      %v551 = vsel %vm455, %v506, %v423
      %v552 = vsel %vm456, %v510, %v424
      %v553 = vsel %vm457, %v510, %v425
      %v554 = vsel %vm458, %v514, %v426
      %v555 = vsel %vm459, %v514, %v427
      %v556 = vsel %vm460, %v518, %v428
      %v557 = vsel %vm461, %v518, %v429
      %v558 = vsel %vm462, %v522, %v430
      %v559 = vsel %vm463, %v522, %v431
      %v560 = vsel %vm464, %v526, %v432
      %v561 = vsel %vm465, %v526, %v433
      %v562 = vsel %vm466, %v530, %v434
      %v563 = vsel %vm467, %v530, %v435
      %vm564 = vcmp.eq.s32.totalorder %v132, 384
      %vm565 = vcmp.eq.s32.totalorder %v133, 384
      %vm566 = vcmp.eq.s32.totalorder %v134, 384
      %vm567 = vcmp.eq.s32.totalorder %v135, 384
      %vm568 = vcmp.eq.s32.totalorder %v136, 384
      %vm569 = vcmp.eq.s32.totalorder %v137, 384
      %vm570 = vcmp.eq.s32.totalorder %v138, 384
      %vm571 = vcmp.eq.s32.totalorder %v139, 384
      %vm572 = vcmp.eq.s32.totalorder %v140, 384
      %vm573 = vcmp.eq.s32.totalorder %v141, 384
      %vm574 = vcmp.eq.s32.totalorder %v142, 384
      %vm575 = vcmp.eq.s32.totalorder %v143, 384
      %vm576 = vcmp.eq.s32.totalorder %v144, 384
      %vm577 = vcmp.eq.s32.totalorder %v145, 384
      %vm578 = vcmp.eq.s32.totalorder %v146, 384
      %vm579 = vcmp.eq.s32.totalorder %v147, 384
      %vm580 = vcmp.eq.s32.totalorder %v148, 384
      %vm581 = vcmp.eq.s32.totalorder %v149, 384
      %vm582 = vcmp.eq.s32.totalorder %v150, 384
      %vm583 = vcmp.eq.s32.totalorder %v151, 384
      %vm584 = vcmp.eq.s32.totalorder %v152, 384
      %vm585 = vcmp.eq.s32.totalorder %v153, 384
      %vm586 = vcmp.eq.s32.totalorder %v154, 384
      %vm587 = vcmp.eq.s32.totalorder %v155, 384
      %vm588 = vcmp.eq.s32.totalorder %v156, 384
      %vm589 = vcmp.eq.s32.totalorder %v157, 384
      %vm590 = vcmp.eq.s32.totalorder %v158, 384
      %vm591 = vcmp.eq.s32.totalorder %v159, 384
      %vm592 = vcmp.eq.s32.totalorder %v160, 384
      %vm593 = vcmp.eq.s32.totalorder %v161, 384
      %vm594 = vcmp.eq.s32.totalorder %v162, 384
      %vm595 = vcmp.eq.s32.totalorder %v163, 384
      %596 = vset.pattern.permute.xlu0 3
      %597 = vperm.xlu0 %596, %v108
      %v598 = vpop.permute.xlu0 %597
      %600 = vset.pattern.permute.xlu0 3
      %601 = vperm.xlu0 %600, %v109
      %v602 = vpop.permute.xlu0 %601
      %604 = vset.pattern.permute.xlu0 3
      %605 = vperm.xlu0 %604, %v110
      %v606 = vpop.permute.xlu0 %605
      %608 = vset.pattern.permute.xlu0 3
      %609 = vperm.xlu0 %608, %v111
      %v610 = vpop.permute.xlu0 %609
      %612 = vset.pattern.permute.xlu0 3
      %613 = vperm.xlu0 %612, %v112
      %v614 = vpop.permute.xlu0 %613
      %616 = vset.pattern.permute.xlu0 3
      %617 = vperm.xlu0 %616, %v113
      %v618 = vpop.permute.xlu0 %617
      %620 = vset.pattern.permute.xlu0 3
      %621 = vperm.xlu0 %620, %v114
      %v622 = vpop.permute.xlu0 %621
      %624 = vset.pattern.permute.xlu0 3
      %625 = vperm.xlu0 %624, %v115
      %v626 = vpop.permute.xlu0 %625
      %628 = vset.pattern.permute.xlu0 3
      %629 = vperm.xlu0 %628, %v116
      %v630 = vpop.permute.xlu0 %629
      %632 = vset.pattern.permute.xlu0 3
      %633 = vperm.xlu0 %632, %v117
      %v634 = vpop.permute.xlu0 %633
      %636 = vset.pattern.permute.xlu0 3
      %637 = vperm.xlu0 %636, %v118
      %v638 = vpop.permute.xlu0 %637
      %640 = vset.pattern.permute.xlu0 3
      %641 = vperm.xlu0 %640, %v119
      %v642 = vpop.permute.xlu0 %641
      %644 = vset.pattern.permute.xlu0 3
      %645 = vperm.xlu0 %644, %v120
      %v646 = vpop.permute.xlu0 %645
      %648 = vset.pattern.permute.xlu0 3
      %649 = vperm.xlu0 %648, %v121
      %v650 = vpop.permute.xlu0 %649
      %652 = vset.pattern.permute.xlu0 3
      %653 = vperm.xlu0 %652, %v122
      %v654 = vpop.permute.xlu0 %653
      %656 = vset.pattern.permute.xlu0 3
      %657 = vperm.xlu0 %656, %v123
      %v658 = vpop.permute.xlu0 %657
      %v660 = vsel %vm564, %v598, %v532
      %v661 = vsel %vm565, %v598, %v533
      %v662 = vsel %vm566, %v602, %v534
      %v663 = vsel %vm567, %v602, %v535
      %v664 = vsel %vm568, %v606, %v536
      %v665 = vsel %vm569, %v606, %v537
      %v666 = vsel %vm570, %v610, %v538
      %v667 = vsel %vm571, %v610, %v539
      %v668 = vsel %vm572, %v614, %v540
      %v669 = vsel %vm573, %v614, %v541
      %v670 = vsel %vm574, %v618, %v542
      %v671 = vsel %vm575, %v618, %v543
      %v672 = vsel %vm576, %v622, %v544
      %v673 = vsel %vm577, %v622, %v545
      %v674 = vsel %vm578, %v626, %v546
      %v675 = vsel %vm579, %v626, %v547
      %v676 = vsel %vm580, %v630, %v548
      %v677 = vsel %vm581, %v630, %v549
      %v678 = vsel %vm582, %v634, %v550
      %v679 = vsel %vm583, %v634, %v551
      %v680 = vsel %vm584, %v638, %v552
      %v681 = vsel %vm585, %v638, %v553
      %v682 = vsel %vm586, %v642, %v554
      %v683 = vsel %vm587, %v642, %v555
      %v684 = vsel %vm588, %v646, %v556
      %v685 = vsel %vm589, %v646, %v557
      %v686 = vsel %vm590, %v650, %v558
      %v687 = vsel %vm591, %v650, %v559
      %v688 = vsel %vm592, %v654, %v560
      %v689 = vsel %vm593, %v654, %v561
      %v690 = vsel %vm594, %v658, %v562
      %v691 = vsel %vm595, %v658, %v563
      %v692 = vadd.f32 %v51, %v660
      %v693 = vadd.f32 %v52, %v661
      %v694 = vadd.f32 %v53, %v662
      %v695 = vadd.f32 %v54, %v663
      %v696 = vadd.f32 %v55, %v664
      %v697 = vadd.f32 %v56, %v665
      %v698 = vadd.f32 %v57, %v666
      %v699 = vadd.f32 %v58, %v667
      %v700 = vadd.f32 %v59, %v668
      %v701 = vadd.f32 %v60, %v669
      %v702 = vadd.f32 %v61, %v670
      %v703 = vadd.f32 %v62, %v671
      %v704 = vadd.f32 %v63, %v672
      %v705 = vadd.f32 %v64, %v673
      %v706 = vadd.f32 %v65, %v674
      %v707 = vadd.f32 %v66, %v675
      %v708 = vadd.f32 %v67, %v676
      %v709 = vadd.f32 %v68, %v677
      %v710 = vadd.f32 %v69, %v678
      %v711 = vadd.f32 %v70, %v679
      %v712 = vadd.f32 %v71, %v680
      %v713 = vadd.f32 %v72, %v681
      %v714 = vadd.f32 %v73, %v682
      %v715 = vadd.f32 %v74, %v683
      %v716 = vadd.f32 %v75, %v684
      %v717 = vadd.f32 %v76, %v685
      %v718 = vadd.f32 %v77, %v686
      %v719 = vadd.f32 %v78, %v687
      %v720 = vadd.f32 %v79, %v688
      %v721 = vadd.f32 %v80, %v689
      %v722 = vadd.f32 %v81, %v690
      %v723 = vadd.f32 %v82, %v691
      %v724 = vlaneseq
      %v725 = vshrl.u32 %v724, 7
      %v726 = vsub.s32 1, %v725
      %v727 = vrot.slane %v103, %v726
      %v728 = vlaneseq
      %v729 = vshrl.u32 %v728, 7
      %v730 = vsub.s32 1, %v729
      %v731 = vrot.slane %v105, %v730
      %v732 = vsub.s32 %v727, %v28
      %v733 = vsub.s32 %v731, %v28
      %v734 = vsub.s32 %v727, %v29
      %v735 = vsub.s32 %v731, %v29
      %v736 = vsub.s32 %v727, %v30
      %v737 = vsub.s32 %v731, %v30
      %v738 = vsub.s32 %v727, %v31
      %v739 = vsub.s32 %v731, %v31
      %v740 = vsub.s32 %v727, %v32
      %v741 = vsub.s32 %v731, %v32
      %v742 = vsub.s32 %v727, %v33
      %v743 = vsub.s32 %v731, %v33
      %v744 = vsub.s32 %v727, %v34
      %v745 = vsub.s32 %v731, %v34
      %v746 = vsub.s32 %v727, %v35
      %v747 = vsub.s32 %v731, %v35
      %v748 = vsub.s32 %v727, %v36
      %v749 = vsub.s32 %v731, %v36
      %v750 = vsub.s32 %v727, %v37
      %v751 = vsub.s32 %v731, %v37
      %v752 = vsub.s32 %v727, %v38
      %v753 = vsub.s32 %v731, %v38
      %v754 = vsub.s32 %v727, %v39
      %v755 = vsub.s32 %v731, %v39
      %v756 = vsub.s32 %v727, %v40
      %v757 = vsub.s32 %v731, %v40
      %v758 = vsub.s32 %v727, %v41
      %v759 = vsub.s32 %v731, %v41
      %v760 = vsub.s32 %v727, %v42
      %v761 = vsub.s32 %v731, %v42
      %v762 = vsub.s32 %v727, %v43
      %v763 = vsub.s32 %v731, %v43
      %vm764 = vcmp.eq.s32.totalorder %v732, 0
      %vm765 = vcmp.eq.s32.totalorder %v733, 0
      %vm766 = vcmp.eq.s32.totalorder %v734, 0
      %vm767 = vcmp.eq.s32.totalorder %v735, 0
      %vm768 = vcmp.eq.s32.totalorder %v736, 0
      %vm769 = vcmp.eq.s32.totalorder %v737, 0
      %vm770 = vcmp.eq.s32.totalorder %v738, 0
      %vm771 = vcmp.eq.s32.totalorder %v739, 0
      %vm772 = vcmp.eq.s32.totalorder %v740, 0
      %vm773 = vcmp.eq.s32.totalorder %v741, 0
      %vm774 = vcmp.eq.s32.totalorder %v742, 0
      %vm775 = vcmp.eq.s32.totalorder %v743, 0
      %vm776 = vcmp.eq.s32.totalorder %v744, 0
      %vm777 = vcmp.eq.s32.totalorder %v745, 0
      %vm778 = vcmp.eq.s32.totalorder %v746, 0
      %vm779 = vcmp.eq.s32.totalorder %v747, 0
      %vm780 = vcmp.eq.s32.totalorder %v748, 0
      %vm781 = vcmp.eq.s32.totalorder %v749, 0
      %vm782 = vcmp.eq.s32.totalorder %v750, 0
      %vm783 = vcmp.eq.s32.totalorder %v751, 0
      %vm784 = vcmp.eq.s32.totalorder %v752, 0
      %vm785 = vcmp.eq.s32.totalorder %v753, 0
      %vm786 = vcmp.eq.s32.totalorder %v754, 0
      %vm787 = vcmp.eq.s32.totalorder %v755, 0
      %vm788 = vcmp.eq.s32.totalorder %v756, 0
      %vm789 = vcmp.eq.s32.totalorder %v757, 0
      %vm790 = vcmp.eq.s32.totalorder %v758, 0
      %vm791 = vcmp.eq.s32.totalorder %v759, 0
      %vm792 = vcmp.eq.s32.totalorder %v760, 0
      %vm793 = vcmp.eq.s32.totalorder %v761, 0
      %vm794 = vcmp.eq.s32.totalorder %v762, 0
      %vm795 = vcmp.eq.s32.totalorder %v763, 0
      %796 = vset.pattern.permute.xlu0 4
      %797 = vperm.xlu0 %796, %v108
      %v798 = vpop.permute.xlu0 %797
      %800 = vset.pattern.permute.xlu0 4
      %801 = vperm.xlu0 %800, %v109
      %v802 = vpop.permute.xlu0 %801
      %804 = vset.pattern.permute.xlu0 4
      %805 = vperm.xlu0 %804, %v110
      %v806 = vpop.permute.xlu0 %805
      %808 = vset.pattern.permute.xlu0 4
      %809 = vperm.xlu0 %808, %v111
      %v810 = vpop.permute.xlu0 %809
      %812 = vset.pattern.permute.xlu0 4
      %813 = vperm.xlu0 %812, %v112
      %v814 = vpop.permute.xlu0 %813
      %816 = vset.pattern.permute.xlu0 4
      %817 = vperm.xlu0 %816, %v113
      %v818 = vpop.permute.xlu0 %817
      %820 = vset.pattern.permute.xlu0 4
      %821 = vperm.xlu0 %820, %v114
      %v822 = vpop.permute.xlu0 %821
      %824 = vset.pattern.permute.xlu0 4
      %825 = vperm.xlu0 %824, %v115
      %v826 = vpop.permute.xlu0 %825
      %828 = vset.pattern.permute.xlu0 4
      %829 = vperm.xlu0 %828, %v116
      %v830 = vpop.permute.xlu0 %829
      %832 = vset.pattern.permute.xlu0 4
      %833 = vperm.xlu0 %832, %v117
      %v834 = vpop.permute.xlu0 %833
      %836 = vset.pattern.permute.xlu0 4
      %837 = vperm.xlu0 %836, %v118
      %v838 = vpop.permute.xlu0 %837
      %840 = vset.pattern.permute.xlu0 4
      %841 = vperm.xlu0 %840, %v119
      %v842 = vpop.permute.xlu0 %841
      %844 = vset.pattern.permute.xlu0 4
      %845 = vperm.xlu0 %844, %v120
      %v846 = vpop.permute.xlu0 %845
      %848 = vset.pattern.permute.xlu0 4
      %849 = vperm.xlu0 %848, %v121
      %v850 = vpop.permute.xlu0 %849
      %852 = vset.pattern.permute.xlu0 4
      %853 = vperm.xlu0 %852, %v122
      %v854 = vpop.permute.xlu0 %853
      %856 = vset.pattern.permute.xlu0 4
      %857 = vperm.xlu0 %856, %v123
      %v858 = vpop.permute.xlu0 %857
      %v860 = vsel %vm764, %v798, 0.0
      %v861 = vsel %vm765, %v798, 0.0
      %v862 = vsel %vm766, %v802, 0.0
      %v863 = vsel %vm767, %v802, 0.0
      %v864 = vsel %vm768, %v806, 0.0
      %v865 = vsel %vm769, %v806, 0.0
      %v866 = vsel %vm770, %v810, 0.0
      %v867 = vsel %vm771, %v810, 0.0
      %v868 = vsel %vm772, %v814, 0.0
      %v869 = vsel %vm773, %v814, 0.0
      %v870 = vsel %vm774, %v818, 0.0
      %v871 = vsel %vm775, %v818, 0.0
      %v872 = vsel %vm776, %v822, 0.0
      %v873 = vsel %vm777, %v822, 0.0
      %v874 = vsel %vm778, %v826, 0.0
      %v875 = vsel %vm779, %v826, 0.0
      %v876 = vsel %vm780, %v830, 0.0
      %v877 = vsel %vm781, %v830, 0.0
      %v878 = vsel %vm782, %v834, 0.0
      %v879 = vsel %vm783, %v834, 0.0
      %v880 = vsel %vm784, %v838, 0.0
      %v881 = vsel %vm785, %v838, 0.0
      %v882 = vsel %vm786, %v842, 0.0
      %v883 = vsel %vm787, %v842, 0.0
      %v884 = vsel %vm788, %v846, 0.0
      %v885 = vsel %vm789, %v846, 0.0
      %v886 = vsel %vm790, %v850, 0.0
      %v887 = vsel %vm791, %v850, 0.0
      %v888 = vsel %vm792, %v854, 0.0
      %v889 = vsel %vm793, %v854, 0.0
      %v890 = vsel %vm794, %v858, 0.0
      %v891 = vsel %vm795, %v858, 0.0
      %vm892 = vcmp.eq.s32.totalorder %v732, 128
      %vm893 = vcmp.eq.s32.totalorder %v733, 128
      %vm894 = vcmp.eq.s32.totalorder %v734, 128
      %vm895 = vcmp.eq.s32.totalorder %v735, 128
      %vm896 = vcmp.eq.s32.totalorder %v736, 128
      %vm897 = vcmp.eq.s32.totalorder %v737, 128
      %vm898 = vcmp.eq.s32.totalorder %v738, 128
      %vm899 = vcmp.eq.s32.totalorder %v739, 128
      %vm900 = vcmp.eq.s32.totalorder %v740, 128
      %vm901 = vcmp.eq.s32.totalorder %v741, 128
      %vm902 = vcmp.eq.s32.totalorder %v742, 128
      %vm903 = vcmp.eq.s32.totalorder %v743, 128
      %vm904 = vcmp.eq.s32.totalorder %v744, 128
      %vm905 = vcmp.eq.s32.totalorder %v745, 128
      %vm906 = vcmp.eq.s32.totalorder %v746, 128
      %vm907 = vcmp.eq.s32.totalorder %v747, 128
      %vm908 = vcmp.eq.s32.totalorder %v748, 128
      %vm909 = vcmp.eq.s32.totalorder %v749, 128
      %vm910 = vcmp.eq.s32.totalorder %v750, 128
      %vm911 = vcmp.eq.s32.totalorder %v751, 128
      %vm912 = vcmp.eq.s32.totalorder %v752, 128
      %vm913 = vcmp.eq.s32.totalorder %v753, 128
      %vm914 = vcmp.eq.s32.totalorder %v754, 128
      %vm915 = vcmp.eq.s32.totalorder %v755, 128
      %vm916 = vcmp.eq.s32.totalorder %v756, 128
      %vm917 = vcmp.eq.s32.totalorder %v757, 128
      %vm918 = vcmp.eq.s32.totalorder %v758, 128
      %vm919 = vcmp.eq.s32.totalorder %v759, 128
      %vm920 = vcmp.eq.s32.totalorder %v760, 128
      %vm921 = vcmp.eq.s32.totalorder %v761, 128
      %vm922 = vcmp.eq.s32.totalorder %v762, 128
      %vm923 = vcmp.eq.s32.totalorder %v763, 128
      %924 = vset.pattern.permute.xlu0 5
      %925 = vperm.xlu0 %924, %v108
      %v926 = vpop.permute.xlu0 %925
      %928 = vset.pattern.permute.xlu0 5
      %929 = vperm.xlu0 %928, %v109
      %v930 = vpop.permute.xlu0 %929
      %932 = vset.pattern.permute.xlu0 5
      %933 = vperm.xlu0 %932, %v110
      %v934 = vpop.permute.xlu0 %933
      %936 = vset.pattern.permute.xlu0 5
      %937 = vperm.xlu0 %936, %v111
      %v938 = vpop.permute.xlu0 %937
      %940 = vset.pattern.permute.xlu0 5
      %941 = vperm.xlu0 %940, %v112
      %v942 = vpop.permute.xlu0 %941
      %944 = vset.pattern.permute.xlu0 5
      %945 = vperm.xlu0 %944, %v113
      %v946 = vpop.permute.xlu0 %945
      %948 = vset.pattern.permute.xlu0 5
      %949 = vperm.xlu0 %948, %v114
      %v950 = vpop.permute.xlu0 %949
      %952 = vset.pattern.permute.xlu0 5
      %953 = vperm.xlu0 %952, %v115
      %v954 = vpop.permute.xlu0 %953
      %956 = vset.pattern.permute.xlu0 5
      %957 = vperm.xlu0 %956, %v116
      %v958 = vpop.permute.xlu0 %957
      %960 = vset.pattern.permute.xlu0 5
      %961 = vperm.xlu0 %960, %v117
      %v962 = vpop.permute.xlu0 %961
      %964 = vset.pattern.permute.xlu0 5
      %965 = vperm.xlu0 %964, %v118
      %v966 = vpop.permute.xlu0 %965
      %968 = vset.pattern.permute.xlu0 5
      %969 = vperm.xlu0 %968, %v119
      %v970 = vpop.permute.xlu0 %969
      %972 = vset.pattern.permute.xlu0 5
      %973 = vperm.xlu0 %972, %v120
      %v974 = vpop.permute.xlu0 %973
      %976 = vset.pattern.permute.xlu0 5
      %977 = vperm.xlu0 %976, %v121
      %v978 = vpop.permute.xlu0 %977
      %980 = vset.pattern.permute.xlu0 5
      %981 = vperm.xlu0 %980, %v122
      %v982 = vpop.permute.xlu0 %981
      %984 = vset.pattern.permute.xlu0 5
      %985 = vperm.xlu0 %984, %v123
      %v986 = vpop.permute.xlu0 %985
      %v988 = vsel %vm892, %v926, %v860
      %v989 = vsel %vm893, %v926, %v861
      %v990 = vsel %vm894, %v930, %v862
      %v991 = vsel %vm895, %v930, %v863
      %v992 = vsel %vm896, %v934, %v864
      %v993 = vsel %vm897, %v934, %v865
      %v994 = vsel %vm898, %v938, %v866
      %v995 = vsel %vm899, %v938, %v867
      %v996 = vsel %vm900, %v942, %v868
      %v997 = vsel %vm901, %v942, %v869
      %v998 = vsel %vm902, %v946, %v870
      %v999 = vsel %vm903, %v946, %v871
      %v1000 = vsel %vm904, %v950, %v872
      %v1001 = vsel %vm905, %v950, %v873
      %v1002 = vsel %vm906, %v954, %v874
      %v1003 = vsel %vm907, %v954, %v875
      %v1004 = vsel %vm908, %v958, %v876
      %v1005 = vsel %vm909, %v958, %v877
      %v1006 = vsel %vm910, %v962, %v878
      %v1007 = vsel %vm911, %v962, %v879
      %v1008 = vsel %vm912, %v966, %v880
      %v1009 = vsel %vm913, %v966, %v881
      %v1010 = vsel %vm914, %v970, %v882
      %v1011 = vsel %vm915, %v970, %v883
      %v1012 = vsel %vm916, %v974, %v884
      %v1013 = vsel %vm917, %v974, %v885
      %v1014 = vsel %vm918, %v978, %v886
      %v1015 = vsel %vm919, %v978, %v887
      %v1016 = vsel %vm920, %v982, %v888
      %v1017 = vsel %vm921, %v982, %v889
      %v1018 = vsel %vm922, %v986, %v890
      %v1019 = vsel %vm923, %v986, %v891
      %vm1020 = vcmp.eq.s32.totalorder %v732, 256
      %vm1021 = vcmp.eq.s32.totalorder %v733, 256
      %vm1022 = vcmp.eq.s32.totalorder %v734, 256
      %vm1023 = vcmp.eq.s32.totalorder %v735, 256
      %vm1024 = vcmp.eq.s32.totalorder %v736, 256
      %vm1025 = vcmp.eq.s32.totalorder %v737, 256
      %vm1026 = vcmp.eq.s32.totalorder %v738, 256
      %vm1027 = vcmp.eq.s32.totalorder %v739, 256
      %vm1028 = vcmp.eq.s32.totalorder %v740, 256
      %vm1029 = vcmp.eq.s32.totalorder %v741, 256
      %vm1030 = vcmp.eq.s32.totalorder %v742, 256
      %vm1031 = vcmp.eq.s32.totalorder %v743, 256
      %vm1032 = vcmp.eq.s32.totalorder %v744, 256
      %vm1033 = vcmp.eq.s32.totalorder %v745, 256
      %vm1034 = vcmp.eq.s32.totalorder %v746, 256
      %vm1035 = vcmp.eq.s32.totalorder %v747, 256
      %vm1036 = vcmp.eq.s32.totalorder %v748, 256
      %vm1037 = vcmp.eq.s32.totalorder %v749, 256
      %vm1038 = vcmp.eq.s32.totalorder %v750, 256
      %vm1039 = vcmp.eq.s32.totalorder %v751, 256
      %vm1040 = vcmp.eq.s32.totalorder %v752, 256
      %vm1041 = vcmp.eq.s32.totalorder %v753, 256
      %vm1042 = vcmp.eq.s32.totalorder %v754, 256
      %vm1043 = vcmp.eq.s32.totalorder %v755, 256
      %vm1044 = vcmp.eq.s32.totalorder %v756, 256
      %vm1045 = vcmp.eq.s32.totalorder %v757, 256
      %vm1046 = vcmp.eq.s32.totalorder %v758, 256
      %vm1047 = vcmp.eq.s32.totalorder %v759, 256
      %vm1048 = vcmp.eq.s32.totalorder %v760, 256
      %vm1049 = vcmp.eq.s32.totalorder %v761, 256
      %vm1050 = vcmp.eq.s32.totalorder %v762, 256
      %vm1051 = vcmp.eq.s32.totalorder %v763, 256
      %1052 = vset.pattern.permute.xlu0 6
      %1053 = vperm.xlu0 %1052, %v108
      %v1054 = vpop.permute.xlu0 %1053
      %1056 = vset.pattern.permute.xlu0 6
      %1057 = vperm.xlu0 %1056, %v109
      %v1058 = vpop.permute.xlu0 %1057
      %1060 = vset.pattern.permute.xlu0 6
      %1061 = vperm.xlu0 %1060, %v110
      %v1062 = vpop.permute.xlu0 %1061
      %1064 = vset.pattern.permute.xlu0 6
      %1065 = vperm.xlu0 %1064, %v111
      %v1066 = vpop.permute.xlu0 %1065
      %1068 = vset.pattern.permute.xlu0 6
      %1069 = vperm.xlu0 %1068, %v112
      %v1070 = vpop.permute.xlu0 %1069
      %1072 = vset.pattern.permute.xlu0 6
      %1073 = vperm.xlu0 %1072, %v113
      %v1074 = vpop.permute.xlu0 %1073
      %1076 = vset.pattern.permute.xlu0 6
      %1077 = vperm.xlu0 %1076, %v114
      %v1078 = vpop.permute.xlu0 %1077
      %1080 = vset.pattern.permute.xlu0 6
      %1081 = vperm.xlu0 %1080, %v115
      %v1082 = vpop.permute.xlu0 %1081
      %1084 = vset.pattern.permute.xlu0 6
      %1085 = vperm.xlu0 %1084, %v116
      %v1086 = vpop.permute.xlu0 %1085
      %1088 = vset.pattern.permute.xlu0 6
      %1089 = vperm.xlu0 %1088, %v117
      %v1090 = vpop.permute.xlu0 %1089
      %1092 = vset.pattern.permute.xlu0 6
      %1093 = vperm.xlu0 %1092, %v118
      %v1094 = vpop.permute.xlu0 %1093
      %1096 = vset.pattern.permute.xlu0 6
      %1097 = vperm.xlu0 %1096, %v119
      %v1098 = vpop.permute.xlu0 %1097
      %1100 = vset.pattern.permute.xlu0 6
      %1101 = vperm.xlu0 %1100, %v120
      %v1102 = vpop.permute.xlu0 %1101
      %1104 = vset.pattern.permute.xlu0 6
      %1105 = vperm.xlu0 %1104, %v121
      %v1106 = vpop.permute.xlu0 %1105
      %1108 = vset.pattern.permute.xlu0 6
      %1109 = vperm.xlu0 %1108, %v122
      %v1110 = vpop.permute.xlu0 %1109
      %1112 = vset.pattern.permute.xlu0 6
      %1113 = vperm.xlu0 %1112, %v123
      %v1114 = vpop.permute.xlu0 %1113
      %v1116 = vsel %vm1020, %v1054, %v988
      %v1117 = vsel %vm1021, %v1054, %v989
      %v1118 = vsel %vm1022, %v1058, %v990
      %v1119 = vsel %vm1023, %v1058, %v991
      %v1120 = vsel %vm1024, %v1062, %v992
      %v1121 = vsel %vm1025, %v1062, %v993
      %v1122 = vsel %vm1026, %v1066, %v994
      %v1123 = vsel %vm1027, %v1066, %v995
      %v1124 = vsel %vm1028, %v1070, %v996
      %v1125 = vsel %vm1029, %v1070, %v997
      %v1126 = vsel %vm1030, %v1074, %v998
      %v1127 = vsel %vm1031, %v1074, %v999
      %v1128 = vsel %vm1032, %v1078, %v1000
      %v1129 = vsel %vm1033, %v1078, %v1001
      %v1130 = vsel %vm1034, %v1082, %v1002
      %v1131 = vsel %vm1035, %v1082, %v1003
      %v1132 = vsel %vm1036, %v1086, %v1004
      %v1133 = vsel %vm1037, %v1086, %v1005
      %v1134 = vsel %vm1038, %v1090, %v1006
      %v1135 = vsel %vm1039, %v1090, %v1007
      %v1136 = vsel %vm1040, %v1094, %v1008
      %v1137 = vsel %vm1041, %v1094, %v1009
      %v1138 = vsel %vm1042, %v1098, %v1010
      %v1139 = vsel %vm1043, %v1098, %v1011
      %v1140 = vsel %vm1044, %v1102, %v1012
      %v1141 = vsel %vm1045, %v1102, %v1013
      %v1142 = vsel %vm1046, %v1106, %v1014
      %v1143 = vsel %vm1047, %v1106, %v1015
      %v1144 = vsel %vm1048, %v1110, %v1016
      %v1145 = vsel %vm1049, %v1110, %v1017
      %v1146 = vsel %vm1050, %v1114, %v1018
      %v1147 = vsel %vm1051, %v1114, %v1019
      %vm1148 = vcmp.eq.s32.totalorder %v732, 384
      %vm1149 = vcmp.eq.s32.totalorder %v733, 384
      %vm1150 = vcmp.eq.s32.totalorder %v734, 384
      %vm1151 = vcmp.eq.s32.totalorder %v735, 384
      %vm1152 = vcmp.eq.s32.totalorder %v736, 384
      %vm1153 = vcmp.eq.s32.totalorder %v737, 384
      %vm1154 = vcmp.eq.s32.totalorder %v738, 384
      %vm1155 = vcmp.eq.s32.totalorder %v739, 384
      %vm1156 = vcmp.eq.s32.totalorder %v740, 384
      %vm1157 = vcmp.eq.s32.totalorder %v741, 384
      %vm1158 = vcmp.eq.s32.totalorder %v742, 384
      %vm1159 = vcmp.eq.s32.totalorder %v743, 384
      %vm1160 = vcmp.eq.s32.totalorder %v744, 384
      %vm1161 = vcmp.eq.s32.totalorder %v745, 384
      %vm1162 = vcmp.eq.s32.totalorder %v746, 384
      %vm1163 = vcmp.eq.s32.totalorder %v747, 384
      %vm1164 = vcmp.eq.s32.totalorder %v748, 384
      %vm1165 = vcmp.eq.s32.totalorder %v749, 384
      %vm1166 = vcmp.eq.s32.totalorder %v750, 384
      %vm1167 = vcmp.eq.s32.totalorder %v751, 384
      %vm1168 = vcmp.eq.s32.totalorder %v752, 384
      %vm1169 = vcmp.eq.s32.totalorder %v753, 384
      %vm1170 = vcmp.eq.s32.totalorder %v754, 384
      %vm1171 = vcmp.eq.s32.totalorder %v755, 384
      %vm1172 = vcmp.eq.s32.totalorder %v756, 384
      %vm1173 = vcmp.eq.s32.totalorder %v757, 384
      %vm1174 = vcmp.eq.s32.totalorder %v758, 384
      %vm1175 = vcmp.eq.s32.totalorder %v759, 384
      %vm1176 = vcmp.eq.s32.totalorder %v760, 384
      %vm1177 = vcmp.eq.s32.totalorder %v761, 384
      %vm1178 = vcmp.eq.s32.totalorder %v762, 384
      %vm1179 = vcmp.eq.s32.totalorder %v763, 384
      %1180 = vset.pattern.permute.xlu0 7
      %1181 = vperm.xlu0 %1180, %v108
      %v1182 = vpop.permute.xlu0 %1181
      %1184 = vset.pattern.permute.xlu0 7
      %1185 = vperm.xlu0 %1184, %v109
      %v1186 = vpop.permute.xlu0 %1185
      %1188 = vset.pattern.permute.xlu0 7
      %1189 = vperm.xlu0 %1188, %v110
      %v1190 = vpop.permute.xlu0 %1189
      %1192 = vset.pattern.permute.xlu0 7
      %1193 = vperm.xlu0 %1192, %v111
      %v1194 = vpop.permute.xlu0 %1193
      %1196 = vset.pattern.permute.xlu0 7
      %1197 = vperm.xlu0 %1196, %v112
      %v1198 = vpop.permute.xlu0 %1197
      %1200 = vset.pattern.permute.xlu0 7
      %1201 = vperm.xlu0 %1200, %v113
      %v1202 = vpop.permute.xlu0 %1201
      %1204 = vset.pattern.permute.xlu0 7
      %1205 = vperm.xlu0 %1204, %v114
      %v1206 = vpop.permute.xlu0 %1205
      %1208 = vset.pattern.permute.xlu0 7
      %1209 = vperm.xlu0 %1208, %v115
      %v1210 = vpop.permute.xlu0 %1209
      %1212 = vset.pattern.permute.xlu0 7
      %1213 = vperm.xlu0 %1212, %v116
      %v1214 = vpop.permute.xlu0 %1213
      %1216 = vset.pattern.permute.xlu0 7
      %1217 = vperm.xlu0 %1216, %v117
      %v1218 = vpop.permute.xlu0 %1217
      %1220 = vset.pattern.permute.xlu0 7
      %1221 = vperm.xlu0 %1220, %v118
      %v1222 = vpop.permute.xlu0 %1221
      %1224 = vset.pattern.permute.xlu0 7
      %1225 = vperm.xlu0 %1224, %v119
      %v1226 = vpop.permute.xlu0 %1225
      %1228 = vset.pattern.permute.xlu0 7
      %1229 = vperm.xlu0 %1228, %v120
      %v1230 = vpop.permute.xlu0 %1229
      %1232 = vset.pattern.permute.xlu0 7
      %1233 = vperm.xlu0 %1232, %v121
      %v1234 = vpop.permute.xlu0 %1233
      %1236 = vset.pattern.permute.xlu0 7
      %1237 = vperm.xlu0 %1236, %v122
      %v1238 = vpop.permute.xlu0 %1237
      %1240 = vset.pattern.permute.xlu0 7
      %1241 = vperm.xlu0 %1240, %v123
      %v1242 = vpop.permute.xlu0 %1241
      %v1244 = vsel %vm1148, %v1182, %v1116
      %v1245 = vsel %vm1149, %v1182, %v1117
      %v1246 = vsel %vm1150, %v1186, %v1118
      %v1247 = vsel %vm1151, %v1186, %v1119
      %v1248 = vsel %vm1152, %v1190, %v1120
      %v1249 = vsel %vm1153, %v1190, %v1121
      %v1250 = vsel %vm1154, %v1194, %v1122
      %v1251 = vsel %vm1155, %v1194, %v1123
      %v1252 = vsel %vm1156, %v1198, %v1124
      %v1253 = vsel %vm1157, %v1198, %v1125
      %v1254 = vsel %vm1158, %v1202, %v1126
      %v1255 = vsel %vm1159, %v1202, %v1127
      %v1256 = vsel %vm1160, %v1206, %v1128
      %v1257 = vsel %vm1161, %v1206, %v1129
      %v1258 = vsel %vm1162, %v1210, %v1130
      %v1259 = vsel %vm1163, %v1210, %v1131
      %v1260 = vsel %vm1164, %v1214, %v1132
      %v1261 = vsel %vm1165, %v1214, %v1133
      %v1262 = vsel %vm1166, %v1218, %v1134
      %v1263 = vsel %vm1167, %v1218, %v1135
      %v1264 = vsel %vm1168, %v1222, %v1136
      %v1265 = vsel %vm1169, %v1222, %v1137
      %v1266 = vsel %vm1170, %v1226, %v1138
      %v1267 = vsel %vm1171, %v1226, %v1139
      %v1268 = vsel %vm1172, %v1230, %v1140
      %v1269 = vsel %vm1173, %v1230, %v1141
      %v1270 = vsel %vm1174, %v1234, %v1142
      %v1271 = vsel %vm1175, %v1234, %v1143
      %v1272 = vsel %vm1176, %v1238, %v1144
      %v1273 = vsel %vm1177, %v1238, %v1145
      %v1274 = vsel %vm1178, %v1242, %v1146
      %v1275 = vsel %vm1179, %v1242, %v1147
      %v1276 = vadd.f32 %v692, %v1244
      %v1277 = vadd.f32 %v693, %v1245
      %v1278 = vadd.f32 %v694, %v1246
      %v1279 = vadd.f32 %v695, %v1247
      %v1280 = vadd.f32 %v696, %v1248
      %v1281 = vadd.f32 %v697, %v1249
      %v1282 = vadd.f32 %v698, %v1250
      %v1283 = vadd.f32 %v699, %v1251
      %v1284 = vadd.f32 %v700, %v1252
      %v1285 = vadd.f32 %v701, %v1253
      %v1286 = vadd.f32 %v702, %v1254
      %v1287 = vadd.f32 %v703, %v1255
      %v1288 = vadd.f32 %v704, %v1256
      %v1289 = vadd.f32 %v705, %v1257
      %v1290 = vadd.f32 %v706, %v1258
      %v1291 = vadd.f32 %v707, %v1259
      %v1292 = vadd.f32 %v708, %v1260
      %v1293 = vadd.f32 %v709, %v1261
      %v1294 = vadd.f32 %v710, %v1262
      %v1295 = vadd.f32 %v711, %v1263
      %v1296 = vadd.f32 %v712, %v1264
      %v1297 = vadd.f32 %v713, %v1265
      %v1298 = vadd.f32 %v714, %v1266
      %v1299 = vadd.f32 %v715, %v1267
      %v1300 = vadd.f32 %v716, %v1268
      %v1301 = vadd.f32 %v717, %v1269
      %v1302 = vadd.f32 %v718, %v1270
      %v1303 = vadd.f32 %v719, %v1271
      %v1304 = vadd.f32 %v720, %v1272
      %v1305 = vadd.f32 %v721, %v1273
      %v1306 = vadd.f32 %v722, %v1274
      %v1307 = vadd.f32 %v723, %v1275
      %v1308 = vlaneseq
      %v1309 = vshrl.u32 %v1308, 7
      %v1310 = vsub.s32 2, %v1309
      %v1311 = vrot.slane %v103, %v1310
      %v1312 = vlaneseq
      %v1313 = vshrl.u32 %v1312, 7
      %v1314 = vsub.s32 2, %v1313
      %v1315 = vrot.slane %v105, %v1314
      %v1316 = vsub.s32 %v1311, %v28
      %v1317 = vsub.s32 %v1315, %v28
      %v1318 = vsub.s32 %v1311, %v29
      %v1319 = vsub.s32 %v1315, %v29
      %v1320 = vsub.s32 %v1311, %v30
      %v1321 = vsub.s32 %v1315, %v30
      %v1322 = vsub.s32 %v1311, %v31
      %v1323 = vsub.s32 %v1315, %v31
      %v1324 = vsub.s32 %v1311, %v32
      %v1325 = vsub.s32 %v1315, %v32
      %v1326 = vsub.s32 %v1311, %v33
      %v1327 = vsub.s32 %v1315, %v33
      %v1328 = vsub.s32 %v1311, %v34
      %v1329 = vsub.s32 %v1315, %v34
      %v1330 = vsub.s32 %v1311, %v35
      %v1331 = vsub.s32 %v1315, %v35
      %v1332 = vsub.s32 %v1311, %v36
      %v1333 = vsub.s32 %v1315, %v36
      %v1334 = vsub.s32 %v1311, %v37
      %v1335 = vsub.s32 %v1315, %v37
      %v1336 = vsub.s32 %v1311, %v38
      %v1337 = vsub.s32 %v1315, %v38
      %v1338 = vsub.s32 %v1311, %v39
      %v1339 = vsub.s32 %v1315, %v39
      %v1340 = vsub.s32 %v1311, %v40
      %v1341 = vsub.s32 %v1315, %v40
      %v1342 = vsub.s32 %v1311, %v41
      %v1343 = vsub.s32 %v1315, %v41
      %v1344 = vsub.s32 %v1311, %v42
      %v1345 = vsub.s32 %v1315, %v42
      %v1346 = vsub.s32 %v1311, %v43
      %v1347 = vsub.s32 %v1315, %v43
      %vm1348 = vcmp.eq.s32.totalorder %v1316, 0
      %vm1349 = vcmp.eq.s32.totalorder %v1317, 0
      %vm1350 = vcmp.eq.s32.totalorder %v1318, 0
      %vm1351 = vcmp.eq.s32.totalorder %v1319, 0
      %vm1352 = vcmp.eq.s32.totalorder %v1320, 0
      %vm1353 = vcmp.eq.s32.totalorder %v1321, 0
      %vm1354 = vcmp.eq.s32.totalorder %v1322, 0
      %vm1355 = vcmp.eq.s32.totalorder %v1323, 0
      %vm1356 = vcmp.eq.s32.totalorder %v1324, 0
      %vm1357 = vcmp.eq.s32.totalorder %v1325, 0
      %vm1358 = vcmp.eq.s32.totalorder %v1326, 0
      %vm1359 = vcmp.eq.s32.totalorder %v1327, 0
      %vm1360 = vcmp.eq.s32.totalorder %v1328, 0
      %vm1361 = vcmp.eq.s32.totalorder %v1329, 0
      %vm1362 = vcmp.eq.s32.totalorder %v1330, 0
      %vm1363 = vcmp.eq.s32.totalorder %v1331, 0
      %vm1364 = vcmp.eq.s32.totalorder %v1332, 0
      %vm1365 = vcmp.eq.s32.totalorder %v1333, 0
      %vm1366 = vcmp.eq.s32.totalorder %v1334, 0
      %vm1367 = vcmp.eq.s32.totalorder %v1335, 0
      %vm1368 = vcmp.eq.s32.totalorder %v1336, 0
      %vm1369 = vcmp.eq.s32.totalorder %v1337, 0
      %vm1370 = vcmp.eq.s32.totalorder %v1338, 0
      %vm1371 = vcmp.eq.s32.totalorder %v1339, 0
      %vm1372 = vcmp.eq.s32.totalorder %v1340, 0
      %vm1373 = vcmp.eq.s32.totalorder %v1341, 0
      %vm1374 = vcmp.eq.s32.totalorder %v1342, 0
      %vm1375 = vcmp.eq.s32.totalorder %v1343, 0
      %vm1376 = vcmp.eq.s32.totalorder %v1344, 0
      %vm1377 = vcmp.eq.s32.totalorder %v1345, 0
      %vm1378 = vcmp.eq.s32.totalorder %v1346, 0
      %vm1379 = vcmp.eq.s32.totalorder %v1347, 0
      %1380 = vset.pattern.permute.xlu0 8
      %1381 = vperm.xlu0 %1380, %v108
      %v1382 = vpop.permute.xlu0 %1381
      %1384 = vset.pattern.permute.xlu0 8
      %1385 = vperm.xlu0 %1384, %v109
      %v1386 = vpop.permute.xlu0 %1385
      %1388 = vset.pattern.permute.xlu0 8
      %1389 = vperm.xlu0 %1388, %v110
      %v1390 = vpop.permute.xlu0 %1389
      %1392 = vset.pattern.permute.xlu0 8
      %1393 = vperm.xlu0 %1392, %v111
      %v1394 = vpop.permute.xlu0 %1393
      %1396 = vset.pattern.permute.xlu0 8
      %1397 = vperm.xlu0 %1396, %v112
      %v1398 = vpop.permute.xlu0 %1397
      %1400 = vset.pattern.permute.xlu0 8
      %1401 = vperm.xlu0 %1400, %v113
      %v1402 = vpop.permute.xlu0 %1401
      %1404 = vset.pattern.permute.xlu0 8
      %1405 = vperm.xlu0 %1404, %v114
      %v1406 = vpop.permute.xlu0 %1405
      %1408 = vset.pattern.permute.xlu0 8
      %1409 = vperm.xlu0 %1408, %v115
      %v1410 = vpop.permute.xlu0 %1409
      %1412 = vset.pattern.permute.xlu0 8
      %1413 = vperm.xlu0 %1412, %v116
      %v1414 = vpop.permute.xlu0 %1413
      %1416 = vset.pattern.permute.xlu0 8
      %1417 = vperm.xlu0 %1416, %v117
      %v1418 = vpop.permute.xlu0 %1417
      %1420 = vset.pattern.permute.xlu0 8
      %1421 = vperm.xlu0 %1420, %v118
      %v1422 = vpop.permute.xlu0 %1421
      %1424 = vset.pattern.permute.xlu0 8
      %1425 = vperm.xlu0 %1424, %v119
      %v1426 = vpop.permute.xlu0 %1425
      %1428 = vset.pattern.permute.xlu0 8
      %1429 = vperm.xlu0 %1428, %v120
      %v1430 = vpop.permute.xlu0 %1429
      %1432 = vset.pattern.permute.xlu0 8
      %1433 = vperm.xlu0 %1432, %v121
      %v1434 = vpop.permute.xlu0 %1433
      %1436 = vset.pattern.permute.xlu0 8
      %1437 = vperm.xlu0 %1436, %v122
      %v1438 = vpop.permute.xlu0 %1437
      %1440 = vset.pattern.permute.xlu0 8
      %1441 = vperm.xlu0 %1440, %v123
      %v1442 = vpop.permute.xlu0 %1441
      %v1444 = vsel %vm1348, %v1382, 0.0
      %v1445 = vsel %vm1349, %v1382, 0.0
      %v1446 = vsel %vm1350, %v1386, 0.0
      %v1447 = vsel %vm1351, %v1386, 0.0
      %v1448 = vsel %vm1352, %v1390, 0.0
      %v1449 = vsel %vm1353, %v1390, 0.0
      %v1450 = vsel %vm1354, %v1394, 0.0
      %v1451 = vsel %vm1355, %v1394, 0.0
      %v1452 = vsel %vm1356, %v1398, 0.0
      %v1453 = vsel %vm1357, %v1398, 0.0
      %v1454 = vsel %vm1358, %v1402, 0.0
      %v1455 = vsel %vm1359, %v1402, 0.0
      %v1456 = vsel %vm1360, %v1406, 0.0
      %v1457 = vsel %vm1361, %v1406, 0.0
      %v1458 = vsel %vm1362, %v1410, 0.0
      %v1459 = vsel %vm1363, %v1410, 0.0
      %v1460 = vsel %vm1364, %v1414, 0.0
      %v1461 = vsel %vm1365, %v1414, 0.0
      %v1462 = vsel %vm1366, %v1418, 0.0
      %v1463 = vsel %vm1367, %v1418, 0.0
      %v1464 = vsel %vm1368, %v1422, 0.0
      %v1465 = vsel %vm1369, %v1422, 0.0
      %v1466 = vsel %vm1370, %v1426, 0.0
      %v1467 = vsel %vm1371, %v1426, 0.0
      %v1468 = vsel %vm1372, %v1430, 0.0
      %v1469 = vsel %vm1373, %v1430, 0.0
      %v1470 = vsel %vm1374, %v1434, 0.0
      %v1471 = vsel %vm1375, %v1434, 0.0
      %v1472 = vsel %vm1376, %v1438, 0.0
      %v1473 = vsel %vm1377, %v1438, 0.0
      %v1474 = vsel %vm1378, %v1442, 0.0
      %v1475 = vsel %vm1379, %v1442, 0.0
      %vm1476 = vcmp.eq.s32.totalorder %v1316, 128
      %vm1477 = vcmp.eq.s32.totalorder %v1317, 128
      %vm1478 = vcmp.eq.s32.totalorder %v1318, 128
      %vm1479 = vcmp.eq.s32.totalorder %v1319, 128
      %vm1480 = vcmp.eq.s32.totalorder %v1320, 128
      %vm1481 = vcmp.eq.s32.totalorder %v1321, 128
      %vm1482 = vcmp.eq.s32.totalorder %v1322, 128
      %vm1483 = vcmp.eq.s32.totalorder %v1323, 128
      %vm1484 = vcmp.eq.s32.totalorder %v1324, 128
      %vm1485 = vcmp.eq.s32.totalorder %v1325, 128
      %vm1486 = vcmp.eq.s32.totalorder %v1326, 128
      %vm1487 = vcmp.eq.s32.totalorder %v1327, 128
      %vm1488 = vcmp.eq.s32.totalorder %v1328, 128
      %vm1489 = vcmp.eq.s32.totalorder %v1329, 128
      %vm1490 = vcmp.eq.s32.totalorder %v1330, 128
      %vm1491 = vcmp.eq.s32.totalorder %v1331, 128
      %vm1492 = vcmp.eq.s32.totalorder %v1332, 128
      %vm1493 = vcmp.eq.s32.totalorder %v1333, 128
      %vm1494 = vcmp.eq.s32.totalorder %v1334, 128
      %vm1495 = vcmp.eq.s32.totalorder %v1335, 128
      %vm1496 = vcmp.eq.s32.totalorder %v1336, 128
      %vm1497 = vcmp.eq.s32.totalorder %v1337, 128
      %vm1498 = vcmp.eq.s32.totalorder %v1338, 128
      %vm1499 = vcmp.eq.s32.totalorder %v1339, 128
      %vm1500 = vcmp.eq.s32.totalorder %v1340, 128
      %vm1501 = vcmp.eq.s32.totalorder %v1341, 128
      %vm1502 = vcmp.eq.s32.totalorder %v1342, 128
      %vm1503 = vcmp.eq.s32.totalorder %v1343, 128
      %vm1504 = vcmp.eq.s32.totalorder %v1344, 128
      %vm1505 = vcmp.eq.s32.totalorder %v1345, 128
      %vm1506 = vcmp.eq.s32.totalorder %v1346, 128
      %vm1507 = vcmp.eq.s32.totalorder %v1347, 128
      %1508 = vset.pattern.permute.xlu0 9
      %1509 = vperm.xlu0 %1508, %v108
      %v1510 = vpop.permute.xlu0 %1509
      %1512 = vset.pattern.permute.xlu0 9
      %1513 = vperm.xlu0 %1512, %v109
      %v1514 = vpop.permute.xlu0 %1513
      %1516 = vset.pattern.permute.xlu0 9
      %1517 = vperm.xlu0 %1516, %v110
      %v1518 = vpop.permute.xlu0 %1517
      %1520 = vset.pattern.permute.xlu0 9
      %1521 = vperm.xlu0 %1520, %v111
      %v1522 = vpop.permute.xlu0 %1521
      %1524 = vset.pattern.permute.xlu0 9
      %1525 = vperm.xlu0 %1524, %v112
      %v1526 = vpop.permute.xlu0 %1525
      %1528 = vset.pattern.permute.xlu0 9
      %1529 = vperm.xlu0 %1528, %v113
      %v1530 = vpop.permute.xlu0 %1529
      %1532 = vset.pattern.permute.xlu0 9
      %1533 = vperm.xlu0 %1532, %v114
      %v1534 = vpop.permute.xlu0 %1533
      %1536 = vset.pattern.permute.xlu0 9
      %1537 = vperm.xlu0 %1536, %v115
      %v1538 = vpop.permute.xlu0 %1537
      %1540 = vset.pattern.permute.xlu0 9
      %1541 = vperm.xlu0 %1540, %v116
      %v1542 = vpop.permute.xlu0 %1541
      %1544 = vset.pattern.permute.xlu0 9
      %1545 = vperm.xlu0 %1544, %v117
      %v1546 = vpop.permute.xlu0 %1545
      %1548 = vset.pattern.permute.xlu0 9
      %1549 = vperm.xlu0 %1548, %v118
      %v1550 = vpop.permute.xlu0 %1549
      %1552 = vset.pattern.permute.xlu0 9
      %1553 = vperm.xlu0 %1552, %v119
      %v1554 = vpop.permute.xlu0 %1553
      %1556 = vset.pattern.permute.xlu0 9
      %1557 = vperm.xlu0 %1556, %v120
      %v1558 = vpop.permute.xlu0 %1557
      %1560 = vset.pattern.permute.xlu0 9
      %1561 = vperm.xlu0 %1560, %v121
      %v1562 = vpop.permute.xlu0 %1561
      %1564 = vset.pattern.permute.xlu0 9
      %1565 = vperm.xlu0 %1564, %v122
      %v1566 = vpop.permute.xlu0 %1565
      %1568 = vset.pattern.permute.xlu0 9
      %1569 = vperm.xlu0 %1568, %v123
      %v1570 = vpop.permute.xlu0 %1569
      %v1572 = vsel %vm1476, %v1510, %v1444
      %v1573 = vsel %vm1477, %v1510, %v1445
      %v1574 = vsel %vm1478, %v1514, %v1446
      %v1575 = vsel %vm1479, %v1514, %v1447
      %v1576 = vsel %vm1480, %v1518, %v1448
      %v1577 = vsel %vm1481, %v1518, %v1449
      %v1578 = vsel %vm1482, %v1522, %v1450
      %v1579 = vsel %vm1483, %v1522, %v1451
      %v1580 = vsel %vm1484, %v1526, %v1452
      %v1581 = vsel %vm1485, %v1526, %v1453
      %v1582 = vsel %vm1486, %v1530, %v1454
      %v1583 = vsel %vm1487, %v1530, %v1455
      %v1584 = vsel %vm1488, %v1534, %v1456
      %v1585 = vsel %vm1489, %v1534, %v1457
      %v1586 = vsel %vm1490, %v1538, %v1458
      %v1587 = vsel %vm1491, %v1538, %v1459
      %v1588 = vsel %vm1492, %v1542, %v1460
      %v1589 = vsel %vm1493, %v1542, %v1461
      %v1590 = vsel %vm1494, %v1546, %v1462
      %v1591 = vsel %vm1495, %v1546, %v1463
      %v1592 = vsel %vm1496, %v1550, %v1464
      %v1593 = vsel %vm1497, %v1550, %v1465
      %v1594 = vsel %vm1498, %v1554, %v1466
      %v1595 = vsel %vm1499, %v1554, %v1467
      %v1596 = vsel %vm1500, %v1558, %v1468
      %v1597 = vsel %vm1501, %v1558, %v1469
      %v1598 = vsel %vm1502, %v1562, %v1470
      %v1599 = vsel %vm1503, %v1562, %v1471
      %v1600 = vsel %vm1504, %v1566, %v1472
      %v1601 = vsel %vm1505, %v1566, %v1473
      %v1602 = vsel %vm1506, %v1570, %v1474
      %v1603 = vsel %vm1507, %v1570, %v1475
      %vm1604 = vcmp.eq.s32.totalorder %v1316, 256
      %vm1605 = vcmp.eq.s32.totalorder %v1317, 256
      %vm1606 = vcmp.eq.s32.totalorder %v1318, 256
      %vm1607 = vcmp.eq.s32.totalorder %v1319, 256
      %vm1608 = vcmp.eq.s32.totalorder %v1320, 256
      %vm1609 = vcmp.eq.s32.totalorder %v1321, 256
      %vm1610 = vcmp.eq.s32.totalorder %v1322, 256
      %vm1611 = vcmp.eq.s32.totalorder %v1323, 256
      %vm1612 = vcmp.eq.s32.totalorder %v1324, 256
      %vm1613 = vcmp.eq.s32.totalorder %v1325, 256
      %vm1614 = vcmp.eq.s32.totalorder %v1326, 256
      %vm1615 = vcmp.eq.s32.totalorder %v1327, 256
      %vm1616 = vcmp.eq.s32.totalorder %v1328, 256
      %vm1617 = vcmp.eq.s32.totalorder %v1329, 256
      %vm1618 = vcmp.eq.s32.totalorder %v1330, 256
      %vm1619 = vcmp.eq.s32.totalorder %v1331, 256
      %vm1620 = vcmp.eq.s32.totalorder %v1332, 256
      %vm1621 = vcmp.eq.s32.totalorder %v1333, 256
      %vm1622 = vcmp.eq.s32.totalorder %v1334, 256
      %vm1623 = vcmp.eq.s32.totalorder %v1335, 256
      %vm1624 = vcmp.eq.s32.totalorder %v1336, 256
      %vm1625 = vcmp.eq.s32.totalorder %v1337, 256
      %vm1626 = vcmp.eq.s32.totalorder %v1338, 256
      %vm1627 = vcmp.eq.s32.totalorder %v1339, 256
      %vm1628 = vcmp.eq.s32.totalorder %v1340, 256
      %vm1629 = vcmp.eq.s32.totalorder %v1341, 256
      %vm1630 = vcmp.eq.s32.totalorder %v1342, 256
      %vm1631 = vcmp.eq.s32.totalorder %v1343, 256
      %vm1632 = vcmp.eq.s32.totalorder %v1344, 256
      %vm1633 = vcmp.eq.s32.totalorder %v1345, 256
      %vm1634 = vcmp.eq.s32.totalorder %v1346, 256
      %vm1635 = vcmp.eq.s32.totalorder %v1347, 256
      %1636 = vset.pattern.permute.xlu0 10
      %1637 = vperm.xlu0 %1636, %v108
      %v1638 = vpop.permute.xlu0 %1637
      %1640 = vset.pattern.permute.xlu0 10
      %1641 = vperm.xlu0 %1640, %v109
      %v1642 = vpop.permute.xlu0 %1641
      %1644 = vset.pattern.permute.xlu0 10
      %1645 = vperm.xlu0 %1644, %v110
      %v1646 = vpop.permute.xlu0 %1645
      %1648 = vset.pattern.permute.xlu0 10
      %1649 = vperm.xlu0 %1648, %v111
      %v1650 = vpop.permute.xlu0 %1649
      %1652 = vset.pattern.permute.xlu0 10
      %1653 = vperm.xlu0 %1652, %v112
      %v1654 = vpop.permute.xlu0 %1653
      %1656 = vset.pattern.permute.xlu0 10
      %1657 = vperm.xlu0 %1656, %v113
      %v1658 = vpop.permute.xlu0 %1657
      %1660 = vset.pattern.permute.xlu0 10
      %1661 = vperm.xlu0 %1660, %v114
      %v1662 = vpop.permute.xlu0 %1661
      %1664 = vset.pattern.permute.xlu0 10
      %1665 = vperm.xlu0 %1664, %v115
      %v1666 = vpop.permute.xlu0 %1665
      %1668 = vset.pattern.permute.xlu0 10
      %1669 = vperm.xlu0 %1668, %v116
      %v1670 = vpop.permute.xlu0 %1669
      %1672 = vset.pattern.permute.xlu0 10
      %1673 = vperm.xlu0 %1672, %v117
      %v1674 = vpop.permute.xlu0 %1673
      %1676 = vset.pattern.permute.xlu0 10
      %1677 = vperm.xlu0 %1676, %v118
      %v1678 = vpop.permute.xlu0 %1677
      %1680 = vset.pattern.permute.xlu0 10
      %1681 = vperm.xlu0 %1680, %v119
      %v1682 = vpop.permute.xlu0 %1681
      %1684 = vset.pattern.permute.xlu0 10
      %1685 = vperm.xlu0 %1684, %v120
      %v1686 = vpop.permute.xlu0 %1685
      %1688 = vset.pattern.permute.xlu0 10
      %1689 = vperm.xlu0 %1688, %v121
      %v1690 = vpop.permute.xlu0 %1689
      %1692 = vset.pattern.permute.xlu0 10
      %1693 = vperm.xlu0 %1692, %v122
      %v1694 = vpop.permute.xlu0 %1693
      %1696 = vset.pattern.permute.xlu0 10
      %1697 = vperm.xlu0 %1696, %v123
      %v1698 = vpop.permute.xlu0 %1697
      %v1700 = vsel %vm1604, %v1638, %v1572
      %v1701 = vsel %vm1605, %v1638, %v1573
      %v1702 = vsel %vm1606, %v1642, %v1574
      %v1703 = vsel %vm1607, %v1642, %v1575
      %v1704 = vsel %vm1608, %v1646, %v1576
      %v1705 = vsel %vm1609, %v1646, %v1577
      %v1706 = vsel %vm1610, %v1650, %v1578
      %v1707 = vsel %vm1611, %v1650, %v1579
      %v1708 = vsel %vm1612, %v1654, %v1580
      %v1709 = vsel %vm1613, %v1654, %v1581
      %v1710 = vsel %vm1614, %v1658, %v1582
      %v1711 = vsel %vm1615, %v1658, %v1583
      %v1712 = vsel %vm1616, %v1662, %v1584
      %v1713 = vsel %vm1617, %v1662, %v1585
      %v1714 = vsel %vm1618, %v1666, %v1586
      %v1715 = vsel %vm1619, %v1666, %v1587
      %v1716 = vsel %vm1620, %v1670, %v1588
      %v1717 = vsel %vm1621, %v1670, %v1589
      %v1718 = vsel %vm1622, %v1674, %v1590
      %v1719 = vsel %vm1623, %v1674, %v1591
      %v1720 = vsel %vm1624, %v1678, %v1592
      %v1721 = vsel %vm1625, %v1678, %v1593
      %v1722 = vsel %vm1626, %v1682, %v1594
      %v1723 = vsel %vm1627, %v1682, %v1595
      %v1724 = vsel %vm1628, %v1686, %v1596
      %v1725 = vsel %vm1629, %v1686, %v1597
      %v1726 = vsel %vm1630, %v1690, %v1598
      %v1727 = vsel %vm1631, %v1690, %v1599
      %v1728 = vsel %vm1632, %v1694, %v1600
      %v1729 = vsel %vm1633, %v1694, %v1601
      %v1730 = vsel %vm1634, %v1698, %v1602
      %v1731 = vsel %vm1635, %v1698, %v1603
      %vm1732 = vcmp.eq.s32.totalorder %v1316, 384
      %vm1733 = vcmp.eq.s32.totalorder %v1317, 384
      %vm1734 = vcmp.eq.s32.totalorder %v1318, 384
      %vm1735 = vcmp.eq.s32.totalorder %v1319, 384
      %vm1736 = vcmp.eq.s32.totalorder %v1320, 384
      %vm1737 = vcmp.eq.s32.totalorder %v1321, 384
      %vm1738 = vcmp.eq.s32.totalorder %v1322, 384
      %vm1739 = vcmp.eq.s32.totalorder %v1323, 384
      %vm1740 = vcmp.eq.s32.totalorder %v1324, 384
      %vm1741 = vcmp.eq.s32.totalorder %v1325, 384
      %vm1742 = vcmp.eq.s32.totalorder %v1326, 384
      %vm1743 = vcmp.eq.s32.totalorder %v1327, 384
      %vm1744 = vcmp.eq.s32.totalorder %v1328, 384
      %vm1745 = vcmp.eq.s32.totalorder %v1329, 384
      %vm1746 = vcmp.eq.s32.totalorder %v1330, 384
      %vm1747 = vcmp.eq.s32.totalorder %v1331, 384
      %vm1748 = vcmp.eq.s32.totalorder %v1332, 384
      %vm1749 = vcmp.eq.s32.totalorder %v1333, 384
      %vm1750 = vcmp.eq.s32.totalorder %v1334, 384
      %vm1751 = vcmp.eq.s32.totalorder %v1335, 384
      %vm1752 = vcmp.eq.s32.totalorder %v1336, 384
      %vm1753 = vcmp.eq.s32.totalorder %v1337, 384
      %vm1754 = vcmp.eq.s32.totalorder %v1338, 384
      %vm1755 = vcmp.eq.s32.totalorder %v1339, 384
      %vm1756 = vcmp.eq.s32.totalorder %v1340, 384
      %vm1757 = vcmp.eq.s32.totalorder %v1341, 384
      %vm1758 = vcmp.eq.s32.totalorder %v1342, 384
      %vm1759 = vcmp.eq.s32.totalorder %v1343, 384
      %vm1760 = vcmp.eq.s32.totalorder %v1344, 384
      %vm1761 = vcmp.eq.s32.totalorder %v1345, 384
      %vm1762 = vcmp.eq.s32.totalorder %v1346, 384
      %vm1763 = vcmp.eq.s32.totalorder %v1347, 384
      %1764 = vset.pattern.permute.xlu0 11
      %1765 = vperm.xlu0 %1764, %v108
      %v1766 = vpop.permute.xlu0 %1765
      %1768 = vset.pattern.permute.xlu0 11
      %1769 = vperm.xlu0 %1768, %v109
      %v1770 = vpop.permute.xlu0 %1769
      %1772 = vset.pattern.permute.xlu0 11
      %1773 = vperm.xlu0 %1772, %v110
      %v1774 = vpop.permute.xlu0 %1773
      %1776 = vset.pattern.permute.xlu0 11
      %1777 = vperm.xlu0 %1776, %v111
      %v1778 = vpop.permute.xlu0 %1777
      %1780 = vset.pattern.permute.xlu0 11
      %1781 = vperm.xlu0 %1780, %v112
      %v1782 = vpop.permute.xlu0 %1781
      %1784 = vset.pattern.permute.xlu0 11
      %1785 = vperm.xlu0 %1784, %v113
      %v1786 = vpop.permute.xlu0 %1785
      %1788 = vset.pattern.permute.xlu0 11
      %1789 = vperm.xlu0 %1788, %v114
      %v1790 = vpop.permute.xlu0 %1789
      %1792 = vset.pattern.permute.xlu0 11
      %1793 = vperm.xlu0 %1792, %v115
      %v1794 = vpop.permute.xlu0 %1793
      %1796 = vset.pattern.permute.xlu0 11
      %1797 = vperm.xlu0 %1796, %v116
      %v1798 = vpop.permute.xlu0 %1797
      %1800 = vset.pattern.permute.xlu0 11
      %1801 = vperm.xlu0 %1800, %v117
      %v1802 = vpop.permute.xlu0 %1801
      %1804 = vset.pattern.permute.xlu0 11
      %1805 = vperm.xlu0 %1804, %v118
      %v1806 = vpop.permute.xlu0 %1805
      %1808 = vset.pattern.permute.xlu0 11
      %1809 = vperm.xlu0 %1808, %v119
      %v1810 = vpop.permute.xlu0 %1809
      %1812 = vset.pattern.permute.xlu0 11
      %1813 = vperm.xlu0 %1812, %v120
      %v1814 = vpop.permute.xlu0 %1813
      %1816 = vset.pattern.permute.xlu0 11
      %1817 = vperm.xlu0 %1816, %v121
      %v1818 = vpop.permute.xlu0 %1817
      %1820 = vset.pattern.permute.xlu0 11
      %1821 = vperm.xlu0 %1820, %v122
      %v1822 = vpop.permute.xlu0 %1821
      %1824 = vset.pattern.permute.xlu0 11
      %1825 = vperm.xlu0 %1824, %v123
      %v1826 = vpop.permute.xlu0 %1825
      %v1828 = vsel %vm1732, %v1766, %v1700
      %v1829 = vsel %vm1733, %v1766, %v1701
      %v1830 = vsel %vm1734, %v1770, %v1702
      %v1831 = vsel %vm1735, %v1770, %v1703
      %v1832 = vsel %vm1736, %v1774, %v1704
      %v1833 = vsel %vm1737, %v1774, %v1705
      %v1834 = vsel %vm1738, %v1778, %v1706
      %v1835 = vsel %vm1739, %v1778, %v1707
      %v1836 = vsel %vm1740, %v1782, %v1708
      %v1837 = vsel %vm1741, %v1782, %v1709
      %v1838 = vsel %vm1742, %v1786, %v1710
      %v1839 = vsel %vm1743, %v1786, %v1711
      %v1840 = vsel %vm1744, %v1790, %v1712
      %v1841 = vsel %vm1745, %v1790, %v1713
      %v1842 = vsel %vm1746, %v1794, %v1714
      %v1843 = vsel %vm1747, %v1794, %v1715
      %v1844 = vsel %vm1748, %v1798, %v1716
      %v1845 = vsel %vm1749, %v1798, %v1717
      %v1846 = vsel %vm1750, %v1802, %v1718
      %v1847 = vsel %vm1751, %v1802, %v1719
      %v1848 = vsel %vm1752, %v1806, %v1720
      %v1849 = vsel %vm1753, %v1806, %v1721
      %v1850 = vsel %vm1754, %v1810, %v1722
      %v1851 = vsel %vm1755, %v1810, %v1723
      %v1852 = vsel %vm1756, %v1814, %v1724
      %v1853 = vsel %vm1757, %v1814, %v1725
      %v1854 = vsel %vm1758, %v1818, %v1726
      %v1855 = vsel %vm1759, %v1818, %v1727
      %v1856 = vsel %vm1760, %v1822, %v1728
      %v1857 = vsel %vm1761, %v1822, %v1729
      %v1858 = vsel %vm1762, %v1826, %v1730
      %v1859 = vsel %vm1763, %v1826, %v1731
      %v1860 = vadd.f32 %v1276, %v1828
      %v1861 = vadd.f32 %v1277, %v1829
      %v1862 = vadd.f32 %v1278, %v1830
      %v1863 = vadd.f32 %v1279, %v1831
      %v1864 = vadd.f32 %v1280, %v1832
      %v1865 = vadd.f32 %v1281, %v1833
      %v1866 = vadd.f32 %v1282, %v1834
      %v1867 = vadd.f32 %v1283, %v1835
      %v1868 = vadd.f32 %v1284, %v1836
      %v1869 = vadd.f32 %v1285, %v1837
      %v1870 = vadd.f32 %v1286, %v1838
      %v1871 = vadd.f32 %v1287, %v1839
      %v1872 = vadd.f32 %v1288, %v1840
      %v1873 = vadd.f32 %v1289, %v1841
      %v1874 = vadd.f32 %v1290, %v1842
      %v1875 = vadd.f32 %v1291, %v1843
      %v1876 = vadd.f32 %v1292, %v1844
      %v1877 = vadd.f32 %v1293, %v1845
      %v1878 = vadd.f32 %v1294, %v1846
      %v1879 = vadd.f32 %v1295, %v1847
      %v1880 = vadd.f32 %v1296, %v1848
      %v1881 = vadd.f32 %v1297, %v1849
      %v1882 = vadd.f32 %v1298, %v1850
      %v1883 = vadd.f32 %v1299, %v1851
      %v1884 = vadd.f32 %v1300, %v1852
      %v1885 = vadd.f32 %v1301, %v1853
      %v1886 = vadd.f32 %v1302, %v1854
      %v1887 = vadd.f32 %v1303, %v1855
      %v1888 = vadd.f32 %v1304, %v1856
      %v1889 = vadd.f32 %v1305, %v1857
      %v1890 = vadd.f32 %v1306, %v1858
      %v1891 = vadd.f32 %v1307, %v1859
      %v1892 = vlaneseq
      %v1893 = vshrl.u32 %v1892, 7
      %v1894 = vsub.s32 3, %v1893
      %v1895 = vrot.slane %v103, %v1894
      %v1896 = vlaneseq
      %v1897 = vshrl.u32 %v1896, 7
      %v1898 = vsub.s32 3, %v1897
      %v1899 = vrot.slane %v105, %v1898
      %v1900 = vsub.s32 %v1895, %v28
      %v1901 = vsub.s32 %v1899, %v28
      %v1902 = vsub.s32 %v1895, %v29
      %v1903 = vsub.s32 %v1899, %v29
      %v1904 = vsub.s32 %v1895, %v30
      %v1905 = vsub.s32 %v1899, %v30
      %v1906 = vsub.s32 %v1895, %v31
      %v1907 = vsub.s32 %v1899, %v31
      %v1908 = vsub.s32 %v1895, %v32
      %v1909 = vsub.s32 %v1899, %v32
      %v1910 = vsub.s32 %v1895, %v33
      %v1911 = vsub.s32 %v1899, %v33
      %v1912 = vsub.s32 %v1895, %v34
      %v1913 = vsub.s32 %v1899, %v34
      %v1914 = vsub.s32 %v1895, %v35
      %v1915 = vsub.s32 %v1899, %v35
      %v1916 = vsub.s32 %v1895, %v36
      %v1917 = vsub.s32 %v1899, %v36
      %v1918 = vsub.s32 %v1895, %v37
      %v1919 = vsub.s32 %v1899, %v37
      %v1920 = vsub.s32 %v1895, %v38
      %v1921 = vsub.s32 %v1899, %v38
      %v1922 = vsub.s32 %v1895, %v39
      %v1923 = vsub.s32 %v1899, %v39
      %v1924 = vsub.s32 %v1895, %v40
      %v1925 = vsub.s32 %v1899, %v40
      %v1926 = vsub.s32 %v1895, %v41
      %v1927 = vsub.s32 %v1899, %v41
      %v1928 = vsub.s32 %v1895, %v42
      %v1929 = vsub.s32 %v1899, %v42
      %v1930 = vsub.s32 %v1895, %v43
      %v1931 = vsub.s32 %v1899, %v43
      %vm1932 = vcmp.eq.s32.totalorder %v1900, 0
      %vm1933 = vcmp.eq.s32.totalorder %v1901, 0
      %vm1934 = vcmp.eq.s32.totalorder %v1902, 0
      %vm1935 = vcmp.eq.s32.totalorder %v1903, 0
      %vm1936 = vcmp.eq.s32.totalorder %v1904, 0
      %vm1937 = vcmp.eq.s32.totalorder %v1905, 0
      %vm1938 = vcmp.eq.s32.totalorder %v1906, 0
      %vm1939 = vcmp.eq.s32.totalorder %v1907, 0
      %vm1940 = vcmp.eq.s32.totalorder %v1908, 0
      %vm1941 = vcmp.eq.s32.totalorder %v1909, 0
      %vm1942 = vcmp.eq.s32.totalorder %v1910, 0
      %vm1943 = vcmp.eq.s32.totalorder %v1911, 0
      %vm1944 = vcmp.eq.s32.totalorder %v1912, 0
      %vm1945 = vcmp.eq.s32.totalorder %v1913, 0
      %vm1946 = vcmp.eq.s32.totalorder %v1914, 0
      %vm1947 = vcmp.eq.s32.totalorder %v1915, 0
      %vm1948 = vcmp.eq.s32.totalorder %v1916, 0
      %vm1949 = vcmp.eq.s32.totalorder %v1917, 0
      %vm1950 = vcmp.eq.s32.totalorder %v1918, 0
      %vm1951 = vcmp.eq.s32.totalorder %v1919, 0
      %vm1952 = vcmp.eq.s32.totalorder %v1920, 0
      %vm1953 = vcmp.eq.s32.totalorder %v1921, 0
      %vm1954 = vcmp.eq.s32.totalorder %v1922, 0
      %vm1955 = vcmp.eq.s32.totalorder %v1923, 0
      %vm1956 = vcmp.eq.s32.totalorder %v1924, 0
      %vm1957 = vcmp.eq.s32.totalorder %v1925, 0
      %vm1958 = vcmp.eq.s32.totalorder %v1926, 0
      %vm1959 = vcmp.eq.s32.totalorder %v1927, 0
      %vm1960 = vcmp.eq.s32.totalorder %v1928, 0
      %vm1961 = vcmp.eq.s32.totalorder %v1929, 0
      %vm1962 = vcmp.eq.s32.totalorder %v1930, 0
      %vm1963 = vcmp.eq.s32.totalorder %v1931, 0
      %1964 = vset.pattern.permute.xlu0 12
      %1965 = vperm.xlu0 %1964, %v108
      %v1966 = vpop.permute.xlu0 %1965
      %1968 = vset.pattern.permute.xlu0 12
      %1969 = vperm.xlu0 %1968, %v109
      %v1970 = vpop.permute.xlu0 %1969
      %1972 = vset.pattern.permute.xlu0 12
      %1973 = vperm.xlu0 %1972, %v110
      %v1974 = vpop.permute.xlu0 %1973
      %1976 = vset.pattern.permute.xlu0 12
      %1977 = vperm.xlu0 %1976, %v111
      %v1978 = vpop.permute.xlu0 %1977
      %1980 = vset.pattern.permute.xlu0 12
      %1981 = vperm.xlu0 %1980, %v112
      %v1982 = vpop.permute.xlu0 %1981
      %1984 = vset.pattern.permute.xlu0 12
      %1985 = vperm.xlu0 %1984, %v113
      %v1986 = vpop.permute.xlu0 %1985
      %1988 = vset.pattern.permute.xlu0 12
      %1989 = vperm.xlu0 %1988, %v114
      %v1990 = vpop.permute.xlu0 %1989
      %1992 = vset.pattern.permute.xlu0 12
      %1993 = vperm.xlu0 %1992, %v115
      %v1994 = vpop.permute.xlu0 %1993
      %1996 = vset.pattern.permute.xlu0 12
      %1997 = vperm.xlu0 %1996, %v116
      %v1998 = vpop.permute.xlu0 %1997
      %2000 = vset.pattern.permute.xlu0 12
      %2001 = vperm.xlu0 %2000, %v117
      %v2002 = vpop.permute.xlu0 %2001
      %2004 = vset.pattern.permute.xlu0 12
      %2005 = vperm.xlu0 %2004, %v118
      %v2006 = vpop.permute.xlu0 %2005
      %2008 = vset.pattern.permute.xlu0 12
      %2009 = vperm.xlu0 %2008, %v119
      %v2010 = vpop.permute.xlu0 %2009
      %2012 = vset.pattern.permute.xlu0 12
      %2013 = vperm.xlu0 %2012, %v120
      %v2014 = vpop.permute.xlu0 %2013
      %2016 = vset.pattern.permute.xlu0 12
      %2017 = vperm.xlu0 %2016, %v121
      %v2018 = vpop.permute.xlu0 %2017
      %2020 = vset.pattern.permute.xlu0 12
      %2021 = vperm.xlu0 %2020, %v122
      %v2022 = vpop.permute.xlu0 %2021
      %2024 = vset.pattern.permute.xlu0 12
      %2025 = vperm.xlu0 %2024, %v123
      %v2026 = vpop.permute.xlu0 %2025
      %v2028 = vsel %vm1932, %v1966, 0.0
      %v2029 = vsel %vm1933, %v1966, 0.0
      %v2030 = vsel %vm1934, %v1970, 0.0
      %v2031 = vsel %vm1935, %v1970, 0.0
      %v2032 = vsel %vm1936, %v1974, 0.0
      %v2033 = vsel %vm1937, %v1974, 0.0
      %v2034 = vsel %vm1938, %v1978, 0.0
      %v2035 = vsel %vm1939, %v1978, 0.0
      %v2036 = vsel %vm1940, %v1982, 0.0
      %v2037 = vsel %vm1941, %v1982, 0.0
      %v2038 = vsel %vm1942, %v1986, 0.0
      %v2039 = vsel %vm1943, %v1986, 0.0
      %v2040 = vsel %vm1944, %v1990, 0.0
      %v2041 = vsel %vm1945, %v1990, 0.0
      %v2042 = vsel %vm1946, %v1994, 0.0
      %v2043 = vsel %vm1947, %v1994, 0.0
      %v2044 = vsel %vm1948, %v1998, 0.0
      %v2045 = vsel %vm1949, %v1998, 0.0
      %v2046 = vsel %vm1950, %v2002, 0.0
      %v2047 = vsel %vm1951, %v2002, 0.0
      %v2048 = vsel %vm1952, %v2006, 0.0
      %v2049 = vsel %vm1953, %v2006, 0.0
      %v2050 = vsel %vm1954, %v2010, 0.0
      %v2051 = vsel %vm1955, %v2010, 0.0
      %v2052 = vsel %vm1956, %v2014, 0.0
      %v2053 = vsel %vm1957, %v2014, 0.0
      %v2054 = vsel %vm1958, %v2018, 0.0
      %v2055 = vsel %vm1959, %v2018, 0.0
      %v2056 = vsel %vm1960, %v2022, 0.0
      %v2057 = vsel %vm1961, %v2022, 0.0
      %v2058 = vsel %vm1962, %v2026, 0.0
      %v2059 = vsel %vm1963, %v2026, 0.0
      %vm2060 = vcmp.eq.s32.totalorder %v1900, 128
      %vm2061 = vcmp.eq.s32.totalorder %v1901, 128
      %vm2062 = vcmp.eq.s32.totalorder %v1902, 128
      %vm2063 = vcmp.eq.s32.totalorder %v1903, 128
      %vm2064 = vcmp.eq.s32.totalorder %v1904, 128
      %vm2065 = vcmp.eq.s32.totalorder %v1905, 128
      %vm2066 = vcmp.eq.s32.totalorder %v1906, 128
      %vm2067 = vcmp.eq.s32.totalorder %v1907, 128
      %vm2068 = vcmp.eq.s32.totalorder %v1908, 128
      %vm2069 = vcmp.eq.s32.totalorder %v1909, 128
      %vm2070 = vcmp.eq.s32.totalorder %v1910, 128
      %vm2071 = vcmp.eq.s32.totalorder %v1911, 128
      %vm2072 = vcmp.eq.s32.totalorder %v1912, 128
      %vm2073 = vcmp.eq.s32.totalorder %v1913, 128
      %vm2074 = vcmp.eq.s32.totalorder %v1914, 128
      %vm2075 = vcmp.eq.s32.totalorder %v1915, 128
      %vm2076 = vcmp.eq.s32.totalorder %v1916, 128
      %vm2077 = vcmp.eq.s32.totalorder %v1917, 128
      %vm2078 = vcmp.eq.s32.totalorder %v1918, 128
      %vm2079 = vcmp.eq.s32.totalorder %v1919, 128
      %vm2080 = vcmp.eq.s32.totalorder %v1920, 128
      %vm2081 = vcmp.eq.s32.totalorder %v1921, 128
      %vm2082 = vcmp.eq.s32.totalorder %v1922, 128
      %vm2083 = vcmp.eq.s32.totalorder %v1923, 128
      %vm2084 = vcmp.eq.s32.totalorder %v1924, 128
      %vm2085 = vcmp.eq.s32.totalorder %v1925, 128
      %vm2086 = vcmp.eq.s32.totalorder %v1926, 128
      %vm2087 = vcmp.eq.s32.totalorder %v1927, 128
      %vm2088 = vcmp.eq.s32.totalorder %v1928, 128
      %vm2089 = vcmp.eq.s32.totalorder %v1929, 128
      %vm2090 = vcmp.eq.s32.totalorder %v1930, 128
      %vm2091 = vcmp.eq.s32.totalorder %v1931, 128
      %2092 = vset.pattern.permute.xlu0 13
      %2093 = vperm.xlu0 %2092, %v108
      %v2094 = vpop.permute.xlu0 %2093
      %2096 = vset.pattern.permute.xlu0 13
      %2097 = vperm.xlu0 %2096, %v109
      %v2098 = vpop.permute.xlu0 %2097
      %2100 = vset.pattern.permute.xlu0 13
      %2101 = vperm.xlu0 %2100, %v110
      %v2102 = vpop.permute.xlu0 %2101
      %2104 = vset.pattern.permute.xlu0 13
      %2105 = vperm.xlu0 %2104, %v111
      %v2106 = vpop.permute.xlu0 %2105
      %2108 = vset.pattern.permute.xlu0 13
      %2109 = vperm.xlu0 %2108, %v112
      %v2110 = vpop.permute.xlu0 %2109
      %2112 = vset.pattern.permute.xlu0 13
      %2113 = vperm.xlu0 %2112, %v113
      %v2114 = vpop.permute.xlu0 %2113
      %2116 = vset.pattern.permute.xlu0 13
      %2117 = vperm.xlu0 %2116, %v114
      %v2118 = vpop.permute.xlu0 %2117
      %2120 = vset.pattern.permute.xlu0 13
      %2121 = vperm.xlu0 %2120, %v115
      %v2122 = vpop.permute.xlu0 %2121
      %2124 = vset.pattern.permute.xlu0 13
      %2125 = vperm.xlu0 %2124, %v116
      %v2126 = vpop.permute.xlu0 %2125
      %2128 = vset.pattern.permute.xlu0 13
      %2129 = vperm.xlu0 %2128, %v117
      %v2130 = vpop.permute.xlu0 %2129
      %2132 = vset.pattern.permute.xlu0 13
      %2133 = vperm.xlu0 %2132, %v118
      %v2134 = vpop.permute.xlu0 %2133
      %2136 = vset.pattern.permute.xlu0 13
      %2137 = vperm.xlu0 %2136, %v119
      %v2138 = vpop.permute.xlu0 %2137
      %2140 = vset.pattern.permute.xlu0 13
      %2141 = vperm.xlu0 %2140, %v120
      %v2142 = vpop.permute.xlu0 %2141
      %2144 = vset.pattern.permute.xlu0 13
      %2145 = vperm.xlu0 %2144, %v121
      %v2146 = vpop.permute.xlu0 %2145
      %2148 = vset.pattern.permute.xlu0 13
      %2149 = vperm.xlu0 %2148, %v122
      %v2150 = vpop.permute.xlu0 %2149
      %2152 = vset.pattern.permute.xlu0 13
      %2153 = vperm.xlu0 %2152, %v123
      %v2154 = vpop.permute.xlu0 %2153
      %v2156 = vsel %vm2060, %v2094, %v2028
      %v2157 = vsel %vm2061, %v2094, %v2029
      %v2158 = vsel %vm2062, %v2098, %v2030
      %v2159 = vsel %vm2063, %v2098, %v2031
      %v2160 = vsel %vm2064, %v2102, %v2032
      %v2161 = vsel %vm2065, %v2102, %v2033
      %v2162 = vsel %vm2066, %v2106, %v2034
      %v2163 = vsel %vm2067, %v2106, %v2035
      %v2164 = vsel %vm2068, %v2110, %v2036
      %v2165 = vsel %vm2069, %v2110, %v2037
      %v2166 = vsel %vm2070, %v2114, %v2038
      %v2167 = vsel %vm2071, %v2114, %v2039
      %v2168 = vsel %vm2072, %v2118, %v2040
      %v2169 = vsel %vm2073, %v2118, %v2041
      %v2170 = vsel %vm2074, %v2122, %v2042
      %v2171 = vsel %vm2075, %v2122, %v2043
      %v2172 = vsel %vm2076, %v2126, %v2044
      %v2173 = vsel %vm2077, %v2126, %v2045
      %v2174 = vsel %vm2078, %v2130, %v2046
      %v2175 = vsel %vm2079, %v2130, %v2047
      %v2176 = vsel %vm2080, %v2134, %v2048
      %v2177 = vsel %vm2081, %v2134, %v2049
      %v2178 = vsel %vm2082, %v2138, %v2050
      %v2179 = vsel %vm2083, %v2138, %v2051
      %v2180 = vsel %vm2084, %v2142, %v2052
      %v2181 = vsel %vm2085, %v2142, %v2053
      %v2182 = vsel %vm2086, %v2146, %v2054
      %v2183 = vsel %vm2087, %v2146, %v2055
      %v2184 = vsel %vm2088, %v2150, %v2056
      %v2185 = vsel %vm2089, %v2150, %v2057
      %v2186 = vsel %vm2090, %v2154, %v2058
      %v2187 = vsel %vm2091, %v2154, %v2059
      %vm2188 = vcmp.eq.s32.totalorder %v1900, 256
      %vm2189 = vcmp.eq.s32.totalorder %v1901, 256
      %vm2190 = vcmp.eq.s32.totalorder %v1902, 256
      %vm2191 = vcmp.eq.s32.totalorder %v1903, 256
      %vm2192 = vcmp.eq.s32.totalorder %v1904, 256
      %vm2193 = vcmp.eq.s32.totalorder %v1905, 256
      %vm2194 = vcmp.eq.s32.totalorder %v1906, 256
      %vm2195 = vcmp.eq.s32.totalorder %v1907, 256
      %vm2196 = vcmp.eq.s32.totalorder %v1908, 256
      %vm2197 = vcmp.eq.s32.totalorder %v1909, 256
      %vm2198 = vcmp.eq.s32.totalorder %v1910, 256
      %vm2199 = vcmp.eq.s32.totalorder %v1911, 256
      %vm2200 = vcmp.eq.s32.totalorder %v1912, 256
      %vm2201 = vcmp.eq.s32.totalorder %v1913, 256
      %vm2202 = vcmp.eq.s32.totalorder %v1914, 256
      %vm2203 = vcmp.eq.s32.totalorder %v1915, 256
      %vm2204 = vcmp.eq.s32.totalorder %v1916, 256
      %vm2205 = vcmp.eq.s32.totalorder %v1917, 256
      %vm2206 = vcmp.eq.s32.totalorder %v1918, 256
      %vm2207 = vcmp.eq.s32.totalorder %v1919, 256
      %vm2208 = vcmp.eq.s32.totalorder %v1920, 256
      %vm2209 = vcmp.eq.s32.totalorder %v1921, 256
      %vm2210 = vcmp.eq.s32.totalorder %v1922, 256
      %vm2211 = vcmp.eq.s32.totalorder %v1923, 256
      %vm2212 = vcmp.eq.s32.totalorder %v1924, 256
      %vm2213 = vcmp.eq.s32.totalorder %v1925, 256
      %vm2214 = vcmp.eq.s32.totalorder %v1926, 256
      %vm2215 = vcmp.eq.s32.totalorder %v1927, 256
      %vm2216 = vcmp.eq.s32.totalorder %v1928, 256
      %vm2217 = vcmp.eq.s32.totalorder %v1929, 256
      %vm2218 = vcmp.eq.s32.totalorder %v1930, 256
      %vm2219 = vcmp.eq.s32.totalorder %v1931, 256
      %2220 = vset.pattern.permute.xlu0 14
      %2221 = vperm.xlu0 %2220, %v108
      %v2222 = vpop.permute.xlu0 %2221
      %2224 = vset.pattern.permute.xlu0 14
      %2225 = vperm.xlu0 %2224, %v109
      %v2226 = vpop.permute.xlu0 %2225
      %2228 = vset.pattern.permute.xlu0 14
      %2229 = vperm.xlu0 %2228, %v110
      %v2230 = vpop.permute.xlu0 %2229
      %2232 = vset.pattern.permute.xlu0 14
      %2233 = vperm.xlu0 %2232, %v111
      %v2234 = vpop.permute.xlu0 %2233
      %2236 = vset.pattern.permute.xlu0 14
      %2237 = vperm.xlu0 %2236, %v112
      %v2238 = vpop.permute.xlu0 %2237
      %2240 = vset.pattern.permute.xlu0 14
      %2241 = vperm.xlu0 %2240, %v113
      %v2242 = vpop.permute.xlu0 %2241
      %2244 = vset.pattern.permute.xlu0 14
      %2245 = vperm.xlu0 %2244, %v114
      %v2246 = vpop.permute.xlu0 %2245
      %2248 = vset.pattern.permute.xlu0 14
      %2249 = vperm.xlu0 %2248, %v115
      %v2250 = vpop.permute.xlu0 %2249
      %2252 = vset.pattern.permute.xlu0 14
      %2253 = vperm.xlu0 %2252, %v116
      %v2254 = vpop.permute.xlu0 %2253
      %2256 = vset.pattern.permute.xlu0 14
      %2257 = vperm.xlu0 %2256, %v117
      %v2258 = vpop.permute.xlu0 %2257
      %2260 = vset.pattern.permute.xlu0 14
      %2261 = vperm.xlu0 %2260, %v118
      %v2262 = vpop.permute.xlu0 %2261
      %2264 = vset.pattern.permute.xlu0 14
      %2265 = vperm.xlu0 %2264, %v119
      %v2266 = vpop.permute.xlu0 %2265
      %2268 = vset.pattern.permute.xlu0 14
      %2269 = vperm.xlu0 %2268, %v120
      %v2270 = vpop.permute.xlu0 %2269
      %2272 = vset.pattern.permute.xlu0 14
      %2273 = vperm.xlu0 %2272, %v121
      %v2274 = vpop.permute.xlu0 %2273
      %2276 = vset.pattern.permute.xlu0 14
      %2277 = vperm.xlu0 %2276, %v122
      %v2278 = vpop.permute.xlu0 %2277
      %2280 = vset.pattern.permute.xlu0 14
      %2281 = vperm.xlu0 %2280, %v123
      %v2282 = vpop.permute.xlu0 %2281
      %v2284 = vsel %vm2188, %v2222, %v2156
      %v2285 = vsel %vm2189, %v2222, %v2157
      %v2286 = vsel %vm2190, %v2226, %v2158
      %v2287 = vsel %vm2191, %v2226, %v2159
      %v2288 = vsel %vm2192, %v2230, %v2160
      %v2289 = vsel %vm2193, %v2230, %v2161
      %v2290 = vsel %vm2194, %v2234, %v2162
      %v2291 = vsel %vm2195, %v2234, %v2163
      %v2292 = vsel %vm2196, %v2238, %v2164
      %v2293 = vsel %vm2197, %v2238, %v2165
      %v2294 = vsel %vm2198, %v2242, %v2166
      %v2295 = vsel %vm2199, %v2242, %v2167
      %v2296 = vsel %vm2200, %v2246, %v2168
      %v2297 = vsel %vm2201, %v2246, %v2169
      %v2298 = vsel %vm2202, %v2250, %v2170
      %v2299 = vsel %vm2203, %v2250, %v2171
      %v2300 = vsel %vm2204, %v2254, %v2172
      %v2301 = vsel %vm2205, %v2254, %v2173
      %v2302 = vsel %vm2206, %v2258, %v2174
      %v2303 = vsel %vm2207, %v2258, %v2175
      %v2304 = vsel %vm2208, %v2262, %v2176
      %v2305 = vsel %vm2209, %v2262, %v2177
      %v2306 = vsel %vm2210, %v2266, %v2178
      %v2307 = vsel %vm2211, %v2266, %v2179
      %v2308 = vsel %vm2212, %v2270, %v2180
      %v2309 = vsel %vm2213, %v2270, %v2181
      %v2310 = vsel %vm2214, %v2274, %v2182
      %v2311 = vsel %vm2215, %v2274, %v2183
      %v2312 = vsel %vm2216, %v2278, %v2184
      %v2313 = vsel %vm2217, %v2278, %v2185
      %v2314 = vsel %vm2218, %v2282, %v2186
      %v2315 = vsel %vm2219, %v2282, %v2187
      %vm2316 = vcmp.eq.s32.totalorder %v1900, 384
      %vm2317 = vcmp.eq.s32.totalorder %v1901, 384
      %vm2318 = vcmp.eq.s32.totalorder %v1902, 384
      %vm2319 = vcmp.eq.s32.totalorder %v1903, 384
      %vm2320 = vcmp.eq.s32.totalorder %v1904, 384
      %vm2321 = vcmp.eq.s32.totalorder %v1905, 384
      %vm2322 = vcmp.eq.s32.totalorder %v1906, 384
      %vm2323 = vcmp.eq.s32.totalorder %v1907, 384
      %vm2324 = vcmp.eq.s32.totalorder %v1908, 384
      %vm2325 = vcmp.eq.s32.totalorder %v1909, 384
      %vm2326 = vcmp.eq.s32.totalorder %v1910, 384
      %vm2327 = vcmp.eq.s32.totalorder %v1911, 384
      %vm2328 = vcmp.eq.s32.totalorder %v1912, 384
      %vm2329 = vcmp.eq.s32.totalorder %v1913, 384
      %vm2330 = vcmp.eq.s32.totalorder %v1914, 384
      %vm2331 = vcmp.eq.s32.totalorder %v1915, 384
      %vm2332 = vcmp.eq.s32.totalorder %v1916, 384
      %vm2333 = vcmp.eq.s32.totalorder %v1917, 384
      %vm2334 = vcmp.eq.s32.totalorder %v1918, 384
      %vm2335 = vcmp.eq.s32.totalorder %v1919, 384
      %vm2336 = vcmp.eq.s32.totalorder %v1920, 384
      %vm2337 = vcmp.eq.s32.totalorder %v1921, 384
      %vm2338 = vcmp.eq.s32.totalorder %v1922, 384
      %vm2339 = vcmp.eq.s32.totalorder %v1923, 384
      %vm2340 = vcmp.eq.s32.totalorder %v1924, 384
      %vm2341 = vcmp.eq.s32.totalorder %v1925, 384
      %vm2342 = vcmp.eq.s32.totalorder %v1926, 384
      %vm2343 = vcmp.eq.s32.totalorder %v1927, 384
      %vm2344 = vcmp.eq.s32.totalorder %v1928, 384
      %vm2345 = vcmp.eq.s32.totalorder %v1929, 384
      %vm2346 = vcmp.eq.s32.totalorder %v1930, 384
      %vm2347 = vcmp.eq.s32.totalorder %v1931, 384
      %2348 = vset.pattern.permute.xlu0 15
      %2349 = vperm.xlu0 %2348, %v108
      %v2350 = vpop.permute.xlu0 %2349
      %2352 = vset.pattern.permute.xlu0 15
      %2353 = vperm.xlu0 %2352, %v109
      %v2354 = vpop.permute.xlu0 %2353
      %2356 = vset.pattern.permute.xlu0 15
      %2357 = vperm.xlu0 %2356, %v110
      %v2358 = vpop.permute.xlu0 %2357
      %2360 = vset.pattern.permute.xlu0 15
      %2361 = vperm.xlu0 %2360, %v111
      %v2362 = vpop.permute.xlu0 %2361
      %2364 = vset.pattern.permute.xlu0 15
      %2365 = vperm.xlu0 %2364, %v112
      %v2366 = vpop.permute.xlu0 %2365
      %2368 = vset.pattern.permute.xlu0 15
      %2369 = vperm.xlu0 %2368, %v113
      %v2370 = vpop.permute.xlu0 %2369
      %2372 = vset.pattern.permute.xlu0 15
      %2373 = vperm.xlu0 %2372, %v114
      %v2374 = vpop.permute.xlu0 %2373
      %2376 = vset.pattern.permute.xlu0 15
      %2377 = vperm.xlu0 %2376, %v115
      %v2378 = vpop.permute.xlu0 %2377
      %2380 = vset.pattern.permute.xlu0 15
      %2381 = vperm.xlu0 %2380, %v116
      %v2382 = vpop.permute.xlu0 %2381
      %2384 = vset.pattern.permute.xlu0 15
      %2385 = vperm.xlu0 %2384, %v117
      %v2386 = vpop.permute.xlu0 %2385
      %2388 = vset.pattern.permute.xlu0 15
      %2389 = vperm.xlu0 %2388, %v118
      %v2390 = vpop.permute.xlu0 %2389
      %2392 = vset.pattern.permute.xlu0 15
      %2393 = vperm.xlu0 %2392, %v119
      %v2394 = vpop.permute.xlu0 %2393
      %2396 = vset.pattern.permute.xlu0 15
      %2397 = vperm.xlu0 %2396, %v120
      %v2398 = vpop.permute.xlu0 %2397
      %2400 = vset.pattern.permute.xlu0 15
      %2401 = vperm.xlu0 %2400, %v121
      %v2402 = vpop.permute.xlu0 %2401
      %2404 = vset.pattern.permute.xlu0 15
      %2405 = vperm.xlu0 %2404, %v122
      %v2406 = vpop.permute.xlu0 %2405
      %2408 = vset.pattern.permute.xlu0 15
      %2409 = vperm.xlu0 %2408, %v123
      %v2410 = vpop.permute.xlu0 %2409
      %v2412 = vsel %vm2316, %v2350, %v2284
      %v2413 = vsel %vm2317, %v2350, %v2285
      %v2414 = vsel %vm2318, %v2354, %v2286
      %v2415 = vsel %vm2319, %v2354, %v2287
      %v2416 = vsel %vm2320, %v2358, %v2288
      %v2417 = vsel %vm2321, %v2358, %v2289
      %v2418 = vsel %vm2322, %v2362, %v2290
      %v2419 = vsel %vm2323, %v2362, %v2291
      %v2420 = vsel %vm2324, %v2366, %v2292
      %v2421 = vsel %vm2325, %v2366, %v2293
      %v2422 = vsel %vm2326, %v2370, %v2294
      %v2423 = vsel %vm2327, %v2370, %v2295
      %v2424 = vsel %vm2328, %v2374, %v2296
      %v2425 = vsel %vm2329, %v2374, %v2297
      %v2426 = vsel %vm2330, %v2378, %v2298
      %v2427 = vsel %vm2331, %v2378, %v2299
      %v2428 = vsel %vm2332, %v2382, %v2300
      %v2429 = vsel %vm2333, %v2382, %v2301
      %v2430 = vsel %vm2334, %v2386, %v2302
      %v2431 = vsel %vm2335, %v2386, %v2303
      %v2432 = vsel %vm2336, %v2390, %v2304
      %v2433 = vsel %vm2337, %v2390, %v2305
      %v2434 = vsel %vm2338, %v2394, %v2306
      %v2435 = vsel %vm2339, %v2394, %v2307
      %v2436 = vsel %vm2340, %v2398, %v2308
      %v2437 = vsel %vm2341, %v2398, %v2309
      %v2438 = vsel %vm2342, %v2402, %v2310
      %v2439 = vsel %vm2343, %v2402, %v2311
      %v2440 = vsel %vm2344, %v2406, %v2312
      %v2441 = vsel %vm2345, %v2406, %v2313
      %v2442 = vsel %vm2346, %v2410, %v2314
      %v2443 = vsel %vm2347, %v2410, %v2315
      %v2444 = vadd.f32 %v1860, %v2412
      %v2445 = vadd.f32 %v1861, %v2413
      %v2446 = vadd.f32 %v1862, %v2414
      %v2447 = vadd.f32 %v1863, %v2415
      %v2448 = vadd.f32 %v1864, %v2416
      %v2449 = vadd.f32 %v1865, %v2417
      %v2450 = vadd.f32 %v1866, %v2418
      %v2451 = vadd.f32 %v1867, %v2419
      %v2452 = vadd.f32 %v1868, %v2420
      %v2453 = vadd.f32 %v1869, %v2421
      %v2454 = vadd.f32 %v1870, %v2422
      %v2455 = vadd.f32 %v1871, %v2423
      %v2456 = vadd.f32 %v1872, %v2424
      %v2457 = vadd.f32 %v1873, %v2425
      %v2458 = vadd.f32 %v1874, %v2426
      %v2459 = vadd.f32 %v1875, %v2427
      %v2460 = vadd.f32 %v1876, %v2428
      %v2461 = vadd.f32 %v1877, %v2429
      %v2462 = vadd.f32 %v1878, %v2430
      %v2463 = vadd.f32 %v1879, %v2431
      %v2464 = vadd.f32 %v1880, %v2432
      %v2465 = vadd.f32 %v1881, %v2433
      %v2466 = vadd.f32 %v1882, %v2434
      %v2467 = vadd.f32 %v1883, %v2435
      %v2468 = vadd.f32 %v1884, %v2436
      %v2469 = vadd.f32 %v1885, %v2437
      %v2470 = vadd.f32 %v1886, %v2438
      %v2471 = vadd.f32 %v1887, %v2439
      %v2472 = vadd.f32 %v1888, %v2440
      %v2473 = vadd.f32 %v1889, %v2441
      %v2474 = vadd.f32 %v1890, %v2442
      %v2475 = vadd.f32 %v1891, %v2443
      %v2476 = vlaneseq
      %v2477 = vshrl.u32 %v2476, 7
      %v2478 = vsub.s32 4, %v2477
      %v2479 = vrot.slane %v103, %v2478
      %v2480 = vlaneseq
      %v2481 = vshrl.u32 %v2480, 7
      %v2482 = vsub.s32 4, %v2481
      %v2483 = vrot.slane %v105, %v2482
      %v2484 = vsub.s32 %v2479, %v28
      %v2485 = vsub.s32 %v2483, %v28
      %v2486 = vsub.s32 %v2479, %v29
      %v2487 = vsub.s32 %v2483, %v29
      %v2488 = vsub.s32 %v2479, %v30
      %v2489 = vsub.s32 %v2483, %v30
      %v2490 = vsub.s32 %v2479, %v31
      %v2491 = vsub.s32 %v2483, %v31
      %v2492 = vsub.s32 %v2479, %v32
      %v2493 = vsub.s32 %v2483, %v32
      %v2494 = vsub.s32 %v2479, %v33
      %v2495 = vsub.s32 %v2483, %v33
      %v2496 = vsub.s32 %v2479, %v34
      %v2497 = vsub.s32 %v2483, %v34
      %v2498 = vsub.s32 %v2479, %v35
      %v2499 = vsub.s32 %v2483, %v35
      %v2500 = vsub.s32 %v2479, %v36
      %v2501 = vsub.s32 %v2483, %v36
      %v2502 = vsub.s32 %v2479, %v37
      %v2503 = vsub.s32 %v2483, %v37
      %v2504 = vsub.s32 %v2479, %v38
      %v2505 = vsub.s32 %v2483, %v38
      %v2506 = vsub.s32 %v2479, %v39
      %v2507 = vsub.s32 %v2483, %v39
      %v2508 = vsub.s32 %v2479, %v40
      %v2509 = vsub.s32 %v2483, %v40
      %v2510 = vsub.s32 %v2479, %v41
      %v2511 = vsub.s32 %v2483, %v41
      %v2512 = vsub.s32 %v2479, %v42
      %v2513 = vsub.s32 %v2483, %v42
      %v2514 = vsub.s32 %v2479, %v43
      %v2515 = vsub.s32 %v2483, %v43
      %vm2516 = vcmp.eq.s32.totalorder %v2484, 0
      %vm2517 = vcmp.eq.s32.totalorder %v2485, 0
      %vm2518 = vcmp.eq.s32.totalorder %v2486, 0
      %vm2519 = vcmp.eq.s32.totalorder %v2487, 0
      %vm2520 = vcmp.eq.s32.totalorder %v2488, 0
      %vm2521 = vcmp.eq.s32.totalorder %v2489, 0
      %vm2522 = vcmp.eq.s32.totalorder %v2490, 0
      %vm2523 = vcmp.eq.s32.totalorder %v2491, 0
      %vm2524 = vcmp.eq.s32.totalorder %v2492, 0
      %vm2525 = vcmp.eq.s32.totalorder %v2493, 0
      %vm2526 = vcmp.eq.s32.totalorder %v2494, 0
      %vm2527 = vcmp.eq.s32.totalorder %v2495, 0
      %vm2528 = vcmp.eq.s32.totalorder %v2496, 0
      %vm2529 = vcmp.eq.s32.totalorder %v2497, 0
      %vm2530 = vcmp.eq.s32.totalorder %v2498, 0
      %vm2531 = vcmp.eq.s32.totalorder %v2499, 0
      %vm2532 = vcmp.eq.s32.totalorder %v2500, 0
      %vm2533 = vcmp.eq.s32.totalorder %v2501, 0
      %vm2534 = vcmp.eq.s32.totalorder %v2502, 0
      %vm2535 = vcmp.eq.s32.totalorder %v2503, 0
      %vm2536 = vcmp.eq.s32.totalorder %v2504, 0
      %vm2537 = vcmp.eq.s32.totalorder %v2505, 0
      %vm2538 = vcmp.eq.s32.totalorder %v2506, 0
      %vm2539 = vcmp.eq.s32.totalorder %v2507, 0
      %vm2540 = vcmp.eq.s32.totalorder %v2508, 0
      %vm2541 = vcmp.eq.s32.totalorder %v2509, 0
      %vm2542 = vcmp.eq.s32.totalorder %v2510, 0
      %vm2543 = vcmp.eq.s32.totalorder %v2511, 0
      %vm2544 = vcmp.eq.s32.totalorder %v2512, 0
      %vm2545 = vcmp.eq.s32.totalorder %v2513, 0
      %vm2546 = vcmp.eq.s32.totalorder %v2514, 0
      %vm2547 = vcmp.eq.s32.totalorder %v2515, 0
      %2548 = vset.pattern.permute.xlu0 16
      %2549 = vperm.xlu0 %2548, %v108
      %v2550 = vpop.permute.xlu0 %2549
      %2552 = vset.pattern.permute.xlu0 16
      %2553 = vperm.xlu0 %2552, %v109
      %v2554 = vpop.permute.xlu0 %2553
      %2556 = vset.pattern.permute.xlu0 16
      %2557 = vperm.xlu0 %2556, %v110
      %v2558 = vpop.permute.xlu0 %2557
      %2560 = vset.pattern.permute.xlu0 16
      %2561 = vperm.xlu0 %2560, %v111
      %v2562 = vpop.permute.xlu0 %2561
      %2564 = vset.pattern.permute.xlu0 16
      %2565 = vperm.xlu0 %2564, %v112
      %v2566 = vpop.permute.xlu0 %2565
      %2568 = vset.pattern.permute.xlu0 16
      %2569 = vperm.xlu0 %2568, %v113
      %v2570 = vpop.permute.xlu0 %2569
      %2572 = vset.pattern.permute.xlu0 16
      %2573 = vperm.xlu0 %2572, %v114
      %v2574 = vpop.permute.xlu0 %2573
      %2576 = vset.pattern.permute.xlu0 16
      %2577 = vperm.xlu0 %2576, %v115
      %v2578 = vpop.permute.xlu0 %2577
      %2580 = vset.pattern.permute.xlu0 16
      %2581 = vperm.xlu0 %2580, %v116
      %v2582 = vpop.permute.xlu0 %2581
      %2584 = vset.pattern.permute.xlu0 16
      %2585 = vperm.xlu0 %2584, %v117
      %v2586 = vpop.permute.xlu0 %2585
      %2588 = vset.pattern.permute.xlu0 16
      %2589 = vperm.xlu0 %2588, %v118
      %v2590 = vpop.permute.xlu0 %2589
      %2592 = vset.pattern.permute.xlu0 16
      %2593 = vperm.xlu0 %2592, %v119
      %v2594 = vpop.permute.xlu0 %2593
      %2596 = vset.pattern.permute.xlu0 16
      %2597 = vperm.xlu0 %2596, %v120
      %v2598 = vpop.permute.xlu0 %2597
      %2600 = vset.pattern.permute.xlu0 16
      %2601 = vperm.xlu0 %2600, %v121
      %v2602 = vpop.permute.xlu0 %2601
      %2604 = vset.pattern.permute.xlu0 16
      %2605 = vperm.xlu0 %2604, %v122
      %v2606 = vpop.permute.xlu0 %2605
      %2608 = vset.pattern.permute.xlu0 16
      %2609 = vperm.xlu0 %2608, %v123
      %v2610 = vpop.permute.xlu0 %2609
      %v2612 = vsel %vm2516, %v2550, 0.0
      %v2613 = vsel %vm2517, %v2550, 0.0
      %v2614 = vsel %vm2518, %v2554, 0.0
      %v2615 = vsel %vm2519, %v2554, 0.0
      %v2616 = vsel %vm2520, %v2558, 0.0
      %v2617 = vsel %vm2521, %v2558, 0.0
      %v2618 = vsel %vm2522, %v2562, 0.0
      %v2619 = vsel %vm2523, %v2562, 0.0
      %v2620 = vsel %vm2524, %v2566, 0.0
      %v2621 = vsel %vm2525, %v2566, 0.0
      %v2622 = vsel %vm2526, %v2570, 0.0
      %v2623 = vsel %vm2527, %v2570, 0.0
      %v2624 = vsel %vm2528, %v2574, 0.0
      %v2625 = vsel %vm2529, %v2574, 0.0
      %v2626 = vsel %vm2530, %v2578, 0.0
      %v2627 = vsel %vm2531, %v2578, 0.0
      %v2628 = vsel %vm2532, %v2582, 0.0
      %v2629 = vsel %vm2533, %v2582, 0.0
      %v2630 = vsel %vm2534, %v2586, 0.0
      %v2631 = vsel %vm2535, %v2586, 0.0
      %v2632 = vsel %vm2536, %v2590, 0.0
      %v2633 = vsel %vm2537, %v2590, 0.0
      %v2634 = vsel %vm2538, %v2594, 0.0
      %v2635 = vsel %vm2539, %v2594, 0.0
      %v2636 = vsel %vm2540, %v2598, 0.0
      %v2637 = vsel %vm2541, %v2598, 0.0
      %v2638 = vsel %vm2542, %v2602, 0.0
      %v2639 = vsel %vm2543, %v2602, 0.0
      %v2640 = vsel %vm2544, %v2606, 0.0
      %v2641 = vsel %vm2545, %v2606, 0.0
      %v2642 = vsel %vm2546, %v2610, 0.0
      %v2643 = vsel %vm2547, %v2610, 0.0
      %vm2644 = vcmp.eq.s32.totalorder %v2484, 128
      %vm2645 = vcmp.eq.s32.totalorder %v2485, 128
      %vm2646 = vcmp.eq.s32.totalorder %v2486, 128
      %vm2647 = vcmp.eq.s32.totalorder %v2487, 128
      %vm2648 = vcmp.eq.s32.totalorder %v2488, 128
      %vm2649 = vcmp.eq.s32.totalorder %v2489, 128
      %vm2650 = vcmp.eq.s32.totalorder %v2490, 128
      %vm2651 = vcmp.eq.s32.totalorder %v2491, 128
      %vm2652 = vcmp.eq.s32.totalorder %v2492, 128
      %vm2653 = vcmp.eq.s32.totalorder %v2493, 128
      %vm2654 = vcmp.eq.s32.totalorder %v2494, 128
      %vm2655 = vcmp.eq.s32.totalorder %v2495, 128
      %vm2656 = vcmp.eq.s32.totalorder %v2496, 128
      %vm2657 = vcmp.eq.s32.totalorder %v2497, 128
      %vm2658 = vcmp.eq.s32.totalorder %v2498, 128
      %vm2659 = vcmp.eq.s32.totalorder %v2499, 128
      %vm2660 = vcmp.eq.s32.totalorder %v2500, 128
      %vm2661 = vcmp.eq.s32.totalorder %v2501, 128
      %vm2662 = vcmp.eq.s32.totalorder %v2502, 128
      %vm2663 = vcmp.eq.s32.totalorder %v2503, 128
      %vm2664 = vcmp.eq.s32.totalorder %v2504, 128
      %vm2665 = vcmp.eq.s32.totalorder %v2505, 128
      %vm2666 = vcmp.eq.s32.totalorder %v2506, 128
      %vm2667 = vcmp.eq.s32.totalorder %v2507, 128
      %vm2668 = vcmp.eq.s32.totalorder %v2508, 128
      %vm2669 = vcmp.eq.s32.totalorder %v2509, 128
      %vm2670 = vcmp.eq.s32.totalorder %v2510, 128
      %vm2671 = vcmp.eq.s32.totalorder %v2511, 128
      %vm2672 = vcmp.eq.s32.totalorder %v2512, 128
      %vm2673 = vcmp.eq.s32.totalorder %v2513, 128
      %vm2674 = vcmp.eq.s32.totalorder %v2514, 128
      %vm2675 = vcmp.eq.s32.totalorder %v2515, 128
      %2676 = vset.pattern.permute.xlu0 17
      %2677 = vperm.xlu0 %2676, %v108
      %v2678 = vpop.permute.xlu0 %2677
      %2680 = vset.pattern.permute.xlu0 17
      %2681 = vperm.xlu0 %2680, %v109
      %v2682 = vpop.permute.xlu0 %2681
      %2684 = vset.pattern.permute.xlu0 17
      %2685 = vperm.xlu0 %2684, %v110
      %v2686 = vpop.permute.xlu0 %2685
      %2688 = vset.pattern.permute.xlu0 17
      %2689 = vperm.xlu0 %2688, %v111
      %v2690 = vpop.permute.xlu0 %2689
      %2692 = vset.pattern.permute.xlu0 17
      %2693 = vperm.xlu0 %2692, %v112
      %v2694 = vpop.permute.xlu0 %2693
      %2696 = vset.pattern.permute.xlu0 17
      %2697 = vperm.xlu0 %2696, %v113
      %v2698 = vpop.permute.xlu0 %2697
      %2700 = vset.pattern.permute.xlu0 17
      %2701 = vperm.xlu0 %2700, %v114
      %v2702 = vpop.permute.xlu0 %2701
      %2704 = vset.pattern.permute.xlu0 17
      %2705 = vperm.xlu0 %2704, %v115
      %v2706 = vpop.permute.xlu0 %2705
      %2708 = vset.pattern.permute.xlu0 17
      %2709 = vperm.xlu0 %2708, %v116
      %v2710 = vpop.permute.xlu0 %2709
      %2712 = vset.pattern.permute.xlu0 17
      %2713 = vperm.xlu0 %2712, %v117
      %v2714 = vpop.permute.xlu0 %2713
      %2716 = vset.pattern.permute.xlu0 17
      %2717 = vperm.xlu0 %2716, %v118
      %v2718 = vpop.permute.xlu0 %2717
      %2720 = vset.pattern.permute.xlu0 17
      %2721 = vperm.xlu0 %2720, %v119
      %v2722 = vpop.permute.xlu0 %2721
      %2724 = vset.pattern.permute.xlu0 17
      %2725 = vperm.xlu0 %2724, %v120
      %v2726 = vpop.permute.xlu0 %2725
      %2728 = vset.pattern.permute.xlu0 17
      %2729 = vperm.xlu0 %2728, %v121
      %v2730 = vpop.permute.xlu0 %2729
      %2732 = vset.pattern.permute.xlu0 17
      %2733 = vperm.xlu0 %2732, %v122
      %v2734 = vpop.permute.xlu0 %2733
      %2736 = vset.pattern.permute.xlu0 17
      %2737 = vperm.xlu0 %2736, %v123
      %v2738 = vpop.permute.xlu0 %2737
      %v2740 = vsel %vm2644, %v2678, %v2612
      %v2741 = vsel %vm2645, %v2678, %v2613
      %v2742 = vsel %vm2646, %v2682, %v2614
      %v2743 = vsel %vm2647, %v2682, %v2615
      %v2744 = vsel %vm2648, %v2686, %v2616
      %v2745 = vsel %vm2649, %v2686, %v2617
      %v2746 = vsel %vm2650, %v2690, %v2618
      %v2747 = vsel %vm2651, %v2690, %v2619
      %v2748 = vsel %vm2652, %v2694, %v2620
      %v2749 = vsel %vm2653, %v2694, %v2621
      %v2750 = vsel %vm2654, %v2698, %v2622
      %v2751 = vsel %vm2655, %v2698, %v2623
      %v2752 = vsel %vm2656, %v2702, %v2624
      %v2753 = vsel %vm2657, %v2702, %v2625
      %v2754 = vsel %vm2658, %v2706, %v2626
      %v2755 = vsel %vm2659, %v2706, %v2627
      %v2756 = vsel %vm2660, %v2710, %v2628
      %v2757 = vsel %vm2661, %v2710, %v2629
      %v2758 = vsel %vm2662, %v2714, %v2630
      %v2759 = vsel %vm2663, %v2714, %v2631
      %v2760 = vsel %vm2664, %v2718, %v2632
      %v2761 = vsel %vm2665, %v2718, %v2633
      %v2762 = vsel %vm2666, %v2722, %v2634
      %v2763 = vsel %vm2667, %v2722, %v2635
      %v2764 = vsel %vm2668, %v2726, %v2636
      %v2765 = vsel %vm2669, %v2726, %v2637
      %v2766 = vsel %vm2670, %v2730, %v2638
      %v2767 = vsel %vm2671, %v2730, %v2639
      %v2768 = vsel %vm2672, %v2734, %v2640
      %v2769 = vsel %vm2673, %v2734, %v2641
      %v2770 = vsel %vm2674, %v2738, %v2642
      %v2771 = vsel %vm2675, %v2738, %v2643
      %vm2772 = vcmp.eq.s32.totalorder %v2484, 256
      %vm2773 = vcmp.eq.s32.totalorder %v2485, 256
      %vm2774 = vcmp.eq.s32.totalorder %v2486, 256
      %vm2775 = vcmp.eq.s32.totalorder %v2487, 256
      %vm2776 = vcmp.eq.s32.totalorder %v2488, 256
      %vm2777 = vcmp.eq.s32.totalorder %v2489, 256
      %vm2778 = vcmp.eq.s32.totalorder %v2490, 256
      %vm2779 = vcmp.eq.s32.totalorder %v2491, 256
      %vm2780 = vcmp.eq.s32.totalorder %v2492, 256
      %vm2781 = vcmp.eq.s32.totalorder %v2493, 256
      %vm2782 = vcmp.eq.s32.totalorder %v2494, 256
      %vm2783 = vcmp.eq.s32.totalorder %v2495, 256
      %vm2784 = vcmp.eq.s32.totalorder %v2496, 256
      %vm2785 = vcmp.eq.s32.totalorder %v2497, 256
      %vm2786 = vcmp.eq.s32.totalorder %v2498, 256
      %vm2787 = vcmp.eq.s32.totalorder %v2499, 256
      %vm2788 = vcmp.eq.s32.totalorder %v2500, 256
      %vm2789 = vcmp.eq.s32.totalorder %v2501, 256
      %vm2790 = vcmp.eq.s32.totalorder %v2502, 256
      %vm2791 = vcmp.eq.s32.totalorder %v2503, 256
      %vm2792 = vcmp.eq.s32.totalorder %v2504, 256
      %vm2793 = vcmp.eq.s32.totalorder %v2505, 256
      %vm2794 = vcmp.eq.s32.totalorder %v2506, 256
      %vm2795 = vcmp.eq.s32.totalorder %v2507, 256
      %vm2796 = vcmp.eq.s32.totalorder %v2508, 256
      %vm2797 = vcmp.eq.s32.totalorder %v2509, 256
      %vm2798 = vcmp.eq.s32.totalorder %v2510, 256
      %vm2799 = vcmp.eq.s32.totalorder %v2511, 256
      %vm2800 = vcmp.eq.s32.totalorder %v2512, 256
      %vm2801 = vcmp.eq.s32.totalorder %v2513, 256
      %vm2802 = vcmp.eq.s32.totalorder %v2514, 256
      %vm2803 = vcmp.eq.s32.totalorder %v2515, 256
      %2804 = vset.pattern.permute.xlu0 18
      %2805 = vperm.xlu0 %2804, %v108
      %v2806 = vpop.permute.xlu0 %2805
      %2808 = vset.pattern.permute.xlu0 18
      %2809 = vperm.xlu0 %2808, %v109
      %v2810 = vpop.permute.xlu0 %2809
      %2812 = vset.pattern.permute.xlu0 18
      %2813 = vperm.xlu0 %2812, %v110
      %v2814 = vpop.permute.xlu0 %2813
      %2816 = vset.pattern.permute.xlu0 18
      %2817 = vperm.xlu0 %2816, %v111
      %v2818 = vpop.permute.xlu0 %2817
      %2820 = vset.pattern.permute.xlu0 18
      %2821 = vperm.xlu0 %2820, %v112
      %v2822 = vpop.permute.xlu0 %2821
      %2824 = vset.pattern.permute.xlu0 18
      %2825 = vperm.xlu0 %2824, %v113
      %v2826 = vpop.permute.xlu0 %2825
      %2828 = vset.pattern.permute.xlu0 18
      %2829 = vperm.xlu0 %2828, %v114
      %v2830 = vpop.permute.xlu0 %2829
      %2832 = vset.pattern.permute.xlu0 18
      %2833 = vperm.xlu0 %2832, %v115
      %v2834 = vpop.permute.xlu0 %2833
      %2836 = vset.pattern.permute.xlu0 18
      %2837 = vperm.xlu0 %2836, %v116
      %v2838 = vpop.permute.xlu0 %2837
      %2840 = vset.pattern.permute.xlu0 18
      %2841 = vperm.xlu0 %2840, %v117
      %v2842 = vpop.permute.xlu0 %2841
      %2844 = vset.pattern.permute.xlu0 18
      %2845 = vperm.xlu0 %2844, %v118
      %v2846 = vpop.permute.xlu0 %2845
      %2848 = vset.pattern.permute.xlu0 18
      %2849 = vperm.xlu0 %2848, %v119
      %v2850 = vpop.permute.xlu0 %2849
      %2852 = vset.pattern.permute.xlu0 18
      %2853 = vperm.xlu0 %2852, %v120
      %v2854 = vpop.permute.xlu0 %2853
      %2856 = vset.pattern.permute.xlu0 18
      %2857 = vperm.xlu0 %2856, %v121
      %v2858 = vpop.permute.xlu0 %2857
      %2860 = vset.pattern.permute.xlu0 18
      %2861 = vperm.xlu0 %2860, %v122
      %v2862 = vpop.permute.xlu0 %2861
      %2864 = vset.pattern.permute.xlu0 18
      %2865 = vperm.xlu0 %2864, %v123
      %v2866 = vpop.permute.xlu0 %2865
      %v2868 = vsel %vm2772, %v2806, %v2740
      %v2869 = vsel %vm2773, %v2806, %v2741
      %v2870 = vsel %vm2774, %v2810, %v2742
      %v2871 = vsel %vm2775, %v2810, %v2743
      %v2872 = vsel %vm2776, %v2814, %v2744
      %v2873 = vsel %vm2777, %v2814, %v2745
      %v2874 = vsel %vm2778, %v2818, %v2746
      %v2875 = vsel %vm2779, %v2818, %v2747
      %v2876 = vsel %vm2780, %v2822, %v2748
      %v2877 = vsel %vm2781, %v2822, %v2749
      %v2878 = vsel %vm2782, %v2826, %v2750
      %v2879 = vsel %vm2783, %v2826, %v2751
      %v2880 = vsel %vm2784, %v2830, %v2752
      %v2881 = vsel %vm2785, %v2830, %v2753
      %v2882 = vsel %vm2786, %v2834, %v2754
      %v2883 = vsel %vm2787, %v2834, %v2755
      %v2884 = vsel %vm2788, %v2838, %v2756
      %v2885 = vsel %vm2789, %v2838, %v2757
      %v2886 = vsel %vm2790, %v2842, %v2758
      %v2887 = vsel %vm2791, %v2842, %v2759
      %v2888 = vsel %vm2792, %v2846, %v2760
      %v2889 = vsel %vm2793, %v2846, %v2761
      %v2890 = vsel %vm2794, %v2850, %v2762
      %v2891 = vsel %vm2795, %v2850, %v2763
      %v2892 = vsel %vm2796, %v2854, %v2764
      %v2893 = vsel %vm2797, %v2854, %v2765
      %v2894 = vsel %vm2798, %v2858, %v2766
      %v2895 = vsel %vm2799, %v2858, %v2767
      %v2896 = vsel %vm2800, %v2862, %v2768
      %v2897 = vsel %vm2801, %v2862, %v2769
      %v2898 = vsel %vm2802, %v2866, %v2770
      %v2899 = vsel %vm2803, %v2866, %v2771
      %vm2900 = vcmp.eq.s32.totalorder %v2484, 384
      %vm2901 = vcmp.eq.s32.totalorder %v2485, 384
      %vm2902 = vcmp.eq.s32.totalorder %v2486, 384
      %vm2903 = vcmp.eq.s32.totalorder %v2487, 384
      %vm2904 = vcmp.eq.s32.totalorder %v2488, 384
      %vm2905 = vcmp.eq.s32.totalorder %v2489, 384
      %vm2906 = vcmp.eq.s32.totalorder %v2490, 384
      %vm2907 = vcmp.eq.s32.totalorder %v2491, 384
      %vm2908 = vcmp.eq.s32.totalorder %v2492, 384
      %vm2909 = vcmp.eq.s32.totalorder %v2493, 384
      %vm2910 = vcmp.eq.s32.totalorder %v2494, 384
      %vm2911 = vcmp.eq.s32.totalorder %v2495, 384
      %vm2912 = vcmp.eq.s32.totalorder %v2496, 384
      %vm2913 = vcmp.eq.s32.totalorder %v2497, 384
      %vm2914 = vcmp.eq.s32.totalorder %v2498, 384
      %vm2915 = vcmp.eq.s32.totalorder %v2499, 384
      %vm2916 = vcmp.eq.s32.totalorder %v2500, 384
      %vm2917 = vcmp.eq.s32.totalorder %v2501, 384
      %vm2918 = vcmp.eq.s32.totalorder %v2502, 384
      %vm2919 = vcmp.eq.s32.totalorder %v2503, 384
      %vm2920 = vcmp.eq.s32.totalorder %v2504, 384
      %vm2921 = vcmp.eq.s32.totalorder %v2505, 384
      %vm2922 = vcmp.eq.s32.totalorder %v2506, 384
      %vm2923 = vcmp.eq.s32.totalorder %v2507, 384
      %vm2924 = vcmp.eq.s32.totalorder %v2508, 384
      %vm2925 = vcmp.eq.s32.totalorder %v2509, 384
      %vm2926 = vcmp.eq.s32.totalorder %v2510, 384
      %vm2927 = vcmp.eq.s32.totalorder %v2511, 384
      %vm2928 = vcmp.eq.s32.totalorder %v2512, 384
      %vm2929 = vcmp.eq.s32.totalorder %v2513, 384
      %vm2930 = vcmp.eq.s32.totalorder %v2514, 384
      %vm2931 = vcmp.eq.s32.totalorder %v2515, 384
      %2932 = vset.pattern.permute.xlu0 19
      %2933 = vperm.xlu0 %2932, %v108
      %v2934 = vpop.permute.xlu0 %2933
      %2936 = vset.pattern.permute.xlu0 19
      %2937 = vperm.xlu0 %2936, %v109
      %v2938 = vpop.permute.xlu0 %2937
      %2940 = vset.pattern.permute.xlu0 19
      %2941 = vperm.xlu0 %2940, %v110
      %v2942 = vpop.permute.xlu0 %2941
      %2944 = vset.pattern.permute.xlu0 19
      %2945 = vperm.xlu0 %2944, %v111
      %v2946 = vpop.permute.xlu0 %2945
      %2948 = vset.pattern.permute.xlu0 19
      %2949 = vperm.xlu0 %2948, %v112
      %v2950 = vpop.permute.xlu0 %2949
      %2952 = vset.pattern.permute.xlu0 19
      %2953 = vperm.xlu0 %2952, %v113
      %v2954 = vpop.permute.xlu0 %2953
      %2956 = vset.pattern.permute.xlu0 19
      %2957 = vperm.xlu0 %2956, %v114
      %v2958 = vpop.permute.xlu0 %2957
      %2960 = vset.pattern.permute.xlu0 19
      %2961 = vperm.xlu0 %2960, %v115
      %v2962 = vpop.permute.xlu0 %2961
      %2964 = vset.pattern.permute.xlu0 19
      %2965 = vperm.xlu0 %2964, %v116
      %v2966 = vpop.permute.xlu0 %2965
      %2968 = vset.pattern.permute.xlu0 19
      %2969 = vperm.xlu0 %2968, %v117
      %v2970 = vpop.permute.xlu0 %2969
      %2972 = vset.pattern.permute.xlu0 19
      %2973 = vperm.xlu0 %2972, %v118
      %v2974 = vpop.permute.xlu0 %2973
      %2976 = vset.pattern.permute.xlu0 19
      %2977 = vperm.xlu0 %2976, %v119
      %v2978 = vpop.permute.xlu0 %2977
      %2980 = vset.pattern.permute.xlu0 19
      %2981 = vperm.xlu0 %2980, %v120
      %v2982 = vpop.permute.xlu0 %2981
      %2984 = vset.pattern.permute.xlu0 19
      %2985 = vperm.xlu0 %2984, %v121
      %v2986 = vpop.permute.xlu0 %2985
      %2988 = vset.pattern.permute.xlu0 19
      %2989 = vperm.xlu0 %2988, %v122
      %v2990 = vpop.permute.xlu0 %2989
      %2992 = vset.pattern.permute.xlu0 19
      %2993 = vperm.xlu0 %2992, %v123
      %v2994 = vpop.permute.xlu0 %2993
      %v2996 = vsel %vm2900, %v2934, %v2868
      %v2997 = vsel %vm2901, %v2934, %v2869
      %v2998 = vsel %vm2902, %v2938, %v2870
      %v2999 = vsel %vm2903, %v2938, %v2871
      %v3000 = vsel %vm2904, %v2942, %v2872
      %v3001 = vsel %vm2905, %v2942, %v2873
      %v3002 = vsel %vm2906, %v2946, %v2874
      %v3003 = vsel %vm2907, %v2946, %v2875
      %v3004 = vsel %vm2908, %v2950, %v2876
      %v3005 = vsel %vm2909, %v2950, %v2877
      %v3006 = vsel %vm2910, %v2954, %v2878
      %v3007 = vsel %vm2911, %v2954, %v2879
      %v3008 = vsel %vm2912, %v2958, %v2880
      %v3009 = vsel %vm2913, %v2958, %v2881
      %v3010 = vsel %vm2914, %v2962, %v2882
      %v3011 = vsel %vm2915, %v2962, %v2883
      %v3012 = vsel %vm2916, %v2966, %v2884
      %v3013 = vsel %vm2917, %v2966, %v2885
      %v3014 = vsel %vm2918, %v2970, %v2886
      %v3015 = vsel %vm2919, %v2970, %v2887
      %v3016 = vsel %vm2920, %v2974, %v2888
      %v3017 = vsel %vm2921, %v2974, %v2889
      %v3018 = vsel %vm2922, %v2978, %v2890
      %v3019 = vsel %vm2923, %v2978, %v2891
      %v3020 = vsel %vm2924, %v2982, %v2892
      %v3021 = vsel %vm2925, %v2982, %v2893
      %v3022 = vsel %vm2926, %v2986, %v2894
      %v3023 = vsel %vm2927, %v2986, %v2895
      %v3024 = vsel %vm2928, %v2990, %v2896
      %v3025 = vsel %vm2929, %v2990, %v2897
      %v3026 = vsel %vm2930, %v2994, %v2898
      %v3027 = vsel %vm2931, %v2994, %v2899
      %v3028 = vadd.f32 %v2444, %v2996
      %v3029 = vadd.f32 %v2445, %v2997
      %v3030 = vadd.f32 %v2446, %v2998
      %v3031 = vadd.f32 %v2447, %v2999
      %v3032 = vadd.f32 %v2448, %v3000
      %v3033 = vadd.f32 %v2449, %v3001
      %v3034 = vadd.f32 %v2450, %v3002
      %v3035 = vadd.f32 %v2451, %v3003
      %v3036 = vadd.f32 %v2452, %v3004
      %v3037 = vadd.f32 %v2453, %v3005
      %v3038 = vadd.f32 %v2454, %v3006
      %v3039 = vadd.f32 %v2455, %v3007
      %v3040 = vadd.f32 %v2456, %v3008
      %v3041 = vadd.f32 %v2457, %v3009
      %v3042 = vadd.f32 %v2458, %v3010
      %v3043 = vadd.f32 %v2459, %v3011
      %v3044 = vadd.f32 %v2460, %v3012
      %v3045 = vadd.f32 %v2461, %v3013
      %v3046 = vadd.f32 %v2462, %v3014
      %v3047 = vadd.f32 %v2463, %v3015
      %v3048 = vadd.f32 %v2464, %v3016
      %v3049 = vadd.f32 %v2465, %v3017
      %v3050 = vadd.f32 %v2466, %v3018
      %v3051 = vadd.f32 %v2467, %v3019
      %v3052 = vadd.f32 %v2468, %v3020
      %v3053 = vadd.f32 %v2469, %v3021
      %v3054 = vadd.f32 %v2470, %v3022
      %v3055 = vadd.f32 %v2471, %v3023
      %v3056 = vadd.f32 %v2472, %v3024
      %v3057 = vadd.f32 %v2473, %v3025
      %v3058 = vadd.f32 %v2474, %v3026
      %v3059 = vadd.f32 %v2475, %v3027
      %v3060 = vlaneseq
      %v3061 = vshrl.u32 %v3060, 7
      %v3062 = vsub.s32 5, %v3061
      %v3063 = vrot.slane %v103, %v3062
      %v3064 = vlaneseq
      %v3065 = vshrl.u32 %v3064, 7
      %v3066 = vsub.s32 5, %v3065
      %v3067 = vrot.slane %v105, %v3066
      %v3068 = vsub.s32 %v3063, %v28
      %v3069 = vsub.s32 %v3067, %v28
      %v3070 = vsub.s32 %v3063, %v29
      %v3071 = vsub.s32 %v3067, %v29
      %v3072 = vsub.s32 %v3063, %v30
      %v3073 = vsub.s32 %v3067, %v30
      %v3074 = vsub.s32 %v3063, %v31
      %v3075 = vsub.s32 %v3067, %v31
      %v3076 = vsub.s32 %v3063, %v32
      %v3077 = vsub.s32 %v3067, %v32
      %v3078 = vsub.s32 %v3063, %v33
      %v3079 = vsub.s32 %v3067, %v33
      %v3080 = vsub.s32 %v3063, %v34
      %v3081 = vsub.s32 %v3067, %v34
      %v3082 = vsub.s32 %v3063, %v35
      %v3083 = vsub.s32 %v3067, %v35
      %v3084 = vsub.s32 %v3063, %v36
      %v3085 = vsub.s32 %v3067, %v36
      %v3086 = vsub.s32 %v3063, %v37
      %v3087 = vsub.s32 %v3067, %v37
      %v3088 = vsub.s32 %v3063, %v38
      %v3089 = vsub.s32 %v3067, %v38
      %v3090 = vsub.s32 %v3063, %v39
      %v3091 = vsub.s32 %v3067, %v39
      %v3092 = vsub.s32 %v3063, %v40
      %v3093 = vsub.s32 %v3067, %v40
      %v3094 = vsub.s32 %v3063, %v41
      %v3095 = vsub.s32 %v3067, %v41
      %v3096 = vsub.s32 %v3063, %v42
      %v3097 = vsub.s32 %v3067, %v42
      %v3098 = vsub.s32 %v3063, %v43
      %v3099 = vsub.s32 %v3067, %v43
      %vm3100 = vcmp.eq.s32.totalorder %v3068, 0
      %vm3101 = vcmp.eq.s32.totalorder %v3069, 0
      %vm3102 = vcmp.eq.s32.totalorder %v3070, 0
      %vm3103 = vcmp.eq.s32.totalorder %v3071, 0
      %vm3104 = vcmp.eq.s32.totalorder %v3072, 0
      %vm3105 = vcmp.eq.s32.totalorder %v3073, 0
      %vm3106 = vcmp.eq.s32.totalorder %v3074, 0
      %vm3107 = vcmp.eq.s32.totalorder %v3075, 0
      %vm3108 = vcmp.eq.s32.totalorder %v3076, 0
      %vm3109 = vcmp.eq.s32.totalorder %v3077, 0
      %vm3110 = vcmp.eq.s32.totalorder %v3078, 0
      %vm3111 = vcmp.eq.s32.totalorder %v3079, 0
      %vm3112 = vcmp.eq.s32.totalorder %v3080, 0
      %vm3113 = vcmp.eq.s32.totalorder %v3081, 0
      %vm3114 = vcmp.eq.s32.totalorder %v3082, 0
      %vm3115 = vcmp.eq.s32.totalorder %v3083, 0
      %vm3116 = vcmp.eq.s32.totalorder %v3084, 0
      %vm3117 = vcmp.eq.s32.totalorder %v3085, 0
      %vm3118 = vcmp.eq.s32.totalorder %v3086, 0
      %vm3119 = vcmp.eq.s32.totalorder %v3087, 0
      %vm3120 = vcmp.eq.s32.totalorder %v3088, 0
      %vm3121 = vcmp.eq.s32.totalorder %v3089, 0
      %vm3122 = vcmp.eq.s32.totalorder %v3090, 0
      %vm3123 = vcmp.eq.s32.totalorder %v3091, 0
      %vm3124 = vcmp.eq.s32.totalorder %v3092, 0
      %vm3125 = vcmp.eq.s32.totalorder %v3093, 0
      %vm3126 = vcmp.eq.s32.totalorder %v3094, 0
      %vm3127 = vcmp.eq.s32.totalorder %v3095, 0
      %vm3128 = vcmp.eq.s32.totalorder %v3096, 0
      %vm3129 = vcmp.eq.s32.totalorder %v3097, 0
      %vm3130 = vcmp.eq.s32.totalorder %v3098, 0
      %vm3131 = vcmp.eq.s32.totalorder %v3099, 0
      %3132 = vset.pattern.permute.xlu0 20
      %3133 = vperm.xlu0 %3132, %v108
      %v3134 = vpop.permute.xlu0 %3133
      %3136 = vset.pattern.permute.xlu0 20
      %3137 = vperm.xlu0 %3136, %v109
      %v3138 = vpop.permute.xlu0 %3137
      %3140 = vset.pattern.permute.xlu0 20
      %3141 = vperm.xlu0 %3140, %v110
      %v3142 = vpop.permute.xlu0 %3141
      %3144 = vset.pattern.permute.xlu0 20
      %3145 = vperm.xlu0 %3144, %v111
      %v3146 = vpop.permute.xlu0 %3145
      %3148 = vset.pattern.permute.xlu0 20
      %3149 = vperm.xlu0 %3148, %v112
      %v3150 = vpop.permute.xlu0 %3149
      %3152 = vset.pattern.permute.xlu0 20
      %3153 = vperm.xlu0 %3152, %v113
      %v3154 = vpop.permute.xlu0 %3153
      %3156 = vset.pattern.permute.xlu0 20
      %3157 = vperm.xlu0 %3156, %v114
      %v3158 = vpop.permute.xlu0 %3157
      %3160 = vset.pattern.permute.xlu0 20
      %3161 = vperm.xlu0 %3160, %v115
      %v3162 = vpop.permute.xlu0 %3161
      %3164 = vset.pattern.permute.xlu0 20
      %3165 = vperm.xlu0 %3164, %v116
      %v3166 = vpop.permute.xlu0 %3165
      %3168 = vset.pattern.permute.xlu0 20
      %3169 = vperm.xlu0 %3168, %v117
      %v3170 = vpop.permute.xlu0 %3169
      %3172 = vset.pattern.permute.xlu0 20
      %3173 = vperm.xlu0 %3172, %v118
      %v3174 = vpop.permute.xlu0 %3173
      %3176 = vset.pattern.permute.xlu0 20
      %3177 = vperm.xlu0 %3176, %v119
      %v3178 = vpop.permute.xlu0 %3177
      %3180 = vset.pattern.permute.xlu0 20
      %3181 = vperm.xlu0 %3180, %v120
      %v3182 = vpop.permute.xlu0 %3181
      %3184 = vset.pattern.permute.xlu0 20
      %3185 = vperm.xlu0 %3184, %v121
      %v3186 = vpop.permute.xlu0 %3185
      %3188 = vset.pattern.permute.xlu0 20
      %3189 = vperm.xlu0 %3188, %v122
      %v3190 = vpop.permute.xlu0 %3189
      %3192 = vset.pattern.permute.xlu0 20
      %3193 = vperm.xlu0 %3192, %v123
      %v3194 = vpop.permute.xlu0 %3193
      %v3196 = vsel %vm3100, %v3134, 0.0
      %v3197 = vsel %vm3101, %v3134, 0.0
      %v3198 = vsel %vm3102, %v3138, 0.0
      %v3199 = vsel %vm3103, %v3138, 0.0
      %v3200 = vsel %vm3104, %v3142, 0.0
      %v3201 = vsel %vm3105, %v3142, 0.0
      %v3202 = vsel %vm3106, %v3146, 0.0
      %v3203 = vsel %vm3107, %v3146, 0.0
      %v3204 = vsel %vm3108, %v3150, 0.0
      %v3205 = vsel %vm3109, %v3150, 0.0
      %v3206 = vsel %vm3110, %v3154, 0.0
      %v3207 = vsel %vm3111, %v3154, 0.0
      %v3208 = vsel %vm3112, %v3158, 0.0
      %v3209 = vsel %vm3113, %v3158, 0.0
      %v3210 = vsel %vm3114, %v3162, 0.0
      %v3211 = vsel %vm3115, %v3162, 0.0
      %v3212 = vsel %vm3116, %v3166, 0.0
      %v3213 = vsel %vm3117, %v3166, 0.0
      %v3214 = vsel %vm3118, %v3170, 0.0
      %v3215 = vsel %vm3119, %v3170, 0.0
      %v3216 = vsel %vm3120, %v3174, 0.0
      %v3217 = vsel %vm3121, %v3174, 0.0
      %v3218 = vsel %vm3122, %v3178, 0.0
      %v3219 = vsel %vm3123, %v3178, 0.0
      %v3220 = vsel %vm3124, %v3182, 0.0
      %v3221 = vsel %vm3125, %v3182, 0.0
      %v3222 = vsel %vm3126, %v3186, 0.0
      %v3223 = vsel %vm3127, %v3186, 0.0
      %v3224 = vsel %vm3128, %v3190, 0.0
      %v3225 = vsel %vm3129, %v3190, 0.0
      %v3226 = vsel %vm3130, %v3194, 0.0
      %v3227 = vsel %vm3131, %v3194, 0.0
      %vm3228 = vcmp.eq.s32.totalorder %v3068, 128
      %vm3229 = vcmp.eq.s32.totalorder %v3069, 128
      %vm3230 = vcmp.eq.s32.totalorder %v3070, 128
      %vm3231 = vcmp.eq.s32.totalorder %v3071, 128
      %vm3232 = vcmp.eq.s32.totalorder %v3072, 128
      %vm3233 = vcmp.eq.s32.totalorder %v3073, 128
      %vm3234 = vcmp.eq.s32.totalorder %v3074, 128
      %vm3235 = vcmp.eq.s32.totalorder %v3075, 128
      %vm3236 = vcmp.eq.s32.totalorder %v3076, 128
      %vm3237 = vcmp.eq.s32.totalorder %v3077, 128
      %vm3238 = vcmp.eq.s32.totalorder %v3078, 128
      %vm3239 = vcmp.eq.s32.totalorder %v3079, 128
      %vm3240 = vcmp.eq.s32.totalorder %v3080, 128
      %vm3241 = vcmp.eq.s32.totalorder %v3081, 128
      %vm3242 = vcmp.eq.s32.totalorder %v3082, 128
      %vm3243 = vcmp.eq.s32.totalorder %v3083, 128
      %vm3244 = vcmp.eq.s32.totalorder %v3084, 128
      %vm3245 = vcmp.eq.s32.totalorder %v3085, 128
      %vm3246 = vcmp.eq.s32.totalorder %v3086, 128
      %vm3247 = vcmp.eq.s32.totalorder %v3087, 128
      %vm3248 = vcmp.eq.s32.totalorder %v3088, 128
      %vm3249 = vcmp.eq.s32.totalorder %v3089, 128
      %vm3250 = vcmp.eq.s32.totalorder %v3090, 128
      %vm3251 = vcmp.eq.s32.totalorder %v3091, 128
      %vm3252 = vcmp.eq.s32.totalorder %v3092, 128
      %vm3253 = vcmp.eq.s32.totalorder %v3093, 128
      %vm3254 = vcmp.eq.s32.totalorder %v3094, 128
      %vm3255 = vcmp.eq.s32.totalorder %v3095, 128
      %vm3256 = vcmp.eq.s32.totalorder %v3096, 128
      %vm3257 = vcmp.eq.s32.totalorder %v3097, 128
      %vm3258 = vcmp.eq.s32.totalorder %v3098, 128
      %vm3259 = vcmp.eq.s32.totalorder %v3099, 128
      %3260 = vset.pattern.permute.xlu0 21
      %3261 = vperm.xlu0 %3260, %v108
      %v3262 = vpop.permute.xlu0 %3261
      %3264 = vset.pattern.permute.xlu0 21
      %3265 = vperm.xlu0 %3264, %v109
      %v3266 = vpop.permute.xlu0 %3265
      %3268 = vset.pattern.permute.xlu0 21
      %3269 = vperm.xlu0 %3268, %v110
      %v3270 = vpop.permute.xlu0 %3269
      %3272 = vset.pattern.permute.xlu0 21
      %3273 = vperm.xlu0 %3272, %v111
      %v3274 = vpop.permute.xlu0 %3273
      %3276 = vset.pattern.permute.xlu0 21
      %3277 = vperm.xlu0 %3276, %v112
      %v3278 = vpop.permute.xlu0 %3277
      %3280 = vset.pattern.permute.xlu0 21
      %3281 = vperm.xlu0 %3280, %v113
      %v3282 = vpop.permute.xlu0 %3281
      %3284 = vset.pattern.permute.xlu0 21
      %3285 = vperm.xlu0 %3284, %v114
      %v3286 = vpop.permute.xlu0 %3285
      %3288 = vset.pattern.permute.xlu0 21
      %3289 = vperm.xlu0 %3288, %v115
      %v3290 = vpop.permute.xlu0 %3289
      %3292 = vset.pattern.permute.xlu0 21
      %3293 = vperm.xlu0 %3292, %v116
      %v3294 = vpop.permute.xlu0 %3293
      %3296 = vset.pattern.permute.xlu0 21
      %3297 = vperm.xlu0 %3296, %v117
      %v3298 = vpop.permute.xlu0 %3297
      %3300 = vset.pattern.permute.xlu0 21
      %3301 = vperm.xlu0 %3300, %v118
      %v3302 = vpop.permute.xlu0 %3301
      %3304 = vset.pattern.permute.xlu0 21
      %3305 = vperm.xlu0 %3304, %v119
      %v3306 = vpop.permute.xlu0 %3305
      %3308 = vset.pattern.permute.xlu0 21
      %3309 = vperm.xlu0 %3308, %v120
      %v3310 = vpop.permute.xlu0 %3309
      %3312 = vset.pattern.permute.xlu0 21
      %3313 = vperm.xlu0 %3312, %v121
      %v3314 = vpop.permute.xlu0 %3313
      %3316 = vset.pattern.permute.xlu0 21
      %3317 = vperm.xlu0 %3316, %v122
      %v3318 = vpop.permute.xlu0 %3317
      %3320 = vset.pattern.permute.xlu0 21
      %3321 = vperm.xlu0 %3320, %v123
      %v3322 = vpop.permute.xlu0 %3321
      %v3324 = vsel %vm3228, %v3262, %v3196
      %v3325 = vsel %vm3229, %v3262, %v3197
      %v3326 = vsel %vm3230, %v3266, %v3198
      %v3327 = vsel %vm3231, %v3266, %v3199
      %v3328 = vsel %vm3232, %v3270, %v3200
      %v3329 = vsel %vm3233, %v3270, %v3201
      %v3330 = vsel %vm3234, %v3274, %v3202
      %v3331 = vsel %vm3235, %v3274, %v3203
      %v3332 = vsel %vm3236, %v3278, %v3204
      %v3333 = vsel %vm3237, %v3278, %v3205
      %v3334 = vsel %vm3238, %v3282, %v3206
      %v3335 = vsel %vm3239, %v3282, %v3207
      %v3336 = vsel %vm3240, %v3286, %v3208
      %v3337 = vsel %vm3241, %v3286, %v3209
      %v3338 = vsel %vm3242, %v3290, %v3210
      %v3339 = vsel %vm3243, %v3290, %v3211
      %v3340 = vsel %vm3244, %v3294, %v3212
      %v3341 = vsel %vm3245, %v3294, %v3213
      %v3342 = vsel %vm3246, %v3298, %v3214
      %v3343 = vsel %vm3247, %v3298, %v3215
      %v3344 = vsel %vm3248, %v3302, %v3216
      %v3345 = vsel %vm3249, %v3302, %v3217
      %v3346 = vsel %vm3250, %v3306, %v3218
      %v3347 = vsel %vm3251, %v3306, %v3219
      %v3348 = vsel %vm3252, %v3310, %v3220
      %v3349 = vsel %vm3253, %v3310, %v3221
      %v3350 = vsel %vm3254, %v3314, %v3222
      %v3351 = vsel %vm3255, %v3314, %v3223
      %v3352 = vsel %vm3256, %v3318, %v3224
      %v3353 = vsel %vm3257, %v3318, %v3225
      %v3354 = vsel %vm3258, %v3322, %v3226
      %v3355 = vsel %vm3259, %v3322, %v3227
      %vm3356 = vcmp.eq.s32.totalorder %v3068, 256
      %vm3357 = vcmp.eq.s32.totalorder %v3069, 256
      %vm3358 = vcmp.eq.s32.totalorder %v3070, 256
      %vm3359 = vcmp.eq.s32.totalorder %v3071, 256
      %vm3360 = vcmp.eq.s32.totalorder %v3072, 256
      %vm3361 = vcmp.eq.s32.totalorder %v3073, 256
      %vm3362 = vcmp.eq.s32.totalorder %v3074, 256
      %vm3363 = vcmp.eq.s32.totalorder %v3075, 256
      %vm3364 = vcmp.eq.s32.totalorder %v3076, 256
      %vm3365 = vcmp.eq.s32.totalorder %v3077, 256
      %vm3366 = vcmp.eq.s32.totalorder %v3078, 256
      %vm3367 = vcmp.eq.s32.totalorder %v3079, 256
      %vm3368 = vcmp.eq.s32.totalorder %v3080, 256
      %vm3369 = vcmp.eq.s32.totalorder %v3081, 256
      %vm3370 = vcmp.eq.s32.totalorder %v3082, 256
      %vm3371 = vcmp.eq.s32.totalorder %v3083, 256
      %vm3372 = vcmp.eq.s32.totalorder %v3084, 256
      %vm3373 = vcmp.eq.s32.totalorder %v3085, 256
      %vm3374 = vcmp.eq.s32.totalorder %v3086, 256
      %vm3375 = vcmp.eq.s32.totalorder %v3087, 256
      %vm3376 = vcmp.eq.s32.totalorder %v3088, 256
      %vm3377 = vcmp.eq.s32.totalorder %v3089, 256
      %vm3378 = vcmp.eq.s32.totalorder %v3090, 256
      %vm3379 = vcmp.eq.s32.totalorder %v3091, 256
      %vm3380 = vcmp.eq.s32.totalorder %v3092, 256
      %vm3381 = vcmp.eq.s32.totalorder %v3093, 256
      %vm3382 = vcmp.eq.s32.totalorder %v3094, 256
      %vm3383 = vcmp.eq.s32.totalorder %v3095, 256
      %vm3384 = vcmp.eq.s32.totalorder %v3096, 256
      %vm3385 = vcmp.eq.s32.totalorder %v3097, 256
      %vm3386 = vcmp.eq.s32.totalorder %v3098, 256
      %vm3387 = vcmp.eq.s32.totalorder %v3099, 256
      %3388 = vset.pattern.permute.xlu0 22
      %3389 = vperm.xlu0 %3388, %v108
      %v3390 = vpop.permute.xlu0 %3389
      %3392 = vset.pattern.permute.xlu0 22
      %3393 = vperm.xlu0 %3392, %v109
      %v3394 = vpop.permute.xlu0 %3393
      %3396 = vset.pattern.permute.xlu0 22
      %3397 = vperm.xlu0 %3396, %v110
      %v3398 = vpop.permute.xlu0 %3397
      %3400 = vset.pattern.permute.xlu0 22
      %3401 = vperm.xlu0 %3400, %v111
      %v3402 = vpop.permute.xlu0 %3401
      %3404 = vset.pattern.permute.xlu0 22
      %3405 = vperm.xlu0 %3404, %v112
      %v3406 = vpop.permute.xlu0 %3405
      %3408 = vset.pattern.permute.xlu0 22
      %3409 = vperm.xlu0 %3408, %v113
      %v3410 = vpop.permute.xlu0 %3409
      %3412 = vset.pattern.permute.xlu0 22
      %3413 = vperm.xlu0 %3412, %v114
      %v3414 = vpop.permute.xlu0 %3413
      %3416 = vset.pattern.permute.xlu0 22
      %3417 = vperm.xlu0 %3416, %v115
      %v3418 = vpop.permute.xlu0 %3417
      %3420 = vset.pattern.permute.xlu0 22
      %3421 = vperm.xlu0 %3420, %v116
      %v3422 = vpop.permute.xlu0 %3421
      %3424 = vset.pattern.permute.xlu0 22
      %3425 = vperm.xlu0 %3424, %v117
      %v3426 = vpop.permute.xlu0 %3425
      %3428 = vset.pattern.permute.xlu0 22
      %3429 = vperm.xlu0 %3428, %v118
      %v3430 = vpop.permute.xlu0 %3429
      %3432 = vset.pattern.permute.xlu0 22
      %3433 = vperm.xlu0 %3432, %v119
      %v3434 = vpop.permute.xlu0 %3433
      %3436 = vset.pattern.permute.xlu0 22
      %3437 = vperm.xlu0 %3436, %v120
      %v3438 = vpop.permute.xlu0 %3437
      %3440 = vset.pattern.permute.xlu0 22
      %3441 = vperm.xlu0 %3440, %v121
      %v3442 = vpop.permute.xlu0 %3441
      %3444 = vset.pattern.permute.xlu0 22
      %3445 = vperm.xlu0 %3444, %v122
      %v3446 = vpop.permute.xlu0 %3445
      %3448 = vset.pattern.permute.xlu0 22
      %3449 = vperm.xlu0 %3448, %v123
      %v3450 = vpop.permute.xlu0 %3449
      %v3452 = vsel %vm3356, %v3390, %v3324
      %v3453 = vsel %vm3357, %v3390, %v3325
      %v3454 = vsel %vm3358, %v3394, %v3326
      %v3455 = vsel %vm3359, %v3394, %v3327
      %v3456 = vsel %vm3360, %v3398, %v3328
      %v3457 = vsel %vm3361, %v3398, %v3329
      %v3458 = vsel %vm3362, %v3402, %v3330
      %v3459 = vsel %vm3363, %v3402, %v3331
      %v3460 = vsel %vm3364, %v3406, %v3332
      %v3461 = vsel %vm3365, %v3406, %v3333
      %v3462 = vsel %vm3366, %v3410, %v3334
      %v3463 = vsel %vm3367, %v3410, %v3335
      %v3464 = vsel %vm3368, %v3414, %v3336
      %v3465 = vsel %vm3369, %v3414, %v3337
      %v3466 = vsel %vm3370, %v3418, %v3338
      %v3467 = vsel %vm3371, %v3418, %v3339
      %v3468 = vsel %vm3372, %v3422, %v3340
      %v3469 = vsel %vm3373, %v3422, %v3341
      %v3470 = vsel %vm3374, %v3426, %v3342
      %v3471 = vsel %vm3375, %v3426, %v3343
      %v3472 = vsel %vm3376, %v3430, %v3344
      %v3473 = vsel %vm3377, %v3430, %v3345
      %v3474 = vsel %vm3378, %v3434, %v3346
      %v3475 = vsel %vm3379, %v3434, %v3347
      %v3476 = vsel %vm3380, %v3438, %v3348
      %v3477 = vsel %vm3381, %v3438, %v3349
      %v3478 = vsel %vm3382, %v3442, %v3350
      %v3479 = vsel %vm3383, %v3442, %v3351
      %v3480 = vsel %vm3384, %v3446, %v3352
      %v3481 = vsel %vm3385, %v3446, %v3353
      %v3482 = vsel %vm3386, %v3450, %v3354
      %v3483 = vsel %vm3387, %v3450, %v3355
      %vm3484 = vcmp.eq.s32.totalorder %v3068, 384
      %vm3485 = vcmp.eq.s32.totalorder %v3069, 384
      %vm3486 = vcmp.eq.s32.totalorder %v3070, 384
      %vm3487 = vcmp.eq.s32.totalorder %v3071, 384
      %vm3488 = vcmp.eq.s32.totalorder %v3072, 384
      %vm3489 = vcmp.eq.s32.totalorder %v3073, 384
      %vm3490 = vcmp.eq.s32.totalorder %v3074, 384
      %vm3491 = vcmp.eq.s32.totalorder %v3075, 384
      %vm3492 = vcmp.eq.s32.totalorder %v3076, 384
      %vm3493 = vcmp.eq.s32.totalorder %v3077, 384
      %vm3494 = vcmp.eq.s32.totalorder %v3078, 384
      %vm3495 = vcmp.eq.s32.totalorder %v3079, 384
      %vm3496 = vcmp.eq.s32.totalorder %v3080, 384
      %vm3497 = vcmp.eq.s32.totalorder %v3081, 384
      %vm3498 = vcmp.eq.s32.totalorder %v3082, 384
      %vm3499 = vcmp.eq.s32.totalorder %v3083, 384
      %vm3500 = vcmp.eq.s32.totalorder %v3084, 384
      %vm3501 = vcmp.eq.s32.totalorder %v3085, 384
      %vm3502 = vcmp.eq.s32.totalorder %v3086, 384
      %vm3503 = vcmp.eq.s32.totalorder %v3087, 384
      %vm3504 = vcmp.eq.s32.totalorder %v3088, 384
      %vm3505 = vcmp.eq.s32.totalorder %v3089, 384
      %vm3506 = vcmp.eq.s32.totalorder %v3090, 384
      %vm3507 = vcmp.eq.s32.totalorder %v3091, 384
      %vm3508 = vcmp.eq.s32.totalorder %v3092, 384
      %vm3509 = vcmp.eq.s32.totalorder %v3093, 384
      %vm3510 = vcmp.eq.s32.totalorder %v3094, 384
      %vm3511 = vcmp.eq.s32.totalorder %v3095, 384
      %vm3512 = vcmp.eq.s32.totalorder %v3096, 384
      %vm3513 = vcmp.eq.s32.totalorder %v3097, 384
      %vm3514 = vcmp.eq.s32.totalorder %v3098, 384
      %vm3515 = vcmp.eq.s32.totalorder %v3099, 384
      %3516 = vset.pattern.permute.xlu0 23
      %3517 = vperm.xlu0 %3516, %v108
      %v3518 = vpop.permute.xlu0 %3517
      %3520 = vset.pattern.permute.xlu0 23
      %3521 = vperm.xlu0 %3520, %v109
      %v3522 = vpop.permute.xlu0 %3521
      %3524 = vset.pattern.permute.xlu0 23
      %3525 = vperm.xlu0 %3524, %v110
      %v3526 = vpop.permute.xlu0 %3525
      %3528 = vset.pattern.permute.xlu0 23
      %3529 = vperm.xlu0 %3528, %v111
      %v3530 = vpop.permute.xlu0 %3529
      %3532 = vset.pattern.permute.xlu0 23
      %3533 = vperm.xlu0 %3532, %v112
      %v3534 = vpop.permute.xlu0 %3533
      %3536 = vset.pattern.permute.xlu0 23
      %3537 = vperm.xlu0 %3536, %v113
      %v3538 = vpop.permute.xlu0 %3537
      %3540 = vset.pattern.permute.xlu0 23
      %3541 = vperm.xlu0 %3540, %v114
      %v3542 = vpop.permute.xlu0 %3541
      %3544 = vset.pattern.permute.xlu0 23
      %3545 = vperm.xlu0 %3544, %v115
      %v3546 = vpop.permute.xlu0 %3545
      %3548 = vset.pattern.permute.xlu0 23
      %3549 = vperm.xlu0 %3548, %v116
      %v3550 = vpop.permute.xlu0 %3549
      %3552 = vset.pattern.permute.xlu0 23
      %3553 = vperm.xlu0 %3552, %v117
      %v3554 = vpop.permute.xlu0 %3553
      %3556 = vset.pattern.permute.xlu0 23
      %3557 = vperm.xlu0 %3556, %v118
      %v3558 = vpop.permute.xlu0 %3557
      %3560 = vset.pattern.permute.xlu0 23
      %3561 = vperm.xlu0 %3560, %v119
      %v3562 = vpop.permute.xlu0 %3561
      %3564 = vset.pattern.permute.xlu0 23
      %3565 = vperm.xlu0 %3564, %v120
      %v3566 = vpop.permute.xlu0 %3565
      %3568 = vset.pattern.permute.xlu0 23
      %3569 = vperm.xlu0 %3568, %v121
      %v3570 = vpop.permute.xlu0 %3569
      %3572 = vset.pattern.permute.xlu0 23
      %3573 = vperm.xlu0 %3572, %v122
      %v3574 = vpop.permute.xlu0 %3573
      %3576 = vset.pattern.permute.xlu0 23
      %3577 = vperm.xlu0 %3576, %v123
      %v3578 = vpop.permute.xlu0 %3577
      %v3580 = vsel %vm3484, %v3518, %v3452
      %v3581 = vsel %vm3485, %v3518, %v3453
      %v3582 = vsel %vm3486, %v3522, %v3454
      %v3583 = vsel %vm3487, %v3522, %v3455
      %v3584 = vsel %vm3488, %v3526, %v3456
      %v3585 = vsel %vm3489, %v3526, %v3457
      %v3586 = vsel %vm3490, %v3530, %v3458
      %v3587 = vsel %vm3491, %v3530, %v3459
      %v3588 = vsel %vm3492, %v3534, %v3460
      %v3589 = vsel %vm3493, %v3534, %v3461
      %v3590 = vsel %vm3494, %v3538, %v3462
      %v3591 = vsel %vm3495, %v3538, %v3463
      %v3592 = vsel %vm3496, %v3542, %v3464
      %v3593 = vsel %vm3497, %v3542, %v3465
      %v3594 = vsel %vm3498, %v3546, %v3466
      %v3595 = vsel %vm3499, %v3546, %v3467
      %v3596 = vsel %vm3500, %v3550, %v3468
      %v3597 = vsel %vm3501, %v3550, %v3469
      %v3598 = vsel %vm3502, %v3554, %v3470
      %v3599 = vsel %vm3503, %v3554, %v3471
      %v3600 = vsel %vm3504, %v3558, %v3472
      %v3601 = vsel %vm3505, %v3558, %v3473
      %v3602 = vsel %vm3506, %v3562, %v3474
      %v3603 = vsel %vm3507, %v3562, %v3475
      %v3604 = vsel %vm3508, %v3566, %v3476
      %v3605 = vsel %vm3509, %v3566, %v3477
      %v3606 = vsel %vm3510, %v3570, %v3478
      %v3607 = vsel %vm3511, %v3570, %v3479
      %v3608 = vsel %vm3512, %v3574, %v3480
      %v3609 = vsel %vm3513, %v3574, %v3481
      %v3610 = vsel %vm3514, %v3578, %v3482
      %v3611 = vsel %vm3515, %v3578, %v3483
      %v3612 = vadd.f32 %v3028, %v3580
      %v3613 = vadd.f32 %v3029, %v3581
      %v3614 = vadd.f32 %v3030, %v3582
      %v3615 = vadd.f32 %v3031, %v3583
      %v3616 = vadd.f32 %v3032, %v3584
      %v3617 = vadd.f32 %v3033, %v3585
      %v3618 = vadd.f32 %v3034, %v3586
      %v3619 = vadd.f32 %v3035, %v3587
      %v3620 = vadd.f32 %v3036, %v3588
      %v3621 = vadd.f32 %v3037, %v3589
      %v3622 = vadd.f32 %v3038, %v3590
      %v3623 = vadd.f32 %v3039, %v3591
      %v3624 = vadd.f32 %v3040, %v3592
      %v3625 = vadd.f32 %v3041, %v3593
      %v3626 = vadd.f32 %v3042, %v3594
      %v3627 = vadd.f32 %v3043, %v3595
      %v3628 = vadd.f32 %v3044, %v3596
      %v3629 = vadd.f32 %v3045, %v3597
      %v3630 = vadd.f32 %v3046, %v3598
      %v3631 = vadd.f32 %v3047, %v3599
      %v3632 = vadd.f32 %v3048, %v3600
      %v3633 = vadd.f32 %v3049, %v3601
      %v3634 = vadd.f32 %v3050, %v3602
      %v3635 = vadd.f32 %v3051, %v3603
      %v3636 = vadd.f32 %v3052, %v3604
      %v3637 = vadd.f32 %v3053, %v3605
      %v3638 = vadd.f32 %v3054, %v3606
      %v3639 = vadd.f32 %v3055, %v3607
      %v3640 = vadd.f32 %v3056, %v3608
      %v3641 = vadd.f32 %v3057, %v3609
      %v3642 = vadd.f32 %v3058, %v3610
      %v3643 = vadd.f32 %v3059, %v3611
      %v3644 = vlaneseq
      %v3645 = vshrl.u32 %v3644, 7
      %v3646 = vsub.s32 6, %v3645
      %v3647 = vrot.slane %v103, %v3646
      %v3648 = vlaneseq
      %v3649 = vshrl.u32 %v3648, 7
      %v3650 = vsub.s32 6, %v3649
      %v3651 = vrot.slane %v105, %v3650
      %v3652 = vsub.s32 %v3647, %v28
      %v3653 = vsub.s32 %v3651, %v28
      %v3654 = vsub.s32 %v3647, %v29
      %v3655 = vsub.s32 %v3651, %v29
      %v3656 = vsub.s32 %v3647, %v30
      %v3657 = vsub.s32 %v3651, %v30
      %v3658 = vsub.s32 %v3647, %v31
      %v3659 = vsub.s32 %v3651, %v31
      %v3660 = vsub.s32 %v3647, %v32
      %v3661 = vsub.s32 %v3651, %v32
      %v3662 = vsub.s32 %v3647, %v33
      %v3663 = vsub.s32 %v3651, %v33
      %v3664 = vsub.s32 %v3647, %v34
      %v3665 = vsub.s32 %v3651, %v34
      %v3666 = vsub.s32 %v3647, %v35
      %v3667 = vsub.s32 %v3651, %v35
      %v3668 = vsub.s32 %v3647, %v36
      %v3669 = vsub.s32 %v3651, %v36
      %v3670 = vsub.s32 %v3647, %v37
      %v3671 = vsub.s32 %v3651, %v37
      %v3672 = vsub.s32 %v3647, %v38
      %v3673 = vsub.s32 %v3651, %v38
      %v3674 = vsub.s32 %v3647, %v39
      %v3675 = vsub.s32 %v3651, %v39
      %v3676 = vsub.s32 %v3647, %v40
      %v3677 = vsub.s32 %v3651, %v40
      %v3678 = vsub.s32 %v3647, %v41
      %v3679 = vsub.s32 %v3651, %v41
      %v3680 = vsub.s32 %v3647, %v42
      %v3681 = vsub.s32 %v3651, %v42
      %v3682 = vsub.s32 %v3647, %v43
      %v3683 = vsub.s32 %v3651, %v43
      %vm3684 = vcmp.eq.s32.totalorder %v3652, 0
      %vm3685 = vcmp.eq.s32.totalorder %v3653, 0
      %vm3686 = vcmp.eq.s32.totalorder %v3654, 0
      %vm3687 = vcmp.eq.s32.totalorder %v3655, 0
      %vm3688 = vcmp.eq.s32.totalorder %v3656, 0
      %vm3689 = vcmp.eq.s32.totalorder %v3657, 0
      %vm3690 = vcmp.eq.s32.totalorder %v3658, 0
      %vm3691 = vcmp.eq.s32.totalorder %v3659, 0
      %vm3692 = vcmp.eq.s32.totalorder %v3660, 0
      %vm3693 = vcmp.eq.s32.totalorder %v3661, 0
      %vm3694 = vcmp.eq.s32.totalorder %v3662, 0
      %vm3695 = vcmp.eq.s32.totalorder %v3663, 0
      %vm3696 = vcmp.eq.s32.totalorder %v3664, 0
      %vm3697 = vcmp.eq.s32.totalorder %v3665, 0
      %vm3698 = vcmp.eq.s32.totalorder %v3666, 0
      %vm3699 = vcmp.eq.s32.totalorder %v3667, 0
      %vm3700 = vcmp.eq.s32.totalorder %v3668, 0
      %vm3701 = vcmp.eq.s32.totalorder %v3669, 0
      %vm3702 = vcmp.eq.s32.totalorder %v3670, 0
      %vm3703 = vcmp.eq.s32.totalorder %v3671, 0
      %vm3704 = vcmp.eq.s32.totalorder %v3672, 0
      %vm3705 = vcmp.eq.s32.totalorder %v3673, 0
      %vm3706 = vcmp.eq.s32.totalorder %v3674, 0
      %vm3707 = vcmp.eq.s32.totalorder %v3675, 0
      %vm3708 = vcmp.eq.s32.totalorder %v3676, 0
      %vm3709 = vcmp.eq.s32.totalorder %v3677, 0
      %vm3710 = vcmp.eq.s32.totalorder %v3678, 0
      %vm3711 = vcmp.eq.s32.totalorder %v3679, 0
      %vm3712 = vcmp.eq.s32.totalorder %v3680, 0
      %vm3713 = vcmp.eq.s32.totalorder %v3681, 0
      %vm3714 = vcmp.eq.s32.totalorder %v3682, 0
      %vm3715 = vcmp.eq.s32.totalorder %v3683, 0
      %3716 = vset.pattern.permute.xlu0 24
      %3717 = vperm.xlu0 %3716, %v108
      %v3718 = vpop.permute.xlu0 %3717
      %3720 = vset.pattern.permute.xlu0 24
      %3721 = vperm.xlu0 %3720, %v109
      %v3722 = vpop.permute.xlu0 %3721
      %3724 = vset.pattern.permute.xlu0 24
      %3725 = vperm.xlu0 %3724, %v110
      %v3726 = vpop.permute.xlu0 %3725
      %3728 = vset.pattern.permute.xlu0 24
      %3729 = vperm.xlu0 %3728, %v111
      %v3730 = vpop.permute.xlu0 %3729
      %3732 = vset.pattern.permute.xlu0 24
      %3733 = vperm.xlu0 %3732, %v112
      %v3734 = vpop.permute.xlu0 %3733
      %3736 = vset.pattern.permute.xlu0 24
      %3737 = vperm.xlu0 %3736, %v113
      %v3738 = vpop.permute.xlu0 %3737
      %3740 = vset.pattern.permute.xlu0 24
      %3741 = vperm.xlu0 %3740, %v114
      %v3742 = vpop.permute.xlu0 %3741
      %3744 = vset.pattern.permute.xlu0 24
      %3745 = vperm.xlu0 %3744, %v115
      %v3746 = vpop.permute.xlu0 %3745
      %3748 = vset.pattern.permute.xlu0 24
      %3749 = vperm.xlu0 %3748, %v116
      %v3750 = vpop.permute.xlu0 %3749
      %3752 = vset.pattern.permute.xlu0 24
      %3753 = vperm.xlu0 %3752, %v117
      %v3754 = vpop.permute.xlu0 %3753
      %3756 = vset.pattern.permute.xlu0 24
      %3757 = vperm.xlu0 %3756, %v118
      %v3758 = vpop.permute.xlu0 %3757
      %3760 = vset.pattern.permute.xlu0 24
      %3761 = vperm.xlu0 %3760, %v119
      %v3762 = vpop.permute.xlu0 %3761
      %3764 = vset.pattern.permute.xlu0 24
      %3765 = vperm.xlu0 %3764, %v120
      %v3766 = vpop.permute.xlu0 %3765
      %3768 = vset.pattern.permute.xlu0 24
      %3769 = vperm.xlu0 %3768, %v121
      %v3770 = vpop.permute.xlu0 %3769
      %3772 = vset.pattern.permute.xlu0 24
      %3773 = vperm.xlu0 %3772, %v122
      %v3774 = vpop.permute.xlu0 %3773
      %3776 = vset.pattern.permute.xlu0 24
      %3777 = vperm.xlu0 %3776, %v123
      %v3778 = vpop.permute.xlu0 %3777
      %v3780 = vsel %vm3684, %v3718, 0.0
      %v3781 = vsel %vm3685, %v3718, 0.0
      %v3782 = vsel %vm3686, %v3722, 0.0
      %v3783 = vsel %vm3687, %v3722, 0.0
      %v3784 = vsel %vm3688, %v3726, 0.0
      %v3785 = vsel %vm3689, %v3726, 0.0
      %v3786 = vsel %vm3690, %v3730, 0.0
      %v3787 = vsel %vm3691, %v3730, 0.0
      %v3788 = vsel %vm3692, %v3734, 0.0
      %v3789 = vsel %vm3693, %v3734, 0.0
      %v3790 = vsel %vm3694, %v3738, 0.0
      %v3791 = vsel %vm3695, %v3738, 0.0
      %v3792 = vsel %vm3696, %v3742, 0.0
      %v3793 = vsel %vm3697, %v3742, 0.0
      %v3794 = vsel %vm3698, %v3746, 0.0
      %v3795 = vsel %vm3699, %v3746, 0.0
      %v3796 = vsel %vm3700, %v3750, 0.0
      %v3797 = vsel %vm3701, %v3750, 0.0
      %v3798 = vsel %vm3702, %v3754, 0.0
      %v3799 = vsel %vm3703, %v3754, 0.0
      %v3800 = vsel %vm3704, %v3758, 0.0
      %v3801 = vsel %vm3705, %v3758, 0.0
      %v3802 = vsel %vm3706, %v3762, 0.0
      %v3803 = vsel %vm3707, %v3762, 0.0
      %v3804 = vsel %vm3708, %v3766, 0.0
      %v3805 = vsel %vm3709, %v3766, 0.0
      %v3806 = vsel %vm3710, %v3770, 0.0
      %v3807 = vsel %vm3711, %v3770, 0.0
      %v3808 = vsel %vm3712, %v3774, 0.0
      %v3809 = vsel %vm3713, %v3774, 0.0
      %v3810 = vsel %vm3714, %v3778, 0.0
      %v3811 = vsel %vm3715, %v3778, 0.0
      %vm3812 = vcmp.eq.s32.totalorder %v3652, 128
      %vm3813 = vcmp.eq.s32.totalorder %v3653, 128
      %vm3814 = vcmp.eq.s32.totalorder %v3654, 128
      %vm3815 = vcmp.eq.s32.totalorder %v3655, 128
      %vm3816 = vcmp.eq.s32.totalorder %v3656, 128
      %vm3817 = vcmp.eq.s32.totalorder %v3657, 128
      %vm3818 = vcmp.eq.s32.totalorder %v3658, 128
      %vm3819 = vcmp.eq.s32.totalorder %v3659, 128
      %vm3820 = vcmp.eq.s32.totalorder %v3660, 128
      %vm3821 = vcmp.eq.s32.totalorder %v3661, 128
      %vm3822 = vcmp.eq.s32.totalorder %v3662, 128
      %vm3823 = vcmp.eq.s32.totalorder %v3663, 128
      %vm3824 = vcmp.eq.s32.totalorder %v3664, 128
      %vm3825 = vcmp.eq.s32.totalorder %v3665, 128
      %vm3826 = vcmp.eq.s32.totalorder %v3666, 128
      %vm3827 = vcmp.eq.s32.totalorder %v3667, 128
      %vm3828 = vcmp.eq.s32.totalorder %v3668, 128
      %vm3829 = vcmp.eq.s32.totalorder %v3669, 128
      %vm3830 = vcmp.eq.s32.totalorder %v3670, 128
      %vm3831 = vcmp.eq.s32.totalorder %v3671, 128
      %vm3832 = vcmp.eq.s32.totalorder %v3672, 128
      %vm3833 = vcmp.eq.s32.totalorder %v3673, 128
      %vm3834 = vcmp.eq.s32.totalorder %v3674, 128
      %vm3835 = vcmp.eq.s32.totalorder %v3675, 128
      %vm3836 = vcmp.eq.s32.totalorder %v3676, 128
      %vm3837 = vcmp.eq.s32.totalorder %v3677, 128
      %vm3838 = vcmp.eq.s32.totalorder %v3678, 128
      %vm3839 = vcmp.eq.s32.totalorder %v3679, 128
      %vm3840 = vcmp.eq.s32.totalorder %v3680, 128
      %vm3841 = vcmp.eq.s32.totalorder %v3681, 128
      %vm3842 = vcmp.eq.s32.totalorder %v3682, 128
      %vm3843 = vcmp.eq.s32.totalorder %v3683, 128
      %3844 = vset.pattern.permute.xlu0 25
      %3845 = vperm.xlu0 %3844, %v108
      %v3846 = vpop.permute.xlu0 %3845
      %3848 = vset.pattern.permute.xlu0 25
      %3849 = vperm.xlu0 %3848, %v109
      %v3850 = vpop.permute.xlu0 %3849
      %3852 = vset.pattern.permute.xlu0 25
      %3853 = vperm.xlu0 %3852, %v110
      %v3854 = vpop.permute.xlu0 %3853
      %3856 = vset.pattern.permute.xlu0 25
      %3857 = vperm.xlu0 %3856, %v111
      %v3858 = vpop.permute.xlu0 %3857
      %3860 = vset.pattern.permute.xlu0 25
      %3861 = vperm.xlu0 %3860, %v112
      %v3862 = vpop.permute.xlu0 %3861
      %3864 = vset.pattern.permute.xlu0 25
      %3865 = vperm.xlu0 %3864, %v113
      %v3866 = vpop.permute.xlu0 %3865
      %3868 = vset.pattern.permute.xlu0 25
      %3869 = vperm.xlu0 %3868, %v114
      %v3870 = vpop.permute.xlu0 %3869
      %3872 = vset.pattern.permute.xlu0 25
      %3873 = vperm.xlu0 %3872, %v115
      %v3874 = vpop.permute.xlu0 %3873
      %3876 = vset.pattern.permute.xlu0 25
      %3877 = vperm.xlu0 %3876, %v116
      %v3878 = vpop.permute.xlu0 %3877
      %3880 = vset.pattern.permute.xlu0 25
      %3881 = vperm.xlu0 %3880, %v117
      %v3882 = vpop.permute.xlu0 %3881
      %3884 = vset.pattern.permute.xlu0 25
      %3885 = vperm.xlu0 %3884, %v118
      %v3886 = vpop.permute.xlu0 %3885
      %3888 = vset.pattern.permute.xlu0 25
      %3889 = vperm.xlu0 %3888, %v119
      %v3890 = vpop.permute.xlu0 %3889
      %3892 = vset.pattern.permute.xlu0 25
      %3893 = vperm.xlu0 %3892, %v120
      %v3894 = vpop.permute.xlu0 %3893
      %3896 = vset.pattern.permute.xlu0 25
      %3897 = vperm.xlu0 %3896, %v121
      %v3898 = vpop.permute.xlu0 %3897
      %3900 = vset.pattern.permute.xlu0 25
      %3901 = vperm.xlu0 %3900, %v122
      %v3902 = vpop.permute.xlu0 %3901
      %3904 = vset.pattern.permute.xlu0 25
      %3905 = vperm.xlu0 %3904, %v123
      %v3906 = vpop.permute.xlu0 %3905
      %v3908 = vsel %vm3812, %v3846, %v3780
      %v3909 = vsel %vm3813, %v3846, %v3781
      %v3910 = vsel %vm3814, %v3850, %v3782
      %v3911 = vsel %vm3815, %v3850, %v3783
      %v3912 = vsel %vm3816, %v3854, %v3784
      %v3913 = vsel %vm3817, %v3854, %v3785
      %v3914 = vsel %vm3818, %v3858, %v3786
      %v3915 = vsel %vm3819, %v3858, %v3787
      %v3916 = vsel %vm3820, %v3862, %v3788
      %v3917 = vsel %vm3821, %v3862, %v3789
      %v3918 = vsel %vm3822, %v3866, %v3790
      %v3919 = vsel %vm3823, %v3866, %v3791
      %v3920 = vsel %vm3824, %v3870, %v3792
      %v3921 = vsel %vm3825, %v3870, %v3793
      %v3922 = vsel %vm3826, %v3874, %v3794
      %v3923 = vsel %vm3827, %v3874, %v3795
      %v3924 = vsel %vm3828, %v3878, %v3796
      %v3925 = vsel %vm3829, %v3878, %v3797
      %v3926 = vsel %vm3830, %v3882, %v3798
      %v3927 = vsel %vm3831, %v3882, %v3799
      %v3928 = vsel %vm3832, %v3886, %v3800
      %v3929 = vsel %vm3833, %v3886, %v3801
      %v3930 = vsel %vm3834, %v3890, %v3802
      %v3931 = vsel %vm3835, %v3890, %v3803
      %v3932 = vsel %vm3836, %v3894, %v3804
      %v3933 = vsel %vm3837, %v3894, %v3805
      %v3934 = vsel %vm3838, %v3898, %v3806
      %v3935 = vsel %vm3839, %v3898, %v3807
      %v3936 = vsel %vm3840, %v3902, %v3808
      %v3937 = vsel %vm3841, %v3902, %v3809
      %v3938 = vsel %vm3842, %v3906, %v3810
      %v3939 = vsel %vm3843, %v3906, %v3811
      %vm3940 = vcmp.eq.s32.totalorder %v3652, 256
      %vm3941 = vcmp.eq.s32.totalorder %v3653, 256
      %vm3942 = vcmp.eq.s32.totalorder %v3654, 256
      %vm3943 = vcmp.eq.s32.totalorder %v3655, 256
      %vm3944 = vcmp.eq.s32.totalorder %v3656, 256
      %vm3945 = vcmp.eq.s32.totalorder %v3657, 256
      %vm3946 = vcmp.eq.s32.totalorder %v3658, 256
      %vm3947 = vcmp.eq.s32.totalorder %v3659, 256
      %vm3948 = vcmp.eq.s32.totalorder %v3660, 256
      %vm3949 = vcmp.eq.s32.totalorder %v3661, 256
      %vm3950 = vcmp.eq.s32.totalorder %v3662, 256
      %vm3951 = vcmp.eq.s32.totalorder %v3663, 256
      %vm3952 = vcmp.eq.s32.totalorder %v3664, 256
      %vm3953 = vcmp.eq.s32.totalorder %v3665, 256
      %vm3954 = vcmp.eq.s32.totalorder %v3666, 256
      %vm3955 = vcmp.eq.s32.totalorder %v3667, 256
      %vm3956 = vcmp.eq.s32.totalorder %v3668, 256
      %vm3957 = vcmp.eq.s32.totalorder %v3669, 256
      %vm3958 = vcmp.eq.s32.totalorder %v3670, 256
      %vm3959 = vcmp.eq.s32.totalorder %v3671, 256
      %vm3960 = vcmp.eq.s32.totalorder %v3672, 256
      %vm3961 = vcmp.eq.s32.totalorder %v3673, 256
      %vm3962 = vcmp.eq.s32.totalorder %v3674, 256
      %vm3963 = vcmp.eq.s32.totalorder %v3675, 256
      %vm3964 = vcmp.eq.s32.totalorder %v3676, 256
      %vm3965 = vcmp.eq.s32.totalorder %v3677, 256
      %vm3966 = vcmp.eq.s32.totalorder %v3678, 256
      %vm3967 = vcmp.eq.s32.totalorder %v3679, 256
      %vm3968 = vcmp.eq.s32.totalorder %v3680, 256
      %vm3969 = vcmp.eq.s32.totalorder %v3681, 256
      %vm3970 = vcmp.eq.s32.totalorder %v3682, 256
      %vm3971 = vcmp.eq.s32.totalorder %v3683, 256
      %3972 = vset.pattern.permute.xlu0 26
      %3973 = vperm.xlu0 %3972, %v108
      %v3974 = vpop.permute.xlu0 %3973
      %3976 = vset.pattern.permute.xlu0 26
      %3977 = vperm.xlu0 %3976, %v109
      %v3978 = vpop.permute.xlu0 %3977
      %3980 = vset.pattern.permute.xlu0 26
      %3981 = vperm.xlu0 %3980, %v110
      %v3982 = vpop.permute.xlu0 %3981
      %3984 = vset.pattern.permute.xlu0 26
      %3985 = vperm.xlu0 %3984, %v111
      %v3986 = vpop.permute.xlu0 %3985
      %3988 = vset.pattern.permute.xlu0 26
      %3989 = vperm.xlu0 %3988, %v112
      %v3990 = vpop.permute.xlu0 %3989
      %3992 = vset.pattern.permute.xlu0 26
      %3993 = vperm.xlu0 %3992, %v113
      %v3994 = vpop.permute.xlu0 %3993
      %3996 = vset.pattern.permute.xlu0 26
      %3997 = vperm.xlu0 %3996, %v114
      %v3998 = vpop.permute.xlu0 %3997
      %4000 = vset.pattern.permute.xlu0 26
      %4001 = vperm.xlu0 %4000, %v115
      %v4002 = vpop.permute.xlu0 %4001
      %4004 = vset.pattern.permute.xlu0 26
      %4005 = vperm.xlu0 %4004, %v116
      %v4006 = vpop.permute.xlu0 %4005
      %4008 = vset.pattern.permute.xlu0 26
      %4009 = vperm.xlu0 %4008, %v117
      %v4010 = vpop.permute.xlu0 %4009
      %4012 = vset.pattern.permute.xlu0 26
      %4013 = vperm.xlu0 %4012, %v118
      %v4014 = vpop.permute.xlu0 %4013
      %4016 = vset.pattern.permute.xlu0 26
      %4017 = vperm.xlu0 %4016, %v119
      %v4018 = vpop.permute.xlu0 %4017
      %4020 = vset.pattern.permute.xlu0 26
      %4021 = vperm.xlu0 %4020, %v120
      %v4022 = vpop.permute.xlu0 %4021
      %4024 = vset.pattern.permute.xlu0 26
      %4025 = vperm.xlu0 %4024, %v121
      %v4026 = vpop.permute.xlu0 %4025
      %4028 = vset.pattern.permute.xlu0 26
      %4029 = vperm.xlu0 %4028, %v122
      %v4030 = vpop.permute.xlu0 %4029
      %4032 = vset.pattern.permute.xlu0 26
      %4033 = vperm.xlu0 %4032, %v123
      %v4034 = vpop.permute.xlu0 %4033
      %v4036 = vsel %vm3940, %v3974, %v3908
      %v4037 = vsel %vm3941, %v3974, %v3909
      %v4038 = vsel %vm3942, %v3978, %v3910
      %v4039 = vsel %vm3943, %v3978, %v3911
      %v4040 = vsel %vm3944, %v3982, %v3912
      %v4041 = vsel %vm3945, %v3982, %v3913
      %v4042 = vsel %vm3946, %v3986, %v3914
      %v4043 = vsel %vm3947, %v3986, %v3915
      %v4044 = vsel %vm3948, %v3990, %v3916
      %v4045 = vsel %vm3949, %v3990, %v3917
      %v4046 = vsel %vm3950, %v3994, %v3918
      %v4047 = vsel %vm3951, %v3994, %v3919
      %v4048 = vsel %vm3952, %v3998, %v3920
      %v4049 = vsel %vm3953, %v3998, %v3921
      %v4050 = vsel %vm3954, %v4002, %v3922
      %v4051 = vsel %vm3955, %v4002, %v3923
      %v4052 = vsel %vm3956, %v4006, %v3924
      %v4053 = vsel %vm3957, %v4006, %v3925
      %v4054 = vsel %vm3958, %v4010, %v3926
      %v4055 = vsel %vm3959, %v4010, %v3927
      %v4056 = vsel %vm3960, %v4014, %v3928
      %v4057 = vsel %vm3961, %v4014, %v3929
      %v4058 = vsel %vm3962, %v4018, %v3930
      %v4059 = vsel %vm3963, %v4018, %v3931
      %v4060 = vsel %vm3964, %v4022, %v3932
      %v4061 = vsel %vm3965, %v4022, %v3933
      %v4062 = vsel %vm3966, %v4026, %v3934
      %v4063 = vsel %vm3967, %v4026, %v3935
      %v4064 = vsel %vm3968, %v4030, %v3936
      %v4065 = vsel %vm3969, %v4030, %v3937
      %v4066 = vsel %vm3970, %v4034, %v3938
      %v4067 = vsel %vm3971, %v4034, %v3939
      %vm4068 = vcmp.eq.s32.totalorder %v3652, 384
      %vm4069 = vcmp.eq.s32.totalorder %v3653, 384
      %vm4070 = vcmp.eq.s32.totalorder %v3654, 384
      %vm4071 = vcmp.eq.s32.totalorder %v3655, 384
      %vm4072 = vcmp.eq.s32.totalorder %v3656, 384
      %vm4073 = vcmp.eq.s32.totalorder %v3657, 384
      %vm4074 = vcmp.eq.s32.totalorder %v3658, 384
      %vm4075 = vcmp.eq.s32.totalorder %v3659, 384
      %vm4076 = vcmp.eq.s32.totalorder %v3660, 384
      %vm4077 = vcmp.eq.s32.totalorder %v3661, 384
      %vm4078 = vcmp.eq.s32.totalorder %v3662, 384
      %vm4079 = vcmp.eq.s32.totalorder %v3663, 384
      %vm4080 = vcmp.eq.s32.totalorder %v3664, 384
      %vm4081 = vcmp.eq.s32.totalorder %v3665, 384
      %vm4082 = vcmp.eq.s32.totalorder %v3666, 384
      %vm4083 = vcmp.eq.s32.totalorder %v3667, 384
      %vm4084 = vcmp.eq.s32.totalorder %v3668, 384
      %vm4085 = vcmp.eq.s32.totalorder %v3669, 384
      %vm4086 = vcmp.eq.s32.totalorder %v3670, 384
      %vm4087 = vcmp.eq.s32.totalorder %v3671, 384
      %vm4088 = vcmp.eq.s32.totalorder %v3672, 384
      %vm4089 = vcmp.eq.s32.totalorder %v3673, 384
      %vm4090 = vcmp.eq.s32.totalorder %v3674, 384
      %vm4091 = vcmp.eq.s32.totalorder %v3675, 384
      %vm4092 = vcmp.eq.s32.totalorder %v3676, 384
      %vm4093 = vcmp.eq.s32.totalorder %v3677, 384
      %vm4094 = vcmp.eq.s32.totalorder %v3678, 384
      %vm4095 = vcmp.eq.s32.totalorder %v3679, 384
      %vm4096 = vcmp.eq.s32.totalorder %v3680, 384
      %vm4097 = vcmp.eq.s32.totalorder %v3681, 384
      %vm4098 = vcmp.eq.s32.totalorder %v3682, 384
      %vm4099 = vcmp.eq.s32.totalorder %v3683, 384
      %4100 = vset.pattern.permute.xlu0 27
      %4101 = vperm.xlu0 %4100, %v108
      %v4102 = vpop.permute.xlu0 %4101
      %4104 = vset.pattern.permute.xlu0 27
      %4105 = vperm.xlu0 %4104, %v109
      %v4106 = vpop.permute.xlu0 %4105
      %4108 = vset.pattern.permute.xlu0 27
      %4109 = vperm.xlu0 %4108, %v110
      %v4110 = vpop.permute.xlu0 %4109
      %4112 = vset.pattern.permute.xlu0 27
      %4113 = vperm.xlu0 %4112, %v111
      %v4114 = vpop.permute.xlu0 %4113
      %4116 = vset.pattern.permute.xlu0 27
      %4117 = vperm.xlu0 %4116, %v112
      %v4118 = vpop.permute.xlu0 %4117
      %4120 = vset.pattern.permute.xlu0 27
      %4121 = vperm.xlu0 %4120, %v113
      %v4122 = vpop.permute.xlu0 %4121
      %4124 = vset.pattern.permute.xlu0 27
      %4125 = vperm.xlu0 %4124, %v114
      %v4126 = vpop.permute.xlu0 %4125
      %4128 = vset.pattern.permute.xlu0 27
      %4129 = vperm.xlu0 %4128, %v115
      %v4130 = vpop.permute.xlu0 %4129
      %4132 = vset.pattern.permute.xlu0 27
      %4133 = vperm.xlu0 %4132, %v116
      %v4134 = vpop.permute.xlu0 %4133
      %4136 = vset.pattern.permute.xlu0 27
      %4137 = vperm.xlu0 %4136, %v117
      %v4138 = vpop.permute.xlu0 %4137
      %4140 = vset.pattern.permute.xlu0 27
      %4141 = vperm.xlu0 %4140, %v118
      %v4142 = vpop.permute.xlu0 %4141
      %4144 = vset.pattern.permute.xlu0 27
      %4145 = vperm.xlu0 %4144, %v119
      %v4146 = vpop.permute.xlu0 %4145
      %4148 = vset.pattern.permute.xlu0 27
      %4149 = vperm.xlu0 %4148, %v120
      %v4150 = vpop.permute.xlu0 %4149
      %4152 = vset.pattern.permute.xlu0 27
      %4153 = vperm.xlu0 %4152, %v121
      %v4154 = vpop.permute.xlu0 %4153
      %4156 = vset.pattern.permute.xlu0 27
      %4157 = vperm.xlu0 %4156, %v122
      %v4158 = vpop.permute.xlu0 %4157
      %4160 = vset.pattern.permute.xlu0 27
      %4161 = vperm.xlu0 %4160, %v123
      %v4162 = vpop.permute.xlu0 %4161
      %v4164 = vsel %vm4068, %v4102, %v4036
      %v4165 = vsel %vm4069, %v4102, %v4037
      %v4166 = vsel %vm4070, %v4106, %v4038
      %v4167 = vsel %vm4071, %v4106, %v4039
      %v4168 = vsel %vm4072, %v4110, %v4040
      %v4169 = vsel %vm4073, %v4110, %v4041
      %v4170 = vsel %vm4074, %v4114, %v4042
      %v4171 = vsel %vm4075, %v4114, %v4043
      %v4172 = vsel %vm4076, %v4118, %v4044
      %v4173 = vsel %vm4077, %v4118, %v4045
      %v4174 = vsel %vm4078, %v4122, %v4046
      %v4175 = vsel %vm4079, %v4122, %v4047
      %v4176 = vsel %vm4080, %v4126, %v4048
      %v4177 = vsel %vm4081, %v4126, %v4049
      %v4178 = vsel %vm4082, %v4130, %v4050
      %v4179 = vsel %vm4083, %v4130, %v4051
      %v4180 = vsel %vm4084, %v4134, %v4052
      %v4181 = vsel %vm4085, %v4134, %v4053
      %v4182 = vsel %vm4086, %v4138, %v4054
      %v4183 = vsel %vm4087, %v4138, %v4055
      %v4184 = vsel %vm4088, %v4142, %v4056
      %v4185 = vsel %vm4089, %v4142, %v4057
      %v4186 = vsel %vm4090, %v4146, %v4058
      %v4187 = vsel %vm4091, %v4146, %v4059
      %v4188 = vsel %vm4092, %v4150, %v4060
      %v4189 = vsel %vm4093, %v4150, %v4061
      %v4190 = vsel %vm4094, %v4154, %v4062
      %v4191 = vsel %vm4095, %v4154, %v4063
      %v4192 = vsel %vm4096, %v4158, %v4064
      %v4193 = vsel %vm4097, %v4158, %v4065
      %v4194 = vsel %vm4098, %v4162, %v4066
      %v4195 = vsel %vm4099, %v4162, %v4067
      %v4196 = vadd.f32 %v3612, %v4164
      %v4197 = vadd.f32 %v3613, %v4165
      %v4198 = vadd.f32 %v3614, %v4166
      %v4199 = vadd.f32 %v3615, %v4167
      %v4200 = vadd.f32 %v3616, %v4168
      %v4201 = vadd.f32 %v3617, %v4169
      %v4202 = vadd.f32 %v3618, %v4170
      %v4203 = vadd.f32 %v3619, %v4171
      %v4204 = vadd.f32 %v3620, %v4172
      %v4205 = vadd.f32 %v3621, %v4173
      %v4206 = vadd.f32 %v3622, %v4174
      %v4207 = vadd.f32 %v3623, %v4175
      %v4208 = vadd.f32 %v3624, %v4176
      %v4209 = vadd.f32 %v3625, %v4177
      %v4210 = vadd.f32 %v3626, %v4178
      %v4211 = vadd.f32 %v3627, %v4179
      %v4212 = vadd.f32 %v3628, %v4180
      %v4213 = vadd.f32 %v3629, %v4181
      %v4214 = vadd.f32 %v3630, %v4182
      %v4215 = vadd.f32 %v3631, %v4183
      %v4216 = vadd.f32 %v3632, %v4184
      %v4217 = vadd.f32 %v3633, %v4185
      %v4218 = vadd.f32 %v3634, %v4186
      %v4219 = vadd.f32 %v3635, %v4187
      %v4220 = vadd.f32 %v3636, %v4188
      %v4221 = vadd.f32 %v3637, %v4189
      %v4222 = vadd.f32 %v3638, %v4190
      %v4223 = vadd.f32 %v3639, %v4191
      %v4224 = vadd.f32 %v3640, %v4192
      %v4225 = vadd.f32 %v3641, %v4193
      %v4226 = vadd.f32 %v3642, %v4194
      %v4227 = vadd.f32 %v3643, %v4195
      %v4228 = vlaneseq
      %v4229 = vshrl.u32 %v4228, 7
      %v4230 = vsub.s32 7, %v4229
      %v4231 = vrot.slane %v103, %v4230
      %v4232 = vlaneseq
      %v4233 = vshrl.u32 %v4232, 7
      %v4234 = vsub.s32 7, %v4233
      %v4235 = vrot.slane %v105, %v4234
      %v4236 = vsub.s32 %v4231, %v28
      %v4237 = vsub.s32 %v4235, %v28
      %v4238 = vsub.s32 %v4231, %v29
      %v4239 = vsub.s32 %v4235, %v29
      %v4240 = vsub.s32 %v4231, %v30
      %v4241 = vsub.s32 %v4235, %v30
      %v4242 = vsub.s32 %v4231, %v31
      %v4243 = vsub.s32 %v4235, %v31
      %v4244 = vsub.s32 %v4231, %v32
      %v4245 = vsub.s32 %v4235, %v32
      %v4246 = vsub.s32 %v4231, %v33
      %v4247 = vsub.s32 %v4235, %v33
      %v4248 = vsub.s32 %v4231, %v34
      %v4249 = vsub.s32 %v4235, %v34
      %v4250 = vsub.s32 %v4231, %v35
      %v4251 = vsub.s32 %v4235, %v35
      %v4252 = vsub.s32 %v4231, %v36
      %v4253 = vsub.s32 %v4235, %v36
      %v4254 = vsub.s32 %v4231, %v37
      %v4255 = vsub.s32 %v4235, %v37
      %v4256 = vsub.s32 %v4231, %v38
      %v4257 = vsub.s32 %v4235, %v38
      %v4258 = vsub.s32 %v4231, %v39
      %v4259 = vsub.s32 %v4235, %v39
      %v4260 = vsub.s32 %v4231, %v40
      %v4261 = vsub.s32 %v4235, %v40
      %v4262 = vsub.s32 %v4231, %v41
      %v4263 = vsub.s32 %v4235, %v41
      %v4264 = vsub.s32 %v4231, %v42
      %v4265 = vsub.s32 %v4235, %v42
      %v4266 = vsub.s32 %v4231, %v43
      %v4267 = vsub.s32 %v4235, %v43
      %vm4268 = vcmp.eq.s32.totalorder %v4236, 0
      %vm4269 = vcmp.eq.s32.totalorder %v4237, 0
      %vm4270 = vcmp.eq.s32.totalorder %v4238, 0
      %vm4271 = vcmp.eq.s32.totalorder %v4239, 0
      %vm4272 = vcmp.eq.s32.totalorder %v4240, 0
      %vm4273 = vcmp.eq.s32.totalorder %v4241, 0
      %vm4274 = vcmp.eq.s32.totalorder %v4242, 0
      %vm4275 = vcmp.eq.s32.totalorder %v4243, 0
      %vm4276 = vcmp.eq.s32.totalorder %v4244, 0
      %vm4277 = vcmp.eq.s32.totalorder %v4245, 0
      %vm4278 = vcmp.eq.s32.totalorder %v4246, 0
      %vm4279 = vcmp.eq.s32.totalorder %v4247, 0
      %vm4280 = vcmp.eq.s32.totalorder %v4248, 0
      %vm4281 = vcmp.eq.s32.totalorder %v4249, 0
      %vm4282 = vcmp.eq.s32.totalorder %v4250, 0
      %vm4283 = vcmp.eq.s32.totalorder %v4251, 0
      %vm4284 = vcmp.eq.s32.totalorder %v4252, 0
      %vm4285 = vcmp.eq.s32.totalorder %v4253, 0
      %vm4286 = vcmp.eq.s32.totalorder %v4254, 0
      %vm4287 = vcmp.eq.s32.totalorder %v4255, 0
      %vm4288 = vcmp.eq.s32.totalorder %v4256, 0
      %vm4289 = vcmp.eq.s32.totalorder %v4257, 0
      %vm4290 = vcmp.eq.s32.totalorder %v4258, 0
      %vm4291 = vcmp.eq.s32.totalorder %v4259, 0
      %vm4292 = vcmp.eq.s32.totalorder %v4260, 0
      %vm4293 = vcmp.eq.s32.totalorder %v4261, 0
      %vm4294 = vcmp.eq.s32.totalorder %v4262, 0
      %vm4295 = vcmp.eq.s32.totalorder %v4263, 0
      %vm4296 = vcmp.eq.s32.totalorder %v4264, 0
      %vm4297 = vcmp.eq.s32.totalorder %v4265, 0
      %vm4298 = vcmp.eq.s32.totalorder %v4266, 0
      %vm4299 = vcmp.eq.s32.totalorder %v4267, 0
      %4300 = vset.pattern.permute.xlu0 28
      %4301 = vperm.xlu0 %4300, %v108
      %v4302 = vpop.permute.xlu0 %4301
      %4304 = vset.pattern.permute.xlu0 28
      %4305 = vperm.xlu0 %4304, %v109
      %v4306 = vpop.permute.xlu0 %4305
      %4308 = vset.pattern.permute.xlu0 28
      %4309 = vperm.xlu0 %4308, %v110
      %v4310 = vpop.permute.xlu0 %4309
      %4312 = vset.pattern.permute.xlu0 28
      %4313 = vperm.xlu0 %4312, %v111
      %v4314 = vpop.permute.xlu0 %4313
      %4316 = vset.pattern.permute.xlu0 28
      %4317 = vperm.xlu0 %4316, %v112
      %v4318 = vpop.permute.xlu0 %4317
      %4320 = vset.pattern.permute.xlu0 28
      %4321 = vperm.xlu0 %4320, %v113
      %v4322 = vpop.permute.xlu0 %4321
      %4324 = vset.pattern.permute.xlu0 28
      %4325 = vperm.xlu0 %4324, %v114
      %v4326 = vpop.permute.xlu0 %4325
      %4328 = vset.pattern.permute.xlu0 28
      %4329 = vperm.xlu0 %4328, %v115
      %v4330 = vpop.permute.xlu0 %4329
      %4332 = vset.pattern.permute.xlu0 28
      %4333 = vperm.xlu0 %4332, %v116
      %v4334 = vpop.permute.xlu0 %4333
      %4336 = vset.pattern.permute.xlu0 28
      %4337 = vperm.xlu0 %4336, %v117
      %v4338 = vpop.permute.xlu0 %4337
      %4340 = vset.pattern.permute.xlu0 28
      %4341 = vperm.xlu0 %4340, %v118
      %v4342 = vpop.permute.xlu0 %4341
      %4344 = vset.pattern.permute.xlu0 28
      %4345 = vperm.xlu0 %4344, %v119
      %v4346 = vpop.permute.xlu0 %4345
      %4348 = vset.pattern.permute.xlu0 28
      %4349 = vperm.xlu0 %4348, %v120
      %v4350 = vpop.permute.xlu0 %4349
      %4352 = vset.pattern.permute.xlu0 28
      %4353 = vperm.xlu0 %4352, %v121
      %v4354 = vpop.permute.xlu0 %4353
      %4356 = vset.pattern.permute.xlu0 28
      %4357 = vperm.xlu0 %4356, %v122
      %v4358 = vpop.permute.xlu0 %4357
      %4360 = vset.pattern.permute.xlu0 28
      %4361 = vperm.xlu0 %4360, %v123
      %v4362 = vpop.permute.xlu0 %4361
      %v4364 = vsel %vm4268, %v4302, 0.0
      %v4365 = vsel %vm4269, %v4302, 0.0
      %v4366 = vsel %vm4270, %v4306, 0.0
      %v4367 = vsel %vm4271, %v4306, 0.0
      %v4368 = vsel %vm4272, %v4310, 0.0
      %v4369 = vsel %vm4273, %v4310, 0.0
      %v4370 = vsel %vm4274, %v4314, 0.0
      %v4371 = vsel %vm4275, %v4314, 0.0
      %v4372 = vsel %vm4276, %v4318, 0.0
      %v4373 = vsel %vm4277, %v4318, 0.0
      %v4374 = vsel %vm4278, %v4322, 0.0
      %v4375 = vsel %vm4279, %v4322, 0.0
      %v4376 = vsel %vm4280, %v4326, 0.0
      %v4377 = vsel %vm4281, %v4326, 0.0
      %v4378 = vsel %vm4282, %v4330, 0.0
      %v4379 = vsel %vm4283, %v4330, 0.0
      %v4380 = vsel %vm4284, %v4334, 0.0
      %v4381 = vsel %vm4285, %v4334, 0.0
      %v4382 = vsel %vm4286, %v4338, 0.0
      %v4383 = vsel %vm4287, %v4338, 0.0
      %v4384 = vsel %vm4288, %v4342, 0.0
      %v4385 = vsel %vm4289, %v4342, 0.0
      %v4386 = vsel %vm4290, %v4346, 0.0
      %v4387 = vsel %vm4291, %v4346, 0.0
      %v4388 = vsel %vm4292, %v4350, 0.0
      %v4389 = vsel %vm4293, %v4350, 0.0
      %v4390 = vsel %vm4294, %v4354, 0.0
      %v4391 = vsel %vm4295, %v4354, 0.0
      %v4392 = vsel %vm4296, %v4358, 0.0
      %v4393 = vsel %vm4297, %v4358, 0.0
      %v4394 = vsel %vm4298, %v4362, 0.0
      %v4395 = vsel %vm4299, %v4362, 0.0
      %vm4396 = vcmp.eq.s32.totalorder %v4236, 128
      %vm4397 = vcmp.eq.s32.totalorder %v4237, 128
      %vm4398 = vcmp.eq.s32.totalorder %v4238, 128
      %vm4399 = vcmp.eq.s32.totalorder %v4239, 128
      %vm4400 = vcmp.eq.s32.totalorder %v4240, 128
      %vm4401 = vcmp.eq.s32.totalorder %v4241, 128
      %vm4402 = vcmp.eq.s32.totalorder %v4242, 128
      %vm4403 = vcmp.eq.s32.totalorder %v4243, 128
      %vm4404 = vcmp.eq.s32.totalorder %v4244, 128
      %vm4405 = vcmp.eq.s32.totalorder %v4245, 128
      %vm4406 = vcmp.eq.s32.totalorder %v4246, 128
      %vm4407 = vcmp.eq.s32.totalorder %v4247, 128
      %vm4408 = vcmp.eq.s32.totalorder %v4248, 128
      %vm4409 = vcmp.eq.s32.totalorder %v4249, 128
      %vm4410 = vcmp.eq.s32.totalorder %v4250, 128
      %vm4411 = vcmp.eq.s32.totalorder %v4251, 128
      %vm4412 = vcmp.eq.s32.totalorder %v4252, 128
      %vm4413 = vcmp.eq.s32.totalorder %v4253, 128
      %vm4414 = vcmp.eq.s32.totalorder %v4254, 128
      %vm4415 = vcmp.eq.s32.totalorder %v4255, 128
      %vm4416 = vcmp.eq.s32.totalorder %v4256, 128
      %vm4417 = vcmp.eq.s32.totalorder %v4257, 128
      %vm4418 = vcmp.eq.s32.totalorder %v4258, 128
      %vm4419 = vcmp.eq.s32.totalorder %v4259, 128
      %vm4420 = vcmp.eq.s32.totalorder %v4260, 128
      %vm4421 = vcmp.eq.s32.totalorder %v4261, 128
      %vm4422 = vcmp.eq.s32.totalorder %v4262, 128
      %vm4423 = vcmp.eq.s32.totalorder %v4263, 128
      %vm4424 = vcmp.eq.s32.totalorder %v4264, 128
      %vm4425 = vcmp.eq.s32.totalorder %v4265, 128
      %vm4426 = vcmp.eq.s32.totalorder %v4266, 128
      %vm4427 = vcmp.eq.s32.totalorder %v4267, 128
      %4428 = vset.pattern.permute.xlu0 29
      %4429 = vperm.xlu0 %4428, %v108
      %v4430 = vpop.permute.xlu0 %4429
      %4432 = vset.pattern.permute.xlu0 29
      %4433 = vperm.xlu0 %4432, %v109
      %v4434 = vpop.permute.xlu0 %4433
      %4436 = vset.pattern.permute.xlu0 29
      %4437 = vperm.xlu0 %4436, %v110
      %v4438 = vpop.permute.xlu0 %4437
      %4440 = vset.pattern.permute.xlu0 29
      %4441 = vperm.xlu0 %4440, %v111
      %v4442 = vpop.permute.xlu0 %4441
      %4444 = vset.pattern.permute.xlu0 29
      %4445 = vperm.xlu0 %4444, %v112
      %v4446 = vpop.permute.xlu0 %4445
      %4448 = vset.pattern.permute.xlu0 29
      %4449 = vperm.xlu0 %4448, %v113
      %v4450 = vpop.permute.xlu0 %4449
      %4452 = vset.pattern.permute.xlu0 29
      %4453 = vperm.xlu0 %4452, %v114
      %v4454 = vpop.permute.xlu0 %4453
      %4456 = vset.pattern.permute.xlu0 29
      %4457 = vperm.xlu0 %4456, %v115
      %v4458 = vpop.permute.xlu0 %4457
      %4460 = vset.pattern.permute.xlu0 29
      %4461 = vperm.xlu0 %4460, %v116
      %v4462 = vpop.permute.xlu0 %4461
      %4464 = vset.pattern.permute.xlu0 29
      %4465 = vperm.xlu0 %4464, %v117
      %v4466 = vpop.permute.xlu0 %4465
      %4468 = vset.pattern.permute.xlu0 29
      %4469 = vperm.xlu0 %4468, %v118
      %v4470 = vpop.permute.xlu0 %4469
      %4472 = vset.pattern.permute.xlu0 29
      %4473 = vperm.xlu0 %4472, %v119
      %v4474 = vpop.permute.xlu0 %4473
      %4476 = vset.pattern.permute.xlu0 29
      %4477 = vperm.xlu0 %4476, %v120
      %v4478 = vpop.permute.xlu0 %4477
      %4480 = vset.pattern.permute.xlu0 29
      %4481 = vperm.xlu0 %4480, %v121
      %v4482 = vpop.permute.xlu0 %4481
      %4484 = vset.pattern.permute.xlu0 29
      %4485 = vperm.xlu0 %4484, %v122
      %v4486 = vpop.permute.xlu0 %4485
      %4488 = vset.pattern.permute.xlu0 29
      %4489 = vperm.xlu0 %4488, %v123
      %v4490 = vpop.permute.xlu0 %4489
      %v4492 = vsel %vm4396, %v4430, %v4364
      %v4493 = vsel %vm4397, %v4430, %v4365
      %v4494 = vsel %vm4398, %v4434, %v4366
      %v4495 = vsel %vm4399, %v4434, %v4367
      %v4496 = vsel %vm4400, %v4438, %v4368
      %v4497 = vsel %vm4401, %v4438, %v4369
      %v4498 = vsel %vm4402, %v4442, %v4370
      %v4499 = vsel %vm4403, %v4442, %v4371
      %v4500 = vsel %vm4404, %v4446, %v4372
      %v4501 = vsel %vm4405, %v4446, %v4373
      %v4502 = vsel %vm4406, %v4450, %v4374
      %v4503 = vsel %vm4407, %v4450, %v4375
      %v4504 = vsel %vm4408, %v4454, %v4376
      %v4505 = vsel %vm4409, %v4454, %v4377
      %v4506 = vsel %vm4410, %v4458, %v4378
      %v4507 = vsel %vm4411, %v4458, %v4379
      %v4508 = vsel %vm4412, %v4462, %v4380
      %v4509 = vsel %vm4413, %v4462, %v4381
      %v4510 = vsel %vm4414, %v4466, %v4382
      %v4511 = vsel %vm4415, %v4466, %v4383
      %v4512 = vsel %vm4416, %v4470, %v4384
      %v4513 = vsel %vm4417, %v4470, %v4385
      %v4514 = vsel %vm4418, %v4474, %v4386
      %v4515 = vsel %vm4419, %v4474, %v4387
      %v4516 = vsel %vm4420, %v4478, %v4388
      %v4517 = vsel %vm4421, %v4478, %v4389
      %v4518 = vsel %vm4422, %v4482, %v4390
      %v4519 = vsel %vm4423, %v4482, %v4391
      %v4520 = vsel %vm4424, %v4486, %v4392
      %v4521 = vsel %vm4425, %v4486, %v4393
      %v4522 = vsel %vm4426, %v4490, %v4394
      %v4523 = vsel %vm4427, %v4490, %v4395
      %vm4524 = vcmp.eq.s32.totalorder %v4236, 256
      %vm4525 = vcmp.eq.s32.totalorder %v4237, 256
      %vm4526 = vcmp.eq.s32.totalorder %v4238, 256
      %vm4527 = vcmp.eq.s32.totalorder %v4239, 256
      %vm4528 = vcmp.eq.s32.totalorder %v4240, 256
      %vm4529 = vcmp.eq.s32.totalorder %v4241, 256
      %vm4530 = vcmp.eq.s32.totalorder %v4242, 256
      %vm4531 = vcmp.eq.s32.totalorder %v4243, 256
      %vm4532 = vcmp.eq.s32.totalorder %v4244, 256
      %vm4533 = vcmp.eq.s32.totalorder %v4245, 256
      %vm4534 = vcmp.eq.s32.totalorder %v4246, 256
      %vm4535 = vcmp.eq.s32.totalorder %v4247, 256
      %vm4536 = vcmp.eq.s32.totalorder %v4248, 256
      %vm4537 = vcmp.eq.s32.totalorder %v4249, 256
      %vm4538 = vcmp.eq.s32.totalorder %v4250, 256
      %vm4539 = vcmp.eq.s32.totalorder %v4251, 256
      %vm4540 = vcmp.eq.s32.totalorder %v4252, 256
      %vm4541 = vcmp.eq.s32.totalorder %v4253, 256
      %vm4542 = vcmp.eq.s32.totalorder %v4254, 256
      %vm4543 = vcmp.eq.s32.totalorder %v4255, 256
      %vm4544 = vcmp.eq.s32.totalorder %v4256, 256
      %vm4545 = vcmp.eq.s32.totalorder %v4257, 256
      %vm4546 = vcmp.eq.s32.totalorder %v4258, 256
      %vm4547 = vcmp.eq.s32.totalorder %v4259, 256
      %vm4548 = vcmp.eq.s32.totalorder %v4260, 256
      %vm4549 = vcmp.eq.s32.totalorder %v4261, 256
      %vm4550 = vcmp.eq.s32.totalorder %v4262, 256
      %vm4551 = vcmp.eq.s32.totalorder %v4263, 256
      %vm4552 = vcmp.eq.s32.totalorder %v4264, 256
      %vm4553 = vcmp.eq.s32.totalorder %v4265, 256
      %vm4554 = vcmp.eq.s32.totalorder %v4266, 256
      %vm4555 = vcmp.eq.s32.totalorder %v4267, 256
      %4556 = vset.pattern.permute.xlu0 30
      %4557 = vperm.xlu0 %4556, %v108
      %v4558 = vpop.permute.xlu0 %4557
      %4560 = vset.pattern.permute.xlu0 30
      %4561 = vperm.xlu0 %4560, %v109
      %v4562 = vpop.permute.xlu0 %4561
      %4564 = vset.pattern.permute.xlu0 30
      %4565 = vperm.xlu0 %4564, %v110
      %v4566 = vpop.permute.xlu0 %4565
      %4568 = vset.pattern.permute.xlu0 30
      %4569 = vperm.xlu0 %4568, %v111
      %v4570 = vpop.permute.xlu0 %4569
      %4572 = vset.pattern.permute.xlu0 30
      %4573 = vperm.xlu0 %4572, %v112
      %v4574 = vpop.permute.xlu0 %4573
      %4576 = vset.pattern.permute.xlu0 30
      %4577 = vperm.xlu0 %4576, %v113
      %v4578 = vpop.permute.xlu0 %4577
      %4580 = vset.pattern.permute.xlu0 30
      %4581 = vperm.xlu0 %4580, %v114
      %v4582 = vpop.permute.xlu0 %4581
      %4584 = vset.pattern.permute.xlu0 30
      %4585 = vperm.xlu0 %4584, %v115
      %v4586 = vpop.permute.xlu0 %4585
      %4588 = vset.pattern.permute.xlu0 30
      %4589 = vperm.xlu0 %4588, %v116
      %v4590 = vpop.permute.xlu0 %4589
      %4592 = vset.pattern.permute.xlu0 30
      %4593 = vperm.xlu0 %4592, %v117
      %v4594 = vpop.permute.xlu0 %4593
      %4596 = vset.pattern.permute.xlu0 30
      %4597 = vperm.xlu0 %4596, %v118
      %v4598 = vpop.permute.xlu0 %4597
      %4600 = vset.pattern.permute.xlu0 30
      %4601 = vperm.xlu0 %4600, %v119
      %v4602 = vpop.permute.xlu0 %4601
      %4604 = vset.pattern.permute.xlu0 30
      %4605 = vperm.xlu0 %4604, %v120
      %v4606 = vpop.permute.xlu0 %4605
      %4608 = vset.pattern.permute.xlu0 30
      %4609 = vperm.xlu0 %4608, %v121
      %v4610 = vpop.permute.xlu0 %4609
      %4612 = vset.pattern.permute.xlu0 30
      %4613 = vperm.xlu0 %4612, %v122
      %v4614 = vpop.permute.xlu0 %4613
      %4616 = vset.pattern.permute.xlu0 30
      %4617 = vperm.xlu0 %4616, %v123
      %v4618 = vpop.permute.xlu0 %4617
      %v4620 = vsel %vm4524, %v4558, %v4492
      %v4621 = vsel %vm4525, %v4558, %v4493
      %v4622 = vsel %vm4526, %v4562, %v4494
      %v4623 = vsel %vm4527, %v4562, %v4495
      %v4624 = vsel %vm4528, %v4566, %v4496
      %v4625 = vsel %vm4529, %v4566, %v4497
      %v4626 = vsel %vm4530, %v4570, %v4498
      %v4627 = vsel %vm4531, %v4570, %v4499
      %v4628 = vsel %vm4532, %v4574, %v4500
      %v4629 = vsel %vm4533, %v4574, %v4501
      %v4630 = vsel %vm4534, %v4578, %v4502
      %v4631 = vsel %vm4535, %v4578, %v4503
      %v4632 = vsel %vm4536, %v4582, %v4504
      %v4633 = vsel %vm4537, %v4582, %v4505
      %v4634 = vsel %vm4538, %v4586, %v4506
      %v4635 = vsel %vm4539, %v4586, %v4507
      %v4636 = vsel %vm4540, %v4590, %v4508
      %v4637 = vsel %vm4541, %v4590, %v4509
      %v4638 = vsel %vm4542, %v4594, %v4510
      %v4639 = vsel %vm4543, %v4594, %v4511
      %v4640 = vsel %vm4544, %v4598, %v4512
      %v4641 = vsel %vm4545, %v4598, %v4513
      %v4642 = vsel %vm4546, %v4602, %v4514
      %v4643 = vsel %vm4547, %v4602, %v4515
      %v4644 = vsel %vm4548, %v4606, %v4516
      %v4645 = vsel %vm4549, %v4606, %v4517
      %v4646 = vsel %vm4550, %v4610, %v4518
      %v4647 = vsel %vm4551, %v4610, %v4519
      %v4648 = vsel %vm4552, %v4614, %v4520
      %v4649 = vsel %vm4553, %v4614, %v4521
      %v4650 = vsel %vm4554, %v4618, %v4522
      %v4651 = vsel %vm4555, %v4618, %v4523
      %vm4652 = vcmp.eq.s32.totalorder %v4236, 384
      %vm4653 = vcmp.eq.s32.totalorder %v4237, 384
      %vm4654 = vcmp.eq.s32.totalorder %v4238, 384
      %vm4655 = vcmp.eq.s32.totalorder %v4239, 384
      %vm4656 = vcmp.eq.s32.totalorder %v4240, 384
      %vm4657 = vcmp.eq.s32.totalorder %v4241, 384
      %vm4658 = vcmp.eq.s32.totalorder %v4242, 384
      %vm4659 = vcmp.eq.s32.totalorder %v4243, 384
      %vm4660 = vcmp.eq.s32.totalorder %v4244, 384
      %vm4661 = vcmp.eq.s32.totalorder %v4245, 384
      %vm4662 = vcmp.eq.s32.totalorder %v4246, 384
      %vm4663 = vcmp.eq.s32.totalorder %v4247, 384
      %vm4664 = vcmp.eq.s32.totalorder %v4248, 384
      %vm4665 = vcmp.eq.s32.totalorder %v4249, 384
      %vm4666 = vcmp.eq.s32.totalorder %v4250, 384
      %vm4667 = vcmp.eq.s32.totalorder %v4251, 384
      %vm4668 = vcmp.eq.s32.totalorder %v4252, 384
      %vm4669 = vcmp.eq.s32.totalorder %v4253, 384
      %vm4670 = vcmp.eq.s32.totalorder %v4254, 384
      %vm4671 = vcmp.eq.s32.totalorder %v4255, 384
      %vm4672 = vcmp.eq.s32.totalorder %v4256, 384
      %vm4673 = vcmp.eq.s32.totalorder %v4257, 384
      %vm4674 = vcmp.eq.s32.totalorder %v4258, 384
      %vm4675 = vcmp.eq.s32.totalorder %v4259, 384
      %vm4676 = vcmp.eq.s32.totalorder %v4260, 384
      %vm4677 = vcmp.eq.s32.totalorder %v4261, 384
      %vm4678 = vcmp.eq.s32.totalorder %v4262, 384
      %vm4679 = vcmp.eq.s32.totalorder %v4263, 384
      %vm4680 = vcmp.eq.s32.totalorder %v4264, 384
      %vm4681 = vcmp.eq.s32.totalorder %v4265, 384
      %vm4682 = vcmp.eq.s32.totalorder %v4266, 384
      %vm4683 = vcmp.eq.s32.totalorder %v4267, 384
      %4684 = vset.pattern.permute.xlu0 31
      %4685 = vperm.xlu0 %4684, %v108
      %v4686 = vpop.permute.xlu0 %4685
      %4688 = vset.pattern.permute.xlu0 31
      %4689 = vperm.xlu0 %4688, %v109
      %v4690 = vpop.permute.xlu0 %4689
      %4692 = vset.pattern.permute.xlu0 31
      %4693 = vperm.xlu0 %4692, %v110
      %v4694 = vpop.permute.xlu0 %4693
      %4696 = vset.pattern.permute.xlu0 31
      %4697 = vperm.xlu0 %4696, %v111
      %v4698 = vpop.permute.xlu0 %4697
      %4700 = vset.pattern.permute.xlu0 31
      %4701 = vperm.xlu0 %4700, %v112
      %v4702 = vpop.permute.xlu0 %4701
      %4704 = vset.pattern.permute.xlu0 31
      %4705 = vperm.xlu0 %4704, %v113
      %v4706 = vpop.permute.xlu0 %4705
      %4708 = vset.pattern.permute.xlu0 31
      %4709 = vperm.xlu0 %4708, %v114
      %v4710 = vpop.permute.xlu0 %4709
      %4712 = vset.pattern.permute.xlu0 31
      %4713 = vperm.xlu0 %4712, %v115
      %v4714 = vpop.permute.xlu0 %4713
      %4716 = vset.pattern.permute.xlu0 31
      %4717 = vperm.xlu0 %4716, %v116
      %v4718 = vpop.permute.xlu0 %4717
      %4720 = vset.pattern.permute.xlu0 31
      %4721 = vperm.xlu0 %4720, %v117
      %v4722 = vpop.permute.xlu0 %4721
      %4724 = vset.pattern.permute.xlu0 31
      %4725 = vperm.xlu0 %4724, %v118
      %v4726 = vpop.permute.xlu0 %4725
      %4728 = vset.pattern.permute.xlu0 31
      %4729 = vperm.xlu0 %4728, %v119
      %v4730 = vpop.permute.xlu0 %4729
      %4732 = vset.pattern.permute.xlu0 31
      %4733 = vperm.xlu0 %4732, %v120
      %v4734 = vpop.permute.xlu0 %4733
      %4736 = vset.pattern.permute.xlu0 31
      %4737 = vperm.xlu0 %4736, %v121
      %v4738 = vpop.permute.xlu0 %4737
      %4740 = vset.pattern.permute.xlu0 31
      %4741 = vperm.xlu0 %4740, %v122
      %v4742 = vpop.permute.xlu0 %4741
      %4744 = vset.pattern.permute.xlu0 31
      %4745 = vperm.xlu0 %4744, %v123
      %v4746 = vpop.permute.xlu0 %4745
      %v4748 = vsel %vm4652, %v4686, %v4620
      %v4749 = vsel %vm4653, %v4686, %v4621
      %v4750 = vsel %vm4654, %v4690, %v4622
      %v4751 = vsel %vm4655, %v4690, %v4623
      %v4752 = vsel %vm4656, %v4694, %v4624
      %v4753 = vsel %vm4657, %v4694, %v4625
      %v4754 = vsel %vm4658, %v4698, %v4626
      %v4755 = vsel %vm4659, %v4698, %v4627
      %v4756 = vsel %vm4660, %v4702, %v4628
      %v4757 = vsel %vm4661, %v4702, %v4629
      %v4758 = vsel %vm4662, %v4706, %v4630
      %v4759 = vsel %vm4663, %v4706, %v4631
      %v4760 = vsel %vm4664, %v4710, %v4632
      %v4761 = vsel %vm4665, %v4710, %v4633
      %v4762 = vsel %vm4666, %v4714, %v4634
      %v4763 = vsel %vm4667, %v4714, %v4635
      %v4764 = vsel %vm4668, %v4718, %v4636
      %v4765 = vsel %vm4669, %v4718, %v4637
      %v4766 = vsel %vm4670, %v4722, %v4638
      %v4767 = vsel %vm4671, %v4722, %v4639
      %v4768 = vsel %vm4672, %v4726, %v4640
      %v4769 = vsel %vm4673, %v4726, %v4641
      %v4770 = vsel %vm4674, %v4730, %v4642
      %v4771 = vsel %vm4675, %v4730, %v4643
      %v4772 = vsel %vm4676, %v4734, %v4644
      %v4773 = vsel %vm4677, %v4734, %v4645
      %v4774 = vsel %vm4678, %v4738, %v4646
      %v4775 = vsel %vm4679, %v4738, %v4647
      %v4776 = vsel %vm4680, %v4742, %v4648
      %v4777 = vsel %vm4681, %v4742, %v4649
      %v4778 = vsel %vm4682, %v4746, %v4650
      %v4779 = vsel %vm4683, %v4746, %v4651
      %v4780 = vadd.f32 %v4196, %v4748
      %v4781 = vadd.f32 %v4197, %v4749
      %v4782 = vadd.f32 %v4198, %v4750
      %v4783 = vadd.f32 %v4199, %v4751
      %v4784 = vadd.f32 %v4200, %v4752
      %v4785 = vadd.f32 %v4201, %v4753
      %v4786 = vadd.f32 %v4202, %v4754
      %v4787 = vadd.f32 %v4203, %v4755
      %v4788 = vadd.f32 %v4204, %v4756
      %v4789 = vadd.f32 %v4205, %v4757
      %v4790 = vadd.f32 %v4206, %v4758
      %v4791 = vadd.f32 %v4207, %v4759
      %v4792 = vadd.f32 %v4208, %v4760
      %v4793 = vadd.f32 %v4209, %v4761
      %v4794 = vadd.f32 %v4210, %v4762
      %v4795 = vadd.f32 %v4211, %v4763
      %v4796 = vadd.f32 %v4212, %v4764
      %v4797 = vadd.f32 %v4213, %v4765
      %v4798 = vadd.f32 %v4214, %v4766
      %v4799 = vadd.f32 %v4215, %v4767
      %v4800 = vadd.f32 %v4216, %v4768
      %v4801 = vadd.f32 %v4217, %v4769
      %v4802 = vadd.f32 %v4218, %v4770
      %v4803 = vadd.f32 %v4219, %v4771
      %v4804 = vadd.f32 %v4220, %v4772
      %v4805 = vadd.f32 %v4221, %v4773
      %v4806 = vadd.f32 %v4222, %v4774
      %v4807 = vadd.f32 %v4223, %v4775
      %v4808 = vadd.f32 %v4224, %v4776
      %v4809 = vadd.f32 %v4225, %v4777
      %v4810 = vadd.f32 %v4226, %v4778
      %v4811 = vadd.f32 %v4227, %v4779
    $region22: #{_forward.1} parent=1 // loop_footer
      %s50 = sadd.s32 1, %s46
    $region23: #{_forward.1} parent=1 // loop_footer_branch
      %45 = sbr.rel target = $region19
    $region24: #{_forward.1} parent=1 // loop_exit
      _
    %v4812 = vadd.f32 %v51, %v53
    %v4813 = vadd.f32 %v4812, %v55
    %v4814 = vadd.f32 %v4813, %v57
    %v4815 = vadd.f32 %v4814, %v59
    %v4816 = vadd.f32 %v4815, %v61
    %v4817 = vadd.f32 %v4816, %v63
    %v4818 = vadd.f32 %v4817, %v65
    %v4819 = vadd.f32 %v4818, %v67
    %v4820 = vadd.f32 %v4819, %v69
    %v4821 = vadd.f32 %v4820, %v71
    %v4822 = vadd.f32 %v4821, %v73
    %v4823 = vadd.f32 %v4822, %v75
    %v4824 = vadd.f32 %v4823, %v77
    %v4825 = vadd.f32 %v4824, %v79
    %v4826 = vadd.f32 %v4825, %v81
    %v4827 = vrot.slane %v4826, 4
    %v4828 = vadd.f32 %v4826, %v4827
    %v4829 = vrot.slane %v4828, 2
    %v4830 = vadd.f32 %v4828, %v4829
    %v4831 = vrot.slane %v4830, 1
    %v4832 = vadd.f32 %v4830, %v4831
    %v4833 = vadd.f32 %v52, %v54
    %v4834 = vadd.f32 %v4833, %v56
    %v4835 = vadd.f32 %v4834, %v58
    %v4836 = vadd.f32 %v4835, %v60
    %v4837 = vadd.f32 %v4836, %v62
    %v4838 = vadd.f32 %v4837, %v64
    %v4839 = vadd.f32 %v4838, %v66
    %v4840 = vadd.f32 %v4839, %v68
    %v4841 = vadd.f32 %v4840, %v70
    %v4842 = vadd.f32 %v4841, %v72
    %v4843 = vadd.f32 %v4842, %v74
    %v4844 = vadd.f32 %v4843, %v76
    %v4845 = vadd.f32 %v4844, %v78
    %v4846 = vadd.f32 %v4845, %v80
    %v4847 = vadd.f32 %v4846, %v82
    %v4848 = vrot.slane %v4847, 4
    %v4849 = vadd.f32 %v4847, %v4848
    %v4850 = vrot.slane %v4849, 2
    %v4851 = vadd.f32 %v4849, %v4850
    %v4852 = vrot.slane %v4851, 1
    %v4853 = vadd.f32 %v4851, %v4852
    %v4854 = vand.u32 2147483647, %v4832
    %v4855 = vand.u32 2147483647, %v4853
    %v4856 = vmul.f32 %v4854, 0.0625
    %v4857 = vmul.f32 %v4855, 0.0625
    %v4860 = vcombine.low %v4856, %v4857
    %v4862 = vunpack.c.l.s4 1966171168
    %v4863 = vunpack.c.0.s8 %v4862
    %v4864 = vlaneseq
    %v4865 = vshrl.u32 %v4864, 7
    %v4866 = vsub.s32 %v4863, %v4865
    %v4867 = vrot.slane %v4860, %v4866
    %v4869 = vunpack.c.l.s4 1966171168
    %v4870 = vunpack.c.0.s8 %v4869
    %v4871 = vlaneseq
    %v4872 = vshrl.u32 %v4871, 7
    %v4873 = vsub.s32 %v4870, %v4872
    %v4874 = vrot.slane %v4867, %v4873
    %v4876 = vlaneseq
    %vm4877 = vcmp.ge.s32.totalorder %v4876, 0
    %vm4878 = vcmp.lt.s32.totalorder %v4876, 256
    %vm4879 = vmand %vm4877, %vm4878
    %4880 = vst.msk [vmem:[%s3] ss:$2 sm:$0x3] %vm4879, %v4874
    %s4881 = sld [smem:[#allocation2 + $0x1]]
    loop: start=0, step=1, limit=2
    $region25: #{_forward.1} parent=1 // loop_pre_header
      _
    $region26: #{_forward.1} parent=1 // loop_header
      %s4883 = sphi 0, %s4887
      %p4884 = scmp.ge.s32.totalorder %s4883, 2
      %v4888 = vphi 0.0, %v9618
      %v4889 = vphi 0.0, %v9619
      %v4890 = vphi 0.0, %v9620
      %v4891 = vphi 0.0, %v9621
      %v4892 = vphi 0.0, %v9622
      %v4893 = vphi 0.0, %v9623
      %v4894 = vphi 0.0, %v9624
      %v4895 = vphi 0.0, %v9625
      %v4896 = vphi 0.0, %v9626
      %v4897 = vphi 0.0, %v9627
      %v4898 = vphi 0.0, %v9628
      %v4899 = vphi 0.0, %v9629
      %v4900 = vphi 0.0, %v9630
      %v4901 = vphi 0.0, %v9631
      %v4902 = vphi 0.0, %v9632
      %v4903 = vphi 0.0, %v9633
      %v4904 = vphi 0.0, %v9634
      %v4905 = vphi 0.0, %v9635
      %v4906 = vphi 0.0, %v9636
      %v4907 = vphi 0.0, %v9637
      %v4908 = vphi 0.0, %v9638
      %v4909 = vphi 0.0, %v9639
      %v4910 = vphi 0.0, %v9640
      %v4911 = vphi 0.0, %v9641
      %v4912 = vphi 0.0, %v9642
      %v4913 = vphi 0.0, %v9643
      %v4914 = vphi 0.0, %v9644
      %v4915 = vphi 0.0, %v9645
      %v4916 = vphi 0.0, %v9646
      %v4917 = vphi 0.0, %v9647
      %v4918 = vphi 0.0, %v9648
      %v4919 = vphi 0.0, %v9649
    $region27: #{_forward.1} parent=1 // loop_header_branch
      %4886 = sbr.rel (%p4884) target = $region31
    $region28: #{_forward.1} parent=1 // loop_body
      %s4920 = smul.u32 %s4883, 8
      %s4921 = sshra.s32 %s4920, 3
      %s4922 = sand.u32 %s4920, 7
      %s4923 = smul.u32 %s4921, 2
      %s4924 = smul.addr %s4923, 8
      %s4925 = scalar_lea.vmem %s1, %s4924
      %v4926 = vld [vmem:[%s4925] sm:$0xff]
      %v4927 = vld [vmem:[%s4925 + $0x8] sm:$0xff]
      %v4928 = vstv %s4881
      %v4929 = vmul.f32 %v4926, %v4928
      %v4930 = vmul.f32 %v4927, %v4928
      %v4931 = vcvt.f32.s32.ties.to.even %v4929
      %v4932 = vcvt.f32.s32.ties.to.even %v4930
      %v4933 = vsub.s32 %v4931, 4
      %v4934 = vsub.s32 %v4932, 4
      %vm4935 = vcmp.gt.s32.totalorder %v4933, 0
      %v4936 = vsel %vm4935, %v4933, 0
      %vm4937 = vcmp.gt.s32.totalorder %v4934, 0
      %v4938 = vsel %vm4937, %v4934, 0
      %vm4939 = vcmp.lt.s32.totalorder %v4936, 499
      %v4940 = vsel %vm4939, %v4936, 499
      %vm4941 = vcmp.lt.s32.totalorder %v4938, 499
      %v4942 = vsel %vm4941, %v4938, 499
      %s4943 = sadd.s32 %s4883, 2
      %s4944 = smul.u32 %s4943, 128
      %s4945 = scalar_lea.vmem %s2, %s4944
      %v4946 = vld [vmem:[%s4945] sm:$0xff]
      %v4947 = vld [vmem:[%s4945 + $0x8] sm:$0xff]
      %v4948 = vld [vmem:[%s4945 + $0x10] sm:$0xff]
      %v4949 = vld [vmem:[%s4945 + $0x18] sm:$0xff]
      %v4950 = vld [vmem:[%s4945 + $0x20] sm:$0xff]
      %v4951 = vld [vmem:[%s4945 + $0x28] sm:$0xff]
      %v4952 = vld [vmem:[%s4945 + $0x30] sm:$0xff]
      %v4953 = vld [vmem:[%s4945 + $0x38] sm:$0xff]
      %v4954 = vld [vmem:[%s4945 + $0x40] sm:$0xff]
      %v4955 = vld [vmem:[%s4945 + $0x48] sm:$0xff]
      %v4956 = vld [vmem:[%s4945 + $0x50] sm:$0xff]
      %v4957 = vld [vmem:[%s4945 + $0x58] sm:$0xff]
      %v4958 = vld [vmem:[%s4945 + $0x60] sm:$0xff]
      %v4959 = vld [vmem:[%s4945 + $0x68] sm:$0xff]
      %v4960 = vld [vmem:[%s4945 + $0x70] sm:$0xff]
      %v4961 = vld [vmem:[%s4945 + $0x78] sm:$0xff]
      %v4962 = vlaneseq
      %v4963 = vshrl.u32 %v4962, 7
      %v4964 = vsub.s32 0, %v4963
      %v4965 = vrot.slane %v4940, %v4964
      %v4966 = vlaneseq
      %v4967 = vshrl.u32 %v4966, 7
      %v4968 = vsub.s32 0, %v4967
      %v4969 = vrot.slane %v4942, %v4968
      %v4970 = vsub.s32 %v4965, %v28
      %v4971 = vsub.s32 %v4969, %v28
      %v4972 = vsub.s32 %v4965, %v29
      %v4973 = vsub.s32 %v4969, %v29
      %v4974 = vsub.s32 %v4965, %v30
      %v4975 = vsub.s32 %v4969, %v30
      %v4976 = vsub.s32 %v4965, %v31
      %v4977 = vsub.s32 %v4969, %v31
      %v4978 = vsub.s32 %v4965, %v32
      %v4979 = vsub.s32 %v4969, %v32
      %v4980 = vsub.s32 %v4965, %v33
      %v4981 = vsub.s32 %v4969, %v33
      %v4982 = vsub.s32 %v4965, %v34
      %v4983 = vsub.s32 %v4969, %v34
      %v4984 = vsub.s32 %v4965, %v35
      %v4985 = vsub.s32 %v4969, %v35
      %v4986 = vsub.s32 %v4965, %v36
      %v4987 = vsub.s32 %v4969, %v36
      %v4988 = vsub.s32 %v4965, %v37
      %v4989 = vsub.s32 %v4969, %v37
      %v4990 = vsub.s32 %v4965, %v38
      %v4991 = vsub.s32 %v4969, %v38
      %v4992 = vsub.s32 %v4965, %v39
      %v4993 = vsub.s32 %v4969, %v39
      %v4994 = vsub.s32 %v4965, %v40
      %v4995 = vsub.s32 %v4969, %v40
      %v4996 = vsub.s32 %v4965, %v41
      %v4997 = vsub.s32 %v4969, %v41
      %v4998 = vsub.s32 %v4965, %v42
      %v4999 = vsub.s32 %v4969, %v42
      %v5000 = vsub.s32 %v4965, %v43
      %v5001 = vsub.s32 %v4969, %v43
      %vm5002 = vcmp.eq.s32.totalorder %v4970, 0
      %vm5003 = vcmp.eq.s32.totalorder %v4971, 0
      %vm5004 = vcmp.eq.s32.totalorder %v4972, 0
      %vm5005 = vcmp.eq.s32.totalorder %v4973, 0
      %vm5006 = vcmp.eq.s32.totalorder %v4974, 0
      %vm5007 = vcmp.eq.s32.totalorder %v4975, 0
      %vm5008 = vcmp.eq.s32.totalorder %v4976, 0
      %vm5009 = vcmp.eq.s32.totalorder %v4977, 0
      %vm5010 = vcmp.eq.s32.totalorder %v4978, 0
      %vm5011 = vcmp.eq.s32.totalorder %v4979, 0
      %vm5012 = vcmp.eq.s32.totalorder %v4980, 0
      %vm5013 = vcmp.eq.s32.totalorder %v4981, 0
      %vm5014 = vcmp.eq.s32.totalorder %v4982, 0
      %vm5015 = vcmp.eq.s32.totalorder %v4983, 0
      %vm5016 = vcmp.eq.s32.totalorder %v4984, 0
      %vm5017 = vcmp.eq.s32.totalorder %v4985, 0
      %vm5018 = vcmp.eq.s32.totalorder %v4986, 0
      %vm5019 = vcmp.eq.s32.totalorder %v4987, 0
      %vm5020 = vcmp.eq.s32.totalorder %v4988, 0
      %vm5021 = vcmp.eq.s32.totalorder %v4989, 0
      %vm5022 = vcmp.eq.s32.totalorder %v4990, 0
      %vm5023 = vcmp.eq.s32.totalorder %v4991, 0
      %vm5024 = vcmp.eq.s32.totalorder %v4992, 0
      %vm5025 = vcmp.eq.s32.totalorder %v4993, 0
      %vm5026 = vcmp.eq.s32.totalorder %v4994, 0
      %vm5027 = vcmp.eq.s32.totalorder %v4995, 0
      %vm5028 = vcmp.eq.s32.totalorder %v4996, 0
      %vm5029 = vcmp.eq.s32.totalorder %v4997, 0
      %vm5030 = vcmp.eq.s32.totalorder %v4998, 0
      %vm5031 = vcmp.eq.s32.totalorder %v4999, 0
      %vm5032 = vcmp.eq.s32.totalorder %v5000, 0
      %vm5033 = vcmp.eq.s32.totalorder %v5001, 0
      %5035 = vset.pattern.permute.xlu0 0
      %5036 = vperm.xlu0 %5035, %v4946
      %v5037 = vpop.permute.xlu0 %5036
      %5040 = vset.pattern.permute.xlu0 0
      %5041 = vperm.xlu0 %5040, %v4947
      %v5042 = vpop.permute.xlu0 %5041
      %5045 = vset.pattern.permute.xlu0 0
      %5046 = vperm.xlu0 %5045, %v4948
      %v5047 = vpop.permute.xlu0 %5046
      %5050 = vset.pattern.permute.xlu0 0
      %5051 = vperm.xlu0 %5050, %v4949
      %v5052 = vpop.permute.xlu0 %5051
      %5055 = vset.pattern.permute.xlu0 0
      %5056 = vperm.xlu0 %5055, %v4950
      %v5057 = vpop.permute.xlu0 %5056
      %5060 = vset.pattern.permute.xlu0 0
      %5061 = vperm.xlu0 %5060, %v4951
      %v5062 = vpop.permute.xlu0 %5061
      %5065 = vset.pattern.permute.xlu0 0
      %5066 = vperm.xlu0 %5065, %v4952
      %v5067 = vpop.permute.xlu0 %5066
      %5070 = vset.pattern.permute.xlu0 0
      %5071 = vperm.xlu0 %5070, %v4953
      %v5072 = vpop.permute.xlu0 %5071
      %5075 = vset.pattern.permute.xlu0 0
      %5076 = vperm.xlu0 %5075, %v4954
      %v5077 = vpop.permute.xlu0 %5076
      %5080 = vset.pattern.permute.xlu0 0
      %5081 = vperm.xlu0 %5080, %v4955
      %v5082 = vpop.permute.xlu0 %5081
      %5085 = vset.pattern.permute.xlu0 0
      %5086 = vperm.xlu0 %5085, %v4956
      %v5087 = vpop.permute.xlu0 %5086
      %5090 = vset.pattern.permute.xlu0 0
      %5091 = vperm.xlu0 %5090, %v4957
      %v5092 = vpop.permute.xlu0 %5091
      %5095 = vset.pattern.permute.xlu0 0
      %5096 = vperm.xlu0 %5095, %v4958
      %v5097 = vpop.permute.xlu0 %5096
      %5100 = vset.pattern.permute.xlu0 0
      %5101 = vperm.xlu0 %5100, %v4959
      %v5102 = vpop.permute.xlu0 %5101
      %5105 = vset.pattern.permute.xlu0 0
      %5106 = vperm.xlu0 %5105, %v4960
      %v5107 = vpop.permute.xlu0 %5106
      %5110 = vset.pattern.permute.xlu0 0
      %5111 = vperm.xlu0 %5110, %v4961
      %v5112 = vpop.permute.xlu0 %5111
      %v5114 = vsel %vm5002, %v5037, 0.0
      %v5115 = vsel %vm5003, %v5037, 0.0
      %v5116 = vsel %vm5004, %v5042, 0.0
      %v5117 = vsel %vm5005, %v5042, 0.0
      %v5118 = vsel %vm5006, %v5047, 0.0
      %v5119 = vsel %vm5007, %v5047, 0.0
      %v5120 = vsel %vm5008, %v5052, 0.0
      %v5121 = vsel %vm5009, %v5052, 0.0
      %v5122 = vsel %vm5010, %v5057, 0.0
      %v5123 = vsel %vm5011, %v5057, 0.0
      %v5124 = vsel %vm5012, %v5062, 0.0
      %v5125 = vsel %vm5013, %v5062, 0.0
      %v5126 = vsel %vm5014, %v5067, 0.0
      %v5127 = vsel %vm5015, %v5067, 0.0
      %v5128 = vsel %vm5016, %v5072, 0.0
      %v5129 = vsel %vm5017, %v5072, 0.0
      %v5130 = vsel %vm5018, %v5077, 0.0
      %v5131 = vsel %vm5019, %v5077, 0.0
      %v5132 = vsel %vm5020, %v5082, 0.0
      %v5133 = vsel %vm5021, %v5082, 0.0
      %v5134 = vsel %vm5022, %v5087, 0.0
      %v5135 = vsel %vm5023, %v5087, 0.0
      %v5136 = vsel %vm5024, %v5092, 0.0
      %v5137 = vsel %vm5025, %v5092, 0.0
      %v5138 = vsel %vm5026, %v5097, 0.0
      %v5139 = vsel %vm5027, %v5097, 0.0
      %v5140 = vsel %vm5028, %v5102, 0.0
      %v5141 = vsel %vm5029, %v5102, 0.0
      %v5142 = vsel %vm5030, %v5107, 0.0
      %v5143 = vsel %vm5031, %v5107, 0.0
      %v5144 = vsel %vm5032, %v5112, 0.0
      %v5145 = vsel %vm5033, %v5112, 0.0
      %vm5146 = vcmp.eq.s32.totalorder %v4970, 128
      %vm5147 = vcmp.eq.s32.totalorder %v4971, 128
      %vm5148 = vcmp.eq.s32.totalorder %v4972, 128
      %vm5149 = vcmp.eq.s32.totalorder %v4973, 128
      %vm5150 = vcmp.eq.s32.totalorder %v4974, 128
      %vm5151 = vcmp.eq.s32.totalorder %v4975, 128
      %vm5152 = vcmp.eq.s32.totalorder %v4976, 128
      %vm5153 = vcmp.eq.s32.totalorder %v4977, 128
      %vm5154 = vcmp.eq.s32.totalorder %v4978, 128
      %vm5155 = vcmp.eq.s32.totalorder %v4979, 128
      %vm5156 = vcmp.eq.s32.totalorder %v4980, 128
      %vm5157 = vcmp.eq.s32.totalorder %v4981, 128
      %vm5158 = vcmp.eq.s32.totalorder %v4982, 128
      %vm5159 = vcmp.eq.s32.totalorder %v4983, 128
      %vm5160 = vcmp.eq.s32.totalorder %v4984, 128
      %vm5161 = vcmp.eq.s32.totalorder %v4985, 128
      %vm5162 = vcmp.eq.s32.totalorder %v4986, 128
      %vm5163 = vcmp.eq.s32.totalorder %v4987, 128
      %vm5164 = vcmp.eq.s32.totalorder %v4988, 128
      %vm5165 = vcmp.eq.s32.totalorder %v4989, 128
      %vm5166 = vcmp.eq.s32.totalorder %v4990, 128
      %vm5167 = vcmp.eq.s32.totalorder %v4991, 128
      %vm5168 = vcmp.eq.s32.totalorder %v4992, 128
      %vm5169 = vcmp.eq.s32.totalorder %v4993, 128
      %vm5170 = vcmp.eq.s32.totalorder %v4994, 128
      %vm5171 = vcmp.eq.s32.totalorder %v4995, 128
      %vm5172 = vcmp.eq.s32.totalorder %v4996, 128
      %vm5173 = vcmp.eq.s32.totalorder %v4997, 128
      %vm5174 = vcmp.eq.s32.totalorder %v4998, 128
      %vm5175 = vcmp.eq.s32.totalorder %v4999, 128
      %vm5176 = vcmp.eq.s32.totalorder %v5000, 128
      %vm5177 = vcmp.eq.s32.totalorder %v5001, 128
      %5178 = vset.pattern.permute.xlu0 1
      %5179 = vperm.xlu0 %5178, %v4946
      %v5180 = vpop.permute.xlu0 %5179
      %5182 = vset.pattern.permute.xlu0 1
      %5183 = vperm.xlu0 %5182, %v4947
      %v5184 = vpop.permute.xlu0 %5183
      %5186 = vset.pattern.permute.xlu0 1
      %5187 = vperm.xlu0 %5186, %v4948
      %v5188 = vpop.permute.xlu0 %5187
      %5190 = vset.pattern.permute.xlu0 1
      %5191 = vperm.xlu0 %5190, %v4949
      %v5192 = vpop.permute.xlu0 %5191
      %5194 = vset.pattern.permute.xlu0 1
      %5195 = vperm.xlu0 %5194, %v4950
      %v5196 = vpop.permute.xlu0 %5195
      %5198 = vset.pattern.permute.xlu0 1
      %5199 = vperm.xlu0 %5198, %v4951
      %v5200 = vpop.permute.xlu0 %5199
      %5202 = vset.pattern.permute.xlu0 1
      %5203 = vperm.xlu0 %5202, %v4952
      %v5204 = vpop.permute.xlu0 %5203
      %5206 = vset.pattern.permute.xlu0 1
      %5207 = vperm.xlu0 %5206, %v4953
      %v5208 = vpop.permute.xlu0 %5207
      %5210 = vset.pattern.permute.xlu0 1
      %5211 = vperm.xlu0 %5210, %v4954
      %v5212 = vpop.permute.xlu0 %5211
      %5214 = vset.pattern.permute.xlu0 1
      %5215 = vperm.xlu0 %5214, %v4955
      %v5216 = vpop.permute.xlu0 %5215
      %5218 = vset.pattern.permute.xlu0 1
      %5219 = vperm.xlu0 %5218, %v4956
      %v5220 = vpop.permute.xlu0 %5219
      %5222 = vset.pattern.permute.xlu0 1
      %5223 = vperm.xlu0 %5222, %v4957
      %v5224 = vpop.permute.xlu0 %5223
      %5226 = vset.pattern.permute.xlu0 1
      %5227 = vperm.xlu0 %5226, %v4958
      %v5228 = vpop.permute.xlu0 %5227
      %5230 = vset.pattern.permute.xlu0 1
      %5231 = vperm.xlu0 %5230, %v4959
      %v5232 = vpop.permute.xlu0 %5231
      %5234 = vset.pattern.permute.xlu0 1
      %5235 = vperm.xlu0 %5234, %v4960
      %v5236 = vpop.permute.xlu0 %5235
      %5238 = vset.pattern.permute.xlu0 1
      %5239 = vperm.xlu0 %5238, %v4961
      %v5240 = vpop.permute.xlu0 %5239
      %v5242 = vsel %vm5146, %v5180, %v5114
      %v5243 = vsel %vm5147, %v5180, %v5115
      %v5244 = vsel %vm5148, %v5184, %v5116
      %v5245 = vsel %vm5149, %v5184, %v5117
      %v5246 = vsel %vm5150, %v5188, %v5118
      %v5247 = vsel %vm5151, %v5188, %v5119
      %v5248 = vsel %vm5152, %v5192, %v5120
      %v5249 = vsel %vm5153, %v5192, %v5121
      %v5250 = vsel %vm5154, %v5196, %v5122
      %v5251 = vsel %vm5155, %v5196, %v5123
      %v5252 = vsel %vm5156, %v5200, %v5124
      %v5253 = vsel %vm5157, %v5200, %v5125
      %v5254 = vsel %vm5158, %v5204, %v5126
      %v5255 = vsel %vm5159, %v5204, %v5127
      %v5256 = vsel %vm5160, %v5208, %v5128
      %v5257 = vsel %vm5161, %v5208, %v5129
      %v5258 = vsel %vm5162, %v5212, %v5130
      %v5259 = vsel %vm5163, %v5212, %v5131
      %v5260 = vsel %vm5164, %v5216, %v5132
      %v5261 = vsel %vm5165, %v5216, %v5133
      %v5262 = vsel %vm5166, %v5220, %v5134
      %v5263 = vsel %vm5167, %v5220, %v5135
      %v5264 = vsel %vm5168, %v5224, %v5136
      %v5265 = vsel %vm5169, %v5224, %v5137
      %v5266 = vsel %vm5170, %v5228, %v5138
      %v5267 = vsel %vm5171, %v5228, %v5139
      %v5268 = vsel %vm5172, %v5232, %v5140
      %v5269 = vsel %vm5173, %v5232, %v5141
      %v5270 = vsel %vm5174, %v5236, %v5142
      %v5271 = vsel %vm5175, %v5236, %v5143
      %v5272 = vsel %vm5176, %v5240, %v5144
      %v5273 = vsel %vm5177, %v5240, %v5145
      %vm5274 = vcmp.eq.s32.totalorder %v4970, 256
      %vm5275 = vcmp.eq.s32.totalorder %v4971, 256
      %vm5276 = vcmp.eq.s32.totalorder %v4972, 256
      %vm5277 = vcmp.eq.s32.totalorder %v4973, 256
      %vm5278 = vcmp.eq.s32.totalorder %v4974, 256
      %vm5279 = vcmp.eq.s32.totalorder %v4975, 256
      %vm5280 = vcmp.eq.s32.totalorder %v4976, 256
      %vm5281 = vcmp.eq.s32.totalorder %v4977, 256
      %vm5282 = vcmp.eq.s32.totalorder %v4978, 256
      %vm5283 = vcmp.eq.s32.totalorder %v4979, 256
      %vm5284 = vcmp.eq.s32.totalorder %v4980, 256
      %vm5285 = vcmp.eq.s32.totalorder %v4981, 256
      %vm5286 = vcmp.eq.s32.totalorder %v4982, 256
      %vm5287 = vcmp.eq.s32.totalorder %v4983, 256
      %vm5288 = vcmp.eq.s32.totalorder %v4984, 256
      %vm5289 = vcmp.eq.s32.totalorder %v4985, 256
      %vm5290 = vcmp.eq.s32.totalorder %v4986, 256
      %vm5291 = vcmp.eq.s32.totalorder %v4987, 256
      %vm5292 = vcmp.eq.s32.totalorder %v4988, 256
      %vm5293 = vcmp.eq.s32.totalorder %v4989, 256
      %vm5294 = vcmp.eq.s32.totalorder %v4990, 256
      %vm5295 = vcmp.eq.s32.totalorder %v4991, 256
      %vm5296 = vcmp.eq.s32.totalorder %v4992, 256
      %vm5297 = vcmp.eq.s32.totalorder %v4993, 256
      %vm5298 = vcmp.eq.s32.totalorder %v4994, 256
      %vm5299 = vcmp.eq.s32.totalorder %v4995, 256
      %vm5300 = vcmp.eq.s32.totalorder %v4996, 256
      %vm5301 = vcmp.eq.s32.totalorder %v4997, 256
      %vm5302 = vcmp.eq.s32.totalorder %v4998, 256
      %vm5303 = vcmp.eq.s32.totalorder %v4999, 256
      %vm5304 = vcmp.eq.s32.totalorder %v5000, 256
      %vm5305 = vcmp.eq.s32.totalorder %v5001, 256
      %5306 = vset.pattern.permute.xlu0 2
      %5307 = vperm.xlu0 %5306, %v4946
      %v5308 = vpop.permute.xlu0 %5307
      %5310 = vset.pattern.permute.xlu0 2
      %5311 = vperm.xlu0 %5310, %v4947
      %v5312 = vpop.permute.xlu0 %5311
      %5314 = vset.pattern.permute.xlu0 2
      %5315 = vperm.xlu0 %5314, %v4948
      %v5316 = vpop.permute.xlu0 %5315
      %5318 = vset.pattern.permute.xlu0 2
      %5319 = vperm.xlu0 %5318, %v4949
      %v5320 = vpop.permute.xlu0 %5319
      %5322 = vset.pattern.permute.xlu0 2
      %5323 = vperm.xlu0 %5322, %v4950
      %v5324 = vpop.permute.xlu0 %5323
      %5326 = vset.pattern.permute.xlu0 2
      %5327 = vperm.xlu0 %5326, %v4951
      %v5328 = vpop.permute.xlu0 %5327
      %5330 = vset.pattern.permute.xlu0 2
      %5331 = vperm.xlu0 %5330, %v4952
      %v5332 = vpop.permute.xlu0 %5331
      %5334 = vset.pattern.permute.xlu0 2
      %5335 = vperm.xlu0 %5334, %v4953
      %v5336 = vpop.permute.xlu0 %5335
      %5338 = vset.pattern.permute.xlu0 2
      %5339 = vperm.xlu0 %5338, %v4954
      %v5340 = vpop.permute.xlu0 %5339
      %5342 = vset.pattern.permute.xlu0 2
      %5343 = vperm.xlu0 %5342, %v4955
      %v5344 = vpop.permute.xlu0 %5343
      %5346 = vset.pattern.permute.xlu0 2
      %5347 = vperm.xlu0 %5346, %v4956
      %v5348 = vpop.permute.xlu0 %5347
      %5350 = vset.pattern.permute.xlu0 2
      %5351 = vperm.xlu0 %5350, %v4957
      %v5352 = vpop.permute.xlu0 %5351
      %5354 = vset.pattern.permute.xlu0 2
      %5355 = vperm.xlu0 %5354, %v4958
      %v5356 = vpop.permute.xlu0 %5355
      %5358 = vset.pattern.permute.xlu0 2
      %5359 = vperm.xlu0 %5358, %v4959
      %v5360 = vpop.permute.xlu0 %5359
      %5362 = vset.pattern.permute.xlu0 2
      %5363 = vperm.xlu0 %5362, %v4960
      %v5364 = vpop.permute.xlu0 %5363
      %5366 = vset.pattern.permute.xlu0 2
      %5367 = vperm.xlu0 %5366, %v4961
      %v5368 = vpop.permute.xlu0 %5367
      %v5370 = vsel %vm5274, %v5308, %v5242
      %v5371 = vsel %vm5275, %v5308, %v5243
      %v5372 = vsel %vm5276, %v5312, %v5244
      %v5373 = vsel %vm5277, %v5312, %v5245
      %v5374 = vsel %vm5278, %v5316, %v5246
      %v5375 = vsel %vm5279, %v5316, %v5247
      %v5376 = vsel %vm5280, %v5320, %v5248
      %v5377 = vsel %vm5281, %v5320, %v5249
      %v5378 = vsel %vm5282, %v5324, %v5250
      %v5379 = vsel %vm5283, %v5324, %v5251
      %v5380 = vsel %vm5284, %v5328, %v5252
      %v5381 = vsel %vm5285, %v5328, %v5253
      %v5382 = vsel %vm5286, %v5332, %v5254
      %v5383 = vsel %vm5287, %v5332, %v5255
      %v5384 = vsel %vm5288, %v5336, %v5256
      %v5385 = vsel %vm5289, %v5336, %v5257
      %v5386 = vsel %vm5290, %v5340, %v5258
      %v5387 = vsel %vm5291, %v5340, %v5259
      %v5388 = vsel %vm5292, %v5344, %v5260
      %v5389 = vsel %vm5293, %v5344, %v5261
      %v5390 = vsel %vm5294, %v5348, %v5262
      %v5391 = vsel %vm5295, %v5348, %v5263
      %v5392 = vsel %vm5296, %v5352, %v5264
      %v5393 = vsel %vm5297, %v5352, %v5265
      %v5394 = vsel %vm5298, %v5356, %v5266
      %v5395 = vsel %vm5299, %v5356, %v5267
      %v5396 = vsel %vm5300, %v5360, %v5268
      %v5397 = vsel %vm5301, %v5360, %v5269
      %v5398 = vsel %vm5302, %v5364, %v5270
      %v5399 = vsel %vm5303, %v5364, %v5271
      %v5400 = vsel %vm5304, %v5368, %v5272
      %v5401 = vsel %vm5305, %v5368, %v5273
      %vm5402 = vcmp.eq.s32.totalorder %v4970, 384
      %vm5403 = vcmp.eq.s32.totalorder %v4971, 384
      %vm5404 = vcmp.eq.s32.totalorder %v4972, 384
      %vm5405 = vcmp.eq.s32.totalorder %v4973, 384
      %vm5406 = vcmp.eq.s32.totalorder %v4974, 384
      %vm5407 = vcmp.eq.s32.totalorder %v4975, 384
      %vm5408 = vcmp.eq.s32.totalorder %v4976, 384
      %vm5409 = vcmp.eq.s32.totalorder %v4977, 384
      %vm5410 = vcmp.eq.s32.totalorder %v4978, 384
      %vm5411 = vcmp.eq.s32.totalorder %v4979, 384
      %vm5412 = vcmp.eq.s32.totalorder %v4980, 384
      %vm5413 = vcmp.eq.s32.totalorder %v4981, 384
      %vm5414 = vcmp.eq.s32.totalorder %v4982, 384
      %vm5415 = vcmp.eq.s32.totalorder %v4983, 384
      %vm5416 = vcmp.eq.s32.totalorder %v4984, 384
      %vm5417 = vcmp.eq.s32.totalorder %v4985, 384
      %vm5418 = vcmp.eq.s32.totalorder %v4986, 384
      %vm5419 = vcmp.eq.s32.totalorder %v4987, 384
      %vm5420 = vcmp.eq.s32.totalorder %v4988, 384
      %vm5421 = vcmp.eq.s32.totalorder %v4989, 384
      %vm5422 = vcmp.eq.s32.totalorder %v4990, 384
      %vm5423 = vcmp.eq.s32.totalorder %v4991, 384
      %vm5424 = vcmp.eq.s32.totalorder %v4992, 384
      %vm5425 = vcmp.eq.s32.totalorder %v4993, 384
      %vm5426 = vcmp.eq.s32.totalorder %v4994, 384
      %vm5427 = vcmp.eq.s32.totalorder %v4995, 384
      %vm5428 = vcmp.eq.s32.totalorder %v4996, 384
      %vm5429 = vcmp.eq.s32.totalorder %v4997, 384
      %vm5430 = vcmp.eq.s32.totalorder %v4998, 384
      %vm5431 = vcmp.eq.s32.totalorder %v4999, 384
      %vm5432 = vcmp.eq.s32.totalorder %v5000, 384
      %vm5433 = vcmp.eq.s32.totalorder %v5001, 384
      %5434 = vset.pattern.permute.xlu0 3
      %5435 = vperm.xlu0 %5434, %v4946
      %v5436 = vpop.permute.xlu0 %5435
      %5438 = vset.pattern.permute.xlu0 3
      %5439 = vperm.xlu0 %5438, %v4947
      %v5440 = vpop.permute.xlu0 %5439
      %5442 = vset.pattern.permute.xlu0 3
      %5443 = vperm.xlu0 %5442, %v4948
      %v5444 = vpop.permute.xlu0 %5443
      %5446 = vset.pattern.permute.xlu0 3
      %5447 = vperm.xlu0 %5446, %v4949
      %v5448 = vpop.permute.xlu0 %5447
      %5450 = vset.pattern.permute.xlu0 3
      %5451 = vperm.xlu0 %5450, %v4950
      %v5452 = vpop.permute.xlu0 %5451
      %5454 = vset.pattern.permute.xlu0 3
      %5455 = vperm.xlu0 %5454, %v4951
      %v5456 = vpop.permute.xlu0 %5455
      %5458 = vset.pattern.permute.xlu0 3
      %5459 = vperm.xlu0 %5458, %v4952
      %v5460 = vpop.permute.xlu0 %5459
      %5462 = vset.pattern.permute.xlu0 3
      %5463 = vperm.xlu0 %5462, %v4953
      %v5464 = vpop.permute.xlu0 %5463
      %5466 = vset.pattern.permute.xlu0 3
      %5467 = vperm.xlu0 %5466, %v4954
      %v5468 = vpop.permute.xlu0 %5467
      %5470 = vset.pattern.permute.xlu0 3
      %5471 = vperm.xlu0 %5470, %v4955
      %v5472 = vpop.permute.xlu0 %5471
      %5474 = vset.pattern.permute.xlu0 3
      %5475 = vperm.xlu0 %5474, %v4956
      %v5476 = vpop.permute.xlu0 %5475
      %5478 = vset.pattern.permute.xlu0 3
      %5479 = vperm.xlu0 %5478, %v4957
      %v5480 = vpop.permute.xlu0 %5479
      %5482 = vset.pattern.permute.xlu0 3
      %5483 = vperm.xlu0 %5482, %v4958
      %v5484 = vpop.permute.xlu0 %5483
      %5486 = vset.pattern.permute.xlu0 3
      %5487 = vperm.xlu0 %5486, %v4959
      %v5488 = vpop.permute.xlu0 %5487
      %5490 = vset.pattern.permute.xlu0 3
      %5491 = vperm.xlu0 %5490, %v4960
      %v5492 = vpop.permute.xlu0 %5491
      %5494 = vset.pattern.permute.xlu0 3
      %5495 = vperm.xlu0 %5494, %v4961
      %v5496 = vpop.permute.xlu0 %5495
      %v5498 = vsel %vm5402, %v5436, %v5370
      %v5499 = vsel %vm5403, %v5436, %v5371
      %v5500 = vsel %vm5404, %v5440, %v5372
      %v5501 = vsel %vm5405, %v5440, %v5373
      %v5502 = vsel %vm5406, %v5444, %v5374
      %v5503 = vsel %vm5407, %v5444, %v5375
      %v5504 = vsel %vm5408, %v5448, %v5376
      %v5505 = vsel %vm5409, %v5448, %v5377
      %v5506 = vsel %vm5410, %v5452, %v5378
      %v5507 = vsel %vm5411, %v5452, %v5379
      %v5508 = vsel %vm5412, %v5456, %v5380
      %v5509 = vsel %vm5413, %v5456, %v5381
      %v5510 = vsel %vm5414, %v5460, %v5382
      %v5511 = vsel %vm5415, %v5460, %v5383
      %v5512 = vsel %vm5416, %v5464, %v5384
      %v5513 = vsel %vm5417, %v5464, %v5385
      %v5514 = vsel %vm5418, %v5468, %v5386
      %v5515 = vsel %vm5419, %v5468, %v5387
      %v5516 = vsel %vm5420, %v5472, %v5388
      %v5517 = vsel %vm5421, %v5472, %v5389
      %v5518 = vsel %vm5422, %v5476, %v5390
      %v5519 = vsel %vm5423, %v5476, %v5391
      %v5520 = vsel %vm5424, %v5480, %v5392
      %v5521 = vsel %vm5425, %v5480, %v5393
      %v5522 = vsel %vm5426, %v5484, %v5394
      %v5523 = vsel %vm5427, %v5484, %v5395
      %v5524 = vsel %vm5428, %v5488, %v5396
      %v5525 = vsel %vm5429, %v5488, %v5397
      %v5526 = vsel %vm5430, %v5492, %v5398
      %v5527 = vsel %vm5431, %v5492, %v5399
      %v5528 = vsel %vm5432, %v5496, %v5400
      %v5529 = vsel %vm5433, %v5496, %v5401
      %v5530 = vadd.f32 %v4888, %v5498
      %v5531 = vadd.f32 %v4889, %v5499
      %v5532 = vadd.f32 %v4890, %v5500
      %v5533 = vadd.f32 %v4891, %v5501
      %v5534 = vadd.f32 %v4892, %v5502
      %v5535 = vadd.f32 %v4893, %v5503
      %v5536 = vadd.f32 %v4894, %v5504
      %v5537 = vadd.f32 %v4895, %v5505
      %v5538 = vadd.f32 %v4896, %v5506
      %v5539 = vadd.f32 %v4897, %v5507
      %v5540 = vadd.f32 %v4898, %v5508
      %v5541 = vadd.f32 %v4899, %v5509
      %v5542 = vadd.f32 %v4900, %v5510
      %v5543 = vadd.f32 %v4901, %v5511
      %v5544 = vadd.f32 %v4902, %v5512
      %v5545 = vadd.f32 %v4903, %v5513
      %v5546 = vadd.f32 %v4904, %v5514
      %v5547 = vadd.f32 %v4905, %v5515
      %v5548 = vadd.f32 %v4906, %v5516
      %v5549 = vadd.f32 %v4907, %v5517
      %v5550 = vadd.f32 %v4908, %v5518
      %v5551 = vadd.f32 %v4909, %v5519
      %v5552 = vadd.f32 %v4910, %v5520
      %v5553 = vadd.f32 %v4911, %v5521
      %v5554 = vadd.f32 %v4912, %v5522
      %v5555 = vadd.f32 %v4913, %v5523
      %v5556 = vadd.f32 %v4914, %v5524
      %v5557 = vadd.f32 %v4915, %v5525
      %v5558 = vadd.f32 %v4916, %v5526
      %v5559 = vadd.f32 %v4917, %v5527
      %v5560 = vadd.f32 %v4918, %v5528
      %v5561 = vadd.f32 %v4919, %v5529
      %v5562 = vlaneseq
      %v5563 = vshrl.u32 %v5562, 7
      %v5564 = vsub.s32 1, %v5563
      %v5565 = vrot.slane %v4940, %v5564
      %v5566 = vlaneseq
      %v5567 = vshrl.u32 %v5566, 7
      %v5568 = vsub.s32 1, %v5567
      %v5569 = vrot.slane %v4942, %v5568
      %v5570 = vsub.s32 %v5565, %v28
      %v5571 = vsub.s32 %v5569, %v28
      %v5572 = vsub.s32 %v5565, %v29
      %v5573 = vsub.s32 %v5569, %v29
      %v5574 = vsub.s32 %v5565, %v30
      %v5575 = vsub.s32 %v5569, %v30
      %v5576 = vsub.s32 %v5565, %v31
      %v5577 = vsub.s32 %v5569, %v31
      %v5578 = vsub.s32 %v5565, %v32
      %v5579 = vsub.s32 %v5569, %v32
      %v5580 = vsub.s32 %v5565, %v33
      %v5581 = vsub.s32 %v5569, %v33
      %v5582 = vsub.s32 %v5565, %v34
      %v5583 = vsub.s32 %v5569, %v34
      %v5584 = vsub.s32 %v5565, %v35
      %v5585 = vsub.s32 %v5569, %v35
      %v5586 = vsub.s32 %v5565, %v36
      %v5587 = vsub.s32 %v5569, %v36
      %v5588 = vsub.s32 %v5565, %v37
      %v5589 = vsub.s32 %v5569, %v37
      %v5590 = vsub.s32 %v5565, %v38
      %v5591 = vsub.s32 %v5569, %v38
      %v5592 = vsub.s32 %v5565, %v39
      %v5593 = vsub.s32 %v5569, %v39
      %v5594 = vsub.s32 %v5565, %v40
      %v5595 = vsub.s32 %v5569, %v40
      %v5596 = vsub.s32 %v5565, %v41
      %v5597 = vsub.s32 %v5569, %v41
      %v5598 = vsub.s32 %v5565, %v42
      %v5599 = vsub.s32 %v5569, %v42
      %v5600 = vsub.s32 %v5565, %v43
      %v5601 = vsub.s32 %v5569, %v43
      %vm5602 = vcmp.eq.s32.totalorder %v5570, 0
      %vm5603 = vcmp.eq.s32.totalorder %v5571, 0
      %vm5604 = vcmp.eq.s32.totalorder %v5572, 0
      %vm5605 = vcmp.eq.s32.totalorder %v5573, 0
      %vm5606 = vcmp.eq.s32.totalorder %v5574, 0
      %vm5607 = vcmp.eq.s32.totalorder %v5575, 0
      %vm5608 = vcmp.eq.s32.totalorder %v5576, 0
      %vm5609 = vcmp.eq.s32.totalorder %v5577, 0
      %vm5610 = vcmp.eq.s32.totalorder %v5578, 0
      %vm5611 = vcmp.eq.s32.totalorder %v5579, 0
      %vm5612 = vcmp.eq.s32.totalorder %v5580, 0
      %vm5613 = vcmp.eq.s32.totalorder %v5581, 0
      %vm5614 = vcmp.eq.s32.totalorder %v5582, 0
      %vm5615 = vcmp.eq.s32.totalorder %v5583, 0
      %vm5616 = vcmp.eq.s32.totalorder %v5584, 0
      %vm5617 = vcmp.eq.s32.totalorder %v5585, 0
      %vm5618 = vcmp.eq.s32.totalorder %v5586, 0
      %vm5619 = vcmp.eq.s32.totalorder %v5587, 0
      %vm5620 = vcmp.eq.s32.totalorder %v5588, 0
      %vm5621 = vcmp.eq.s32.totalorder %v5589, 0
      %vm5622 = vcmp.eq.s32.totalorder %v5590, 0
      %vm5623 = vcmp.eq.s32.totalorder %v5591, 0
      %vm5624 = vcmp.eq.s32.totalorder %v5592, 0
      %vm5625 = vcmp.eq.s32.totalorder %v5593, 0
      %vm5626 = vcmp.eq.s32.totalorder %v5594, 0
      %vm5627 = vcmp.eq.s32.totalorder %v5595, 0
      %vm5628 = vcmp.eq.s32.totalorder %v5596, 0
      %vm5629 = vcmp.eq.s32.totalorder %v5597, 0
      %vm5630 = vcmp.eq.s32.totalorder %v5598, 0
      %vm5631 = vcmp.eq.s32.totalorder %v5599, 0
      %vm5632 = vcmp.eq.s32.totalorder %v5600, 0
      %vm5633 = vcmp.eq.s32.totalorder %v5601, 0
      %5634 = vset.pattern.permute.xlu0 4
      %5635 = vperm.xlu0 %5634, %v4946
      %v5636 = vpop.permute.xlu0 %5635
      %5638 = vset.pattern.permute.xlu0 4
      %5639 = vperm.xlu0 %5638, %v4947
      %v5640 = vpop.permute.xlu0 %5639
      %5642 = vset.pattern.permute.xlu0 4
      %5643 = vperm.xlu0 %5642, %v4948
      %v5644 = vpop.permute.xlu0 %5643
      %5646 = vset.pattern.permute.xlu0 4
      %5647 = vperm.xlu0 %5646, %v4949
      %v5648 = vpop.permute.xlu0 %5647
      %5650 = vset.pattern.permute.xlu0 4
      %5651 = vperm.xlu0 %5650, %v4950
      %v5652 = vpop.permute.xlu0 %5651
      %5654 = vset.pattern.permute.xlu0 4
      %5655 = vperm.xlu0 %5654, %v4951
      %v5656 = vpop.permute.xlu0 %5655
      %5658 = vset.pattern.permute.xlu0 4
      %5659 = vperm.xlu0 %5658, %v4952
      %v5660 = vpop.permute.xlu0 %5659
      %5662 = vset.pattern.permute.xlu0 4
      %5663 = vperm.xlu0 %5662, %v4953
      %v5664 = vpop.permute.xlu0 %5663
      %5666 = vset.pattern.permute.xlu0 4
      %5667 = vperm.xlu0 %5666, %v4954
      %v5668 = vpop.permute.xlu0 %5667
      %5670 = vset.pattern.permute.xlu0 4
      %5671 = vperm.xlu0 %5670, %v4955
      %v5672 = vpop.permute.xlu0 %5671
      %5674 = vset.pattern.permute.xlu0 4
      %5675 = vperm.xlu0 %5674, %v4956
      %v5676 = vpop.permute.xlu0 %5675
      %5678 = vset.pattern.permute.xlu0 4
      %5679 = vperm.xlu0 %5678, %v4957
      %v5680 = vpop.permute.xlu0 %5679
      %5682 = vset.pattern.permute.xlu0 4
      %5683 = vperm.xlu0 %5682, %v4958
      %v5684 = vpop.permute.xlu0 %5683
      %5686 = vset.pattern.permute.xlu0 4
      %5687 = vperm.xlu0 %5686, %v4959
      %v5688 = vpop.permute.xlu0 %5687
      %5690 = vset.pattern.permute.xlu0 4
      %5691 = vperm.xlu0 %5690, %v4960
      %v5692 = vpop.permute.xlu0 %5691
      %5694 = vset.pattern.permute.xlu0 4
      %5695 = vperm.xlu0 %5694, %v4961
      %v5696 = vpop.permute.xlu0 %5695
      %v5698 = vsel %vm5602, %v5636, 0.0
      %v5699 = vsel %vm5603, %v5636, 0.0
      %v5700 = vsel %vm5604, %v5640, 0.0
      %v5701 = vsel %vm5605, %v5640, 0.0
      %v5702 = vsel %vm5606, %v5644, 0.0
      %v5703 = vsel %vm5607, %v5644, 0.0
      %v5704 = vsel %vm5608, %v5648, 0.0
      %v5705 = vsel %vm5609, %v5648, 0.0
      %v5706 = vsel %vm5610, %v5652, 0.0
      %v5707 = vsel %vm5611, %v5652, 0.0
      %v5708 = vsel %vm5612, %v5656, 0.0
      %v5709 = vsel %vm5613, %v5656, 0.0
      %v5710 = vsel %vm5614, %v5660, 0.0
      %v5711 = vsel %vm5615, %v5660, 0.0
      %v5712 = vsel %vm5616, %v5664, 0.0
      %v5713 = vsel %vm5617, %v5664, 0.0
      %v5714 = vsel %vm5618, %v5668, 0.0
      %v5715 = vsel %vm5619, %v5668, 0.0
      %v5716 = vsel %vm5620, %v5672, 0.0
      %v5717 = vsel %vm5621, %v5672, 0.0
      %v5718 = vsel %vm5622, %v5676, 0.0
      %v5719 = vsel %vm5623, %v5676, 0.0
      %v5720 = vsel %vm5624, %v5680, 0.0
      %v5721 = vsel %vm5625, %v5680, 0.0
      %v5722 = vsel %vm5626, %v5684, 0.0
      %v5723 = vsel %vm5627, %v5684, 0.0
      %v5724 = vsel %vm5628, %v5688, 0.0
      %v5725 = vsel %vm5629, %v5688, 0.0
      %v5726 = vsel %vm5630, %v5692, 0.0
      %v5727 = vsel %vm5631, %v5692, 0.0
      %v5728 = vsel %vm5632, %v5696, 0.0
      %v5729 = vsel %vm5633, %v5696, 0.0
      %vm5730 = vcmp.eq.s32.totalorder %v5570, 128
      %vm5731 = vcmp.eq.s32.totalorder %v5571, 128
      %vm5732 = vcmp.eq.s32.totalorder %v5572, 128
      %vm5733 = vcmp.eq.s32.totalorder %v5573, 128
      %vm5734 = vcmp.eq.s32.totalorder %v5574, 128
      %vm5735 = vcmp.eq.s32.totalorder %v5575, 128
      %vm5736 = vcmp.eq.s32.totalorder %v5576, 128
      %vm5737 = vcmp.eq.s32.totalorder %v5577, 128
      %vm5738 = vcmp.eq.s32.totalorder %v5578, 128
      %vm5739 = vcmp.eq.s32.totalorder %v5579, 128
      %vm5740 = vcmp.eq.s32.totalorder %v5580, 128
      %vm5741 = vcmp.eq.s32.totalorder %v5581, 128
      %vm5742 = vcmp.eq.s32.totalorder %v5582, 128
      %vm5743 = vcmp.eq.s32.totalorder %v5583, 128
      %vm5744 = vcmp.eq.s32.totalorder %v5584, 128
      %vm5745 = vcmp.eq.s32.totalorder %v5585, 128
      %vm5746 = vcmp.eq.s32.totalorder %v5586, 128
      %vm5747 = vcmp.eq.s32.totalorder %v5587, 128
      %vm5748 = vcmp.eq.s32.totalorder %v5588, 128
      %vm5749 = vcmp.eq.s32.totalorder %v5589, 128
      %vm5750 = vcmp.eq.s32.totalorder %v5590, 128
      %vm5751 = vcmp.eq.s32.totalorder %v5591, 128
      %vm5752 = vcmp.eq.s32.totalorder %v5592, 128
      %vm5753 = vcmp.eq.s32.totalorder %v5593, 128
      %vm5754 = vcmp.eq.s32.totalorder %v5594, 128
      %vm5755 = vcmp.eq.s32.totalorder %v5595, 128
      %vm5756 = vcmp.eq.s32.totalorder %v5596, 128
      %vm5757 = vcmp.eq.s32.totalorder %v5597, 128
      %vm5758 = vcmp.eq.s32.totalorder %v5598, 128
      %vm5759 = vcmp.eq.s32.totalorder %v5599, 128
      %vm5760 = vcmp.eq.s32.totalorder %v5600, 128
      %vm5761 = vcmp.eq.s32.totalorder %v5601, 128
      %5762 = vset.pattern.permute.xlu0 5
      %5763 = vperm.xlu0 %5762, %v4946
      %v5764 = vpop.permute.xlu0 %5763
      %5766 = vset.pattern.permute.xlu0 5
      %5767 = vperm.xlu0 %5766, %v4947
      %v5768 = vpop.permute.xlu0 %5767
      %5770 = vset.pattern.permute.xlu0 5
      %5771 = vperm.xlu0 %5770, %v4948
      %v5772 = vpop.permute.xlu0 %5771
      %5774 = vset.pattern.permute.xlu0 5
      %5775 = vperm.xlu0 %5774, %v4949
      %v5776 = vpop.permute.xlu0 %5775
      %5778 = vset.pattern.permute.xlu0 5
      %5779 = vperm.xlu0 %5778, %v4950
      %v5780 = vpop.permute.xlu0 %5779
      %5782 = vset.pattern.permute.xlu0 5
      %5783 = vperm.xlu0 %5782, %v4951
      %v5784 = vpop.permute.xlu0 %5783
      %5786 = vset.pattern.permute.xlu0 5
      %5787 = vperm.xlu0 %5786, %v4952
      %v5788 = vpop.permute.xlu0 %5787
      %5790 = vset.pattern.permute.xlu0 5
      %5791 = vperm.xlu0 %5790, %v4953
      %v5792 = vpop.permute.xlu0 %5791
      %5794 = vset.pattern.permute.xlu0 5
      %5795 = vperm.xlu0 %5794, %v4954
      %v5796 = vpop.permute.xlu0 %5795
      %5798 = vset.pattern.permute.xlu0 5
      %5799 = vperm.xlu0 %5798, %v4955
      %v5800 = vpop.permute.xlu0 %5799
      %5802 = vset.pattern.permute.xlu0 5
      %5803 = vperm.xlu0 %5802, %v4956
      %v5804 = vpop.permute.xlu0 %5803
      %5806 = vset.pattern.permute.xlu0 5
      %5807 = vperm.xlu0 %5806, %v4957
      %v5808 = vpop.permute.xlu0 %5807
      %5810 = vset.pattern.permute.xlu0 5
      %5811 = vperm.xlu0 %5810, %v4958
      %v5812 = vpop.permute.xlu0 %5811
      %5814 = vset.pattern.permute.xlu0 5
      %5815 = vperm.xlu0 %5814, %v4959
      %v5816 = vpop.permute.xlu0 %5815
      %5818 = vset.pattern.permute.xlu0 5
      %5819 = vperm.xlu0 %5818, %v4960
      %v5820 = vpop.permute.xlu0 %5819
      %5822 = vset.pattern.permute.xlu0 5
      %5823 = vperm.xlu0 %5822, %v4961
      %v5824 = vpop.permute.xlu0 %5823
      %v5826 = vsel %vm5730, %v5764, %v5698
      %v5827 = vsel %vm5731, %v5764, %v5699
      %v5828 = vsel %vm5732, %v5768, %v5700
      %v5829 = vsel %vm5733, %v5768, %v5701
      %v5830 = vsel %vm5734, %v5772, %v5702
      %v5831 = vsel %vm5735, %v5772, %v5703
      %v5832 = vsel %vm5736, %v5776, %v5704
      %v5833 = vsel %vm5737, %v5776, %v5705
      %v5834 = vsel %vm5738, %v5780, %v5706
      %v5835 = vsel %vm5739, %v5780, %v5707
      %v5836 = vsel %vm5740, %v5784, %v5708
      %v5837 = vsel %vm5741, %v5784, %v5709
      %v5838 = vsel %vm5742, %v5788, %v5710
      %v5839 = vsel %vm5743, %v5788, %v5711
      %v5840 = vsel %vm5744, %v5792, %v5712
      %v5841 = vsel %vm5745, %v5792, %v5713
      %v5842 = vsel %vm5746, %v5796, %v5714
      %v5843 = vsel %vm5747, %v5796, %v5715
      %v5844 = vsel %vm5748, %v5800, %v5716
      %v5845 = vsel %vm5749, %v5800, %v5717
      %v5846 = vsel %vm5750, %v5804, %v5718
      %v5847 = vsel %vm5751, %v5804, %v5719
      %v5848 = vsel %vm5752, %v5808, %v5720
      %v5849 = vsel %vm5753, %v5808, %v5721
      %v5850 = vsel %vm5754, %v5812, %v5722
      %v5851 = vsel %vm5755, %v5812, %v5723
      %v5852 = vsel %vm5756, %v5816, %v5724
      %v5853 = vsel %vm5757, %v5816, %v5725
      %v5854 = vsel %vm5758, %v5820, %v5726
      %v5855 = vsel %vm5759, %v5820, %v5727
      %v5856 = vsel %vm5760, %v5824, %v5728
      %v5857 = vsel %vm5761, %v5824, %v5729
      %vm5858 = vcmp.eq.s32.totalorder %v5570, 256
      %vm5859 = vcmp.eq.s32.totalorder %v5571, 256
      %vm5860 = vcmp.eq.s32.totalorder %v5572, 256
      %vm5861 = vcmp.eq.s32.totalorder %v5573, 256
      %vm5862 = vcmp.eq.s32.totalorder %v5574, 256
      %vm5863 = vcmp.eq.s32.totalorder %v5575, 256
      %vm5864 = vcmp.eq.s32.totalorder %v5576, 256
      %vm5865 = vcmp.eq.s32.totalorder %v5577, 256
      %vm5866 = vcmp.eq.s32.totalorder %v5578, 256
      %vm5867 = vcmp.eq.s32.totalorder %v5579, 256
      %vm5868 = vcmp.eq.s32.totalorder %v5580, 256
      %vm5869 = vcmp.eq.s32.totalorder %v5581, 256
      %vm5870 = vcmp.eq.s32.totalorder %v5582, 256
      %vm5871 = vcmp.eq.s32.totalorder %v5583, 256
      %vm5872 = vcmp.eq.s32.totalorder %v5584, 256
      %vm5873 = vcmp.eq.s32.totalorder %v5585, 256
      %vm5874 = vcmp.eq.s32.totalorder %v5586, 256
      %vm5875 = vcmp.eq.s32.totalorder %v5587, 256
      %vm5876 = vcmp.eq.s32.totalorder %v5588, 256
      %vm5877 = vcmp.eq.s32.totalorder %v5589, 256
      %vm5878 = vcmp.eq.s32.totalorder %v5590, 256
      %vm5879 = vcmp.eq.s32.totalorder %v5591, 256
      %vm5880 = vcmp.eq.s32.totalorder %v5592, 256
      %vm5881 = vcmp.eq.s32.totalorder %v5593, 256
      %vm5882 = vcmp.eq.s32.totalorder %v5594, 256
      %vm5883 = vcmp.eq.s32.totalorder %v5595, 256
      %vm5884 = vcmp.eq.s32.totalorder %v5596, 256
      %vm5885 = vcmp.eq.s32.totalorder %v5597, 256
      %vm5886 = vcmp.eq.s32.totalorder %v5598, 256
      %vm5887 = vcmp.eq.s32.totalorder %v5599, 256
      %vm5888 = vcmp.eq.s32.totalorder %v5600, 256
      %vm5889 = vcmp.eq.s32.totalorder %v5601, 256
      %5890 = vset.pattern.permute.xlu0 6
      %5891 = vperm.xlu0 %5890, %v4946
      %v5892 = vpop.permute.xlu0 %5891
      %5894 = vset.pattern.permute.xlu0 6
      %5895 = vperm.xlu0 %5894, %v4947
      %v5896 = vpop.permute.xlu0 %5895
      %5898 = vset.pattern.permute.xlu0 6
      %5899 = vperm.xlu0 %5898, %v4948
      %v5900 = vpop.permute.xlu0 %5899
      %5902 = vset.pattern.permute.xlu0 6
      %5903 = vperm.xlu0 %5902, %v4949
      %v5904 = vpop.permute.xlu0 %5903
      %5906 = vset.pattern.permute.xlu0 6
      %5907 = vperm.xlu0 %5906, %v4950
      %v5908 = vpop.permute.xlu0 %5907
      %5910 = vset.pattern.permute.xlu0 6
      %5911 = vperm.xlu0 %5910, %v4951
      %v5912 = vpop.permute.xlu0 %5911
      %5914 = vset.pattern.permute.xlu0 6
      %5915 = vperm.xlu0 %5914, %v4952
      %v5916 = vpop.permute.xlu0 %5915
      %5918 = vset.pattern.permute.xlu0 6
      %5919 = vperm.xlu0 %5918, %v4953
      %v5920 = vpop.permute.xlu0 %5919
      %5922 = vset.pattern.permute.xlu0 6
      %5923 = vperm.xlu0 %5922, %v4954
      %v5924 = vpop.permute.xlu0 %5923
      %5926 = vset.pattern.permute.xlu0 6
      %5927 = vperm.xlu0 %5926, %v4955
      %v5928 = vpop.permute.xlu0 %5927
      %5930 = vset.pattern.permute.xlu0 6
      %5931 = vperm.xlu0 %5930, %v4956
      %v5932 = vpop.permute.xlu0 %5931
      %5934 = vset.pattern.permute.xlu0 6
      %5935 = vperm.xlu0 %5934, %v4957
      %v5936 = vpop.permute.xlu0 %5935
      %5938 = vset.pattern.permute.xlu0 6
      %5939 = vperm.xlu0 %5938, %v4958
      %v5940 = vpop.permute.xlu0 %5939
      %5942 = vset.pattern.permute.xlu0 6
      %5943 = vperm.xlu0 %5942, %v4959
      %v5944 = vpop.permute.xlu0 %5943
      %5946 = vset.pattern.permute.xlu0 6
      %5947 = vperm.xlu0 %5946, %v4960
      %v5948 = vpop.permute.xlu0 %5947
      %5950 = vset.pattern.permute.xlu0 6
      %5951 = vperm.xlu0 %5950, %v4961
      %v5952 = vpop.permute.xlu0 %5951
      %v5954 = vsel %vm5858, %v5892, %v5826
      %v5955 = vsel %vm5859, %v5892, %v5827
      %v5956 = vsel %vm5860, %v5896, %v5828
      %v5957 = vsel %vm5861, %v5896, %v5829
      %v5958 = vsel %vm5862, %v5900, %v5830
      %v5959 = vsel %vm5863, %v5900, %v5831
      %v5960 = vsel %vm5864, %v5904, %v5832
      %v5961 = vsel %vm5865, %v5904, %v5833
      %v5962 = vsel %vm5866, %v5908, %v5834
      %v5963 = vsel %vm5867, %v5908, %v5835
      %v5964 = vsel %vm5868, %v5912, %v5836
      %v5965 = vsel %vm5869, %v5912, %v5837
      %v5966 = vsel %vm5870, %v5916, %v5838
      %v5967 = vsel %vm5871, %v5916, %v5839
      %v5968 = vsel %vm5872, %v5920, %v5840
      %v5969 = vsel %vm5873, %v5920, %v5841
      %v5970 = vsel %vm5874, %v5924, %v5842
      %v5971 = vsel %vm5875, %v5924, %v5843
      %v5972 = vsel %vm5876, %v5928, %v5844
      %v5973 = vsel %vm5877, %v5928, %v5845
      %v5974 = vsel %vm5878, %v5932, %v5846
      %v5975 = vsel %vm5879, %v5932, %v5847
      %v5976 = vsel %vm5880, %v5936, %v5848
      %v5977 = vsel %vm5881, %v5936, %v5849
      %v5978 = vsel %vm5882, %v5940, %v5850
      %v5979 = vsel %vm5883, %v5940, %v5851
      %v5980 = vsel %vm5884, %v5944, %v5852
      %v5981 = vsel %vm5885, %v5944, %v5853
      %v5982 = vsel %vm5886, %v5948, %v5854
      %v5983 = vsel %vm5887, %v5948, %v5855
      %v5984 = vsel %vm5888, %v5952, %v5856
      %v5985 = vsel %vm5889, %v5952, %v5857
      %vm5986 = vcmp.eq.s32.totalorder %v5570, 384
      %vm5987 = vcmp.eq.s32.totalorder %v5571, 384
      %vm5988 = vcmp.eq.s32.totalorder %v5572, 384
      %vm5989 = vcmp.eq.s32.totalorder %v5573, 384
      %vm5990 = vcmp.eq.s32.totalorder %v5574, 384
      %vm5991 = vcmp.eq.s32.totalorder %v5575, 384
      %vm5992 = vcmp.eq.s32.totalorder %v5576, 384
      %vm5993 = vcmp.eq.s32.totalorder %v5577, 384
      %vm5994 = vcmp.eq.s32.totalorder %v5578, 384
      %vm5995 = vcmp.eq.s32.totalorder %v5579, 384
      %vm5996 = vcmp.eq.s32.totalorder %v5580, 384
      %vm5997 = vcmp.eq.s32.totalorder %v5581, 384
      %vm5998 = vcmp.eq.s32.totalorder %v5582, 384
      %vm5999 = vcmp.eq.s32.totalorder %v5583, 384
      %vm6000 = vcmp.eq.s32.totalorder %v5584, 384
      %vm6001 = vcmp.eq.s32.totalorder %v5585, 384
      %vm6002 = vcmp.eq.s32.totalorder %v5586, 384
      %vm6003 = vcmp.eq.s32.totalorder %v5587, 384
      %vm6004 = vcmp.eq.s32.totalorder %v5588, 384
      %vm6005 = vcmp.eq.s32.totalorder %v5589, 384
      %vm6006 = vcmp.eq.s32.totalorder %v5590, 384
      %vm6007 = vcmp.eq.s32.totalorder %v5591, 384
      %vm6008 = vcmp.eq.s32.totalorder %v5592, 384
      %vm6009 = vcmp.eq.s32.totalorder %v5593, 384
      %vm6010 = vcmp.eq.s32.totalorder %v5594, 384
      %vm6011 = vcmp.eq.s32.totalorder %v5595, 384
      %vm6012 = vcmp.eq.s32.totalorder %v5596, 384
      %vm6013 = vcmp.eq.s32.totalorder %v5597, 384
      %vm6014 = vcmp.eq.s32.totalorder %v5598, 384
      %vm6015 = vcmp.eq.s32.totalorder %v5599, 384
      %vm6016 = vcmp.eq.s32.totalorder %v5600, 384
      %vm6017 = vcmp.eq.s32.totalorder %v5601, 384
      %6018 = vset.pattern.permute.xlu0 7
      %6019 = vperm.xlu0 %6018, %v4946
      %v6020 = vpop.permute.xlu0 %6019
      %6022 = vset.pattern.permute.xlu0 7
      %6023 = vperm.xlu0 %6022, %v4947
      %v6024 = vpop.permute.xlu0 %6023
      %6026 = vset.pattern.permute.xlu0 7
      %6027 = vperm.xlu0 %6026, %v4948
      %v6028 = vpop.permute.xlu0 %6027
      %6030 = vset.pattern.permute.xlu0 7
      %6031 = vperm.xlu0 %6030, %v4949
      %v6032 = vpop.permute.xlu0 %6031
      %6034 = vset.pattern.permute.xlu0 7
      %6035 = vperm.xlu0 %6034, %v4950
      %v6036 = vpop.permute.xlu0 %6035
      %6038 = vset.pattern.permute.xlu0 7
      %6039 = vperm.xlu0 %6038, %v4951
      %v6040 = vpop.permute.xlu0 %6039
      %6042 = vset.pattern.permute.xlu0 7
      %6043 = vperm.xlu0 %6042, %v4952
      %v6044 = vpop.permute.xlu0 %6043
      %6046 = vset.pattern.permute.xlu0 7
      %6047 = vperm.xlu0 %6046, %v4953
      %v6048 = vpop.permute.xlu0 %6047
      %6050 = vset.pattern.permute.xlu0 7
      %6051 = vperm.xlu0 %6050, %v4954
      %v6052 = vpop.permute.xlu0 %6051
      %6054 = vset.pattern.permute.xlu0 7
      %6055 = vperm.xlu0 %6054, %v4955
      %v6056 = vpop.permute.xlu0 %6055
      %6058 = vset.pattern.permute.xlu0 7
      %6059 = vperm.xlu0 %6058, %v4956
      %v6060 = vpop.permute.xlu0 %6059
      %6062 = vset.pattern.permute.xlu0 7
      %6063 = vperm.xlu0 %6062, %v4957
      %v6064 = vpop.permute.xlu0 %6063
      %6066 = vset.pattern.permute.xlu0 7
      %6067 = vperm.xlu0 %6066, %v4958
      %v6068 = vpop.permute.xlu0 %6067
      %6070 = vset.pattern.permute.xlu0 7
      %6071 = vperm.xlu0 %6070, %v4959
      %v6072 = vpop.permute.xlu0 %6071
      %6074 = vset.pattern.permute.xlu0 7
      %6075 = vperm.xlu0 %6074, %v4960
      %v6076 = vpop.permute.xlu0 %6075
      %6078 = vset.pattern.permute.xlu0 7
      %6079 = vperm.xlu0 %6078, %v4961
      %v6080 = vpop.permute.xlu0 %6079
      %v6082 = vsel %vm5986, %v6020, %v5954
      %v6083 = vsel %vm5987, %v6020, %v5955
      %v6084 = vsel %vm5988, %v6024, %v5956
      %v6085 = vsel %vm5989, %v6024, %v5957
      %v6086 = vsel %vm5990, %v6028, %v5958
      %v6087 = vsel %vm5991, %v6028, %v5959
      %v6088 = vsel %vm5992, %v6032, %v5960
      %v6089 = vsel %vm5993, %v6032, %v5961
      %v6090 = vsel %vm5994, %v6036, %v5962
      %v6091 = vsel %vm5995, %v6036, %v5963
      %v6092 = vsel %vm5996, %v6040, %v5964
      %v6093 = vsel %vm5997, %v6040, %v5965
      %v6094 = vsel %vm5998, %v6044, %v5966
      %v6095 = vsel %vm5999, %v6044, %v5967
      %v6096 = vsel %vm6000, %v6048, %v5968
      %v6097 = vsel %vm6001, %v6048, %v5969
      %v6098 = vsel %vm6002, %v6052, %v5970
      %v6099 = vsel %vm6003, %v6052, %v5971
      %v6100 = vsel %vm6004, %v6056, %v5972
      %v6101 = vsel %vm6005, %v6056, %v5973
      %v6102 = vsel %vm6006, %v6060, %v5974
      %v6103 = vsel %vm6007, %v6060, %v5975
      %v6104 = vsel %vm6008, %v6064, %v5976
      %v6105 = vsel %vm6009, %v6064, %v5977
      %v6106 = vsel %vm6010, %v6068, %v5978
      %v6107 = vsel %vm6011, %v6068, %v5979
      %v6108 = vsel %vm6012, %v6072, %v5980
      %v6109 = vsel %vm6013, %v6072, %v5981
      %v6110 = vsel %vm6014, %v6076, %v5982
      %v6111 = vsel %vm6015, %v6076, %v5983
      %v6112 = vsel %vm6016, %v6080, %v5984
      %v6113 = vsel %vm6017, %v6080, %v5985
      %v6114 = vadd.f32 %v5530, %v6082
      %v6115 = vadd.f32 %v5531, %v6083
      %v6116 = vadd.f32 %v5532, %v6084
      %v6117 = vadd.f32 %v5533, %v6085
      %v6118 = vadd.f32 %v5534, %v6086
      %v6119 = vadd.f32 %v5535, %v6087
      %v6120 = vadd.f32 %v5536, %v6088
      %v6121 = vadd.f32 %v5537, %v6089
      %v6122 = vadd.f32 %v5538, %v6090
      %v6123 = vadd.f32 %v5539, %v6091
      %v6124 = vadd.f32 %v5540, %v6092
      %v6125 = vadd.f32 %v5541, %v6093
      %v6126 = vadd.f32 %v5542, %v6094
      %v6127 = vadd.f32 %v5543, %v6095
      %v6128 = vadd.f32 %v5544, %v6096
      %v6129 = vadd.f32 %v5545, %v6097
      %v6130 = vadd.f32 %v5546, %v6098
      %v6131 = vadd.f32 %v5547, %v6099
      %v6132 = vadd.f32 %v5548, %v6100
      %v6133 = vadd.f32 %v5549, %v6101
      %v6134 = vadd.f32 %v5550, %v6102
      %v6135 = vadd.f32 %v5551, %v6103
      %v6136 = vadd.f32 %v5552, %v6104
      %v6137 = vadd.f32 %v5553, %v6105
      %v6138 = vadd.f32 %v5554, %v6106
      %v6139 = vadd.f32 %v5555, %v6107
      %v6140 = vadd.f32 %v5556, %v6108
      %v6141 = vadd.f32 %v5557, %v6109
      %v6142 = vadd.f32 %v5558, %v6110
      %v6143 = vadd.f32 %v5559, %v6111
      %v6144 = vadd.f32 %v5560, %v6112
      %v6145 = vadd.f32 %v5561, %v6113
      %v6146 = vlaneseq
      %v6147 = vshrl.u32 %v6146, 7
      %v6148 = vsub.s32 2, %v6147
      %v6149 = vrot.slane %v4940, %v6148
      %v6150 = vlaneseq
      %v6151 = vshrl.u32 %v6150, 7
      %v6152 = vsub.s32 2, %v6151
      %v6153 = vrot.slane %v4942, %v6152
      %v6154 = vsub.s32 %v6149, %v28
      %v6155 = vsub.s32 %v6153, %v28
      %v6156 = vsub.s32 %v6149, %v29
      %v6157 = vsub.s32 %v6153, %v29
      %v6158 = vsub.s32 %v6149, %v30
      %v6159 = vsub.s32 %v6153, %v30
      %v6160 = vsub.s32 %v6149, %v31
      %v6161 = vsub.s32 %v6153, %v31
      %v6162 = vsub.s32 %v6149, %v32
      %v6163 = vsub.s32 %v6153, %v32
      %v6164 = vsub.s32 %v6149, %v33
      %v6165 = vsub.s32 %v6153, %v33
      %v6166 = vsub.s32 %v6149, %v34
      %v6167 = vsub.s32 %v6153, %v34
      %v6168 = vsub.s32 %v6149, %v35
      %v6169 = vsub.s32 %v6153, %v35
      %v6170 = vsub.s32 %v6149, %v36
      %v6171 = vsub.s32 %v6153, %v36
      %v6172 = vsub.s32 %v6149, %v37
      %v6173 = vsub.s32 %v6153, %v37
      %v6174 = vsub.s32 %v6149, %v38
      %v6175 = vsub.s32 %v6153, %v38
      %v6176 = vsub.s32 %v6149, %v39
      %v6177 = vsub.s32 %v6153, %v39
      %v6178 = vsub.s32 %v6149, %v40
      %v6179 = vsub.s32 %v6153, %v40
      %v6180 = vsub.s32 %v6149, %v41
      %v6181 = vsub.s32 %v6153, %v41
      %v6182 = vsub.s32 %v6149, %v42
      %v6183 = vsub.s32 %v6153, %v42
      %v6184 = vsub.s32 %v6149, %v43
      %v6185 = vsub.s32 %v6153, %v43
      %vm6186 = vcmp.eq.s32.totalorder %v6154, 0
      %vm6187 = vcmp.eq.s32.totalorder %v6155, 0
      %vm6188 = vcmp.eq.s32.totalorder %v6156, 0
      %vm6189 = vcmp.eq.s32.totalorder %v6157, 0
      %vm6190 = vcmp.eq.s32.totalorder %v6158, 0
      %vm6191 = vcmp.eq.s32.totalorder %v6159, 0
      %vm6192 = vcmp.eq.s32.totalorder %v6160, 0
      %vm6193 = vcmp.eq.s32.totalorder %v6161, 0
      %vm6194 = vcmp.eq.s32.totalorder %v6162, 0
      %vm6195 = vcmp.eq.s32.totalorder %v6163, 0
      %vm6196 = vcmp.eq.s32.totalorder %v6164, 0
      %vm6197 = vcmp.eq.s32.totalorder %v6165, 0
      %vm6198 = vcmp.eq.s32.totalorder %v6166, 0
      %vm6199 = vcmp.eq.s32.totalorder %v6167, 0
      %vm6200 = vcmp.eq.s32.totalorder %v6168, 0
      %vm6201 = vcmp.eq.s32.totalorder %v6169, 0
      %vm6202 = vcmp.eq.s32.totalorder %v6170, 0
      %vm6203 = vcmp.eq.s32.totalorder %v6171, 0
      %vm6204 = vcmp.eq.s32.totalorder %v6172, 0
      %vm6205 = vcmp.eq.s32.totalorder %v6173, 0
      %vm6206 = vcmp.eq.s32.totalorder %v6174, 0
      %vm6207 = vcmp.eq.s32.totalorder %v6175, 0
      %vm6208 = vcmp.eq.s32.totalorder %v6176, 0
      %vm6209 = vcmp.eq.s32.totalorder %v6177, 0
      %vm6210 = vcmp.eq.s32.totalorder %v6178, 0
      %vm6211 = vcmp.eq.s32.totalorder %v6179, 0
      %vm6212 = vcmp.eq.s32.totalorder %v6180, 0
      %vm6213 = vcmp.eq.s32.totalorder %v6181, 0
      %vm6214 = vcmp.eq.s32.totalorder %v6182, 0
      %vm6215 = vcmp.eq.s32.totalorder %v6183, 0
      %vm6216 = vcmp.eq.s32.totalorder %v6184, 0
      %vm6217 = vcmp.eq.s32.totalorder %v6185, 0
      %6218 = vset.pattern.permute.xlu0 8
      %6219 = vperm.xlu0 %6218, %v4946
      %v6220 = vpop.permute.xlu0 %6219
      %6222 = vset.pattern.permute.xlu0 8
      %6223 = vperm.xlu0 %6222, %v4947
      %v6224 = vpop.permute.xlu0 %6223
      %6226 = vset.pattern.permute.xlu0 8
      %6227 = vperm.xlu0 %6226, %v4948
      %v6228 = vpop.permute.xlu0 %6227
      %6230 = vset.pattern.permute.xlu0 8
      %6231 = vperm.xlu0 %6230, %v4949
      %v6232 = vpop.permute.xlu0 %6231
      %6234 = vset.pattern.permute.xlu0 8
      %6235 = vperm.xlu0 %6234, %v4950
      %v6236 = vpop.permute.xlu0 %6235
      %6238 = vset.pattern.permute.xlu0 8
      %6239 = vperm.xlu0 %6238, %v4951
      %v6240 = vpop.permute.xlu0 %6239
      %6242 = vset.pattern.permute.xlu0 8
      %6243 = vperm.xlu0 %6242, %v4952
      %v6244 = vpop.permute.xlu0 %6243
      %6246 = vset.pattern.permute.xlu0 8
      %6247 = vperm.xlu0 %6246, %v4953
      %v6248 = vpop.permute.xlu0 %6247
      %6250 = vset.pattern.permute.xlu0 8
      %6251 = vperm.xlu0 %6250, %v4954
      %v6252 = vpop.permute.xlu0 %6251
      %6254 = vset.pattern.permute.xlu0 8
      %6255 = vperm.xlu0 %6254, %v4955
      %v6256 = vpop.permute.xlu0 %6255
      %6258 = vset.pattern.permute.xlu0 8
      %6259 = vperm.xlu0 %6258, %v4956
      %v6260 = vpop.permute.xlu0 %6259
      %6262 = vset.pattern.permute.xlu0 8
      %6263 = vperm.xlu0 %6262, %v4957
      %v6264 = vpop.permute.xlu0 %6263
      %6266 = vset.pattern.permute.xlu0 8
      %6267 = vperm.xlu0 %6266, %v4958
      %v6268 = vpop.permute.xlu0 %6267
      %6270 = vset.pattern.permute.xlu0 8
      %6271 = vperm.xlu0 %6270, %v4959
      %v6272 = vpop.permute.xlu0 %6271
      %6274 = vset.pattern.permute.xlu0 8
      %6275 = vperm.xlu0 %6274, %v4960
      %v6276 = vpop.permute.xlu0 %6275
      %6278 = vset.pattern.permute.xlu0 8
      %6279 = vperm.xlu0 %6278, %v4961
      %v6280 = vpop.permute.xlu0 %6279
      %v6282 = vsel %vm6186, %v6220, 0.0
      %v6283 = vsel %vm6187, %v6220, 0.0
      %v6284 = vsel %vm6188, %v6224, 0.0
      %v6285 = vsel %vm6189, %v6224, 0.0
      %v6286 = vsel %vm6190, %v6228, 0.0
      %v6287 = vsel %vm6191, %v6228, 0.0
      %v6288 = vsel %vm6192, %v6232, 0.0
      %v6289 = vsel %vm6193, %v6232, 0.0
      %v6290 = vsel %vm6194, %v6236, 0.0
      %v6291 = vsel %vm6195, %v6236, 0.0
      %v6292 = vsel %vm6196, %v6240, 0.0
      %v6293 = vsel %vm6197, %v6240, 0.0
      %v6294 = vsel %vm6198, %v6244, 0.0
      %v6295 = vsel %vm6199, %v6244, 0.0
      %v6296 = vsel %vm6200, %v6248, 0.0
      %v6297 = vsel %vm6201, %v6248, 0.0
      %v6298 = vsel %vm6202, %v6252, 0.0
      %v6299 = vsel %vm6203, %v6252, 0.0
      %v6300 = vsel %vm6204, %v6256, 0.0
      %v6301 = vsel %vm6205, %v6256, 0.0
      %v6302 = vsel %vm6206, %v6260, 0.0
      %v6303 = vsel %vm6207, %v6260, 0.0
      %v6304 = vsel %vm6208, %v6264, 0.0
      %v6305 = vsel %vm6209, %v6264, 0.0
      %v6306 = vsel %vm6210, %v6268, 0.0
      %v6307 = vsel %vm6211, %v6268, 0.0
      %v6308 = vsel %vm6212, %v6272, 0.0
      %v6309 = vsel %vm6213, %v6272, 0.0
      %v6310 = vsel %vm6214, %v6276, 0.0
      %v6311 = vsel %vm6215, %v6276, 0.0
      %v6312 = vsel %vm6216, %v6280, 0.0
      %v6313 = vsel %vm6217, %v6280, 0.0
      %vm6314 = vcmp.eq.s32.totalorder %v6154, 128
      %vm6315 = vcmp.eq.s32.totalorder %v6155, 128
      %vm6316 = vcmp.eq.s32.totalorder %v6156, 128
      %vm6317 = vcmp.eq.s32.totalorder %v6157, 128
      %vm6318 = vcmp.eq.s32.totalorder %v6158, 128
      %vm6319 = vcmp.eq.s32.totalorder %v6159, 128
      %vm6320 = vcmp.eq.s32.totalorder %v6160, 128
      %vm6321 = vcmp.eq.s32.totalorder %v6161, 128
      %vm6322 = vcmp.eq.s32.totalorder %v6162, 128
      %vm6323 = vcmp.eq.s32.totalorder %v6163, 128
      %vm6324 = vcmp.eq.s32.totalorder %v6164, 128
      %vm6325 = vcmp.eq.s32.totalorder %v6165, 128
      %vm6326 = vcmp.eq.s32.totalorder %v6166, 128
      %vm6327 = vcmp.eq.s32.totalorder %v6167, 128
      %vm6328 = vcmp.eq.s32.totalorder %v6168, 128
      %vm6329 = vcmp.eq.s32.totalorder %v6169, 128
      %vm6330 = vcmp.eq.s32.totalorder %v6170, 128
      %vm6331 = vcmp.eq.s32.totalorder %v6171, 128
      %vm6332 = vcmp.eq.s32.totalorder %v6172, 128
      %vm6333 = vcmp.eq.s32.totalorder %v6173, 128
      %vm6334 = vcmp.eq.s32.totalorder %v6174, 128
      %vm6335 = vcmp.eq.s32.totalorder %v6175, 128
      %vm6336 = vcmp.eq.s32.totalorder %v6176, 128
      %vm6337 = vcmp.eq.s32.totalorder %v6177, 128
      %vm6338 = vcmp.eq.s32.totalorder %v6178, 128
      %vm6339 = vcmp.eq.s32.totalorder %v6179, 128
      %vm6340 = vcmp.eq.s32.totalorder %v6180, 128
      %vm6341 = vcmp.eq.s32.totalorder %v6181, 128
      %vm6342 = vcmp.eq.s32.totalorder %v6182, 128
      %vm6343 = vcmp.eq.s32.totalorder %v6183, 128
      %vm6344 = vcmp.eq.s32.totalorder %v6184, 128
      %vm6345 = vcmp.eq.s32.totalorder %v6185, 128
      %6346 = vset.pattern.permute.xlu0 9
      %6347 = vperm.xlu0 %6346, %v4946
      %v6348 = vpop.permute.xlu0 %6347
      %6350 = vset.pattern.permute.xlu0 9
      %6351 = vperm.xlu0 %6350, %v4947
      %v6352 = vpop.permute.xlu0 %6351
      %6354 = vset.pattern.permute.xlu0 9
      %6355 = vperm.xlu0 %6354, %v4948
      %v6356 = vpop.permute.xlu0 %6355
      %6358 = vset.pattern.permute.xlu0 9
      %6359 = vperm.xlu0 %6358, %v4949
      %v6360 = vpop.permute.xlu0 %6359
      %6362 = vset.pattern.permute.xlu0 9
      %6363 = vperm.xlu0 %6362, %v4950
      %v6364 = vpop.permute.xlu0 %6363
      %6366 = vset.pattern.permute.xlu0 9
      %6367 = vperm.xlu0 %6366, %v4951
      %v6368 = vpop.permute.xlu0 %6367
      %6370 = vset.pattern.permute.xlu0 9
      %6371 = vperm.xlu0 %6370, %v4952
      %v6372 = vpop.permute.xlu0 %6371
      %6374 = vset.pattern.permute.xlu0 9
      %6375 = vperm.xlu0 %6374, %v4953
      %v6376 = vpop.permute.xlu0 %6375
      %6378 = vset.pattern.permute.xlu0 9
      %6379 = vperm.xlu0 %6378, %v4954
      %v6380 = vpop.permute.xlu0 %6379
      %6382 = vset.pattern.permute.xlu0 9
      %6383 = vperm.xlu0 %6382, %v4955
      %v6384 = vpop.permute.xlu0 %6383
      %6386 = vset.pattern.permute.xlu0 9
      %6387 = vperm.xlu0 %6386, %v4956
      %v6388 = vpop.permute.xlu0 %6387
      %6390 = vset.pattern.permute.xlu0 9
      %6391 = vperm.xlu0 %6390, %v4957
      %v6392 = vpop.permute.xlu0 %6391
      %6394 = vset.pattern.permute.xlu0 9
      %6395 = vperm.xlu0 %6394, %v4958
      %v6396 = vpop.permute.xlu0 %6395
      %6398 = vset.pattern.permute.xlu0 9
      %6399 = vperm.xlu0 %6398, %v4959
      %v6400 = vpop.permute.xlu0 %6399
      %6402 = vset.pattern.permute.xlu0 9
      %6403 = vperm.xlu0 %6402, %v4960
      %v6404 = vpop.permute.xlu0 %6403
      %6406 = vset.pattern.permute.xlu0 9
      %6407 = vperm.xlu0 %6406, %v4961
      %v6408 = vpop.permute.xlu0 %6407
      %v6410 = vsel %vm6314, %v6348, %v6282
      %v6411 = vsel %vm6315, %v6348, %v6283
      %v6412 = vsel %vm6316, %v6352, %v6284
      %v6413 = vsel %vm6317, %v6352, %v6285
      %v6414 = vsel %vm6318, %v6356, %v6286
      %v6415 = vsel %vm6319, %v6356, %v6287
      %v6416 = vsel %vm6320, %v6360, %v6288
      %v6417 = vsel %vm6321, %v6360, %v6289
      %v6418 = vsel %vm6322, %v6364, %v6290
      %v6419 = vsel %vm6323, %v6364, %v6291
      %v6420 = vsel %vm6324, %v6368, %v6292
      %v6421 = vsel %vm6325, %v6368, %v6293
      %v6422 = vsel %vm6326, %v6372, %v6294
      %v6423 = vsel %vm6327, %v6372, %v6295
      %v6424 = vsel %vm6328, %v6376, %v6296
      %v6425 = vsel %vm6329, %v6376, %v6297
      %v6426 = vsel %vm6330, %v6380, %v6298
      %v6427 = vsel %vm6331, %v6380, %v6299
      %v6428 = vsel %vm6332, %v6384, %v6300
      %v6429 = vsel %vm6333, %v6384, %v6301
      %v6430 = vsel %vm6334, %v6388, %v6302
      %v6431 = vsel %vm6335, %v6388, %v6303
      %v6432 = vsel %vm6336, %v6392, %v6304
      %v6433 = vsel %vm6337, %v6392, %v6305
      %v6434 = vsel %vm6338, %v6396, %v6306
      %v6435 = vsel %vm6339, %v6396, %v6307
      %v6436 = vsel %vm6340, %v6400, %v6308
      %v6437 = vsel %vm6341, %v6400, %v6309
      %v6438 = vsel %vm6342, %v6404, %v6310
      %v6439 = vsel %vm6343, %v6404, %v6311
      %v6440 = vsel %vm6344, %v6408, %v6312
      %v6441 = vsel %vm6345, %v6408, %v6313
      %vm6442 = vcmp.eq.s32.totalorder %v6154, 256
      %vm6443 = vcmp.eq.s32.totalorder %v6155, 256
      %vm6444 = vcmp.eq.s32.totalorder %v6156, 256
      %vm6445 = vcmp.eq.s32.totalorder %v6157, 256
      %vm6446 = vcmp.eq.s32.totalorder %v6158, 256
      %vm6447 = vcmp.eq.s32.totalorder %v6159, 256
      %vm6448 = vcmp.eq.s32.totalorder %v6160, 256
      %vm6449 = vcmp.eq.s32.totalorder %v6161, 256
      %vm6450 = vcmp.eq.s32.totalorder %v6162, 256
      %vm6451 = vcmp.eq.s32.totalorder %v6163, 256
      %vm6452 = vcmp.eq.s32.totalorder %v6164, 256
      %vm6453 = vcmp.eq.s32.totalorder %v6165, 256
      %vm6454 = vcmp.eq.s32.totalorder %v6166, 256
      %vm6455 = vcmp.eq.s32.totalorder %v6167, 256
      %vm6456 = vcmp.eq.s32.totalorder %v6168, 256
      %vm6457 = vcmp.eq.s32.totalorder %v6169, 256
      %vm6458 = vcmp.eq.s32.totalorder %v6170, 256
      %vm6459 = vcmp.eq.s32.totalorder %v6171, 256
      %vm6460 = vcmp.eq.s32.totalorder %v6172, 256
      %vm6461 = vcmp.eq.s32.totalorder %v6173, 256
      %vm6462 = vcmp.eq.s32.totalorder %v6174, 256
      %vm6463 = vcmp.eq.s32.totalorder %v6175, 256
      %vm6464 = vcmp.eq.s32.totalorder %v6176, 256
      %vm6465 = vcmp.eq.s32.totalorder %v6177, 256
      %vm6466 = vcmp.eq.s32.totalorder %v6178, 256
      %vm6467 = vcmp.eq.s32.totalorder %v6179, 256
      %vm6468 = vcmp.eq.s32.totalorder %v6180, 256
      %vm6469 = vcmp.eq.s32.totalorder %v6181, 256
      %vm6470 = vcmp.eq.s32.totalorder %v6182, 256
      %vm6471 = vcmp.eq.s32.totalorder %v6183, 256
      %vm6472 = vcmp.eq.s32.totalorder %v6184, 256
      %vm6473 = vcmp.eq.s32.totalorder %v6185, 256
      %6474 = vset.pattern.permute.xlu0 10
      %6475 = vperm.xlu0 %6474, %v4946
      %v6476 = vpop.permute.xlu0 %6475
      %6478 = vset.pattern.permute.xlu0 10
      %6479 = vperm.xlu0 %6478, %v4947
      %v6480 = vpop.permute.xlu0 %6479
      %6482 = vset.pattern.permute.xlu0 10
      %6483 = vperm.xlu0 %6482, %v4948
      %v6484 = vpop.permute.xlu0 %6483
      %6486 = vset.pattern.permute.xlu0 10
      %6487 = vperm.xlu0 %6486, %v4949
      %v6488 = vpop.permute.xlu0 %6487
      %6490 = vset.pattern.permute.xlu0 10
      %6491 = vperm.xlu0 %6490, %v4950
      %v6492 = vpop.permute.xlu0 %6491
      %6494 = vset.pattern.permute.xlu0 10
      %6495 = vperm.xlu0 %6494, %v4951
      %v6496 = vpop.permute.xlu0 %6495
      %6498 = vset.pattern.permute.xlu0 10
      %6499 = vperm.xlu0 %6498, %v4952
      %v6500 = vpop.permute.xlu0 %6499
      %6502 = vset.pattern.permute.xlu0 10
      %6503 = vperm.xlu0 %6502, %v4953
      %v6504 = vpop.permute.xlu0 %6503
      %6506 = vset.pattern.permute.xlu0 10
      %6507 = vperm.xlu0 %6506, %v4954
      %v6508 = vpop.permute.xlu0 %6507
      %6510 = vset.pattern.permute.xlu0 10
      %6511 = vperm.xlu0 %6510, %v4955
      %v6512 = vpop.permute.xlu0 %6511
      %6514 = vset.pattern.permute.xlu0 10
      %6515 = vperm.xlu0 %6514, %v4956
      %v6516 = vpop.permute.xlu0 %6515
      %6518 = vset.pattern.permute.xlu0 10
      %6519 = vperm.xlu0 %6518, %v4957
      %v6520 = vpop.permute.xlu0 %6519
      %6522 = vset.pattern.permute.xlu0 10
      %6523 = vperm.xlu0 %6522, %v4958
      %v6524 = vpop.permute.xlu0 %6523
      %6526 = vset.pattern.permute.xlu0 10
      %6527 = vperm.xlu0 %6526, %v4959
      %v6528 = vpop.permute.xlu0 %6527
      %6530 = vset.pattern.permute.xlu0 10
      %6531 = vperm.xlu0 %6530, %v4960
      %v6532 = vpop.permute.xlu0 %6531
      %6534 = vset.pattern.permute.xlu0 10
      %6535 = vperm.xlu0 %6534, %v4961
      %v6536 = vpop.permute.xlu0 %6535
      %v6538 = vsel %vm6442, %v6476, %v6410
      %v6539 = vsel %vm6443, %v6476, %v6411
      %v6540 = vsel %vm6444, %v6480, %v6412
      %v6541 = vsel %vm6445, %v6480, %v6413
      %v6542 = vsel %vm6446, %v6484, %v6414
      %v6543 = vsel %vm6447, %v6484, %v6415
      %v6544 = vsel %vm6448, %v6488, %v6416
      %v6545 = vsel %vm6449, %v6488, %v6417
      %v6546 = vsel %vm6450, %v6492, %v6418
      %v6547 = vsel %vm6451, %v6492, %v6419
      %v6548 = vsel %vm6452, %v6496, %v6420
      %v6549 = vsel %vm6453, %v6496, %v6421
      %v6550 = vsel %vm6454, %v6500, %v6422
      %v6551 = vsel %vm6455, %v6500, %v6423
      %v6552 = vsel %vm6456, %v6504, %v6424
      %v6553 = vsel %vm6457, %v6504, %v6425
      %v6554 = vsel %vm6458, %v6508, %v6426
      %v6555 = vsel %vm6459, %v6508, %v6427
      %v6556 = vsel %vm6460, %v6512, %v6428
      %v6557 = vsel %vm6461, %v6512, %v6429
      %v6558 = vsel %vm6462, %v6516, %v6430
      %v6559 = vsel %vm6463, %v6516, %v6431
      %v6560 = vsel %vm6464, %v6520, %v6432
      %v6561 = vsel %vm6465, %v6520, %v6433
      %v6562 = vsel %vm6466, %v6524, %v6434
      %v6563 = vsel %vm6467, %v6524, %v6435
      %v6564 = vsel %vm6468, %v6528, %v6436
      %v6565 = vsel %vm6469, %v6528, %v6437
      %v6566 = vsel %vm6470, %v6532, %v6438
      %v6567 = vsel %vm6471, %v6532, %v6439
      %v6568 = vsel %vm6472, %v6536, %v6440
      %v6569 = vsel %vm6473, %v6536, %v6441
      %vm6570 = vcmp.eq.s32.totalorder %v6154, 384
      %vm6571 = vcmp.eq.s32.totalorder %v6155, 384
      %vm6572 = vcmp.eq.s32.totalorder %v6156, 384
      %vm6573 = vcmp.eq.s32.totalorder %v6157, 384
      %vm6574 = vcmp.eq.s32.totalorder %v6158, 384
      %vm6575 = vcmp.eq.s32.totalorder %v6159, 384
      %vm6576 = vcmp.eq.s32.totalorder %v6160, 384
      %vm6577 = vcmp.eq.s32.totalorder %v6161, 384
      %vm6578 = vcmp.eq.s32.totalorder %v6162, 384
      %vm6579 = vcmp.eq.s32.totalorder %v6163, 384
      %vm6580 = vcmp.eq.s32.totalorder %v6164, 384
      %vm6581 = vcmp.eq.s32.totalorder %v6165, 384
      %vm6582 = vcmp.eq.s32.totalorder %v6166, 384
      %vm6583 = vcmp.eq.s32.totalorder %v6167, 384
      %vm6584 = vcmp.eq.s32.totalorder %v6168, 384
      %vm6585 = vcmp.eq.s32.totalorder %v6169, 384
      %vm6586 = vcmp.eq.s32.totalorder %v6170, 384
      %vm6587 = vcmp.eq.s32.totalorder %v6171, 384
      %vm6588 = vcmp.eq.s32.totalorder %v6172, 384
      %vm6589 = vcmp.eq.s32.totalorder %v6173, 384
      %vm6590 = vcmp.eq.s32.totalorder %v6174, 384
      %vm6591 = vcmp.eq.s32.totalorder %v6175, 384
      %vm6592 = vcmp.eq.s32.totalorder %v6176, 384
      %vm6593 = vcmp.eq.s32.totalorder %v6177, 384
      %vm6594 = vcmp.eq.s32.totalorder %v6178, 384
      %vm6595 = vcmp.eq.s32.totalorder %v6179, 384
      %vm6596 = vcmp.eq.s32.totalorder %v6180, 384
      %vm6597 = vcmp.eq.s32.totalorder %v6181, 384
      %vm6598 = vcmp.eq.s32.totalorder %v6182, 384
      %vm6599 = vcmp.eq.s32.totalorder %v6183, 384
      %vm6600 = vcmp.eq.s32.totalorder %v6184, 384
      %vm6601 = vcmp.eq.s32.totalorder %v6185, 384
      %6602 = vset.pattern.permute.xlu0 11
      %6603 = vperm.xlu0 %6602, %v4946
      %v6604 = vpop.permute.xlu0 %6603
      %6606 = vset.pattern.permute.xlu0 11
      %6607 = vperm.xlu0 %6606, %v4947
      %v6608 = vpop.permute.xlu0 %6607
      %6610 = vset.pattern.permute.xlu0 11
      %6611 = vperm.xlu0 %6610, %v4948
      %v6612 = vpop.permute.xlu0 %6611
      %6614 = vset.pattern.permute.xlu0 11
      %6615 = vperm.xlu0 %6614, %v4949
      %v6616 = vpop.permute.xlu0 %6615
      %6618 = vset.pattern.permute.xlu0 11
      %6619 = vperm.xlu0 %6618, %v4950
      %v6620 = vpop.permute.xlu0 %6619
      %6622 = vset.pattern.permute.xlu0 11
      %6623 = vperm.xlu0 %6622, %v4951
      %v6624 = vpop.permute.xlu0 %6623
      %6626 = vset.pattern.permute.xlu0 11
      %6627 = vperm.xlu0 %6626, %v4952
      %v6628 = vpop.permute.xlu0 %6627
      %6630 = vset.pattern.permute.xlu0 11
      %6631 = vperm.xlu0 %6630, %v4953
      %v6632 = vpop.permute.xlu0 %6631
      %6634 = vset.pattern.permute.xlu0 11
      %6635 = vperm.xlu0 %6634, %v4954
      %v6636 = vpop.permute.xlu0 %6635
      %6638 = vset.pattern.permute.xlu0 11
      %6639 = vperm.xlu0 %6638, %v4955
      %v6640 = vpop.permute.xlu0 %6639
      %6642 = vset.pattern.permute.xlu0 11
      %6643 = vperm.xlu0 %6642, %v4956
      %v6644 = vpop.permute.xlu0 %6643
      %6646 = vset.pattern.permute.xlu0 11
      %6647 = vperm.xlu0 %6646, %v4957
      %v6648 = vpop.permute.xlu0 %6647
      %6650 = vset.pattern.permute.xlu0 11
      %6651 = vperm.xlu0 %6650, %v4958
      %v6652 = vpop.permute.xlu0 %6651
      %6654 = vset.pattern.permute.xlu0 11
      %6655 = vperm.xlu0 %6654, %v4959
      %v6656 = vpop.permute.xlu0 %6655
      %6658 = vset.pattern.permute.xlu0 11
      %6659 = vperm.xlu0 %6658, %v4960
      %v6660 = vpop.permute.xlu0 %6659
      %6662 = vset.pattern.permute.xlu0 11
      %6663 = vperm.xlu0 %6662, %v4961
      %v6664 = vpop.permute.xlu0 %6663
      %v6666 = vsel %vm6570, %v6604, %v6538
      %v6667 = vsel %vm6571, %v6604, %v6539
      %v6668 = vsel %vm6572, %v6608, %v6540
      %v6669 = vsel %vm6573, %v6608, %v6541
      %v6670 = vsel %vm6574, %v6612, %v6542
      %v6671 = vsel %vm6575, %v6612, %v6543
      %v6672 = vsel %vm6576, %v6616, %v6544
      %v6673 = vsel %vm6577, %v6616, %v6545
      %v6674 = vsel %vm6578, %v6620, %v6546
      %v6675 = vsel %vm6579, %v6620, %v6547
      %v6676 = vsel %vm6580, %v6624, %v6548
      %v6677 = vsel %vm6581, %v6624, %v6549
      %v6678 = vsel %vm6582, %v6628, %v6550
      %v6679 = vsel %vm6583, %v6628, %v6551
      %v6680 = vsel %vm6584, %v6632, %v6552
      %v6681 = vsel %vm6585, %v6632, %v6553
      %v6682 = vsel %vm6586, %v6636, %v6554
      %v6683 = vsel %vm6587, %v6636, %v6555
      %v6684 = vsel %vm6588, %v6640, %v6556
      %v6685 = vsel %vm6589, %v6640, %v6557
      %v6686 = vsel %vm6590, %v6644, %v6558
      %v6687 = vsel %vm6591, %v6644, %v6559
      %v6688 = vsel %vm6592, %v6648, %v6560
      %v6689 = vsel %vm6593, %v6648, %v6561
      %v6690 = vsel %vm6594, %v6652, %v6562
      %v6691 = vsel %vm6595, %v6652, %v6563
      %v6692 = vsel %vm6596, %v6656, %v6564
      %v6693 = vsel %vm6597, %v6656, %v6565
      %v6694 = vsel %vm6598, %v6660, %v6566
      %v6695 = vsel %vm6599, %v6660, %v6567
      %v6696 = vsel %vm6600, %v6664, %v6568
      %v6697 = vsel %vm6601, %v6664, %v6569
      %v6698 = vadd.f32 %v6114, %v6666
      %v6699 = vadd.f32 %v6115, %v6667
      %v6700 = vadd.f32 %v6116, %v6668
      %v6701 = vadd.f32 %v6117, %v6669
      %v6702 = vadd.f32 %v6118, %v6670
      %v6703 = vadd.f32 %v6119, %v6671
      %v6704 = vadd.f32 %v6120, %v6672
      %v6705 = vadd.f32 %v6121, %v6673
      %v6706 = vadd.f32 %v6122, %v6674
      %v6707 = vadd.f32 %v6123, %v6675
      %v6708 = vadd.f32 %v6124, %v6676
      %v6709 = vadd.f32 %v6125, %v6677
      %v6710 = vadd.f32 %v6126, %v6678
      %v6711 = vadd.f32 %v6127, %v6679
      %v6712 = vadd.f32 %v6128, %v6680
      %v6713 = vadd.f32 %v6129, %v6681
      %v6714 = vadd.f32 %v6130, %v6682
      %v6715 = vadd.f32 %v6131, %v6683
      %v6716 = vadd.f32 %v6132, %v6684
      %v6717 = vadd.f32 %v6133, %v6685
      %v6718 = vadd.f32 %v6134, %v6686
      %v6719 = vadd.f32 %v6135, %v6687
      %v6720 = vadd.f32 %v6136, %v6688
      %v6721 = vadd.f32 %v6137, %v6689
      %v6722 = vadd.f32 %v6138, %v6690
      %v6723 = vadd.f32 %v6139, %v6691
      %v6724 = vadd.f32 %v6140, %v6692
      %v6725 = vadd.f32 %v6141, %v6693
      %v6726 = vadd.f32 %v6142, %v6694
      %v6727 = vadd.f32 %v6143, %v6695
      %v6728 = vadd.f32 %v6144, %v6696
      %v6729 = vadd.f32 %v6145, %v6697
      %v6730 = vlaneseq
      %v6731 = vshrl.u32 %v6730, 7
      %v6732 = vsub.s32 3, %v6731
      %v6733 = vrot.slane %v4940, %v6732
      %v6734 = vlaneseq
      %v6735 = vshrl.u32 %v6734, 7
      %v6736 = vsub.s32 3, %v6735
      %v6737 = vrot.slane %v4942, %v6736
      %v6738 = vsub.s32 %v6733, %v28
      %v6739 = vsub.s32 %v6737, %v28
      %v6740 = vsub.s32 %v6733, %v29
      %v6741 = vsub.s32 %v6737, %v29
      %v6742 = vsub.s32 %v6733, %v30
      %v6743 = vsub.s32 %v6737, %v30
      %v6744 = vsub.s32 %v6733, %v31
      %v6745 = vsub.s32 %v6737, %v31
      %v6746 = vsub.s32 %v6733, %v32
      %v6747 = vsub.s32 %v6737, %v32
      %v6748 = vsub.s32 %v6733, %v33
      %v6749 = vsub.s32 %v6737, %v33
      %v6750 = vsub.s32 %v6733, %v34
      %v6751 = vsub.s32 %v6737, %v34
      %v6752 = vsub.s32 %v6733, %v35
      %v6753 = vsub.s32 %v6737, %v35
      %v6754 = vsub.s32 %v6733, %v36
      %v6755 = vsub.s32 %v6737, %v36
      %v6756 = vsub.s32 %v6733, %v37
      %v6757 = vsub.s32 %v6737, %v37
      %v6758 = vsub.s32 %v6733, %v38
      %v6759 = vsub.s32 %v6737, %v38
      %v6760 = vsub.s32 %v6733, %v39
      %v6761 = vsub.s32 %v6737, %v39
      %v6762 = vsub.s32 %v6733, %v40
      %v6763 = vsub.s32 %v6737, %v40
      %v6764 = vsub.s32 %v6733, %v41
      %v6765 = vsub.s32 %v6737, %v41
      %v6766 = vsub.s32 %v6733, %v42
      %v6767 = vsub.s32 %v6737, %v42
      %v6768 = vsub.s32 %v6733, %v43
      %v6769 = vsub.s32 %v6737, %v43
      %vm6770 = vcmp.eq.s32.totalorder %v6738, 0
      %vm6771 = vcmp.eq.s32.totalorder %v6739, 0
      %vm6772 = vcmp.eq.s32.totalorder %v6740, 0
      %vm6773 = vcmp.eq.s32.totalorder %v6741, 0
      %vm6774 = vcmp.eq.s32.totalorder %v6742, 0
      %vm6775 = vcmp.eq.s32.totalorder %v6743, 0
      %vm6776 = vcmp.eq.s32.totalorder %v6744, 0
      %vm6777 = vcmp.eq.s32.totalorder %v6745, 0
      %vm6778 = vcmp.eq.s32.totalorder %v6746, 0
      %vm6779 = vcmp.eq.s32.totalorder %v6747, 0
      %vm6780 = vcmp.eq.s32.totalorder %v6748, 0
      %vm6781 = vcmp.eq.s32.totalorder %v6749, 0
      %vm6782 = vcmp.eq.s32.totalorder %v6750, 0
      %vm6783 = vcmp.eq.s32.totalorder %v6751, 0
      %vm6784 = vcmp.eq.s32.totalorder %v6752, 0
      %vm6785 = vcmp.eq.s32.totalorder %v6753, 0
      %vm6786 = vcmp.eq.s32.totalorder %v6754, 0
      %vm6787 = vcmp.eq.s32.totalorder %v6755, 0
      %vm6788 = vcmp.eq.s32.totalorder %v6756, 0
      %vm6789 = vcmp.eq.s32.totalorder %v6757, 0
      %vm6790 = vcmp.eq.s32.totalorder %v6758, 0
      %vm6791 = vcmp.eq.s32.totalorder %v6759, 0
      %vm6792 = vcmp.eq.s32.totalorder %v6760, 0
      %vm6793 = vcmp.eq.s32.totalorder %v6761, 0
      %vm6794 = vcmp.eq.s32.totalorder %v6762, 0
      %vm6795 = vcmp.eq.s32.totalorder %v6763, 0
      %vm6796 = vcmp.eq.s32.totalorder %v6764, 0
      %vm6797 = vcmp.eq.s32.totalorder %v6765, 0
      %vm6798 = vcmp.eq.s32.totalorder %v6766, 0
      %vm6799 = vcmp.eq.s32.totalorder %v6767, 0
      %vm6800 = vcmp.eq.s32.totalorder %v6768, 0
      %vm6801 = vcmp.eq.s32.totalorder %v6769, 0
      %6802 = vset.pattern.permute.xlu0 12
      %6803 = vperm.xlu0 %6802, %v4946
      %v6804 = vpop.permute.xlu0 %6803
      %6806 = vset.pattern.permute.xlu0 12
      %6807 = vperm.xlu0 %6806, %v4947
      %v6808 = vpop.permute.xlu0 %6807
      %6810 = vset.pattern.permute.xlu0 12
      %6811 = vperm.xlu0 %6810, %v4948
      %v6812 = vpop.permute.xlu0 %6811
      %6814 = vset.pattern.permute.xlu0 12
      %6815 = vperm.xlu0 %6814, %v4949
      %v6816 = vpop.permute.xlu0 %6815
      %6818 = vset.pattern.permute.xlu0 12
      %6819 = vperm.xlu0 %6818, %v4950
      %v6820 = vpop.permute.xlu0 %6819
      %6822 = vset.pattern.permute.xlu0 12
      %6823 = vperm.xlu0 %6822, %v4951
      %v6824 = vpop.permute.xlu0 %6823
      %6826 = vset.pattern.permute.xlu0 12
      %6827 = vperm.xlu0 %6826, %v4952
      %v6828 = vpop.permute.xlu0 %6827
      %6830 = vset.pattern.permute.xlu0 12
      %6831 = vperm.xlu0 %6830, %v4953
      %v6832 = vpop.permute.xlu0 %6831
      %6834 = vset.pattern.permute.xlu0 12
      %6835 = vperm.xlu0 %6834, %v4954
      %v6836 = vpop.permute.xlu0 %6835
      %6838 = vset.pattern.permute.xlu0 12
      %6839 = vperm.xlu0 %6838, %v4955
      %v6840 = vpop.permute.xlu0 %6839
      %6842 = vset.pattern.permute.xlu0 12
      %6843 = vperm.xlu0 %6842, %v4956
      %v6844 = vpop.permute.xlu0 %6843
      %6846 = vset.pattern.permute.xlu0 12
      %6847 = vperm.xlu0 %6846, %v4957
      %v6848 = vpop.permute.xlu0 %6847
      %6850 = vset.pattern.permute.xlu0 12
      %6851 = vperm.xlu0 %6850, %v4958
      %v6852 = vpop.permute.xlu0 %6851
      %6854 = vset.pattern.permute.xlu0 12
      %6855 = vperm.xlu0 %6854, %v4959
      %v6856 = vpop.permute.xlu0 %6855
      %6858 = vset.pattern.permute.xlu0 12
      %6859 = vperm.xlu0 %6858, %v4960
      %v6860 = vpop.permute.xlu0 %6859
      %6862 = vset.pattern.permute.xlu0 12
      %6863 = vperm.xlu0 %6862, %v4961
      %v6864 = vpop.permute.xlu0 %6863
      %v6866 = vsel %vm6770, %v6804, 0.0
      %v6867 = vsel %vm6771, %v6804, 0.0
      %v6868 = vsel %vm6772, %v6808, 0.0
      %v6869 = vsel %vm6773, %v6808, 0.0
      %v6870 = vsel %vm6774, %v6812, 0.0
      %v6871 = vsel %vm6775, %v6812, 0.0
      %v6872 = vsel %vm6776, %v6816, 0.0
      %v6873 = vsel %vm6777, %v6816, 0.0
      %v6874 = vsel %vm6778, %v6820, 0.0
      %v6875 = vsel %vm6779, %v6820, 0.0
      %v6876 = vsel %vm6780, %v6824, 0.0
      %v6877 = vsel %vm6781, %v6824, 0.0
      %v6878 = vsel %vm6782, %v6828, 0.0
      %v6879 = vsel %vm6783, %v6828, 0.0
      %v6880 = vsel %vm6784, %v6832, 0.0
      %v6881 = vsel %vm6785, %v6832, 0.0
      %v6882 = vsel %vm6786, %v6836, 0.0
      %v6883 = vsel %vm6787, %v6836, 0.0
      %v6884 = vsel %vm6788, %v6840, 0.0
      %v6885 = vsel %vm6789, %v6840, 0.0
      %v6886 = vsel %vm6790, %v6844, 0.0
      %v6887 = vsel %vm6791, %v6844, 0.0
      %v6888 = vsel %vm6792, %v6848, 0.0
      %v6889 = vsel %vm6793, %v6848, 0.0
      %v6890 = vsel %vm6794, %v6852, 0.0
      %v6891 = vsel %vm6795, %v6852, 0.0
      %v6892 = vsel %vm6796, %v6856, 0.0
      %v6893 = vsel %vm6797, %v6856, 0.0
      %v6894 = vsel %vm6798, %v6860, 0.0
      %v6895 = vsel %vm6799, %v6860, 0.0
      %v6896 = vsel %vm6800, %v6864, 0.0
      %v6897 = vsel %vm6801, %v6864, 0.0
      %vm6898 = vcmp.eq.s32.totalorder %v6738, 128
      %vm6899 = vcmp.eq.s32.totalorder %v6739, 128
      %vm6900 = vcmp.eq.s32.totalorder %v6740, 128
      %vm6901 = vcmp.eq.s32.totalorder %v6741, 128
      %vm6902 = vcmp.eq.s32.totalorder %v6742, 128
      %vm6903 = vcmp.eq.s32.totalorder %v6743, 128
      %vm6904 = vcmp.eq.s32.totalorder %v6744, 128
      %vm6905 = vcmp.eq.s32.totalorder %v6745, 128
      %vm6906 = vcmp.eq.s32.totalorder %v6746, 128
      %vm6907 = vcmp.eq.s32.totalorder %v6747, 128
      %vm6908 = vcmp.eq.s32.totalorder %v6748, 128
      %vm6909 = vcmp.eq.s32.totalorder %v6749, 128
      %vm6910 = vcmp.eq.s32.totalorder %v6750, 128
      %vm6911 = vcmp.eq.s32.totalorder %v6751, 128
      %vm6912 = vcmp.eq.s32.totalorder %v6752, 128
      %vm6913 = vcmp.eq.s32.totalorder %v6753, 128
      %vm6914 = vcmp.eq.s32.totalorder %v6754, 128
      %vm6915 = vcmp.eq.s32.totalorder %v6755, 128
      %vm6916 = vcmp.eq.s32.totalorder %v6756, 128
      %vm6917 = vcmp.eq.s32.totalorder %v6757, 128
      %vm6918 = vcmp.eq.s32.totalorder %v6758, 128
      %vm6919 = vcmp.eq.s32.totalorder %v6759, 128
      %vm6920 = vcmp.eq.s32.totalorder %v6760, 128
      %vm6921 = vcmp.eq.s32.totalorder %v6761, 128
      %vm6922 = vcmp.eq.s32.totalorder %v6762, 128
      %vm6923 = vcmp.eq.s32.totalorder %v6763, 128
      %vm6924 = vcmp.eq.s32.totalorder %v6764, 128
      %vm6925 = vcmp.eq.s32.totalorder %v6765, 128
      %vm6926 = vcmp.eq.s32.totalorder %v6766, 128
      %vm6927 = vcmp.eq.s32.totalorder %v6767, 128
      %vm6928 = vcmp.eq.s32.totalorder %v6768, 128
      %vm6929 = vcmp.eq.s32.totalorder %v6769, 128
      %6930 = vset.pattern.permute.xlu0 13
      %6931 = vperm.xlu0 %6930, %v4946
      %v6932 = vpop.permute.xlu0 %6931
      %6934 = vset.pattern.permute.xlu0 13
      %6935 = vperm.xlu0 %6934, %v4947
      %v6936 = vpop.permute.xlu0 %6935
      %6938 = vset.pattern.permute.xlu0 13
      %6939 = vperm.xlu0 %6938, %v4948
      %v6940 = vpop.permute.xlu0 %6939
      %6942 = vset.pattern.permute.xlu0 13
      %6943 = vperm.xlu0 %6942, %v4949
      %v6944 = vpop.permute.xlu0 %6943
      %6946 = vset.pattern.permute.xlu0 13
      %6947 = vperm.xlu0 %6946, %v4950
      %v6948 = vpop.permute.xlu0 %6947
      %6950 = vset.pattern.permute.xlu0 13
      %6951 = vperm.xlu0 %6950, %v4951
      %v6952 = vpop.permute.xlu0 %6951
      %6954 = vset.pattern.permute.xlu0 13
      %6955 = vperm.xlu0 %6954, %v4952
      %v6956 = vpop.permute.xlu0 %6955
      %6958 = vset.pattern.permute.xlu0 13
      %6959 = vperm.xlu0 %6958, %v4953
      %v6960 = vpop.permute.xlu0 %6959
      %6962 = vset.pattern.permute.xlu0 13
      %6963 = vperm.xlu0 %6962, %v4954
      %v6964 = vpop.permute.xlu0 %6963
      %6966 = vset.pattern.permute.xlu0 13
      %6967 = vperm.xlu0 %6966, %v4955
      %v6968 = vpop.permute.xlu0 %6967
      %6970 = vset.pattern.permute.xlu0 13
      %6971 = vperm.xlu0 %6970, %v4956
      %v6972 = vpop.permute.xlu0 %6971
      %6974 = vset.pattern.permute.xlu0 13
      %6975 = vperm.xlu0 %6974, %v4957
      %v6976 = vpop.permute.xlu0 %6975
      %6978 = vset.pattern.permute.xlu0 13
      %6979 = vperm.xlu0 %6978, %v4958
      %v6980 = vpop.permute.xlu0 %6979
      %6982 = vset.pattern.permute.xlu0 13
      %6983 = vperm.xlu0 %6982, %v4959
      %v6984 = vpop.permute.xlu0 %6983
      %6986 = vset.pattern.permute.xlu0 13
      %6987 = vperm.xlu0 %6986, %v4960
      %v6988 = vpop.permute.xlu0 %6987
      %6990 = vset.pattern.permute.xlu0 13
      %6991 = vperm.xlu0 %6990, %v4961
      %v6992 = vpop.permute.xlu0 %6991
      %v6994 = vsel %vm6898, %v6932, %v6866
      %v6995 = vsel %vm6899, %v6932, %v6867
      %v6996 = vsel %vm6900, %v6936, %v6868
      %v6997 = vsel %vm6901, %v6936, %v6869
      %v6998 = vsel %vm6902, %v6940, %v6870
      %v6999 = vsel %vm6903, %v6940, %v6871
      %v7000 = vsel %vm6904, %v6944, %v6872
      %v7001 = vsel %vm6905, %v6944, %v6873
      %v7002 = vsel %vm6906, %v6948, %v6874
      %v7003 = vsel %vm6907, %v6948, %v6875
      %v7004 = vsel %vm6908, %v6952, %v6876
      %v7005 = vsel %vm6909, %v6952, %v6877
      %v7006 = vsel %vm6910, %v6956, %v6878
      %v7007 = vsel %vm6911, %v6956, %v6879
      %v7008 = vsel %vm6912, %v6960, %v6880
      %v7009 = vsel %vm6913, %v6960, %v6881
      %v7010 = vsel %vm6914, %v6964, %v6882
      %v7011 = vsel %vm6915, %v6964, %v6883
      %v7012 = vsel %vm6916, %v6968, %v6884
      %v7013 = vsel %vm6917, %v6968, %v6885
      %v7014 = vsel %vm6918, %v6972, %v6886
      %v7015 = vsel %vm6919, %v6972, %v6887
      %v7016 = vsel %vm6920, %v6976, %v6888
      %v7017 = vsel %vm6921, %v6976, %v6889
      %v7018 = vsel %vm6922, %v6980, %v6890
      %v7019 = vsel %vm6923, %v6980, %v6891
      %v7020 = vsel %vm6924, %v6984, %v6892
      %v7021 = vsel %vm6925, %v6984, %v6893
      %v7022 = vsel %vm6926, %v6988, %v6894
      %v7023 = vsel %vm6927, %v6988, %v6895
      %v7024 = vsel %vm6928, %v6992, %v6896
      %v7025 = vsel %vm6929, %v6992, %v6897
      %vm7026 = vcmp.eq.s32.totalorder %v6738, 256
      %vm7027 = vcmp.eq.s32.totalorder %v6739, 256
      %vm7028 = vcmp.eq.s32.totalorder %v6740, 256
      %vm7029 = vcmp.eq.s32.totalorder %v6741, 256
      %vm7030 = vcmp.eq.s32.totalorder %v6742, 256
      %vm7031 = vcmp.eq.s32.totalorder %v6743, 256
      %vm7032 = vcmp.eq.s32.totalorder %v6744, 256
      %vm7033 = vcmp.eq.s32.totalorder %v6745, 256
      %vm7034 = vcmp.eq.s32.totalorder %v6746, 256
      %vm7035 = vcmp.eq.s32.totalorder %v6747, 256
      %vm7036 = vcmp.eq.s32.totalorder %v6748, 256
      %vm7037 = vcmp.eq.s32.totalorder %v6749, 256
      %vm7038 = vcmp.eq.s32.totalorder %v6750, 256
      %vm7039 = vcmp.eq.s32.totalorder %v6751, 256
      %vm7040 = vcmp.eq.s32.totalorder %v6752, 256
      %vm7041 = vcmp.eq.s32.totalorder %v6753, 256
      %vm7042 = vcmp.eq.s32.totalorder %v6754, 256
      %vm7043 = vcmp.eq.s32.totalorder %v6755, 256
      %vm7044 = vcmp.eq.s32.totalorder %v6756, 256
      %vm7045 = vcmp.eq.s32.totalorder %v6757, 256
      %vm7046 = vcmp.eq.s32.totalorder %v6758, 256
      %vm7047 = vcmp.eq.s32.totalorder %v6759, 256
      %vm7048 = vcmp.eq.s32.totalorder %v6760, 256
      %vm7049 = vcmp.eq.s32.totalorder %v6761, 256
      %vm7050 = vcmp.eq.s32.totalorder %v6762, 256
      %vm7051 = vcmp.eq.s32.totalorder %v6763, 256
      %vm7052 = vcmp.eq.s32.totalorder %v6764, 256
      %vm7053 = vcmp.eq.s32.totalorder %v6765, 256
      %vm7054 = vcmp.eq.s32.totalorder %v6766, 256
      %vm7055 = vcmp.eq.s32.totalorder %v6767, 256
      %vm7056 = vcmp.eq.s32.totalorder %v6768, 256
      %vm7057 = vcmp.eq.s32.totalorder %v6769, 256
      %7058 = vset.pattern.permute.xlu0 14
      %7059 = vperm.xlu0 %7058, %v4946
      %v7060 = vpop.permute.xlu0 %7059
      %7062 = vset.pattern.permute.xlu0 14
      %7063 = vperm.xlu0 %7062, %v4947
      %v7064 = vpop.permute.xlu0 %7063
      %7066 = vset.pattern.permute.xlu0 14
      %7067 = vperm.xlu0 %7066, %v4948
      %v7068 = vpop.permute.xlu0 %7067
      %7070 = vset.pattern.permute.xlu0 14
      %7071 = vperm.xlu0 %7070, %v4949
      %v7072 = vpop.permute.xlu0 %7071
      %7074 = vset.pattern.permute.xlu0 14
      %7075 = vperm.xlu0 %7074, %v4950
      %v7076 = vpop.permute.xlu0 %7075
      %7078 = vset.pattern.permute.xlu0 14
      %7079 = vperm.xlu0 %7078, %v4951
      %v7080 = vpop.permute.xlu0 %7079
      %7082 = vset.pattern.permute.xlu0 14
      %7083 = vperm.xlu0 %7082, %v4952
      %v7084 = vpop.permute.xlu0 %7083
      %7086 = vset.pattern.permute.xlu0 14
      %7087 = vperm.xlu0 %7086, %v4953
      %v7088 = vpop.permute.xlu0 %7087
      %7090 = vset.pattern.permute.xlu0 14
      %7091 = vperm.xlu0 %7090, %v4954
      %v7092 = vpop.permute.xlu0 %7091
      %7094 = vset.pattern.permute.xlu0 14
      %7095 = vperm.xlu0 %7094, %v4955
      %v7096 = vpop.permute.xlu0 %7095
      %7098 = vset.pattern.permute.xlu0 14
      %7099 = vperm.xlu0 %7098, %v4956
      %v7100 = vpop.permute.xlu0 %7099
      %7102 = vset.pattern.permute.xlu0 14
      %7103 = vperm.xlu0 %7102, %v4957
      %v7104 = vpop.permute.xlu0 %7103
      %7106 = vset.pattern.permute.xlu0 14
      %7107 = vperm.xlu0 %7106, %v4958
      %v7108 = vpop.permute.xlu0 %7107
      %7110 = vset.pattern.permute.xlu0 14
      %7111 = vperm.xlu0 %7110, %v4959
      %v7112 = vpop.permute.xlu0 %7111
      %7114 = vset.pattern.permute.xlu0 14
      %7115 = vperm.xlu0 %7114, %v4960
      %v7116 = vpop.permute.xlu0 %7115
      %7118 = vset.pattern.permute.xlu0 14
      %7119 = vperm.xlu0 %7118, %v4961
      %v7120 = vpop.permute.xlu0 %7119
      %v7122 = vsel %vm7026, %v7060, %v6994
      %v7123 = vsel %vm7027, %v7060, %v6995
      %v7124 = vsel %vm7028, %v7064, %v6996
      %v7125 = vsel %vm7029, %v7064, %v6997
      %v7126 = vsel %vm7030, %v7068, %v6998
      %v7127 = vsel %vm7031, %v7068, %v6999
      %v7128 = vsel %vm7032, %v7072, %v7000
      %v7129 = vsel %vm7033, %v7072, %v7001
      %v7130 = vsel %vm7034, %v7076, %v7002
      %v7131 = vsel %vm7035, %v7076, %v7003
      %v7132 = vsel %vm7036, %v7080, %v7004
      %v7133 = vsel %vm7037, %v7080, %v7005
      %v7134 = vsel %vm7038, %v7084, %v7006
      %v7135 = vsel %vm7039, %v7084, %v7007
      %v7136 = vsel %vm7040, %v7088, %v7008
      %v7137 = vsel %vm7041, %v7088, %v7009
      %v7138 = vsel %vm7042, %v7092, %v7010
      %v7139 = vsel %vm7043, %v7092, %v7011
      %v7140 = vsel %vm7044, %v7096, %v7012
      %v7141 = vsel %vm7045, %v7096, %v7013
      %v7142 = vsel %vm7046, %v7100, %v7014
      %v7143 = vsel %vm7047, %v7100, %v7015
      %v7144 = vsel %vm7048, %v7104, %v7016
      %v7145 = vsel %vm7049, %v7104, %v7017
      %v7146 = vsel %vm7050, %v7108, %v7018
      %v7147 = vsel %vm7051, %v7108, %v7019
      %v7148 = vsel %vm7052, %v7112, %v7020
      %v7149 = vsel %vm7053, %v7112, %v7021
      %v7150 = vsel %vm7054, %v7116, %v7022
      %v7151 = vsel %vm7055, %v7116, %v7023
      %v7152 = vsel %vm7056, %v7120, %v7024
      %v7153 = vsel %vm7057, %v7120, %v7025
      %vm7154 = vcmp.eq.s32.totalorder %v6738, 384
      %vm7155 = vcmp.eq.s32.totalorder %v6739, 384
      %vm7156 = vcmp.eq.s32.totalorder %v6740, 384
      %vm7157 = vcmp.eq.s32.totalorder %v6741, 384
      %vm7158 = vcmp.eq.s32.totalorder %v6742, 384
      %vm7159 = vcmp.eq.s32.totalorder %v6743, 384
      %vm7160 = vcmp.eq.s32.totalorder %v6744, 384
      %vm7161 = vcmp.eq.s32.totalorder %v6745, 384
      %vm7162 = vcmp.eq.s32.totalorder %v6746, 384
      %vm7163 = vcmp.eq.s32.totalorder %v6747, 384
      %vm7164 = vcmp.eq.s32.totalorder %v6748, 384
      %vm7165 = vcmp.eq.s32.totalorder %v6749, 384
      %vm7166 = vcmp.eq.s32.totalorder %v6750, 384
      %vm7167 = vcmp.eq.s32.totalorder %v6751, 384
      %vm7168 = vcmp.eq.s32.totalorder %v6752, 384
      %vm7169 = vcmp.eq.s32.totalorder %v6753, 384
      %vm7170 = vcmp.eq.s32.totalorder %v6754, 384
      %vm7171 = vcmp.eq.s32.totalorder %v6755, 384
      %vm7172 = vcmp.eq.s32.totalorder %v6756, 384
      %vm7173 = vcmp.eq.s32.totalorder %v6757, 384
      %vm7174 = vcmp.eq.s32.totalorder %v6758, 384
      %vm7175 = vcmp.eq.s32.totalorder %v6759, 384
      %vm7176 = vcmp.eq.s32.totalorder %v6760, 384
      %vm7177 = vcmp.eq.s32.totalorder %v6761, 384
      %vm7178 = vcmp.eq.s32.totalorder %v6762, 384
      %vm7179 = vcmp.eq.s32.totalorder %v6763, 384
      %vm7180 = vcmp.eq.s32.totalorder %v6764, 384
      %vm7181 = vcmp.eq.s32.totalorder %v6765, 384
      %vm7182 = vcmp.eq.s32.totalorder %v6766, 384
      %vm7183 = vcmp.eq.s32.totalorder %v6767, 384
      %vm7184 = vcmp.eq.s32.totalorder %v6768, 384
      %vm7185 = vcmp.eq.s32.totalorder %v6769, 384
      %7186 = vset.pattern.permute.xlu0 15
      %7187 = vperm.xlu0 %7186, %v4946
      %v7188 = vpop.permute.xlu0 %7187
      %7190 = vset.pattern.permute.xlu0 15
      %7191 = vperm.xlu0 %7190, %v4947
      %v7192 = vpop.permute.xlu0 %7191
      %7194 = vset.pattern.permute.xlu0 15
      %7195 = vperm.xlu0 %7194, %v4948
      %v7196 = vpop.permute.xlu0 %7195
      %7198 = vset.pattern.permute.xlu0 15
      %7199 = vperm.xlu0 %7198, %v4949
      %v7200 = vpop.permute.xlu0 %7199
      %7202 = vset.pattern.permute.xlu0 15
      %7203 = vperm.xlu0 %7202, %v4950
      %v7204 = vpop.permute.xlu0 %7203
      %7206 = vset.pattern.permute.xlu0 15
      %7207 = vperm.xlu0 %7206, %v4951
      %v7208 = vpop.permute.xlu0 %7207
      %7210 = vset.pattern.permute.xlu0 15
      %7211 = vperm.xlu0 %7210, %v4952
      %v7212 = vpop.permute.xlu0 %7211
      %7214 = vset.pattern.permute.xlu0 15
      %7215 = vperm.xlu0 %7214, %v4953
      %v7216 = vpop.permute.xlu0 %7215
      %7218 = vset.pattern.permute.xlu0 15
      %7219 = vperm.xlu0 %7218, %v4954
      %v7220 = vpop.permute.xlu0 %7219
      %7222 = vset.pattern.permute.xlu0 15
      %7223 = vperm.xlu0 %7222, %v4955
      %v7224 = vpop.permute.xlu0 %7223
      %7226 = vset.pattern.permute.xlu0 15
      %7227 = vperm.xlu0 %7226, %v4956
      %v7228 = vpop.permute.xlu0 %7227
      %7230 = vset.pattern.permute.xlu0 15
      %7231 = vperm.xlu0 %7230, %v4957
      %v7232 = vpop.permute.xlu0 %7231
      %7234 = vset.pattern.permute.xlu0 15
      %7235 = vperm.xlu0 %7234, %v4958
      %v7236 = vpop.permute.xlu0 %7235
      %7238 = vset.pattern.permute.xlu0 15
      %7239 = vperm.xlu0 %7238, %v4959
      %v7240 = vpop.permute.xlu0 %7239
      %7242 = vset.pattern.permute.xlu0 15
      %7243 = vperm.xlu0 %7242, %v4960
      %v7244 = vpop.permute.xlu0 %7243
      %7246 = vset.pattern.permute.xlu0 15
      %7247 = vperm.xlu0 %7246, %v4961
      %v7248 = vpop.permute.xlu0 %7247
      %v7250 = vsel %vm7154, %v7188, %v7122
      %v7251 = vsel %vm7155, %v7188, %v7123
      %v7252 = vsel %vm7156, %v7192, %v7124
      %v7253 = vsel %vm7157, %v7192, %v7125
      %v7254 = vsel %vm7158, %v7196, %v7126
      %v7255 = vsel %vm7159, %v7196, %v7127
      %v7256 = vsel %vm7160, %v7200, %v7128
      %v7257 = vsel %vm7161, %v7200, %v7129
      %v7258 = vsel %vm7162, %v7204, %v7130
      %v7259 = vsel %vm7163, %v7204, %v7131
      %v7260 = vsel %vm7164, %v7208, %v7132
      %v7261 = vsel %vm7165, %v7208, %v7133
      %v7262 = vsel %vm7166, %v7212, %v7134
      %v7263 = vsel %vm7167, %v7212, %v7135
      %v7264 = vsel %vm7168, %v7216, %v7136
      %v7265 = vsel %vm7169, %v7216, %v7137
      %v7266 = vsel %vm7170, %v7220, %v7138
      %v7267 = vsel %vm7171, %v7220, %v7139
      %v7268 = vsel %vm7172, %v7224, %v7140
      %v7269 = vsel %vm7173, %v7224, %v7141
      %v7270 = vsel %vm7174, %v7228, %v7142
      %v7271 = vsel %vm7175, %v7228, %v7143
      %v7272 = vsel %vm7176, %v7232, %v7144
      %v7273 = vsel %vm7177, %v7232, %v7145
      %v7274 = vsel %vm7178, %v7236, %v7146
      %v7275 = vsel %vm7179, %v7236, %v7147
      %v7276 = vsel %vm7180, %v7240, %v7148
      %v7277 = vsel %vm7181, %v7240, %v7149
      %v7278 = vsel %vm7182, %v7244, %v7150
      %v7279 = vsel %vm7183, %v7244, %v7151
      %v7280 = vsel %vm7184, %v7248, %v7152
      %v7281 = vsel %vm7185, %v7248, %v7153
      %v7282 = vadd.f32 %v6698, %v7250
      %v7283 = vadd.f32 %v6699, %v7251
      %v7284 = vadd.f32 %v6700, %v7252
      %v7285 = vadd.f32 %v6701, %v7253
      %v7286 = vadd.f32 %v6702, %v7254
      %v7287 = vadd.f32 %v6703, %v7255
      %v7288 = vadd.f32 %v6704, %v7256
      %v7289 = vadd.f32 %v6705, %v7257
      %v7290 = vadd.f32 %v6706, %v7258
      %v7291 = vadd.f32 %v6707, %v7259
      %v7292 = vadd.f32 %v6708, %v7260
      %v7293 = vadd.f32 %v6709, %v7261
      %v7294 = vadd.f32 %v6710, %v7262
      %v7295 = vadd.f32 %v6711, %v7263
      %v7296 = vadd.f32 %v6712, %v7264
      %v7297 = vadd.f32 %v6713, %v7265
      %v7298 = vadd.f32 %v6714, %v7266
      %v7299 = vadd.f32 %v6715, %v7267
      %v7300 = vadd.f32 %v6716, %v7268
      %v7301 = vadd.f32 %v6717, %v7269
      %v7302 = vadd.f32 %v6718, %v7270
      %v7303 = vadd.f32 %v6719, %v7271
      %v7304 = vadd.f32 %v6720, %v7272
      %v7305 = vadd.f32 %v6721, %v7273
      %v7306 = vadd.f32 %v6722, %v7274
      %v7307 = vadd.f32 %v6723, %v7275
      %v7308 = vadd.f32 %v6724, %v7276
      %v7309 = vadd.f32 %v6725, %v7277
      %v7310 = vadd.f32 %v6726, %v7278
      %v7311 = vadd.f32 %v6727, %v7279
      %v7312 = vadd.f32 %v6728, %v7280
      %v7313 = vadd.f32 %v6729, %v7281
      %v7314 = vlaneseq
      %v7315 = vshrl.u32 %v7314, 7
      %v7316 = vsub.s32 4, %v7315
      %v7317 = vrot.slane %v4940, %v7316
      %v7318 = vlaneseq
      %v7319 = vshrl.u32 %v7318, 7
      %v7320 = vsub.s32 4, %v7319
      %v7321 = vrot.slane %v4942, %v7320
      %v7322 = vsub.s32 %v7317, %v28
      %v7323 = vsub.s32 %v7321, %v28
      %v7324 = vsub.s32 %v7317, %v29
      %v7325 = vsub.s32 %v7321, %v29
      %v7326 = vsub.s32 %v7317, %v30
      %v7327 = vsub.s32 %v7321, %v30
      %v7328 = vsub.s32 %v7317, %v31
      %v7329 = vsub.s32 %v7321, %v31
      %v7330 = vsub.s32 %v7317, %v32
      %v7331 = vsub.s32 %v7321, %v32
      %v7332 = vsub.s32 %v7317, %v33
      %v7333 = vsub.s32 %v7321, %v33
      %v7334 = vsub.s32 %v7317, %v34
      %v7335 = vsub.s32 %v7321, %v34
      %v7336 = vsub.s32 %v7317, %v35
      %v7337 = vsub.s32 %v7321, %v35
      %v7338 = vsub.s32 %v7317, %v36
      %v7339 = vsub.s32 %v7321, %v36
      %v7340 = vsub.s32 %v7317, %v37
      %v7341 = vsub.s32 %v7321, %v37
      %v7342 = vsub.s32 %v7317, %v38
      %v7343 = vsub.s32 %v7321, %v38
      %v7344 = vsub.s32 %v7317, %v39
      %v7345 = vsub.s32 %v7321, %v39
      %v7346 = vsub.s32 %v7317, %v40
      %v7347 = vsub.s32 %v7321, %v40
      %v7348 = vsub.s32 %v7317, %v41
      %v7349 = vsub.s32 %v7321, %v41
      %v7350 = vsub.s32 %v7317, %v42
      %v7351 = vsub.s32 %v7321, %v42
      %v7352 = vsub.s32 %v7317, %v43
      %v7353 = vsub.s32 %v7321, %v43
      %vm7354 = vcmp.eq.s32.totalorder %v7322, 0
      %vm7355 = vcmp.eq.s32.totalorder %v7323, 0
      %vm7356 = vcmp.eq.s32.totalorder %v7324, 0
      %vm7357 = vcmp.eq.s32.totalorder %v7325, 0
      %vm7358 = vcmp.eq.s32.totalorder %v7326, 0
      %vm7359 = vcmp.eq.s32.totalorder %v7327, 0
      %vm7360 = vcmp.eq.s32.totalorder %v7328, 0
      %vm7361 = vcmp.eq.s32.totalorder %v7329, 0
      %vm7362 = vcmp.eq.s32.totalorder %v7330, 0
      %vm7363 = vcmp.eq.s32.totalorder %v7331, 0
      %vm7364 = vcmp.eq.s32.totalorder %v7332, 0
      %vm7365 = vcmp.eq.s32.totalorder %v7333, 0
      %vm7366 = vcmp.eq.s32.totalorder %v7334, 0
      %vm7367 = vcmp.eq.s32.totalorder %v7335, 0
      %vm7368 = vcmp.eq.s32.totalorder %v7336, 0
      %vm7369 = vcmp.eq.s32.totalorder %v7337, 0
      %vm7370 = vcmp.eq.s32.totalorder %v7338, 0
      %vm7371 = vcmp.eq.s32.totalorder %v7339, 0
      %vm7372 = vcmp.eq.s32.totalorder %v7340, 0
      %vm7373 = vcmp.eq.s32.totalorder %v7341, 0
      %vm7374 = vcmp.eq.s32.totalorder %v7342, 0
      %vm7375 = vcmp.eq.s32.totalorder %v7343, 0
      %vm7376 = vcmp.eq.s32.totalorder %v7344, 0
      %vm7377 = vcmp.eq.s32.totalorder %v7345, 0
      %vm7378 = vcmp.eq.s32.totalorder %v7346, 0
      %vm7379 = vcmp.eq.s32.totalorder %v7347, 0
      %vm7380 = vcmp.eq.s32.totalorder %v7348, 0
      %vm7381 = vcmp.eq.s32.totalorder %v7349, 0
      %vm7382 = vcmp.eq.s32.totalorder %v7350, 0
      %vm7383 = vcmp.eq.s32.totalorder %v7351, 0
      %vm7384 = vcmp.eq.s32.totalorder %v7352, 0
      %vm7385 = vcmp.eq.s32.totalorder %v7353, 0
      %7386 = vset.pattern.permute.xlu0 16
      %7387 = vperm.xlu0 %7386, %v4946
      %v7388 = vpop.permute.xlu0 %7387
      %7390 = vset.pattern.permute.xlu0 16
      %7391 = vperm.xlu0 %7390, %v4947
      %v7392 = vpop.permute.xlu0 %7391
      %7394 = vset.pattern.permute.xlu0 16
      %7395 = vperm.xlu0 %7394, %v4948
      %v7396 = vpop.permute.xlu0 %7395
      %7398 = vset.pattern.permute.xlu0 16
      %7399 = vperm.xlu0 %7398, %v4949
      %v7400 = vpop.permute.xlu0 %7399
      %7402 = vset.pattern.permute.xlu0 16
      %7403 = vperm.xlu0 %7402, %v4950
      %v7404 = vpop.permute.xlu0 %7403
      %7406 = vset.pattern.permute.xlu0 16
      %7407 = vperm.xlu0 %7406, %v4951
      %v7408 = vpop.permute.xlu0 %7407
      %7410 = vset.pattern.permute.xlu0 16
      %7411 = vperm.xlu0 %7410, %v4952
      %v7412 = vpop.permute.xlu0 %7411
      %7414 = vset.pattern.permute.xlu0 16
      %7415 = vperm.xlu0 %7414, %v4953
      %v7416 = vpop.permute.xlu0 %7415
      %7418 = vset.pattern.permute.xlu0 16
      %7419 = vperm.xlu0 %7418, %v4954
      %v7420 = vpop.permute.xlu0 %7419
      %7422 = vset.pattern.permute.xlu0 16
      %7423 = vperm.xlu0 %7422, %v4955
      %v7424 = vpop.permute.xlu0 %7423
      %7426 = vset.pattern.permute.xlu0 16
      %7427 = vperm.xlu0 %7426, %v4956
      %v7428 = vpop.permute.xlu0 %7427
      %7430 = vset.pattern.permute.xlu0 16
      %7431 = vperm.xlu0 %7430, %v4957
      %v7432 = vpop.permute.xlu0 %7431
      %7434 = vset.pattern.permute.xlu0 16
      %7435 = vperm.xlu0 %7434, %v4958
      %v7436 = vpop.permute.xlu0 %7435
      %7438 = vset.pattern.permute.xlu0 16
      %7439 = vperm.xlu0 %7438, %v4959
      %v7440 = vpop.permute.xlu0 %7439
      %7442 = vset.pattern.permute.xlu0 16
      %7443 = vperm.xlu0 %7442, %v4960
      %v7444 = vpop.permute.xlu0 %7443
      %7446 = vset.pattern.permute.xlu0 16
      %7447 = vperm.xlu0 %7446, %v4961
      %v7448 = vpop.permute.xlu0 %7447
      %v7450 = vsel %vm7354, %v7388, 0.0
      %v7451 = vsel %vm7355, %v7388, 0.0
      %v7452 = vsel %vm7356, %v7392, 0.0
      %v7453 = vsel %vm7357, %v7392, 0.0
      %v7454 = vsel %vm7358, %v7396, 0.0
      %v7455 = vsel %vm7359, %v7396, 0.0
      %v7456 = vsel %vm7360, %v7400, 0.0
      %v7457 = vsel %vm7361, %v7400, 0.0
      %v7458 = vsel %vm7362, %v7404, 0.0
      %v7459 = vsel %vm7363, %v7404, 0.0
      %v7460 = vsel %vm7364, %v7408, 0.0
      %v7461 = vsel %vm7365, %v7408, 0.0
      %v7462 = vsel %vm7366, %v7412, 0.0
      %v7463 = vsel %vm7367, %v7412, 0.0
      %v7464 = vsel %vm7368, %v7416, 0.0
      %v7465 = vsel %vm7369, %v7416, 0.0
      %v7466 = vsel %vm7370, %v7420, 0.0
      %v7467 = vsel %vm7371, %v7420, 0.0
      %v7468 = vsel %vm7372, %v7424, 0.0
      %v7469 = vsel %vm7373, %v7424, 0.0
      %v7470 = vsel %vm7374, %v7428, 0.0
      %v7471 = vsel %vm7375, %v7428, 0.0
      %v7472 = vsel %vm7376, %v7432, 0.0
      %v7473 = vsel %vm7377, %v7432, 0.0
      %v7474 = vsel %vm7378, %v7436, 0.0
      %v7475 = vsel %vm7379, %v7436, 0.0
      %v7476 = vsel %vm7380, %v7440, 0.0
      %v7477 = vsel %vm7381, %v7440, 0.0
      %v7478 = vsel %vm7382, %v7444, 0.0
      %v7479 = vsel %vm7383, %v7444, 0.0
      %v7480 = vsel %vm7384, %v7448, 0.0
      %v7481 = vsel %vm7385, %v7448, 0.0
      %vm7482 = vcmp.eq.s32.totalorder %v7322, 128
      %vm7483 = vcmp.eq.s32.totalorder %v7323, 128
      %vm7484 = vcmp.eq.s32.totalorder %v7324, 128
      %vm7485 = vcmp.eq.s32.totalorder %v7325, 128
      %vm7486 = vcmp.eq.s32.totalorder %v7326, 128
      %vm7487 = vcmp.eq.s32.totalorder %v7327, 128
      %vm7488 = vcmp.eq.s32.totalorder %v7328, 128
      %vm7489 = vcmp.eq.s32.totalorder %v7329, 128
      %vm7490 = vcmp.eq.s32.totalorder %v7330, 128
      %vm7491 = vcmp.eq.s32.totalorder %v7331, 128
      %vm7492 = vcmp.eq.s32.totalorder %v7332, 128
      %vm7493 = vcmp.eq.s32.totalorder %v7333, 128
      %vm7494 = vcmp.eq.s32.totalorder %v7334, 128
      %vm7495 = vcmp.eq.s32.totalorder %v7335, 128
      %vm7496 = vcmp.eq.s32.totalorder %v7336, 128
      %vm7497 = vcmp.eq.s32.totalorder %v7337, 128
      %vm7498 = vcmp.eq.s32.totalorder %v7338, 128
      %vm7499 = vcmp.eq.s32.totalorder %v7339, 128
      %vm7500 = vcmp.eq.s32.totalorder %v7340, 128
      %vm7501 = vcmp.eq.s32.totalorder %v7341, 128
      %vm7502 = vcmp.eq.s32.totalorder %v7342, 128
      %vm7503 = vcmp.eq.s32.totalorder %v7343, 128
      %vm7504 = vcmp.eq.s32.totalorder %v7344, 128
      %vm7505 = vcmp.eq.s32.totalorder %v7345, 128
      %vm7506 = vcmp.eq.s32.totalorder %v7346, 128
      %vm7507 = vcmp.eq.s32.totalorder %v7347, 128
      %vm7508 = vcmp.eq.s32.totalorder %v7348, 128
      %vm7509 = vcmp.eq.s32.totalorder %v7349, 128
      %vm7510 = vcmp.eq.s32.totalorder %v7350, 128
      %vm7511 = vcmp.eq.s32.totalorder %v7351, 128
      %vm7512 = vcmp.eq.s32.totalorder %v7352, 128
      %vm7513 = vcmp.eq.s32.totalorder %v7353, 128
      %7514 = vset.pattern.permute.xlu0 17
      %7515 = vperm.xlu0 %7514, %v4946
      %v7516 = vpop.permute.xlu0 %7515
      %7518 = vset.pattern.permute.xlu0 17
      %7519 = vperm.xlu0 %7518, %v4947
      %v7520 = vpop.permute.xlu0 %7519
      %7522 = vset.pattern.permute.xlu0 17
      %7523 = vperm.xlu0 %7522, %v4948
      %v7524 = vpop.permute.xlu0 %7523
      %7526 = vset.pattern.permute.xlu0 17
      %7527 = vperm.xlu0 %7526, %v4949
      %v7528 = vpop.permute.xlu0 %7527
      %7530 = vset.pattern.permute.xlu0 17
      %7531 = vperm.xlu0 %7530, %v4950
      %v7532 = vpop.permute.xlu0 %7531
      %7534 = vset.pattern.permute.xlu0 17
      %7535 = vperm.xlu0 %7534, %v4951
      %v7536 = vpop.permute.xlu0 %7535
      %7538 = vset.pattern.permute.xlu0 17
      %7539 = vperm.xlu0 %7538, %v4952
      %v7540 = vpop.permute.xlu0 %7539
      %7542 = vset.pattern.permute.xlu0 17
      %7543 = vperm.xlu0 %7542, %v4953
      %v7544 = vpop.permute.xlu0 %7543
      %7546 = vset.pattern.permute.xlu0 17
      %7547 = vperm.xlu0 %7546, %v4954
      %v7548 = vpop.permute.xlu0 %7547
      %7550 = vset.pattern.permute.xlu0 17
      %7551 = vperm.xlu0 %7550, %v4955
      %v7552 = vpop.permute.xlu0 %7551
      %7554 = vset.pattern.permute.xlu0 17
      %7555 = vperm.xlu0 %7554, %v4956
      %v7556 = vpop.permute.xlu0 %7555
      %7558 = vset.pattern.permute.xlu0 17
      %7559 = vperm.xlu0 %7558, %v4957
      %v7560 = vpop.permute.xlu0 %7559
      %7562 = vset.pattern.permute.xlu0 17
      %7563 = vperm.xlu0 %7562, %v4958
      %v7564 = vpop.permute.xlu0 %7563
      %7566 = vset.pattern.permute.xlu0 17
      %7567 = vperm.xlu0 %7566, %v4959
      %v7568 = vpop.permute.xlu0 %7567
      %7570 = vset.pattern.permute.xlu0 17
      %7571 = vperm.xlu0 %7570, %v4960
      %v7572 = vpop.permute.xlu0 %7571
      %7574 = vset.pattern.permute.xlu0 17
      %7575 = vperm.xlu0 %7574, %v4961
      %v7576 = vpop.permute.xlu0 %7575
      %v7578 = vsel %vm7482, %v7516, %v7450
      %v7579 = vsel %vm7483, %v7516, %v7451
      %v7580 = vsel %vm7484, %v7520, %v7452
      %v7581 = vsel %vm7485, %v7520, %v7453
      %v7582 = vsel %vm7486, %v7524, %v7454
      %v7583 = vsel %vm7487, %v7524, %v7455
      %v7584 = vsel %vm7488, %v7528, %v7456
      %v7585 = vsel %vm7489, %v7528, %v7457
      %v7586 = vsel %vm7490, %v7532, %v7458
      %v7587 = vsel %vm7491, %v7532, %v7459
      %v7588 = vsel %vm7492, %v7536, %v7460
      %v7589 = vsel %vm7493, %v7536, %v7461
      %v7590 = vsel %vm7494, %v7540, %v7462
      %v7591 = vsel %vm7495, %v7540, %v7463
      %v7592 = vsel %vm7496, %v7544, %v7464
      %v7593 = vsel %vm7497, %v7544, %v7465
      %v7594 = vsel %vm7498, %v7548, %v7466
      %v7595 = vsel %vm7499, %v7548, %v7467
      %v7596 = vsel %vm7500, %v7552, %v7468
      %v7597 = vsel %vm7501, %v7552, %v7469
      %v7598 = vsel %vm7502, %v7556, %v7470
      %v7599 = vsel %vm7503, %v7556, %v7471
      %v7600 = vsel %vm7504, %v7560, %v7472
      %v7601 = vsel %vm7505, %v7560, %v7473
      %v7602 = vsel %vm7506, %v7564, %v7474
      %v7603 = vsel %vm7507, %v7564, %v7475
      %v7604 = vsel %vm7508, %v7568, %v7476
      %v7605 = vsel %vm7509, %v7568, %v7477
      %v7606 = vsel %vm7510, %v7572, %v7478
      %v7607 = vsel %vm7511, %v7572, %v7479
      %v7608 = vsel %vm7512, %v7576, %v7480
      %v7609 = vsel %vm7513, %v7576, %v7481
      %vm7610 = vcmp.eq.s32.totalorder %v7322, 256
      %vm7611 = vcmp.eq.s32.totalorder %v7323, 256
      %vm7612 = vcmp.eq.s32.totalorder %v7324, 256
      %vm7613 = vcmp.eq.s32.totalorder %v7325, 256
      %vm7614 = vcmp.eq.s32.totalorder %v7326, 256
      %vm7615 = vcmp.eq.s32.totalorder %v7327, 256
      %vm7616 = vcmp.eq.s32.totalorder %v7328, 256
      %vm7617 = vcmp.eq.s32.totalorder %v7329, 256
      %vm7618 = vcmp.eq.s32.totalorder %v7330, 256
      %vm7619 = vcmp.eq.s32.totalorder %v7331, 256
      %vm7620 = vcmp.eq.s32.totalorder %v7332, 256
      %vm7621 = vcmp.eq.s32.totalorder %v7333, 256
      %vm7622 = vcmp.eq.s32.totalorder %v7334, 256
      %vm7623 = vcmp.eq.s32.totalorder %v7335, 256
      %vm7624 = vcmp.eq.s32.totalorder %v7336, 256
      %vm7625 = vcmp.eq.s32.totalorder %v7337, 256
      %vm7626 = vcmp.eq.s32.totalorder %v7338, 256
      %vm7627 = vcmp.eq.s32.totalorder %v7339, 256
      %vm7628 = vcmp.eq.s32.totalorder %v7340, 256
      %vm7629 = vcmp.eq.s32.totalorder %v7341, 256
      %vm7630 = vcmp.eq.s32.totalorder %v7342, 256
      %vm7631 = vcmp.eq.s32.totalorder %v7343, 256
      %vm7632 = vcmp.eq.s32.totalorder %v7344, 256
      %vm7633 = vcmp.eq.s32.totalorder %v7345, 256
      %vm7634 = vcmp.eq.s32.totalorder %v7346, 256
      %vm7635 = vcmp.eq.s32.totalorder %v7347, 256
      %vm7636 = vcmp.eq.s32.totalorder %v7348, 256
      %vm7637 = vcmp.eq.s32.totalorder %v7349, 256
      %vm7638 = vcmp.eq.s32.totalorder %v7350, 256
      %vm7639 = vcmp.eq.s32.totalorder %v7351, 256
      %vm7640 = vcmp.eq.s32.totalorder %v7352, 256
      %vm7641 = vcmp.eq.s32.totalorder %v7353, 256
      %7642 = vset.pattern.permute.xlu0 18
      %7643 = vperm.xlu0 %7642, %v4946
      %v7644 = vpop.permute.xlu0 %7643
      %7646 = vset.pattern.permute.xlu0 18
      %7647 = vperm.xlu0 %7646, %v4947
      %v7648 = vpop.permute.xlu0 %7647
      %7650 = vset.pattern.permute.xlu0 18
      %7651 = vperm.xlu0 %7650, %v4948
      %v7652 = vpop.permute.xlu0 %7651
      %7654 = vset.pattern.permute.xlu0 18
      %7655 = vperm.xlu0 %7654, %v4949
      %v7656 = vpop.permute.xlu0 %7655
      %7658 = vset.pattern.permute.xlu0 18
      %7659 = vperm.xlu0 %7658, %v4950
      %v7660 = vpop.permute.xlu0 %7659
      %7662 = vset.pattern.permute.xlu0 18
      %7663 = vperm.xlu0 %7662, %v4951
      %v7664 = vpop.permute.xlu0 %7663
      %7666 = vset.pattern.permute.xlu0 18
      %7667 = vperm.xlu0 %7666, %v4952
      %v7668 = vpop.permute.xlu0 %7667
      %7670 = vset.pattern.permute.xlu0 18
      %7671 = vperm.xlu0 %7670, %v4953
      %v7672 = vpop.permute.xlu0 %7671
      %7674 = vset.pattern.permute.xlu0 18
      %7675 = vperm.xlu0 %7674, %v4954
      %v7676 = vpop.permute.xlu0 %7675
      %7678 = vset.pattern.permute.xlu0 18
      %7679 = vperm.xlu0 %7678, %v4955
      %v7680 = vpop.permute.xlu0 %7679
      %7682 = vset.pattern.permute.xlu0 18
      %7683 = vperm.xlu0 %7682, %v4956
      %v7684 = vpop.permute.xlu0 %7683
      %7686 = vset.pattern.permute.xlu0 18
      %7687 = vperm.xlu0 %7686, %v4957
      %v7688 = vpop.permute.xlu0 %7687
      %7690 = vset.pattern.permute.xlu0 18
      %7691 = vperm.xlu0 %7690, %v4958
      %v7692 = vpop.permute.xlu0 %7691
      %7694 = vset.pattern.permute.xlu0 18
      %7695 = vperm.xlu0 %7694, %v4959
      %v7696 = vpop.permute.xlu0 %7695
      %7698 = vset.pattern.permute.xlu0 18
      %7699 = vperm.xlu0 %7698, %v4960
      %v7700 = vpop.permute.xlu0 %7699
      %7702 = vset.pattern.permute.xlu0 18
      %7703 = vperm.xlu0 %7702, %v4961
      %v7704 = vpop.permute.xlu0 %7703
      %v7706 = vsel %vm7610, %v7644, %v7578
      %v7707 = vsel %vm7611, %v7644, %v7579
      %v7708 = vsel %vm7612, %v7648, %v7580
      %v7709 = vsel %vm7613, %v7648, %v7581
      %v7710 = vsel %vm7614, %v7652, %v7582
      %v7711 = vsel %vm7615, %v7652, %v7583
      %v7712 = vsel %vm7616, %v7656, %v7584
      %v7713 = vsel %vm7617, %v7656, %v7585
      %v7714 = vsel %vm7618, %v7660, %v7586
      %v7715 = vsel %vm7619, %v7660, %v7587
      %v7716 = vsel %vm7620, %v7664, %v7588
      %v7717 = vsel %vm7621, %v7664, %v7589
      %v7718 = vsel %vm7622, %v7668, %v7590
      %v7719 = vsel %vm7623, %v7668, %v7591
      %v7720 = vsel %vm7624, %v7672, %v7592
      %v7721 = vsel %vm7625, %v7672, %v7593
      %v7722 = vsel %vm7626, %v7676, %v7594
      %v7723 = vsel %vm7627, %v7676, %v7595
      %v7724 = vsel %vm7628, %v7680, %v7596
      %v7725 = vsel %vm7629, %v7680, %v7597
      %v7726 = vsel %vm7630, %v7684, %v7598
      %v7727 = vsel %vm7631, %v7684, %v7599
      %v7728 = vsel %vm7632, %v7688, %v7600
      %v7729 = vsel %vm7633, %v7688, %v7601
      %v7730 = vsel %vm7634, %v7692, %v7602
      %v7731 = vsel %vm7635, %v7692, %v7603
      %v7732 = vsel %vm7636, %v7696, %v7604
      %v7733 = vsel %vm7637, %v7696, %v7605
      %v7734 = vsel %vm7638, %v7700, %v7606
      %v7735 = vsel %vm7639, %v7700, %v7607
      %v7736 = vsel %vm7640, %v7704, %v7608
      %v7737 = vsel %vm7641, %v7704, %v7609
      %vm7738 = vcmp.eq.s32.totalorder %v7322, 384
      %vm7739 = vcmp.eq.s32.totalorder %v7323, 384
      %vm7740 = vcmp.eq.s32.totalorder %v7324, 384
      %vm7741 = vcmp.eq.s32.totalorder %v7325, 384
      %vm7742 = vcmp.eq.s32.totalorder %v7326, 384
      %vm7743 = vcmp.eq.s32.totalorder %v7327, 384
      %vm7744 = vcmp.eq.s32.totalorder %v7328, 384
      %vm7745 = vcmp.eq.s32.totalorder %v7329, 384
      %vm7746 = vcmp.eq.s32.totalorder %v7330, 384
      %vm7747 = vcmp.eq.s32.totalorder %v7331, 384
      %vm7748 = vcmp.eq.s32.totalorder %v7332, 384
      %vm7749 = vcmp.eq.s32.totalorder %v7333, 384
      %vm7750 = vcmp.eq.s32.totalorder %v7334, 384
      %vm7751 = vcmp.eq.s32.totalorder %v7335, 384
      %vm7752 = vcmp.eq.s32.totalorder %v7336, 384
      %vm7753 = vcmp.eq.s32.totalorder %v7337, 384
      %vm7754 = vcmp.eq.s32.totalorder %v7338, 384
      %vm7755 = vcmp.eq.s32.totalorder %v7339, 384
      %vm7756 = vcmp.eq.s32.totalorder %v7340, 384
      %vm7757 = vcmp.eq.s32.totalorder %v7341, 384
      %vm7758 = vcmp.eq.s32.totalorder %v7342, 384
      %vm7759 = vcmp.eq.s32.totalorder %v7343, 384
      %vm7760 = vcmp.eq.s32.totalorder %v7344, 384
      %vm7761 = vcmp.eq.s32.totalorder %v7345, 384
      %vm7762 = vcmp.eq.s32.totalorder %v7346, 384
      %vm7763 = vcmp.eq.s32.totalorder %v7347, 384
      %vm7764 = vcmp.eq.s32.totalorder %v7348, 384
      %vm7765 = vcmp.eq.s32.totalorder %v7349, 384
      %vm7766 = vcmp.eq.s32.totalorder %v7350, 384
      %vm7767 = vcmp.eq.s32.totalorder %v7351, 384
      %vm7768 = vcmp.eq.s32.totalorder %v7352, 384
      %vm7769 = vcmp.eq.s32.totalorder %v7353, 384
      %7770 = vset.pattern.permute.xlu0 19
      %7771 = vperm.xlu0 %7770, %v4946
      %v7772 = vpop.permute.xlu0 %7771
      %7774 = vset.pattern.permute.xlu0 19
      %7775 = vperm.xlu0 %7774, %v4947
      %v7776 = vpop.permute.xlu0 %7775
      %7778 = vset.pattern.permute.xlu0 19
      %7779 = vperm.xlu0 %7778, %v4948
      %v7780 = vpop.permute.xlu0 %7779
      %7782 = vset.pattern.permute.xlu0 19
      %7783 = vperm.xlu0 %7782, %v4949
      %v7784 = vpop.permute.xlu0 %7783
      %7786 = vset.pattern.permute.xlu0 19
      %7787 = vperm.xlu0 %7786, %v4950
      %v7788 = vpop.permute.xlu0 %7787
      %7790 = vset.pattern.permute.xlu0 19
      %7791 = vperm.xlu0 %7790, %v4951
      %v7792 = vpop.permute.xlu0 %7791
      %7794 = vset.pattern.permute.xlu0 19
      %7795 = vperm.xlu0 %7794, %v4952
      %v7796 = vpop.permute.xlu0 %7795
      %7798 = vset.pattern.permute.xlu0 19
      %7799 = vperm.xlu0 %7798, %v4953
      %v7800 = vpop.permute.xlu0 %7799
      %7802 = vset.pattern.permute.xlu0 19
      %7803 = vperm.xlu0 %7802, %v4954
      %v7804 = vpop.permute.xlu0 %7803
      %7806 = vset.pattern.permute.xlu0 19
      %7807 = vperm.xlu0 %7806, %v4955
      %v7808 = vpop.permute.xlu0 %7807
      %7810 = vset.pattern.permute.xlu0 19
      %7811 = vperm.xlu0 %7810, %v4956
      %v7812 = vpop.permute.xlu0 %7811
      %7814 = vset.pattern.permute.xlu0 19
      %7815 = vperm.xlu0 %7814, %v4957
      %v7816 = vpop.permute.xlu0 %7815
      %7818 = vset.pattern.permute.xlu0 19
      %7819 = vperm.xlu0 %7818, %v4958
      %v7820 = vpop.permute.xlu0 %7819
      %7822 = vset.pattern.permute.xlu0 19
      %7823 = vperm.xlu0 %7822, %v4959
      %v7824 = vpop.permute.xlu0 %7823
      %7826 = vset.pattern.permute.xlu0 19
      %7827 = vperm.xlu0 %7826, %v4960
      %v7828 = vpop.permute.xlu0 %7827
      %7830 = vset.pattern.permute.xlu0 19
      %7831 = vperm.xlu0 %7830, %v4961
      %v7832 = vpop.permute.xlu0 %7831
      %v7834 = vsel %vm7738, %v7772, %v7706
      %v7835 = vsel %vm7739, %v7772, %v7707
      %v7836 = vsel %vm7740, %v7776, %v7708
      %v7837 = vsel %vm7741, %v7776, %v7709
      %v7838 = vsel %vm7742, %v7780, %v7710
      %v7839 = vsel %vm7743, %v7780, %v7711
      %v7840 = vsel %vm7744, %v7784, %v7712
      %v7841 = vsel %vm7745, %v7784, %v7713
      %v7842 = vsel %vm7746, %v7788, %v7714
      %v7843 = vsel %vm7747, %v7788, %v7715
      %v7844 = vsel %vm7748, %v7792, %v7716
      %v7845 = vsel %vm7749, %v7792, %v7717
      %v7846 = vsel %vm7750, %v7796, %v7718
      %v7847 = vsel %vm7751, %v7796, %v7719
      %v7848 = vsel %vm7752, %v7800, %v7720
      %v7849 = vsel %vm7753, %v7800, %v7721
      %v7850 = vsel %vm7754, %v7804, %v7722
      %v7851 = vsel %vm7755, %v7804, %v7723
      %v7852 = vsel %vm7756, %v7808, %v7724
      %v7853 = vsel %vm7757, %v7808, %v7725
      %v7854 = vsel %vm7758, %v7812, %v7726
      %v7855 = vsel %vm7759, %v7812, %v7727
      %v7856 = vsel %vm7760, %v7816, %v7728
      %v7857 = vsel %vm7761, %v7816, %v7729
      %v7858 = vsel %vm7762, %v7820, %v7730
      %v7859 = vsel %vm7763, %v7820, %v7731
      %v7860 = vsel %vm7764, %v7824, %v7732
      %v7861 = vsel %vm7765, %v7824, %v7733
      %v7862 = vsel %vm7766, %v7828, %v7734
      %v7863 = vsel %vm7767, %v7828, %v7735
      %v7864 = vsel %vm7768, %v7832, %v7736
      %v7865 = vsel %vm7769, %v7832, %v7737
      %v7866 = vadd.f32 %v7282, %v7834
      %v7867 = vadd.f32 %v7283, %v7835
      %v7868 = vadd.f32 %v7284, %v7836
      %v7869 = vadd.f32 %v7285, %v7837
      %v7870 = vadd.f32 %v7286, %v7838
      %v7871 = vadd.f32 %v7287, %v7839
      %v7872 = vadd.f32 %v7288, %v7840
      %v7873 = vadd.f32 %v7289, %v7841
      %v7874 = vadd.f32 %v7290, %v7842
      %v7875 = vadd.f32 %v7291, %v7843
      %v7876 = vadd.f32 %v7292, %v7844
      %v7877 = vadd.f32 %v7293, %v7845
      %v7878 = vadd.f32 %v7294, %v7846
      %v7879 = vadd.f32 %v7295, %v7847
      %v7880 = vadd.f32 %v7296, %v7848
      %v7881 = vadd.f32 %v7297, %v7849
      %v7882 = vadd.f32 %v7298, %v7850
      %v7883 = vadd.f32 %v7299, %v7851
      %v7884 = vadd.f32 %v7300, %v7852
      %v7885 = vadd.f32 %v7301, %v7853
      %v7886 = vadd.f32 %v7302, %v7854
      %v7887 = vadd.f32 %v7303, %v7855
      %v7888 = vadd.f32 %v7304, %v7856
      %v7889 = vadd.f32 %v7305, %v7857
      %v7890 = vadd.f32 %v7306, %v7858
      %v7891 = vadd.f32 %v7307, %v7859
      %v7892 = vadd.f32 %v7308, %v7860
      %v7893 = vadd.f32 %v7309, %v7861
      %v7894 = vadd.f32 %v7310, %v7862
      %v7895 = vadd.f32 %v7311, %v7863
      %v7896 = vadd.f32 %v7312, %v7864
      %v7897 = vadd.f32 %v7313, %v7865
      %v7898 = vlaneseq
      %v7899 = vshrl.u32 %v7898, 7
      %v7900 = vsub.s32 5, %v7899
      %v7901 = vrot.slane %v4940, %v7900
      %v7902 = vlaneseq
      %v7903 = vshrl.u32 %v7902, 7
      %v7904 = vsub.s32 5, %v7903
      %v7905 = vrot.slane %v4942, %v7904
      %v7906 = vsub.s32 %v7901, %v28
      %v7907 = vsub.s32 %v7905, %v28
      %v7908 = vsub.s32 %v7901, %v29
      %v7909 = vsub.s32 %v7905, %v29
      %v7910 = vsub.s32 %v7901, %v30
      %v7911 = vsub.s32 %v7905, %v30
      %v7912 = vsub.s32 %v7901, %v31
      %v7913 = vsub.s32 %v7905, %v31
      %v7914 = vsub.s32 %v7901, %v32
      %v7915 = vsub.s32 %v7905, %v32
      %v7916 = vsub.s32 %v7901, %v33
      %v7917 = vsub.s32 %v7905, %v33
      %v7918 = vsub.s32 %v7901, %v34
      %v7919 = vsub.s32 %v7905, %v34
      %v7920 = vsub.s32 %v7901, %v35
      %v7921 = vsub.s32 %v7905, %v35
      %v7922 = vsub.s32 %v7901, %v36
      %v7923 = vsub.s32 %v7905, %v36
      %v7924 = vsub.s32 %v7901, %v37
      %v7925 = vsub.s32 %v7905, %v37
      %v7926 = vsub.s32 %v7901, %v38
      %v7927 = vsub.s32 %v7905, %v38
      %v7928 = vsub.s32 %v7901, %v39
      %v7929 = vsub.s32 %v7905, %v39
      %v7930 = vsub.s32 %v7901, %v40
      %v7931 = vsub.s32 %v7905, %v40
      %v7932 = vsub.s32 %v7901, %v41
      %v7933 = vsub.s32 %v7905, %v41
      %v7934 = vsub.s32 %v7901, %v42
      %v7935 = vsub.s32 %v7905, %v42
      %v7936 = vsub.s32 %v7901, %v43
      %v7937 = vsub.s32 %v7905, %v43
      %vm7938 = vcmp.eq.s32.totalorder %v7906, 0
      %vm7939 = vcmp.eq.s32.totalorder %v7907, 0
      %vm7940 = vcmp.eq.s32.totalorder %v7908, 0
      %vm7941 = vcmp.eq.s32.totalorder %v7909, 0
      %vm7942 = vcmp.eq.s32.totalorder %v7910, 0
      %vm7943 = vcmp.eq.s32.totalorder %v7911, 0
      %vm7944 = vcmp.eq.s32.totalorder %v7912, 0
      %vm7945 = vcmp.eq.s32.totalorder %v7913, 0
      %vm7946 = vcmp.eq.s32.totalorder %v7914, 0
      %vm7947 = vcmp.eq.s32.totalorder %v7915, 0
      %vm7948 = vcmp.eq.s32.totalorder %v7916, 0
      %vm7949 = vcmp.eq.s32.totalorder %v7917, 0
      %vm7950 = vcmp.eq.s32.totalorder %v7918, 0
      %vm7951 = vcmp.eq.s32.totalorder %v7919, 0
      %vm7952 = vcmp.eq.s32.totalorder %v7920, 0
      %vm7953 = vcmp.eq.s32.totalorder %v7921, 0
      %vm7954 = vcmp.eq.s32.totalorder %v7922, 0
      %vm7955 = vcmp.eq.s32.totalorder %v7923, 0
      %vm7956 = vcmp.eq.s32.totalorder %v7924, 0
      %vm7957 = vcmp.eq.s32.totalorder %v7925, 0
      %vm7958 = vcmp.eq.s32.totalorder %v7926, 0
      %vm7959 = vcmp.eq.s32.totalorder %v7927, 0
      %vm7960 = vcmp.eq.s32.totalorder %v7928, 0
      %vm7961 = vcmp.eq.s32.totalorder %v7929, 0
      %vm7962 = vcmp.eq.s32.totalorder %v7930, 0
      %vm7963 = vcmp.eq.s32.totalorder %v7931, 0
      %vm7964 = vcmp.eq.s32.totalorder %v7932, 0
      %vm7965 = vcmp.eq.s32.totalorder %v7933, 0
      %vm7966 = vcmp.eq.s32.totalorder %v7934, 0
      %vm7967 = vcmp.eq.s32.totalorder %v7935, 0
      %vm7968 = vcmp.eq.s32.totalorder %v7936, 0
      %vm7969 = vcmp.eq.s32.totalorder %v7937, 0
      %7970 = vset.pattern.permute.xlu0 20
      %7971 = vperm.xlu0 %7970, %v4946
      %v7972 = vpop.permute.xlu0 %7971
      %7974 = vset.pattern.permute.xlu0 20
      %7975 = vperm.xlu0 %7974, %v4947
      %v7976 = vpop.permute.xlu0 %7975
      %7978 = vset.pattern.permute.xlu0 20
      %7979 = vperm.xlu0 %7978, %v4948
      %v7980 = vpop.permute.xlu0 %7979
      %7982 = vset.pattern.permute.xlu0 20
      %7983 = vperm.xlu0 %7982, %v4949
      %v7984 = vpop.permute.xlu0 %7983
      %7986 = vset.pattern.permute.xlu0 20
      %7987 = vperm.xlu0 %7986, %v4950
      %v7988 = vpop.permute.xlu0 %7987
      %7990 = vset.pattern.permute.xlu0 20
      %7991 = vperm.xlu0 %7990, %v4951
      %v7992 = vpop.permute.xlu0 %7991
      %7994 = vset.pattern.permute.xlu0 20
      %7995 = vperm.xlu0 %7994, %v4952
      %v7996 = vpop.permute.xlu0 %7995
      %7998 = vset.pattern.permute.xlu0 20
      %7999 = vperm.xlu0 %7998, %v4953
      %v8000 = vpop.permute.xlu0 %7999
      %8002 = vset.pattern.permute.xlu0 20
      %8003 = vperm.xlu0 %8002, %v4954
      %v8004 = vpop.permute.xlu0 %8003
      %8006 = vset.pattern.permute.xlu0 20
      %8007 = vperm.xlu0 %8006, %v4955
      %v8008 = vpop.permute.xlu0 %8007
      %8010 = vset.pattern.permute.xlu0 20
      %8011 = vperm.xlu0 %8010, %v4956
      %v8012 = vpop.permute.xlu0 %8011
      %8014 = vset.pattern.permute.xlu0 20
      %8015 = vperm.xlu0 %8014, %v4957
      %v8016 = vpop.permute.xlu0 %8015
      %8018 = vset.pattern.permute.xlu0 20
      %8019 = vperm.xlu0 %8018, %v4958
      %v8020 = vpop.permute.xlu0 %8019
      %8022 = vset.pattern.permute.xlu0 20
      %8023 = vperm.xlu0 %8022, %v4959
      %v8024 = vpop.permute.xlu0 %8023
      %8026 = vset.pattern.permute.xlu0 20
      %8027 = vperm.xlu0 %8026, %v4960
      %v8028 = vpop.permute.xlu0 %8027
      %8030 = vset.pattern.permute.xlu0 20
      %8031 = vperm.xlu0 %8030, %v4961
      %v8032 = vpop.permute.xlu0 %8031
      %v8034 = vsel %vm7938, %v7972, 0.0
      %v8035 = vsel %vm7939, %v7972, 0.0
      %v8036 = vsel %vm7940, %v7976, 0.0
      %v8037 = vsel %vm7941, %v7976, 0.0
      %v8038 = vsel %vm7942, %v7980, 0.0
      %v8039 = vsel %vm7943, %v7980, 0.0
      %v8040 = vsel %vm7944, %v7984, 0.0
      %v8041 = vsel %vm7945, %v7984, 0.0
      %v8042 = vsel %vm7946, %v7988, 0.0
      %v8043 = vsel %vm7947, %v7988, 0.0
      %v8044 = vsel %vm7948, %v7992, 0.0
      %v8045 = vsel %vm7949, %v7992, 0.0
      %v8046 = vsel %vm7950, %v7996, 0.0
      %v8047 = vsel %vm7951, %v7996, 0.0
      %v8048 = vsel %vm7952, %v8000, 0.0
      %v8049 = vsel %vm7953, %v8000, 0.0
      %v8050 = vsel %vm7954, %v8004, 0.0
      %v8051 = vsel %vm7955, %v8004, 0.0
      %v8052 = vsel %vm7956, %v8008, 0.0
      %v8053 = vsel %vm7957, %v8008, 0.0
      %v8054 = vsel %vm7958, %v8012, 0.0
      %v8055 = vsel %vm7959, %v8012, 0.0
      %v8056 = vsel %vm7960, %v8016, 0.0
      %v8057 = vsel %vm7961, %v8016, 0.0
      %v8058 = vsel %vm7962, %v8020, 0.0
      %v8059 = vsel %vm7963, %v8020, 0.0
      %v8060 = vsel %vm7964, %v8024, 0.0
      %v8061 = vsel %vm7965, %v8024, 0.0
      %v8062 = vsel %vm7966, %v8028, 0.0
      %v8063 = vsel %vm7967, %v8028, 0.0
      %v8064 = vsel %vm7968, %v8032, 0.0
      %v8065 = vsel %vm7969, %v8032, 0.0
      %vm8066 = vcmp.eq.s32.totalorder %v7906, 128
      %vm8067 = vcmp.eq.s32.totalorder %v7907, 128
      %vm8068 = vcmp.eq.s32.totalorder %v7908, 128
      %vm8069 = vcmp.eq.s32.totalorder %v7909, 128
      %vm8070 = vcmp.eq.s32.totalorder %v7910, 128
      %vm8071 = vcmp.eq.s32.totalorder %v7911, 128
      %vm8072 = vcmp.eq.s32.totalorder %v7912, 128
      %vm8073 = vcmp.eq.s32.totalorder %v7913, 128
      %vm8074 = vcmp.eq.s32.totalorder %v7914, 128
      %vm8075 = vcmp.eq.s32.totalorder %v7915, 128
      %vm8076 = vcmp.eq.s32.totalorder %v7916, 128
      %vm8077 = vcmp.eq.s32.totalorder %v7917, 128
      %vm8078 = vcmp.eq.s32.totalorder %v7918, 128
      %vm8079 = vcmp.eq.s32.totalorder %v7919, 128
      %vm8080 = vcmp.eq.s32.totalorder %v7920, 128
      %vm8081 = vcmp.eq.s32.totalorder %v7921, 128
      %vm8082 = vcmp.eq.s32.totalorder %v7922, 128
      %vm8083 = vcmp.eq.s32.totalorder %v7923, 128
      %vm8084 = vcmp.eq.s32.totalorder %v7924, 128
      %vm8085 = vcmp.eq.s32.totalorder %v7925, 128
      %vm8086 = vcmp.eq.s32.totalorder %v7926, 128
      %vm8087 = vcmp.eq.s32.totalorder %v7927, 128
      %vm8088 = vcmp.eq.s32.totalorder %v7928, 128
      %vm8089 = vcmp.eq.s32.totalorder %v7929, 128
      %vm8090 = vcmp.eq.s32.totalorder %v7930, 128
      %vm8091 = vcmp.eq.s32.totalorder %v7931, 128
      %vm8092 = vcmp.eq.s32.totalorder %v7932, 128
      %vm8093 = vcmp.eq.s32.totalorder %v7933, 128
      %vm8094 = vcmp.eq.s32.totalorder %v7934, 128
      %vm8095 = vcmp.eq.s32.totalorder %v7935, 128
      %vm8096 = vcmp.eq.s32.totalorder %v7936, 128
      %vm8097 = vcmp.eq.s32.totalorder %v7937, 128
      %8098 = vset.pattern.permute.xlu0 21
      %8099 = vperm.xlu0 %8098, %v4946
      %v8100 = vpop.permute.xlu0 %8099
      %8102 = vset.pattern.permute.xlu0 21
      %8103 = vperm.xlu0 %8102, %v4947
      %v8104 = vpop.permute.xlu0 %8103
      %8106 = vset.pattern.permute.xlu0 21
      %8107 = vperm.xlu0 %8106, %v4948
      %v8108 = vpop.permute.xlu0 %8107
      %8110 = vset.pattern.permute.xlu0 21
      %8111 = vperm.xlu0 %8110, %v4949
      %v8112 = vpop.permute.xlu0 %8111
      %8114 = vset.pattern.permute.xlu0 21
      %8115 = vperm.xlu0 %8114, %v4950
      %v8116 = vpop.permute.xlu0 %8115
      %8118 = vset.pattern.permute.xlu0 21
      %8119 = vperm.xlu0 %8118, %v4951
      %v8120 = vpop.permute.xlu0 %8119
      %8122 = vset.pattern.permute.xlu0 21
      %8123 = vperm.xlu0 %8122, %v4952
      %v8124 = vpop.permute.xlu0 %8123
      %8126 = vset.pattern.permute.xlu0 21
      %8127 = vperm.xlu0 %8126, %v4953
      %v8128 = vpop.permute.xlu0 %8127
      %8130 = vset.pattern.permute.xlu0 21
      %8131 = vperm.xlu0 %8130, %v4954
      %v8132 = vpop.permute.xlu0 %8131
      %8134 = vset.pattern.permute.xlu0 21
      %8135 = vperm.xlu0 %8134, %v4955
      %v8136 = vpop.permute.xlu0 %8135
      %8138 = vset.pattern.permute.xlu0 21
      %8139 = vperm.xlu0 %8138, %v4956
      %v8140 = vpop.permute.xlu0 %8139
      %8142 = vset.pattern.permute.xlu0 21
      %8143 = vperm.xlu0 %8142, %v4957
      %v8144 = vpop.permute.xlu0 %8143
      %8146 = vset.pattern.permute.xlu0 21
      %8147 = vperm.xlu0 %8146, %v4958
      %v8148 = vpop.permute.xlu0 %8147
      %8150 = vset.pattern.permute.xlu0 21
      %8151 = vperm.xlu0 %8150, %v4959
      %v8152 = vpop.permute.xlu0 %8151
      %8154 = vset.pattern.permute.xlu0 21
      %8155 = vperm.xlu0 %8154, %v4960
      %v8156 = vpop.permute.xlu0 %8155
      %8158 = vset.pattern.permute.xlu0 21
      %8159 = vperm.xlu0 %8158, %v4961
      %v8160 = vpop.permute.xlu0 %8159
      %v8162 = vsel %vm8066, %v8100, %v8034
      %v8163 = vsel %vm8067, %v8100, %v8035
      %v8164 = vsel %vm8068, %v8104, %v8036
      %v8165 = vsel %vm8069, %v8104, %v8037
      %v8166 = vsel %vm8070, %v8108, %v8038
      %v8167 = vsel %vm8071, %v8108, %v8039
      %v8168 = vsel %vm8072, %v8112, %v8040
      %v8169 = vsel %vm8073, %v8112, %v8041
      %v8170 = vsel %vm8074, %v8116, %v8042
      %v8171 = vsel %vm8075, %v8116, %v8043
      %v8172 = vsel %vm8076, %v8120, %v8044
      %v8173 = vsel %vm8077, %v8120, %v8045
      %v8174 = vsel %vm8078, %v8124, %v8046
      %v8175 = vsel %vm8079, %v8124, %v8047
      %v8176 = vsel %vm8080, %v8128, %v8048
      %v8177 = vsel %vm8081, %v8128, %v8049
      %v8178 = vsel %vm8082, %v8132, %v8050
      %v8179 = vsel %vm8083, %v8132, %v8051
      %v8180 = vsel %vm8084, %v8136, %v8052
      %v8181 = vsel %vm8085, %v8136, %v8053
      %v8182 = vsel %vm8086, %v8140, %v8054
      %v8183 = vsel %vm8087, %v8140, %v8055
      %v8184 = vsel %vm8088, %v8144, %v8056
      %v8185 = vsel %vm8089, %v8144, %v8057
      %v8186 = vsel %vm8090, %v8148, %v8058
      %v8187 = vsel %vm8091, %v8148, %v8059
      %v8188 = vsel %vm8092, %v8152, %v8060
      %v8189 = vsel %vm8093, %v8152, %v8061
      %v8190 = vsel %vm8094, %v8156, %v8062
      %v8191 = vsel %vm8095, %v8156, %v8063
      %v8192 = vsel %vm8096, %v8160, %v8064
      %v8193 = vsel %vm8097, %v8160, %v8065
      %vm8194 = vcmp.eq.s32.totalorder %v7906, 256
      %vm8195 = vcmp.eq.s32.totalorder %v7907, 256
      %vm8196 = vcmp.eq.s32.totalorder %v7908, 256
      %vm8197 = vcmp.eq.s32.totalorder %v7909, 256
      %vm8198 = vcmp.eq.s32.totalorder %v7910, 256
      %vm8199 = vcmp.eq.s32.totalorder %v7911, 256
      %vm8200 = vcmp.eq.s32.totalorder %v7912, 256
      %vm8201 = vcmp.eq.s32.totalorder %v7913, 256
      %vm8202 = vcmp.eq.s32.totalorder %v7914, 256
      %vm8203 = vcmp.eq.s32.totalorder %v7915, 256
      %vm8204 = vcmp.eq.s32.totalorder %v7916, 256
      %vm8205 = vcmp.eq.s32.totalorder %v7917, 256
      %vm8206 = vcmp.eq.s32.totalorder %v7918, 256
      %vm8207 = vcmp.eq.s32.totalorder %v7919, 256
      %vm8208 = vcmp.eq.s32.totalorder %v7920, 256
      %vm8209 = vcmp.eq.s32.totalorder %v7921, 256
      %vm8210 = vcmp.eq.s32.totalorder %v7922, 256
      %vm8211 = vcmp.eq.s32.totalorder %v7923, 256
      %vm8212 = vcmp.eq.s32.totalorder %v7924, 256
      %vm8213 = vcmp.eq.s32.totalorder %v7925, 256
      %vm8214 = vcmp.eq.s32.totalorder %v7926, 256
      %vm8215 = vcmp.eq.s32.totalorder %v7927, 256
      %vm8216 = vcmp.eq.s32.totalorder %v7928, 256
      %vm8217 = vcmp.eq.s32.totalorder %v7929, 256
      %vm8218 = vcmp.eq.s32.totalorder %v7930, 256
      %vm8219 = vcmp.eq.s32.totalorder %v7931, 256
      %vm8220 = vcmp.eq.s32.totalorder %v7932, 256
      %vm8221 = vcmp.eq.s32.totalorder %v7933, 256
      %vm8222 = vcmp.eq.s32.totalorder %v7934, 256
      %vm8223 = vcmp.eq.s32.totalorder %v7935, 256
      %vm8224 = vcmp.eq.s32.totalorder %v7936, 256
      %vm8225 = vcmp.eq.s32.totalorder %v7937, 256
      %8226 = vset.pattern.permute.xlu0 22
      %8227 = vperm.xlu0 %8226, %v4946
      %v8228 = vpop.permute.xlu0 %8227
      %8230 = vset.pattern.permute.xlu0 22
      %8231 = vperm.xlu0 %8230, %v4947
      %v8232 = vpop.permute.xlu0 %8231
      %8234 = vset.pattern.permute.xlu0 22
      %8235 = vperm.xlu0 %8234, %v4948
      %v8236 = vpop.permute.xlu0 %8235
      %8238 = vset.pattern.permute.xlu0 22
      %8239 = vperm.xlu0 %8238, %v4949
      %v8240 = vpop.permute.xlu0 %8239
      %8242 = vset.pattern.permute.xlu0 22
      %8243 = vperm.xlu0 %8242, %v4950
      %v8244 = vpop.permute.xlu0 %8243
      %8246 = vset.pattern.permute.xlu0 22
      %8247 = vperm.xlu0 %8246, %v4951
      %v8248 = vpop.permute.xlu0 %8247
      %8250 = vset.pattern.permute.xlu0 22
      %8251 = vperm.xlu0 %8250, %v4952
      %v8252 = vpop.permute.xlu0 %8251
      %8254 = vset.pattern.permute.xlu0 22
      %8255 = vperm.xlu0 %8254, %v4953
      %v8256 = vpop.permute.xlu0 %8255
      %8258 = vset.pattern.permute.xlu0 22
      %8259 = vperm.xlu0 %8258, %v4954
      %v8260 = vpop.permute.xlu0 %8259
      %8262 = vset.pattern.permute.xlu0 22
      %8263 = vperm.xlu0 %8262, %v4955
      %v8264 = vpop.permute.xlu0 %8263
      %8266 = vset.pattern.permute.xlu0 22
      %8267 = vperm.xlu0 %8266, %v4956
      %v8268 = vpop.permute.xlu0 %8267
      %8270 = vset.pattern.permute.xlu0 22
      %8271 = vperm.xlu0 %8270, %v4957
      %v8272 = vpop.permute.xlu0 %8271
      %8274 = vset.pattern.permute.xlu0 22
      %8275 = vperm.xlu0 %8274, %v4958
      %v8276 = vpop.permute.xlu0 %8275
      %8278 = vset.pattern.permute.xlu0 22
      %8279 = vperm.xlu0 %8278, %v4959
      %v8280 = vpop.permute.xlu0 %8279
      %8282 = vset.pattern.permute.xlu0 22
      %8283 = vperm.xlu0 %8282, %v4960
      %v8284 = vpop.permute.xlu0 %8283
      %8286 = vset.pattern.permute.xlu0 22
      %8287 = vperm.xlu0 %8286, %v4961
      %v8288 = vpop.permute.xlu0 %8287
      %v8290 = vsel %vm8194, %v8228, %v8162
      %v8291 = vsel %vm8195, %v8228, %v8163
      %v8292 = vsel %vm8196, %v8232, %v8164
      %v8293 = vsel %vm8197, %v8232, %v8165
      %v8294 = vsel %vm8198, %v8236, %v8166
      %v8295 = vsel %vm8199, %v8236, %v8167
      %v8296 = vsel %vm8200, %v8240, %v8168
      %v8297 = vsel %vm8201, %v8240, %v8169
      %v8298 = vsel %vm8202, %v8244, %v8170
      %v8299 = vsel %vm8203, %v8244, %v8171
      %v8300 = vsel %vm8204, %v8248, %v8172
      %v8301 = vsel %vm8205, %v8248, %v8173
      %v8302 = vsel %vm8206, %v8252, %v8174
      %v8303 = vsel %vm8207, %v8252, %v8175
      %v8304 = vsel %vm8208, %v8256, %v8176
      %v8305 = vsel %vm8209, %v8256, %v8177
      %v8306 = vsel %vm8210, %v8260, %v8178
      %v8307 = vsel %vm8211, %v8260, %v8179
      %v8308 = vsel %vm8212, %v8264, %v8180
      %v8309 = vsel %vm8213, %v8264, %v8181
      %v8310 = vsel %vm8214, %v8268, %v8182
      %v8311 = vsel %vm8215, %v8268, %v8183
      %v8312 = vsel %vm8216, %v8272, %v8184
      %v8313 = vsel %vm8217, %v8272, %v8185
      %v8314 = vsel %vm8218, %v8276, %v8186
      %v8315 = vsel %vm8219, %v8276, %v8187
      %v8316 = vsel %vm8220, %v8280, %v8188
      %v8317 = vsel %vm8221, %v8280, %v8189
      %v8318 = vsel %vm8222, %v8284, %v8190
      %v8319 = vsel %vm8223, %v8284, %v8191
      %v8320 = vsel %vm8224, %v8288, %v8192
      %v8321 = vsel %vm8225, %v8288, %v8193
      %vm8322 = vcmp.eq.s32.totalorder %v7906, 384
      %vm8323 = vcmp.eq.s32.totalorder %v7907, 384
      %vm8324 = vcmp.eq.s32.totalorder %v7908, 384
      %vm8325 = vcmp.eq.s32.totalorder %v7909, 384
      %vm8326 = vcmp.eq.s32.totalorder %v7910, 384
      %vm8327 = vcmp.eq.s32.totalorder %v7911, 384
      %vm8328 = vcmp.eq.s32.totalorder %v7912, 384
      %vm8329 = vcmp.eq.s32.totalorder %v7913, 384
      %vm8330 = vcmp.eq.s32.totalorder %v7914, 384
      %vm8331 = vcmp.eq.s32.totalorder %v7915, 384
      %vm8332 = vcmp.eq.s32.totalorder %v7916, 384
      %vm8333 = vcmp.eq.s32.totalorder %v7917, 384
      %vm8334 = vcmp.eq.s32.totalorder %v7918, 384
      %vm8335 = vcmp.eq.s32.totalorder %v7919, 384
      %vm8336 = vcmp.eq.s32.totalorder %v7920, 384
      %vm8337 = vcmp.eq.s32.totalorder %v7921, 384
      %vm8338 = vcmp.eq.s32.totalorder %v7922, 384
      %vm8339 = vcmp.eq.s32.totalorder %v7923, 384
      %vm8340 = vcmp.eq.s32.totalorder %v7924, 384
      %vm8341 = vcmp.eq.s32.totalorder %v7925, 384
      %vm8342 = vcmp.eq.s32.totalorder %v7926, 384
      %vm8343 = vcmp.eq.s32.totalorder %v7927, 384
      %vm8344 = vcmp.eq.s32.totalorder %v7928, 384
      %vm8345 = vcmp.eq.s32.totalorder %v7929, 384
      %vm8346 = vcmp.eq.s32.totalorder %v7930, 384
      %vm8347 = vcmp.eq.s32.totalorder %v7931, 384
      %vm8348 = vcmp.eq.s32.totalorder %v7932, 384
      %vm8349 = vcmp.eq.s32.totalorder %v7933, 384
      %vm8350 = vcmp.eq.s32.totalorder %v7934, 384
      %vm8351 = vcmp.eq.s32.totalorder %v7935, 384
      %vm8352 = vcmp.eq.s32.totalorder %v7936, 384
      %vm8353 = vcmp.eq.s32.totalorder %v7937, 384
      %8354 = vset.pattern.permute.xlu0 23
      %8355 = vperm.xlu0 %8354, %v4946
      %v8356 = vpop.permute.xlu0 %8355
      %8358 = vset.pattern.permute.xlu0 23
      %8359 = vperm.xlu0 %8358, %v4947
      %v8360 = vpop.permute.xlu0 %8359
      %8362 = vset.pattern.permute.xlu0 23
      %8363 = vperm.xlu0 %8362, %v4948
      %v8364 = vpop.permute.xlu0 %8363
      %8366 = vset.pattern.permute.xlu0 23
      %8367 = vperm.xlu0 %8366, %v4949
      %v8368 = vpop.permute.xlu0 %8367
      %8370 = vset.pattern.permute.xlu0 23
      %8371 = vperm.xlu0 %8370, %v4950
      %v8372 = vpop.permute.xlu0 %8371
      %8374 = vset.pattern.permute.xlu0 23
      %8375 = vperm.xlu0 %8374, %v4951
      %v8376 = vpop.permute.xlu0 %8375
      %8378 = vset.pattern.permute.xlu0 23
      %8379 = vperm.xlu0 %8378, %v4952
      %v8380 = vpop.permute.xlu0 %8379
      %8382 = vset.pattern.permute.xlu0 23
      %8383 = vperm.xlu0 %8382, %v4953
      %v8384 = vpop.permute.xlu0 %8383
      %8386 = vset.pattern.permute.xlu0 23
      %8387 = vperm.xlu0 %8386, %v4954
      %v8388 = vpop.permute.xlu0 %8387
      %8390 = vset.pattern.permute.xlu0 23
      %8391 = vperm.xlu0 %8390, %v4955
      %v8392 = vpop.permute.xlu0 %8391
      %8394 = vset.pattern.permute.xlu0 23
      %8395 = vperm.xlu0 %8394, %v4956
      %v8396 = vpop.permute.xlu0 %8395
      %8398 = vset.pattern.permute.xlu0 23
      %8399 = vperm.xlu0 %8398, %v4957
      %v8400 = vpop.permute.xlu0 %8399
      %8402 = vset.pattern.permute.xlu0 23
      %8403 = vperm.xlu0 %8402, %v4958
      %v8404 = vpop.permute.xlu0 %8403
      %8406 = vset.pattern.permute.xlu0 23
      %8407 = vperm.xlu0 %8406, %v4959
      %v8408 = vpop.permute.xlu0 %8407
      %8410 = vset.pattern.permute.xlu0 23
      %8411 = vperm.xlu0 %8410, %v4960
      %v8412 = vpop.permute.xlu0 %8411
      %8414 = vset.pattern.permute.xlu0 23
      %8415 = vperm.xlu0 %8414, %v4961
      %v8416 = vpop.permute.xlu0 %8415
      %v8418 = vsel %vm8322, %v8356, %v8290
      %v8419 = vsel %vm8323, %v8356, %v8291
      %v8420 = vsel %vm8324, %v8360, %v8292
      %v8421 = vsel %vm8325, %v8360, %v8293
      %v8422 = vsel %vm8326, %v8364, %v8294
      %v8423 = vsel %vm8327, %v8364, %v8295
      %v8424 = vsel %vm8328, %v8368, %v8296
      %v8425 = vsel %vm8329, %v8368, %v8297
      %v8426 = vsel %vm8330, %v8372, %v8298
      %v8427 = vsel %vm8331, %v8372, %v8299
      %v8428 = vsel %vm8332, %v8376, %v8300
      %v8429 = vsel %vm8333, %v8376, %v8301
      %v8430 = vsel %vm8334, %v8380, %v8302
      %v8431 = vsel %vm8335, %v8380, %v8303
      %v8432 = vsel %vm8336, %v8384, %v8304
      %v8433 = vsel %vm8337, %v8384, %v8305
      %v8434 = vsel %vm8338, %v8388, %v8306
      %v8435 = vsel %vm8339, %v8388, %v8307
      %v8436 = vsel %vm8340, %v8392, %v8308
      %v8437 = vsel %vm8341, %v8392, %v8309
      %v8438 = vsel %vm8342, %v8396, %v8310
      %v8439 = vsel %vm8343, %v8396, %v8311
      %v8440 = vsel %vm8344, %v8400, %v8312
      %v8441 = vsel %vm8345, %v8400, %v8313
      %v8442 = vsel %vm8346, %v8404, %v8314
      %v8443 = vsel %vm8347, %v8404, %v8315
      %v8444 = vsel %vm8348, %v8408, %v8316
      %v8445 = vsel %vm8349, %v8408, %v8317
      %v8446 = vsel %vm8350, %v8412, %v8318
      %v8447 = vsel %vm8351, %v8412, %v8319
      %v8448 = vsel %vm8352, %v8416, %v8320
      %v8449 = vsel %vm8353, %v8416, %v8321
      %v8450 = vadd.f32 %v7866, %v8418
      %v8451 = vadd.f32 %v7867, %v8419
      %v8452 = vadd.f32 %v7868, %v8420
      %v8453 = vadd.f32 %v7869, %v8421
      %v8454 = vadd.f32 %v7870, %v8422
      %v8455 = vadd.f32 %v7871, %v8423
      %v8456 = vadd.f32 %v7872, %v8424
      %v8457 = vadd.f32 %v7873, %v8425
      %v8458 = vadd.f32 %v7874, %v8426
      %v8459 = vadd.f32 %v7875, %v8427
      %v8460 = vadd.f32 %v7876, %v8428
      %v8461 = vadd.f32 %v7877, %v8429
      %v8462 = vadd.f32 %v7878, %v8430
      %v8463 = vadd.f32 %v7879, %v8431
      %v8464 = vadd.f32 %v7880, %v8432
      %v8465 = vadd.f32 %v7881, %v8433
      %v8466 = vadd.f32 %v7882, %v8434
      %v8467 = vadd.f32 %v7883, %v8435
      %v8468 = vadd.f32 %v7884, %v8436
      %v8469 = vadd.f32 %v7885, %v8437
      %v8470 = vadd.f32 %v7886, %v8438
      %v8471 = vadd.f32 %v7887, %v8439
      %v8472 = vadd.f32 %v7888, %v8440
      %v8473 = vadd.f32 %v7889, %v8441
      %v8474 = vadd.f32 %v7890, %v8442
      %v8475 = vadd.f32 %v7891, %v8443
      %v8476 = vadd.f32 %v7892, %v8444
      %v8477 = vadd.f32 %v7893, %v8445
      %v8478 = vadd.f32 %v7894, %v8446
      %v8479 = vadd.f32 %v7895, %v8447
      %v8480 = vadd.f32 %v7896, %v8448
      %v8481 = vadd.f32 %v7897, %v8449
      %v8482 = vlaneseq
      %v8483 = vshrl.u32 %v8482, 7
      %v8484 = vsub.s32 6, %v8483
      %v8485 = vrot.slane %v4940, %v8484
      %v8486 = vlaneseq
      %v8487 = vshrl.u32 %v8486, 7
      %v8488 = vsub.s32 6, %v8487
      %v8489 = vrot.slane %v4942, %v8488
      %v8490 = vsub.s32 %v8485, %v28
      %v8491 = vsub.s32 %v8489, %v28
      %v8492 = vsub.s32 %v8485, %v29
      %v8493 = vsub.s32 %v8489, %v29
      %v8494 = vsub.s32 %v8485, %v30
      %v8495 = vsub.s32 %v8489, %v30
      %v8496 = vsub.s32 %v8485, %v31
      %v8497 = vsub.s32 %v8489, %v31
      %v8498 = vsub.s32 %v8485, %v32
      %v8499 = vsub.s32 %v8489, %v32
      %v8500 = vsub.s32 %v8485, %v33
      %v8501 = vsub.s32 %v8489, %v33
      %v8502 = vsub.s32 %v8485, %v34
      %v8503 = vsub.s32 %v8489, %v34
      %v8504 = vsub.s32 %v8485, %v35
      %v8505 = vsub.s32 %v8489, %v35
      %v8506 = vsub.s32 %v8485, %v36
      %v8507 = vsub.s32 %v8489, %v36
      %v8508 = vsub.s32 %v8485, %v37
      %v8509 = vsub.s32 %v8489, %v37
      %v8510 = vsub.s32 %v8485, %v38
      %v8511 = vsub.s32 %v8489, %v38
      %v8512 = vsub.s32 %v8485, %v39
      %v8513 = vsub.s32 %v8489, %v39
      %v8514 = vsub.s32 %v8485, %v40
      %v8515 = vsub.s32 %v8489, %v40
      %v8516 = vsub.s32 %v8485, %v41
      %v8517 = vsub.s32 %v8489, %v41
      %v8518 = vsub.s32 %v8485, %v42
      %v8519 = vsub.s32 %v8489, %v42
      %v8520 = vsub.s32 %v8485, %v43
      %v8521 = vsub.s32 %v8489, %v43
      %vm8522 = vcmp.eq.s32.totalorder %v8490, 0
      %vm8523 = vcmp.eq.s32.totalorder %v8491, 0
      %vm8524 = vcmp.eq.s32.totalorder %v8492, 0
      %vm8525 = vcmp.eq.s32.totalorder %v8493, 0
      %vm8526 = vcmp.eq.s32.totalorder %v8494, 0
      %vm8527 = vcmp.eq.s32.totalorder %v8495, 0
      %vm8528 = vcmp.eq.s32.totalorder %v8496, 0
      %vm8529 = vcmp.eq.s32.totalorder %v8497, 0
      %vm8530 = vcmp.eq.s32.totalorder %v8498, 0
      %vm8531 = vcmp.eq.s32.totalorder %v8499, 0
      %vm8532 = vcmp.eq.s32.totalorder %v8500, 0
      %vm8533 = vcmp.eq.s32.totalorder %v8501, 0
      %vm8534 = vcmp.eq.s32.totalorder %v8502, 0
      %vm8535 = vcmp.eq.s32.totalorder %v8503, 0
      %vm8536 = vcmp.eq.s32.totalorder %v8504, 0
      %vm8537 = vcmp.eq.s32.totalorder %v8505, 0
      %vm8538 = vcmp.eq.s32.totalorder %v8506, 0
      %vm8539 = vcmp.eq.s32.totalorder %v8507, 0
      %vm8540 = vcmp.eq.s32.totalorder %v8508, 0
      %vm8541 = vcmp.eq.s32.totalorder %v8509, 0
      %vm8542 = vcmp.eq.s32.totalorder %v8510, 0
      %vm8543 = vcmp.eq.s32.totalorder %v8511, 0
      %vm8544 = vcmp.eq.s32.totalorder %v8512, 0
      %vm8545 = vcmp.eq.s32.totalorder %v8513, 0
      %vm8546 = vcmp.eq.s32.totalorder %v8514, 0
      %vm8547 = vcmp.eq.s32.totalorder %v8515, 0
      %vm8548 = vcmp.eq.s32.totalorder %v8516, 0
      %vm8549 = vcmp.eq.s32.totalorder %v8517, 0
      %vm8550 = vcmp.eq.s32.totalorder %v8518, 0
      %vm8551 = vcmp.eq.s32.totalorder %v8519, 0
      %vm8552 = vcmp.eq.s32.totalorder %v8520, 0
      %vm8553 = vcmp.eq.s32.totalorder %v8521, 0
      %8554 = vset.pattern.permute.xlu0 24
      %8555 = vperm.xlu0 %8554, %v4946
      %v8556 = vpop.permute.xlu0 %8555
      %8558 = vset.pattern.permute.xlu0 24
      %8559 = vperm.xlu0 %8558, %v4947
      %v8560 = vpop.permute.xlu0 %8559
      %8562 = vset.pattern.permute.xlu0 24
      %8563 = vperm.xlu0 %8562, %v4948
      %v8564 = vpop.permute.xlu0 %8563
      %8566 = vset.pattern.permute.xlu0 24
      %8567 = vperm.xlu0 %8566, %v4949
      %v8568 = vpop.permute.xlu0 %8567
      %8570 = vset.pattern.permute.xlu0 24
      %8571 = vperm.xlu0 %8570, %v4950
      %v8572 = vpop.permute.xlu0 %8571
      %8574 = vset.pattern.permute.xlu0 24
      %8575 = vperm.xlu0 %8574, %v4951
      %v8576 = vpop.permute.xlu0 %8575
      %8578 = vset.pattern.permute.xlu0 24
      %8579 = vperm.xlu0 %8578, %v4952
      %v8580 = vpop.permute.xlu0 %8579
      %8582 = vset.pattern.permute.xlu0 24
      %8583 = vperm.xlu0 %8582, %v4953
      %v8584 = vpop.permute.xlu0 %8583
      %8586 = vset.pattern.permute.xlu0 24
      %8587 = vperm.xlu0 %8586, %v4954
      %v8588 = vpop.permute.xlu0 %8587
      %8590 = vset.pattern.permute.xlu0 24
      %8591 = vperm.xlu0 %8590, %v4955
      %v8592 = vpop.permute.xlu0 %8591
      %8594 = vset.pattern.permute.xlu0 24
      %8595 = vperm.xlu0 %8594, %v4956
      %v8596 = vpop.permute.xlu0 %8595
      %8598 = vset.pattern.permute.xlu0 24
      %8599 = vperm.xlu0 %8598, %v4957
      %v8600 = vpop.permute.xlu0 %8599
      %8602 = vset.pattern.permute.xlu0 24
      %8603 = vperm.xlu0 %8602, %v4958
      %v8604 = vpop.permute.xlu0 %8603
      %8606 = vset.pattern.permute.xlu0 24
      %8607 = vperm.xlu0 %8606, %v4959
      %v8608 = vpop.permute.xlu0 %8607
      %8610 = vset.pattern.permute.xlu0 24
      %8611 = vperm.xlu0 %8610, %v4960
      %v8612 = vpop.permute.xlu0 %8611
      %8614 = vset.pattern.permute.xlu0 24
      %8615 = vperm.xlu0 %8614, %v4961
      %v8616 = vpop.permute.xlu0 %8615
      %v8618 = vsel %vm8522, %v8556, 0.0
      %v8619 = vsel %vm8523, %v8556, 0.0
      %v8620 = vsel %vm8524, %v8560, 0.0
      %v8621 = vsel %vm8525, %v8560, 0.0
      %v8622 = vsel %vm8526, %v8564, 0.0
      %v8623 = vsel %vm8527, %v8564, 0.0
      %v8624 = vsel %vm8528, %v8568, 0.0
      %v8625 = vsel %vm8529, %v8568, 0.0
      %v8626 = vsel %vm8530, %v8572, 0.0
      %v8627 = vsel %vm8531, %v8572, 0.0
      %v8628 = vsel %vm8532, %v8576, 0.0
      %v8629 = vsel %vm8533, %v8576, 0.0
      %v8630 = vsel %vm8534, %v8580, 0.0
      %v8631 = vsel %vm8535, %v8580, 0.0
      %v8632 = vsel %vm8536, %v8584, 0.0
      %v8633 = vsel %vm8537, %v8584, 0.0
      %v8634 = vsel %vm8538, %v8588, 0.0
      %v8635 = vsel %vm8539, %v8588, 0.0
      %v8636 = vsel %vm8540, %v8592, 0.0
      %v8637 = vsel %vm8541, %v8592, 0.0
      %v8638 = vsel %vm8542, %v8596, 0.0
      %v8639 = vsel %vm8543, %v8596, 0.0
      %v8640 = vsel %vm8544, %v8600, 0.0
      %v8641 = vsel %vm8545, %v8600, 0.0
      %v8642 = vsel %vm8546, %v8604, 0.0
      %v8643 = vsel %vm8547, %v8604, 0.0
      %v8644 = vsel %vm8548, %v8608, 0.0
      %v8645 = vsel %vm8549, %v8608, 0.0
      %v8646 = vsel %vm8550, %v8612, 0.0
      %v8647 = vsel %vm8551, %v8612, 0.0
      %v8648 = vsel %vm8552, %v8616, 0.0
      %v8649 = vsel %vm8553, %v8616, 0.0
      %vm8650 = vcmp.eq.s32.totalorder %v8490, 128
      %vm8651 = vcmp.eq.s32.totalorder %v8491, 128
      %vm8652 = vcmp.eq.s32.totalorder %v8492, 128
      %vm8653 = vcmp.eq.s32.totalorder %v8493, 128
      %vm8654 = vcmp.eq.s32.totalorder %v8494, 128
      %vm8655 = vcmp.eq.s32.totalorder %v8495, 128
      %vm8656 = vcmp.eq.s32.totalorder %v8496, 128
      %vm8657 = vcmp.eq.s32.totalorder %v8497, 128
      %vm8658 = vcmp.eq.s32.totalorder %v8498, 128
      %vm8659 = vcmp.eq.s32.totalorder %v8499, 128
      %vm8660 = vcmp.eq.s32.totalorder %v8500, 128
      %vm8661 = vcmp.eq.s32.totalorder %v8501, 128
      %vm8662 = vcmp.eq.s32.totalorder %v8502, 128
      %vm8663 = vcmp.eq.s32.totalorder %v8503, 128
      %vm8664 = vcmp.eq.s32.totalorder %v8504, 128
      %vm8665 = vcmp.eq.s32.totalorder %v8505, 128
      %vm8666 = vcmp.eq.s32.totalorder %v8506, 128
      %vm8667 = vcmp.eq.s32.totalorder %v8507, 128
      %vm8668 = vcmp.eq.s32.totalorder %v8508, 128
      %vm8669 = vcmp.eq.s32.totalorder %v8509, 128
      %vm8670 = vcmp.eq.s32.totalorder %v8510, 128
      %vm8671 = vcmp.eq.s32.totalorder %v8511, 128
      %vm8672 = vcmp.eq.s32.totalorder %v8512, 128
      %vm8673 = vcmp.eq.s32.totalorder %v8513, 128
      %vm8674 = vcmp.eq.s32.totalorder %v8514, 128
      %vm8675 = vcmp.eq.s32.totalorder %v8515, 128
      %vm8676 = vcmp.eq.s32.totalorder %v8516, 128
      %vm8677 = vcmp.eq.s32.totalorder %v8517, 128
      %vm8678 = vcmp.eq.s32.totalorder %v8518, 128
      %vm8679 = vcmp.eq.s32.totalorder %v8519, 128
      %vm8680 = vcmp.eq.s32.totalorder %v8520, 128
      %vm8681 = vcmp.eq.s32.totalorder %v8521, 128
      %8682 = vset.pattern.permute.xlu0 25
      %8683 = vperm.xlu0 %8682, %v4946
      %v8684 = vpop.permute.xlu0 %8683
      %8686 = vset.pattern.permute.xlu0 25
      %8687 = vperm.xlu0 %8686, %v4947
      %v8688 = vpop.permute.xlu0 %8687
      %8690 = vset.pattern.permute.xlu0 25
      %8691 = vperm.xlu0 %8690, %v4948
      %v8692 = vpop.permute.xlu0 %8691
      %8694 = vset.pattern.permute.xlu0 25
      %8695 = vperm.xlu0 %8694, %v4949
      %v8696 = vpop.permute.xlu0 %8695
      %8698 = vset.pattern.permute.xlu0 25
      %8699 = vperm.xlu0 %8698, %v4950
      %v8700 = vpop.permute.xlu0 %8699
      %8702 = vset.pattern.permute.xlu0 25
      %8703 = vperm.xlu0 %8702, %v4951
      %v8704 = vpop.permute.xlu0 %8703
      %8706 = vset.pattern.permute.xlu0 25
      %8707 = vperm.xlu0 %8706, %v4952
      %v8708 = vpop.permute.xlu0 %8707
      %8710 = vset.pattern.permute.xlu0 25
      %8711 = vperm.xlu0 %8710, %v4953
      %v8712 = vpop.permute.xlu0 %8711
      %8714 = vset.pattern.permute.xlu0 25
      %8715 = vperm.xlu0 %8714, %v4954
      %v8716 = vpop.permute.xlu0 %8715
      %8718 = vset.pattern.permute.xlu0 25
      %8719 = vperm.xlu0 %8718, %v4955
      %v8720 = vpop.permute.xlu0 %8719
      %8722 = vset.pattern.permute.xlu0 25
      %8723 = vperm.xlu0 %8722, %v4956
      %v8724 = vpop.permute.xlu0 %8723
      %8726 = vset.pattern.permute.xlu0 25
      %8727 = vperm.xlu0 %8726, %v4957
      %v8728 = vpop.permute.xlu0 %8727
      %8730 = vset.pattern.permute.xlu0 25
      %8731 = vperm.xlu0 %8730, %v4958
      %v8732 = vpop.permute.xlu0 %8731
      %8734 = vset.pattern.permute.xlu0 25
      %8735 = vperm.xlu0 %8734, %v4959
      %v8736 = vpop.permute.xlu0 %8735
      %8738 = vset.pattern.permute.xlu0 25
      %8739 = vperm.xlu0 %8738, %v4960
      %v8740 = vpop.permute.xlu0 %8739
      %8742 = vset.pattern.permute.xlu0 25
      %8743 = vperm.xlu0 %8742, %v4961
      %v8744 = vpop.permute.xlu0 %8743
      %v8746 = vsel %vm8650, %v8684, %v8618
      %v8747 = vsel %vm8651, %v8684, %v8619
      %v8748 = vsel %vm8652, %v8688, %v8620
      %v8749 = vsel %vm8653, %v8688, %v8621
      %v8750 = vsel %vm8654, %v8692, %v8622
      %v8751 = vsel %vm8655, %v8692, %v8623
      %v8752 = vsel %vm8656, %v8696, %v8624
      %v8753 = vsel %vm8657, %v8696, %v8625
      %v8754 = vsel %vm8658, %v8700, %v8626
      %v8755 = vsel %vm8659, %v8700, %v8627
      %v8756 = vsel %vm8660, %v8704, %v8628
      %v8757 = vsel %vm8661, %v8704, %v8629
      %v8758 = vsel %vm8662, %v8708, %v8630
      %v8759 = vsel %vm8663, %v8708, %v8631
      %v8760 = vsel %vm8664, %v8712, %v8632
      %v8761 = vsel %vm8665, %v8712, %v8633
      %v8762 = vsel %vm8666, %v8716, %v8634
      %v8763 = vsel %vm8667, %v8716, %v8635
      %v8764 = vsel %vm8668, %v8720, %v8636
      %v8765 = vsel %vm8669, %v8720, %v8637
      %v8766 = vsel %vm8670, %v8724, %v8638
      %v8767 = vsel %vm8671, %v8724, %v8639
      %v8768 = vsel %vm8672, %v8728, %v8640
      %v8769 = vsel %vm8673, %v8728, %v8641
      %v8770 = vsel %vm8674, %v8732, %v8642
      %v8771 = vsel %vm8675, %v8732, %v8643
      %v8772 = vsel %vm8676, %v8736, %v8644
      %v8773 = vsel %vm8677, %v8736, %v8645
      %v8774 = vsel %vm8678, %v8740, %v8646
      %v8775 = vsel %vm8679, %v8740, %v8647
      %v8776 = vsel %vm8680, %v8744, %v8648
      %v8777 = vsel %vm8681, %v8744, %v8649
      %vm8778 = vcmp.eq.s32.totalorder %v8490, 256
      %vm8779 = vcmp.eq.s32.totalorder %v8491, 256
      %vm8780 = vcmp.eq.s32.totalorder %v8492, 256
      %vm8781 = vcmp.eq.s32.totalorder %v8493, 256
      %vm8782 = vcmp.eq.s32.totalorder %v8494, 256
      %vm8783 = vcmp.eq.s32.totalorder %v8495, 256
      %vm8784 = vcmp.eq.s32.totalorder %v8496, 256
      %vm8785 = vcmp.eq.s32.totalorder %v8497, 256
      %vm8786 = vcmp.eq.s32.totalorder %v8498, 256
      %vm8787 = vcmp.eq.s32.totalorder %v8499, 256
      %vm8788 = vcmp.eq.s32.totalorder %v8500, 256
      %vm8789 = vcmp.eq.s32.totalorder %v8501, 256
      %vm8790 = vcmp.eq.s32.totalorder %v8502, 256
      %vm8791 = vcmp.eq.s32.totalorder %v8503, 256
      %vm8792 = vcmp.eq.s32.totalorder %v8504, 256
      %vm8793 = vcmp.eq.s32.totalorder %v8505, 256
      %vm8794 = vcmp.eq.s32.totalorder %v8506, 256
      %vm8795 = vcmp.eq.s32.totalorder %v8507, 256
      %vm8796 = vcmp.eq.s32.totalorder %v8508, 256
      %vm8797 = vcmp.eq.s32.totalorder %v8509, 256
      %vm8798 = vcmp.eq.s32.totalorder %v8510, 256
      %vm8799 = vcmp.eq.s32.totalorder %v8511, 256
      %vm8800 = vcmp.eq.s32.totalorder %v8512, 256
      %vm8801 = vcmp.eq.s32.totalorder %v8513, 256
      %vm8802 = vcmp.eq.s32.totalorder %v8514, 256
      %vm8803 = vcmp.eq.s32.totalorder %v8515, 256
      %vm8804 = vcmp.eq.s32.totalorder %v8516, 256
      %vm8805 = vcmp.eq.s32.totalorder %v8517, 256
      %vm8806 = vcmp.eq.s32.totalorder %v8518, 256
      %vm8807 = vcmp.eq.s32.totalorder %v8519, 256
      %vm8808 = vcmp.eq.s32.totalorder %v8520, 256
      %vm8809 = vcmp.eq.s32.totalorder %v8521, 256
      %8810 = vset.pattern.permute.xlu0 26
      %8811 = vperm.xlu0 %8810, %v4946
      %v8812 = vpop.permute.xlu0 %8811
      %8814 = vset.pattern.permute.xlu0 26
      %8815 = vperm.xlu0 %8814, %v4947
      %v8816 = vpop.permute.xlu0 %8815
      %8818 = vset.pattern.permute.xlu0 26
      %8819 = vperm.xlu0 %8818, %v4948
      %v8820 = vpop.permute.xlu0 %8819
      %8822 = vset.pattern.permute.xlu0 26
      %8823 = vperm.xlu0 %8822, %v4949
      %v8824 = vpop.permute.xlu0 %8823
      %8826 = vset.pattern.permute.xlu0 26
      %8827 = vperm.xlu0 %8826, %v4950
      %v8828 = vpop.permute.xlu0 %8827
      %8830 = vset.pattern.permute.xlu0 26
      %8831 = vperm.xlu0 %8830, %v4951
      %v8832 = vpop.permute.xlu0 %8831
      %8834 = vset.pattern.permute.xlu0 26
      %8835 = vperm.xlu0 %8834, %v4952
      %v8836 = vpop.permute.xlu0 %8835
      %8838 = vset.pattern.permute.xlu0 26
      %8839 = vperm.xlu0 %8838, %v4953
      %v8840 = vpop.permute.xlu0 %8839
      %8842 = vset.pattern.permute.xlu0 26
      %8843 = vperm.xlu0 %8842, %v4954
      %v8844 = vpop.permute.xlu0 %8843
      %8846 = vset.pattern.permute.xlu0 26
      %8847 = vperm.xlu0 %8846, %v4955
      %v8848 = vpop.permute.xlu0 %8847
      %8850 = vset.pattern.permute.xlu0 26
      %8851 = vperm.xlu0 %8850, %v4956
      %v8852 = vpop.permute.xlu0 %8851
      %8854 = vset.pattern.permute.xlu0 26
      %8855 = vperm.xlu0 %8854, %v4957
      %v8856 = vpop.permute.xlu0 %8855
      %8858 = vset.pattern.permute.xlu0 26
      %8859 = vperm.xlu0 %8858, %v4958
      %v8860 = vpop.permute.xlu0 %8859
      %8862 = vset.pattern.permute.xlu0 26
      %8863 = vperm.xlu0 %8862, %v4959
      %v8864 = vpop.permute.xlu0 %8863
      %8866 = vset.pattern.permute.xlu0 26
      %8867 = vperm.xlu0 %8866, %v4960
      %v8868 = vpop.permute.xlu0 %8867
      %8870 = vset.pattern.permute.xlu0 26
      %8871 = vperm.xlu0 %8870, %v4961
      %v8872 = vpop.permute.xlu0 %8871
      %v8874 = vsel %vm8778, %v8812, %v8746
      %v8875 = vsel %vm8779, %v8812, %v8747
      %v8876 = vsel %vm8780, %v8816, %v8748
      %v8877 = vsel %vm8781, %v8816, %v8749
      %v8878 = vsel %vm8782, %v8820, %v8750
      %v8879 = vsel %vm8783, %v8820, %v8751
      %v8880 = vsel %vm8784, %v8824, %v8752
      %v8881 = vsel %vm8785, %v8824, %v8753
      %v8882 = vsel %vm8786, %v8828, %v8754
      %v8883 = vsel %vm8787, %v8828, %v8755
      %v8884 = vsel %vm8788, %v8832, %v8756
      %v8885 = vsel %vm8789, %v8832, %v8757
      %v8886 = vsel %vm8790, %v8836, %v8758
      %v8887 = vsel %vm8791, %v8836, %v8759
      %v8888 = vsel %vm8792, %v8840, %v8760
      %v8889 = vsel %vm8793, %v8840, %v8761
      %v8890 = vsel %vm8794, %v8844, %v8762
      %v8891 = vsel %vm8795, %v8844, %v8763
      %v8892 = vsel %vm8796, %v8848, %v8764
      %v8893 = vsel %vm8797, %v8848, %v8765
      %v8894 = vsel %vm8798, %v8852, %v8766
      %v8895 = vsel %vm8799, %v8852, %v8767
      %v8896 = vsel %vm8800, %v8856, %v8768
      %v8897 = vsel %vm8801, %v8856, %v8769
      %v8898 = vsel %vm8802, %v8860, %v8770
      %v8899 = vsel %vm8803, %v8860, %v8771
      %v8900 = vsel %vm8804, %v8864, %v8772
      %v8901 = vsel %vm8805, %v8864, %v8773
      %v8902 = vsel %vm8806, %v8868, %v8774
      %v8903 = vsel %vm8807, %v8868, %v8775
      %v8904 = vsel %vm8808, %v8872, %v8776
      %v8905 = vsel %vm8809, %v8872, %v8777
      %vm8906 = vcmp.eq.s32.totalorder %v8490, 384
      %vm8907 = vcmp.eq.s32.totalorder %v8491, 384
      %vm8908 = vcmp.eq.s32.totalorder %v8492, 384
      %vm8909 = vcmp.eq.s32.totalorder %v8493, 384
      %vm8910 = vcmp.eq.s32.totalorder %v8494, 384
      %vm8911 = vcmp.eq.s32.totalorder %v8495, 384
      %vm8912 = vcmp.eq.s32.totalorder %v8496, 384
      %vm8913 = vcmp.eq.s32.totalorder %v8497, 384
      %vm8914 = vcmp.eq.s32.totalorder %v8498, 384
      %vm8915 = vcmp.eq.s32.totalorder %v8499, 384
      %vm8916 = vcmp.eq.s32.totalorder %v8500, 384
      %vm8917 = vcmp.eq.s32.totalorder %v8501, 384
      %vm8918 = vcmp.eq.s32.totalorder %v8502, 384
      %vm8919 = vcmp.eq.s32.totalorder %v8503, 384
      %vm8920 = vcmp.eq.s32.totalorder %v8504, 384
      %vm8921 = vcmp.eq.s32.totalorder %v8505, 384
      %vm8922 = vcmp.eq.s32.totalorder %v8506, 384
      %vm8923 = vcmp.eq.s32.totalorder %v8507, 384
      %vm8924 = vcmp.eq.s32.totalorder %v8508, 384
      %vm8925 = vcmp.eq.s32.totalorder %v8509, 384
      %vm8926 = vcmp.eq.s32.totalorder %v8510, 384
      %vm8927 = vcmp.eq.s32.totalorder %v8511, 384
      %vm8928 = vcmp.eq.s32.totalorder %v8512, 384
      %vm8929 = vcmp.eq.s32.totalorder %v8513, 384
      %vm8930 = vcmp.eq.s32.totalorder %v8514, 384
      %vm8931 = vcmp.eq.s32.totalorder %v8515, 384
      %vm8932 = vcmp.eq.s32.totalorder %v8516, 384
      %vm8933 = vcmp.eq.s32.totalorder %v8517, 384
      %vm8934 = vcmp.eq.s32.totalorder %v8518, 384
      %vm8935 = vcmp.eq.s32.totalorder %v8519, 384
      %vm8936 = vcmp.eq.s32.totalorder %v8520, 384
      %vm8937 = vcmp.eq.s32.totalorder %v8521, 384
      %8938 = vset.pattern.permute.xlu0 27
      %8939 = vperm.xlu0 %8938, %v4946
      %v8940 = vpop.permute.xlu0 %8939
      %8942 = vset.pattern.permute.xlu0 27
      %8943 = vperm.xlu0 %8942, %v4947
      %v8944 = vpop.permute.xlu0 %8943
      %8946 = vset.pattern.permute.xlu0 27
      %8947 = vperm.xlu0 %8946, %v4948
      %v8948 = vpop.permute.xlu0 %8947
      %8950 = vset.pattern.permute.xlu0 27
      %8951 = vperm.xlu0 %8950, %v4949
      %v8952 = vpop.permute.xlu0 %8951
      %8954 = vset.pattern.permute.xlu0 27
      %8955 = vperm.xlu0 %8954, %v4950
      %v8956 = vpop.permute.xlu0 %8955
      %8958 = vset.pattern.permute.xlu0 27
      %8959 = vperm.xlu0 %8958, %v4951
      %v8960 = vpop.permute.xlu0 %8959
      %8962 = vset.pattern.permute.xlu0 27
      %8963 = vperm.xlu0 %8962, %v4952
      %v8964 = vpop.permute.xlu0 %8963
      %8966 = vset.pattern.permute.xlu0 27
      %8967 = vperm.xlu0 %8966, %v4953
      %v8968 = vpop.permute.xlu0 %8967
      %8970 = vset.pattern.permute.xlu0 27
      %8971 = vperm.xlu0 %8970, %v4954
      %v8972 = vpop.permute.xlu0 %8971
      %8974 = vset.pattern.permute.xlu0 27
      %8975 = vperm.xlu0 %8974, %v4955
      %v8976 = vpop.permute.xlu0 %8975
      %8978 = vset.pattern.permute.xlu0 27
      %8979 = vperm.xlu0 %8978, %v4956
      %v8980 = vpop.permute.xlu0 %8979
      %8982 = vset.pattern.permute.xlu0 27
      %8983 = vperm.xlu0 %8982, %v4957
      %v8984 = vpop.permute.xlu0 %8983
      %8986 = vset.pattern.permute.xlu0 27
      %8987 = vperm.xlu0 %8986, %v4958
      %v8988 = vpop.permute.xlu0 %8987
      %8990 = vset.pattern.permute.xlu0 27
      %8991 = vperm.xlu0 %8990, %v4959
      %v8992 = vpop.permute.xlu0 %8991
      %8994 = vset.pattern.permute.xlu0 27
      %8995 = vperm.xlu0 %8994, %v4960
      %v8996 = vpop.permute.xlu0 %8995
      %8998 = vset.pattern.permute.xlu0 27
      %8999 = vperm.xlu0 %8998, %v4961
      %v9000 = vpop.permute.xlu0 %8999
      %v9002 = vsel %vm8906, %v8940, %v8874
      %v9003 = vsel %vm8907, %v8940, %v8875
      %v9004 = vsel %vm8908, %v8944, %v8876
      %v9005 = vsel %vm8909, %v8944, %v8877
      %v9006 = vsel %vm8910, %v8948, %v8878
      %v9007 = vsel %vm8911, %v8948, %v8879
      %v9008 = vsel %vm8912, %v8952, %v8880
      %v9009 = vsel %vm8913, %v8952, %v8881
      %v9010 = vsel %vm8914, %v8956, %v8882
      %v9011 = vsel %vm8915, %v8956, %v8883
      %v9012 = vsel %vm8916, %v8960, %v8884
      %v9013 = vsel %vm8917, %v8960, %v8885
      %v9014 = vsel %vm8918, %v8964, %v8886
      %v9015 = vsel %vm8919, %v8964, %v8887
      %v9016 = vsel %vm8920, %v8968, %v8888
      %v9017 = vsel %vm8921, %v8968, %v8889
      %v9018 = vsel %vm8922, %v8972, %v8890
      %v9019 = vsel %vm8923, %v8972, %v8891
      %v9020 = vsel %vm8924, %v8976, %v8892
      %v9021 = vsel %vm8925, %v8976, %v8893
      %v9022 = vsel %vm8926, %v8980, %v8894
      %v9023 = vsel %vm8927, %v8980, %v8895
      %v9024 = vsel %vm8928, %v8984, %v8896
      %v9025 = vsel %vm8929, %v8984, %v8897
      %v9026 = vsel %vm8930, %v8988, %v8898
      %v9027 = vsel %vm8931, %v8988, %v8899
      %v9028 = vsel %vm8932, %v8992, %v8900
      %v9029 = vsel %vm8933, %v8992, %v8901
      %v9030 = vsel %vm8934, %v8996, %v8902
      %v9031 = vsel %vm8935, %v8996, %v8903
      %v9032 = vsel %vm8936, %v9000, %v8904
      %v9033 = vsel %vm8937, %v9000, %v8905
      %v9034 = vadd.f32 %v8450, %v9002
      %v9035 = vadd.f32 %v8451, %v9003
      %v9036 = vadd.f32 %v8452, %v9004
      %v9037 = vadd.f32 %v8453, %v9005
      %v9038 = vadd.f32 %v8454, %v9006
      %v9039 = vadd.f32 %v8455, %v9007
      %v9040 = vadd.f32 %v8456, %v9008
      %v9041 = vadd.f32 %v8457, %v9009
      %v9042 = vadd.f32 %v8458, %v9010
      %v9043 = vadd.f32 %v8459, %v9011
      %v9044 = vadd.f32 %v8460, %v9012
      %v9045 = vadd.f32 %v8461, %v9013
      %v9046 = vadd.f32 %v8462, %v9014
      %v9047 = vadd.f32 %v8463, %v9015
      %v9048 = vadd.f32 %v8464, %v9016
      %v9049 = vadd.f32 %v8465, %v9017
      %v9050 = vadd.f32 %v8466, %v9018
      %v9051 = vadd.f32 %v8467, %v9019
      %v9052 = vadd.f32 %v8468, %v9020
      %v9053 = vadd.f32 %v8469, %v9021
      %v9054 = vadd.f32 %v8470, %v9022
      %v9055 = vadd.f32 %v8471, %v9023
      %v9056 = vadd.f32 %v8472, %v9024
      %v9057 = vadd.f32 %v8473, %v9025
      %v9058 = vadd.f32 %v8474, %v9026
      %v9059 = vadd.f32 %v8475, %v9027
      %v9060 = vadd.f32 %v8476, %v9028
      %v9061 = vadd.f32 %v8477, %v9029
      %v9062 = vadd.f32 %v8478, %v9030
      %v9063 = vadd.f32 %v8479, %v9031
      %v9064 = vadd.f32 %v8480, %v9032
      %v9065 = vadd.f32 %v8481, %v9033
      %v9066 = vlaneseq
      %v9067 = vshrl.u32 %v9066, 7
      %v9068 = vsub.s32 7, %v9067
      %v9069 = vrot.slane %v4940, %v9068
      %v9070 = vlaneseq
      %v9071 = vshrl.u32 %v9070, 7
      %v9072 = vsub.s32 7, %v9071
      %v9073 = vrot.slane %v4942, %v9072
      %v9074 = vsub.s32 %v9069, %v28
      %v9075 = vsub.s32 %v9073, %v28
      %v9076 = vsub.s32 %v9069, %v29
      %v9077 = vsub.s32 %v9073, %v29
      %v9078 = vsub.s32 %v9069, %v30
      %v9079 = vsub.s32 %v9073, %v30
      %v9080 = vsub.s32 %v9069, %v31
      %v9081 = vsub.s32 %v9073, %v31
      %v9082 = vsub.s32 %v9069, %v32
      %v9083 = vsub.s32 %v9073, %v32
      %v9084 = vsub.s32 %v9069, %v33
      %v9085 = vsub.s32 %v9073, %v33
      %v9086 = vsub.s32 %v9069, %v34
      %v9087 = vsub.s32 %v9073, %v34
      %v9088 = vsub.s32 %v9069, %v35
      %v9089 = vsub.s32 %v9073, %v35
      %v9090 = vsub.s32 %v9069, %v36
      %v9091 = vsub.s32 %v9073, %v36
      %v9092 = vsub.s32 %v9069, %v37
      %v9093 = vsub.s32 %v9073, %v37
      %v9094 = vsub.s32 %v9069, %v38
      %v9095 = vsub.s32 %v9073, %v38
      %v9096 = vsub.s32 %v9069, %v39
      %v9097 = vsub.s32 %v9073, %v39
      %v9098 = vsub.s32 %v9069, %v40
      %v9099 = vsub.s32 %v9073, %v40
      %v9100 = vsub.s32 %v9069, %v41
      %v9101 = vsub.s32 %v9073, %v41
      %v9102 = vsub.s32 %v9069, %v42
      %v9103 = vsub.s32 %v9073, %v42
      %v9104 = vsub.s32 %v9069, %v43
      %v9105 = vsub.s32 %v9073, %v43
      %vm9106 = vcmp.eq.s32.totalorder %v9074, 0
      %vm9107 = vcmp.eq.s32.totalorder %v9075, 0
      %vm9108 = vcmp.eq.s32.totalorder %v9076, 0
      %vm9109 = vcmp.eq.s32.totalorder %v9077, 0
      %vm9110 = vcmp.eq.s32.totalorder %v9078, 0
      %vm9111 = vcmp.eq.s32.totalorder %v9079, 0
      %vm9112 = vcmp.eq.s32.totalorder %v9080, 0
      %vm9113 = vcmp.eq.s32.totalorder %v9081, 0
      %vm9114 = vcmp.eq.s32.totalorder %v9082, 0
      %vm9115 = vcmp.eq.s32.totalorder %v9083, 0
      %vm9116 = vcmp.eq.s32.totalorder %v9084, 0
      %vm9117 = vcmp.eq.s32.totalorder %v9085, 0
      %vm9118 = vcmp.eq.s32.totalorder %v9086, 0
      %vm9119 = vcmp.eq.s32.totalorder %v9087, 0
      %vm9120 = vcmp.eq.s32.totalorder %v9088, 0
      %vm9121 = vcmp.eq.s32.totalorder %v9089, 0
      %vm9122 = vcmp.eq.s32.totalorder %v9090, 0
      %vm9123 = vcmp.eq.s32.totalorder %v9091, 0
      %vm9124 = vcmp.eq.s32.totalorder %v9092, 0
      %vm9125 = vcmp.eq.s32.totalorder %v9093, 0
      %vm9126 = vcmp.eq.s32.totalorder %v9094, 0
      %vm9127 = vcmp.eq.s32.totalorder %v9095, 0
      %vm9128 = vcmp.eq.s32.totalorder %v9096, 0
      %vm9129 = vcmp.eq.s32.totalorder %v9097, 0
      %vm9130 = vcmp.eq.s32.totalorder %v9098, 0
      %vm9131 = vcmp.eq.s32.totalorder %v9099, 0
      %vm9132 = vcmp.eq.s32.totalorder %v9100, 0
      %vm9133 = vcmp.eq.s32.totalorder %v9101, 0
      %vm9134 = vcmp.eq.s32.totalorder %v9102, 0
      %vm9135 = vcmp.eq.s32.totalorder %v9103, 0
      %vm9136 = vcmp.eq.s32.totalorder %v9104, 0
      %vm9137 = vcmp.eq.s32.totalorder %v9105, 0
      %9138 = vset.pattern.permute.xlu0 28
      %9139 = vperm.xlu0 %9138, %v4946
      %v9140 = vpop.permute.xlu0 %9139
      %9142 = vset.pattern.permute.xlu0 28
      %9143 = vperm.xlu0 %9142, %v4947
      %v9144 = vpop.permute.xlu0 %9143
      %9146 = vset.pattern.permute.xlu0 28
      %9147 = vperm.xlu0 %9146, %v4948
      %v9148 = vpop.permute.xlu0 %9147
      %9150 = vset.pattern.permute.xlu0 28
      %9151 = vperm.xlu0 %9150, %v4949
      %v9152 = vpop.permute.xlu0 %9151
      %9154 = vset.pattern.permute.xlu0 28
      %9155 = vperm.xlu0 %9154, %v4950
      %v9156 = vpop.permute.xlu0 %9155
      %9158 = vset.pattern.permute.xlu0 28
      %9159 = vperm.xlu0 %9158, %v4951
      %v9160 = vpop.permute.xlu0 %9159
      %9162 = vset.pattern.permute.xlu0 28
      %9163 = vperm.xlu0 %9162, %v4952
      %v9164 = vpop.permute.xlu0 %9163
      %9166 = vset.pattern.permute.xlu0 28
      %9167 = vperm.xlu0 %9166, %v4953
      %v9168 = vpop.permute.xlu0 %9167
      %9170 = vset.pattern.permute.xlu0 28
      %9171 = vperm.xlu0 %9170, %v4954
      %v9172 = vpop.permute.xlu0 %9171
      %9174 = vset.pattern.permute.xlu0 28
      %9175 = vperm.xlu0 %9174, %v4955
      %v9176 = vpop.permute.xlu0 %9175
      %9178 = vset.pattern.permute.xlu0 28
      %9179 = vperm.xlu0 %9178, %v4956
      %v9180 = vpop.permute.xlu0 %9179
      %9182 = vset.pattern.permute.xlu0 28
      %9183 = vperm.xlu0 %9182, %v4957
      %v9184 = vpop.permute.xlu0 %9183
      %9186 = vset.pattern.permute.xlu0 28
      %9187 = vperm.xlu0 %9186, %v4958
      %v9188 = vpop.permute.xlu0 %9187
      %9190 = vset.pattern.permute.xlu0 28
      %9191 = vperm.xlu0 %9190, %v4959
      %v9192 = vpop.permute.xlu0 %9191
      %9194 = vset.pattern.permute.xlu0 28
      %9195 = vperm.xlu0 %9194, %v4960
      %v9196 = vpop.permute.xlu0 %9195
      %9198 = vset.pattern.permute.xlu0 28
      %9199 = vperm.xlu0 %9198, %v4961
      %v9200 = vpop.permute.xlu0 %9199
      %v9202 = vsel %vm9106, %v9140, 0.0
      %v9203 = vsel %vm9107, %v9140, 0.0
      %v9204 = vsel %vm9108, %v9144, 0.0
      %v9205 = vsel %vm9109, %v9144, 0.0
      %v9206 = vsel %vm9110, %v9148, 0.0
      %v9207 = vsel %vm9111, %v9148, 0.0
      %v9208 = vsel %vm9112, %v9152, 0.0
      %v9209 = vsel %vm9113, %v9152, 0.0
      %v9210 = vsel %vm9114, %v9156, 0.0
      %v9211 = vsel %vm9115, %v9156, 0.0
      %v9212 = vsel %vm9116, %v9160, 0.0
      %v9213 = vsel %vm9117, %v9160, 0.0
      %v9214 = vsel %vm9118, %v9164, 0.0
      %v9215 = vsel %vm9119, %v9164, 0.0
      %v9216 = vsel %vm9120, %v9168, 0.0
      %v9217 = vsel %vm9121, %v9168, 0.0
      %v9218 = vsel %vm9122, %v9172, 0.0
      %v9219 = vsel %vm9123, %v9172, 0.0
      %v9220 = vsel %vm9124, %v9176, 0.0
      %v9221 = vsel %vm9125, %v9176, 0.0
      %v9222 = vsel %vm9126, %v9180, 0.0
      %v9223 = vsel %vm9127, %v9180, 0.0
      %v9224 = vsel %vm9128, %v9184, 0.0
      %v9225 = vsel %vm9129, %v9184, 0.0
      %v9226 = vsel %vm9130, %v9188, 0.0
      %v9227 = vsel %vm9131, %v9188, 0.0
      %v9228 = vsel %vm9132, %v9192, 0.0
      %v9229 = vsel %vm9133, %v9192, 0.0
      %v9230 = vsel %vm9134, %v9196, 0.0
      %v9231 = vsel %vm9135, %v9196, 0.0
      %v9232 = vsel %vm9136, %v9200, 0.0
      %v9233 = vsel %vm9137, %v9200, 0.0
      %vm9234 = vcmp.eq.s32.totalorder %v9074, 128
      %vm9235 = vcmp.eq.s32.totalorder %v9075, 128
      %vm9236 = vcmp.eq.s32.totalorder %v9076, 128
      %vm9237 = vcmp.eq.s32.totalorder %v9077, 128
      %vm9238 = vcmp.eq.s32.totalorder %v9078, 128
      %vm9239 = vcmp.eq.s32.totalorder %v9079, 128
      %vm9240 = vcmp.eq.s32.totalorder %v9080, 128
      %vm9241 = vcmp.eq.s32.totalorder %v9081, 128
      %vm9242 = vcmp.eq.s32.totalorder %v9082, 128
      %vm9243 = vcmp.eq.s32.totalorder %v9083, 128
      %vm9244 = vcmp.eq.s32.totalorder %v9084, 128
      %vm9245 = vcmp.eq.s32.totalorder %v9085, 128
      %vm9246 = vcmp.eq.s32.totalorder %v9086, 128
      %vm9247 = vcmp.eq.s32.totalorder %v9087, 128
      %vm9248 = vcmp.eq.s32.totalorder %v9088, 128
      %vm9249 = vcmp.eq.s32.totalorder %v9089, 128
      %vm9250 = vcmp.eq.s32.totalorder %v9090, 128
      %vm9251 = vcmp.eq.s32.totalorder %v9091, 128
      %vm9252 = vcmp.eq.s32.totalorder %v9092, 128
      %vm9253 = vcmp.eq.s32.totalorder %v9093, 128
      %vm9254 = vcmp.eq.s32.totalorder %v9094, 128
      %vm9255 = vcmp.eq.s32.totalorder %v9095, 128
      %vm9256 = vcmp.eq.s32.totalorder %v9096, 128
      %vm9257 = vcmp.eq.s32.totalorder %v9097, 128
      %vm9258 = vcmp.eq.s32.totalorder %v9098, 128
      %vm9259 = vcmp.eq.s32.totalorder %v9099, 128
      %vm9260 = vcmp.eq.s32.totalorder %v9100, 128
      %vm9261 = vcmp.eq.s32.totalorder %v9101, 128
      %vm9262 = vcmp.eq.s32.totalorder %v9102, 128
      %vm9263 = vcmp.eq.s32.totalorder %v9103, 128
      %vm9264 = vcmp.eq.s32.totalorder %v9104, 128
      %vm9265 = vcmp.eq.s32.totalorder %v9105, 128
      %9266 = vset.pattern.permute.xlu0 29
      %9267 = vperm.xlu0 %9266, %v4946
      %v9268 = vpop.permute.xlu0 %9267
      %9270 = vset.pattern.permute.xlu0 29
      %9271 = vperm.xlu0 %9270, %v4947
      %v9272 = vpop.permute.xlu0 %9271
      %9274 = vset.pattern.permute.xlu0 29
      %9275 = vperm.xlu0 %9274, %v4948
      %v9276 = vpop.permute.xlu0 %9275
      %9278 = vset.pattern.permute.xlu0 29
      %9279 = vperm.xlu0 %9278, %v4949
      %v9280 = vpop.permute.xlu0 %9279
      %9282 = vset.pattern.permute.xlu0 29
      %9283 = vperm.xlu0 %9282, %v4950
      %v9284 = vpop.permute.xlu0 %9283
      %9286 = vset.pattern.permute.xlu0 29
      %9287 = vperm.xlu0 %9286, %v4951
      %v9288 = vpop.permute.xlu0 %9287
      %9290 = vset.pattern.permute.xlu0 29
      %9291 = vperm.xlu0 %9290, %v4952
      %v9292 = vpop.permute.xlu0 %9291
      %9294 = vset.pattern.permute.xlu0 29
      %9295 = vperm.xlu0 %9294, %v4953
      %v9296 = vpop.permute.xlu0 %9295
      %9298 = vset.pattern.permute.xlu0 29
      %9299 = vperm.xlu0 %9298, %v4954
      %v9300 = vpop.permute.xlu0 %9299
      %9302 = vset.pattern.permute.xlu0 29
      %9303 = vperm.xlu0 %9302, %v4955
      %v9304 = vpop.permute.xlu0 %9303
      %9306 = vset.pattern.permute.xlu0 29
      %9307 = vperm.xlu0 %9306, %v4956
      %v9308 = vpop.permute.xlu0 %9307
      %9310 = vset.pattern.permute.xlu0 29
      %9311 = vperm.xlu0 %9310, %v4957
      %v9312 = vpop.permute.xlu0 %9311
      %9314 = vset.pattern.permute.xlu0 29
      %9315 = vperm.xlu0 %9314, %v4958
      %v9316 = vpop.permute.xlu0 %9315
      %9318 = vset.pattern.permute.xlu0 29
      %9319 = vperm.xlu0 %9318, %v4959
      %v9320 = vpop.permute.xlu0 %9319
      %9322 = vset.pattern.permute.xlu0 29
      %9323 = vperm.xlu0 %9322, %v4960
      %v9324 = vpop.permute.xlu0 %9323
      %9326 = vset.pattern.permute.xlu0 29
      %9327 = vperm.xlu0 %9326, %v4961
      %v9328 = vpop.permute.xlu0 %9327
      %v9330 = vsel %vm9234, %v9268, %v9202
      %v9331 = vsel %vm9235, %v9268, %v9203
      %v9332 = vsel %vm9236, %v9272, %v9204
      %v9333 = vsel %vm9237, %v9272, %v9205
      %v9334 = vsel %vm9238, %v9276, %v9206
      %v9335 = vsel %vm9239, %v9276, %v9207
      %v9336 = vsel %vm9240, %v9280, %v9208
      %v9337 = vsel %vm9241, %v9280, %v9209
      %v9338 = vsel %vm9242, %v9284, %v9210
      %v9339 = vsel %vm9243, %v9284, %v9211
      %v9340 = vsel %vm9244, %v9288, %v9212
      %v9341 = vsel %vm9245, %v9288, %v9213
      %v9342 = vsel %vm9246, %v9292, %v9214
      %v9343 = vsel %vm9247, %v9292, %v9215
      %v9344 = vsel %vm9248, %v9296, %v9216
      %v9345 = vsel %vm9249, %v9296, %v9217
      %v9346 = vsel %vm9250, %v9300, %v9218
      %v9347 = vsel %vm9251, %v9300, %v9219
      %v9348 = vsel %vm9252, %v9304, %v9220
      %v9349 = vsel %vm9253, %v9304, %v9221
      %v9350 = vsel %vm9254, %v9308, %v9222
      %v9351 = vsel %vm9255, %v9308, %v9223
      %v9352 = vsel %vm9256, %v9312, %v9224
      %v9353 = vsel %vm9257, %v9312, %v9225
      %v9354 = vsel %vm9258, %v9316, %v9226
      %v9355 = vsel %vm9259, %v9316, %v9227
      %v9356 = vsel %vm9260, %v9320, %v9228
      %v9357 = vsel %vm9261, %v9320, %v9229
      %v9358 = vsel %vm9262, %v9324, %v9230
      %v9359 = vsel %vm9263, %v9324, %v9231
      %v9360 = vsel %vm9264, %v9328, %v9232
      %v9361 = vsel %vm9265, %v9328, %v9233
      %vm9362 = vcmp.eq.s32.totalorder %v9074, 256
      %vm9363 = vcmp.eq.s32.totalorder %v9075, 256
      %vm9364 = vcmp.eq.s32.totalorder %v9076, 256
      %vm9365 = vcmp.eq.s32.totalorder %v9077, 256
      %vm9366 = vcmp.eq.s32.totalorder %v9078, 256
      %vm9367 = vcmp.eq.s32.totalorder %v9079, 256
      %vm9368 = vcmp.eq.s32.totalorder %v9080, 256
      %vm9369 = vcmp.eq.s32.totalorder %v9081, 256
      %vm9370 = vcmp.eq.s32.totalorder %v9082, 256
      %vm9371 = vcmp.eq.s32.totalorder %v9083, 256
      %vm9372 = vcmp.eq.s32.totalorder %v9084, 256
      %vm9373 = vcmp.eq.s32.totalorder %v9085, 256
      %vm9374 = vcmp.eq.s32.totalorder %v9086, 256
      %vm9375 = vcmp.eq.s32.totalorder %v9087, 256
      %vm9376 = vcmp.eq.s32.totalorder %v9088, 256
      %vm9377 = vcmp.eq.s32.totalorder %v9089, 256
      %vm9378 = vcmp.eq.s32.totalorder %v9090, 256
      %vm9379 = vcmp.eq.s32.totalorder %v9091, 256
      %vm9380 = vcmp.eq.s32.totalorder %v9092, 256
      %vm9381 = vcmp.eq.s32.totalorder %v9093, 256
      %vm9382 = vcmp.eq.s32.totalorder %v9094, 256
      %vm9383 = vcmp.eq.s32.totalorder %v9095, 256
      %vm9384 = vcmp.eq.s32.totalorder %v9096, 256
      %vm9385 = vcmp.eq.s32.totalorder %v9097, 256
      %vm9386 = vcmp.eq.s32.totalorder %v9098, 256
      %vm9387 = vcmp.eq.s32.totalorder %v9099, 256
      %vm9388 = vcmp.eq.s32.totalorder %v9100, 256
      %vm9389 = vcmp.eq.s32.totalorder %v9101, 256
      %vm9390 = vcmp.eq.s32.totalorder %v9102, 256
      %vm9391 = vcmp.eq.s32.totalorder %v9103, 256
      %vm9392 = vcmp.eq.s32.totalorder %v9104, 256
      %vm9393 = vcmp.eq.s32.totalorder %v9105, 256
      %9394 = vset.pattern.permute.xlu0 30
      %9395 = vperm.xlu0 %9394, %v4946
      %v9396 = vpop.permute.xlu0 %9395
      %9398 = vset.pattern.permute.xlu0 30
      %9399 = vperm.xlu0 %9398, %v4947
      %v9400 = vpop.permute.xlu0 %9399
      %9402 = vset.pattern.permute.xlu0 30
      %9403 = vperm.xlu0 %9402, %v4948
      %v9404 = vpop.permute.xlu0 %9403
      %9406 = vset.pattern.permute.xlu0 30
      %9407 = vperm.xlu0 %9406, %v4949
      %v9408 = vpop.permute.xlu0 %9407
      %9410 = vset.pattern.permute.xlu0 30
      %9411 = vperm.xlu0 %9410, %v4950
      %v9412 = vpop.permute.xlu0 %9411
      %9414 = vset.pattern.permute.xlu0 30
      %9415 = vperm.xlu0 %9414, %v4951
      %v9416 = vpop.permute.xlu0 %9415
      %9418 = vset.pattern.permute.xlu0 30
      %9419 = vperm.xlu0 %9418, %v4952
      %v9420 = vpop.permute.xlu0 %9419
      %9422 = vset.pattern.permute.xlu0 30
      %9423 = vperm.xlu0 %9422, %v4953
      %v9424 = vpop.permute.xlu0 %9423
      %9426 = vset.pattern.permute.xlu0 30
      %9427 = vperm.xlu0 %9426, %v4954
      %v9428 = vpop.permute.xlu0 %9427
      %9430 = vset.pattern.permute.xlu0 30
      %9431 = vperm.xlu0 %9430, %v4955
      %v9432 = vpop.permute.xlu0 %9431
      %9434 = vset.pattern.permute.xlu0 30
      %9435 = vperm.xlu0 %9434, %v4956
      %v9436 = vpop.permute.xlu0 %9435
      %9438 = vset.pattern.permute.xlu0 30
      %9439 = vperm.xlu0 %9438, %v4957
      %v9440 = vpop.permute.xlu0 %9439
      %9442 = vset.pattern.permute.xlu0 30
      %9443 = vperm.xlu0 %9442, %v4958
      %v9444 = vpop.permute.xlu0 %9443
      %9446 = vset.pattern.permute.xlu0 30
      %9447 = vperm.xlu0 %9446, %v4959
      %v9448 = vpop.permute.xlu0 %9447
      %9450 = vset.pattern.permute.xlu0 30
      %9451 = vperm.xlu0 %9450, %v4960
      %v9452 = vpop.permute.xlu0 %9451
      %9454 = vset.pattern.permute.xlu0 30
      %9455 = vperm.xlu0 %9454, %v4961
      %v9456 = vpop.permute.xlu0 %9455
      %v9458 = vsel %vm9362, %v9396, %v9330
      %v9459 = vsel %vm9363, %v9396, %v9331
      %v9460 = vsel %vm9364, %v9400, %v9332
      %v9461 = vsel %vm9365, %v9400, %v9333
      %v9462 = vsel %vm9366, %v9404, %v9334
      %v9463 = vsel %vm9367, %v9404, %v9335
      %v9464 = vsel %vm9368, %v9408, %v9336
      %v9465 = vsel %vm9369, %v9408, %v9337
      %v9466 = vsel %vm9370, %v9412, %v9338
      %v9467 = vsel %vm9371, %v9412, %v9339
      %v9468 = vsel %vm9372, %v9416, %v9340
      %v9469 = vsel %vm9373, %v9416, %v9341
      %v9470 = vsel %vm9374, %v9420, %v9342
      %v9471 = vsel %vm9375, %v9420, %v9343
      %v9472 = vsel %vm9376, %v9424, %v9344
      %v9473 = vsel %vm9377, %v9424, %v9345
      %v9474 = vsel %vm9378, %v9428, %v9346
      %v9475 = vsel %vm9379, %v9428, %v9347
      %v9476 = vsel %vm9380, %v9432, %v9348
      %v9477 = vsel %vm9381, %v9432, %v9349
      %v9478 = vsel %vm9382, %v9436, %v9350
      %v9479 = vsel %vm9383, %v9436, %v9351
      %v9480 = vsel %vm9384, %v9440, %v9352
      %v9481 = vsel %vm9385, %v9440, %v9353
      %v9482 = vsel %vm9386, %v9444, %v9354
      %v9483 = vsel %vm9387, %v9444, %v9355
      %v9484 = vsel %vm9388, %v9448, %v9356
      %v9485 = vsel %vm9389, %v9448, %v9357
      %v9486 = vsel %vm9390, %v9452, %v9358
      %v9487 = vsel %vm9391, %v9452, %v9359
      %v9488 = vsel %vm9392, %v9456, %v9360
      %v9489 = vsel %vm9393, %v9456, %v9361
      %vm9490 = vcmp.eq.s32.totalorder %v9074, 384
      %vm9491 = vcmp.eq.s32.totalorder %v9075, 384
      %vm9492 = vcmp.eq.s32.totalorder %v9076, 384
      %vm9493 = vcmp.eq.s32.totalorder %v9077, 384
      %vm9494 = vcmp.eq.s32.totalorder %v9078, 384
      %vm9495 = vcmp.eq.s32.totalorder %v9079, 384
      %vm9496 = vcmp.eq.s32.totalorder %v9080, 384
      %vm9497 = vcmp.eq.s32.totalorder %v9081, 384
      %vm9498 = vcmp.eq.s32.totalorder %v9082, 384
      %vm9499 = vcmp.eq.s32.totalorder %v9083, 384
      %vm9500 = vcmp.eq.s32.totalorder %v9084, 384
      %vm9501 = vcmp.eq.s32.totalorder %v9085, 384
      %vm9502 = vcmp.eq.s32.totalorder %v9086, 384
      %vm9503 = vcmp.eq.s32.totalorder %v9087, 384
      %vm9504 = vcmp.eq.s32.totalorder %v9088, 384
      %vm9505 = vcmp.eq.s32.totalorder %v9089, 384
      %vm9506 = vcmp.eq.s32.totalorder %v9090, 384
      %vm9507 = vcmp.eq.s32.totalorder %v9091, 384
      %vm9508 = vcmp.eq.s32.totalorder %v9092, 384
      %vm9509 = vcmp.eq.s32.totalorder %v9093, 384
      %vm9510 = vcmp.eq.s32.totalorder %v9094, 384
      %vm9511 = vcmp.eq.s32.totalorder %v9095, 384
      %vm9512 = vcmp.eq.s32.totalorder %v9096, 384
      %vm9513 = vcmp.eq.s32.totalorder %v9097, 384
      %vm9514 = vcmp.eq.s32.totalorder %v9098, 384
      %vm9515 = vcmp.eq.s32.totalorder %v9099, 384
      %vm9516 = vcmp.eq.s32.totalorder %v9100, 384
      %vm9517 = vcmp.eq.s32.totalorder %v9101, 384
      %vm9518 = vcmp.eq.s32.totalorder %v9102, 384
      %vm9519 = vcmp.eq.s32.totalorder %v9103, 384
      %vm9520 = vcmp.eq.s32.totalorder %v9104, 384
      %vm9521 = vcmp.eq.s32.totalorder %v9105, 384
      %9522 = vset.pattern.permute.xlu0 31
      %9523 = vperm.xlu0 %9522, %v4946
      %v9524 = vpop.permute.xlu0 %9523
      %9526 = vset.pattern.permute.xlu0 31
      %9527 = vperm.xlu0 %9526, %v4947
      %v9528 = vpop.permute.xlu0 %9527
      %9530 = vset.pattern.permute.xlu0 31
      %9531 = vperm.xlu0 %9530, %v4948
      %v9532 = vpop.permute.xlu0 %9531
      %9534 = vset.pattern.permute.xlu0 31
      %9535 = vperm.xlu0 %9534, %v4949
      %v9536 = vpop.permute.xlu0 %9535
      %9538 = vset.pattern.permute.xlu0 31
      %9539 = vperm.xlu0 %9538, %v4950
      %v9540 = vpop.permute.xlu0 %9539
      %9542 = vset.pattern.permute.xlu0 31
      %9543 = vperm.xlu0 %9542, %v4951
      %v9544 = vpop.permute.xlu0 %9543
      %9546 = vset.pattern.permute.xlu0 31
      %9547 = vperm.xlu0 %9546, %v4952
      %v9548 = vpop.permute.xlu0 %9547
      %9550 = vset.pattern.permute.xlu0 31
      %9551 = vperm.xlu0 %9550, %v4953
      %v9552 = vpop.permute.xlu0 %9551
      %9554 = vset.pattern.permute.xlu0 31
      %9555 = vperm.xlu0 %9554, %v4954
      %v9556 = vpop.permute.xlu0 %9555
      %9558 = vset.pattern.permute.xlu0 31
      %9559 = vperm.xlu0 %9558, %v4955
      %v9560 = vpop.permute.xlu0 %9559
      %9562 = vset.pattern.permute.xlu0 31
      %9563 = vperm.xlu0 %9562, %v4956
      %v9564 = vpop.permute.xlu0 %9563
      %9566 = vset.pattern.permute.xlu0 31
      %9567 = vperm.xlu0 %9566, %v4957
      %v9568 = vpop.permute.xlu0 %9567
      %9570 = vset.pattern.permute.xlu0 31
      %9571 = vperm.xlu0 %9570, %v4958
      %v9572 = vpop.permute.xlu0 %9571
      %9574 = vset.pattern.permute.xlu0 31
      %9575 = vperm.xlu0 %9574, %v4959
      %v9576 = vpop.permute.xlu0 %9575
      %9578 = vset.pattern.permute.xlu0 31
      %9579 = vperm.xlu0 %9578, %v4960
      %v9580 = vpop.permute.xlu0 %9579
      %9582 = vset.pattern.permute.xlu0 31
      %9583 = vperm.xlu0 %9582, %v4961
      %v9584 = vpop.permute.xlu0 %9583
      %v9586 = vsel %vm9490, %v9524, %v9458
      %v9587 = vsel %vm9491, %v9524, %v9459
      %v9588 = vsel %vm9492, %v9528, %v9460
      %v9589 = vsel %vm9493, %v9528, %v9461
      %v9590 = vsel %vm9494, %v9532, %v9462
      %v9591 = vsel %vm9495, %v9532, %v9463
      %v9592 = vsel %vm9496, %v9536, %v9464
      %v9593 = vsel %vm9497, %v9536, %v9465
      %v9594 = vsel %vm9498, %v9540, %v9466
      %v9595 = vsel %vm9499, %v9540, %v9467
      %v9596 = vsel %vm9500, %v9544, %v9468
      %v9597 = vsel %vm9501, %v9544, %v9469
      %v9598 = vsel %vm9502, %v9548, %v9470
      %v9599 = vsel %vm9503, %v9548, %v9471
      %v9600 = vsel %vm9504, %v9552, %v9472
      %v9601 = vsel %vm9505, %v9552, %v9473
      %v9602 = vsel %vm9506, %v9556, %v9474
      %v9603 = vsel %vm9507, %v9556, %v9475
      %v9604 = vsel %vm9508, %v9560, %v9476
      %v9605 = vsel %vm9509, %v9560, %v9477
      %v9606 = vsel %vm9510, %v9564, %v9478
      %v9607 = vsel %vm9511, %v9564, %v9479
      %v9608 = vsel %vm9512, %v9568, %v9480
      %v9609 = vsel %vm9513, %v9568, %v9481
      %v9610 = vsel %vm9514, %v9572, %v9482
      %v9611 = vsel %vm9515, %v9572, %v9483
      %v9612 = vsel %vm9516, %v9576, %v9484
      %v9613 = vsel %vm9517, %v9576, %v9485
      %v9614 = vsel %vm9518, %v9580, %v9486
      %v9615 = vsel %vm9519, %v9580, %v9487
      %v9616 = vsel %vm9520, %v9584, %v9488
      %v9617 = vsel %vm9521, %v9584, %v9489
      %v9618 = vadd.f32 %v9034, %v9586
      %v9619 = vadd.f32 %v9035, %v9587
      %v9620 = vadd.f32 %v9036, %v9588
      %v9621 = vadd.f32 %v9037, %v9589
      %v9622 = vadd.f32 %v9038, %v9590
      %v9623 = vadd.f32 %v9039, %v9591
      %v9624 = vadd.f32 %v9040, %v9592
      %v9625 = vadd.f32 %v9041, %v9593
      %v9626 = vadd.f32 %v9042, %v9594
      %v9627 = vadd.f32 %v9043, %v9595
      %v9628 = vadd.f32 %v9044, %v9596
      %v9629 = vadd.f32 %v9045, %v9597
      %v9630 = vadd.f32 %v9046, %v9598
      %v9631 = vadd.f32 %v9047, %v9599
      %v9632 = vadd.f32 %v9048, %v9600
      %v9633 = vadd.f32 %v9049, %v9601
      %v9634 = vadd.f32 %v9050, %v9602
      %v9635 = vadd.f32 %v9051, %v9603
      %v9636 = vadd.f32 %v9052, %v9604
      %v9637 = vadd.f32 %v9053, %v9605
      %v9638 = vadd.f32 %v9054, %v9606
      %v9639 = vadd.f32 %v9055, %v9607
      %v9640 = vadd.f32 %v9056, %v9608
      %v9641 = vadd.f32 %v9057, %v9609
      %v9642 = vadd.f32 %v9058, %v9610
      %v9643 = vadd.f32 %v9059, %v9611
      %v9644 = vadd.f32 %v9060, %v9612
      %v9645 = vadd.f32 %v9061, %v9613
      %v9646 = vadd.f32 %v9062, %v9614
      %v9647 = vadd.f32 %v9063, %v9615
      %v9648 = vadd.f32 %v9064, %v9616
      %v9649 = vadd.f32 %v9065, %v9617
    $region29: #{_forward.1} parent=1 // loop_footer
      %s4887 = sadd.s32 1, %s4883
    $region30: #{_forward.1} parent=1 // loop_footer_branch
      %4882 = sbr.rel target = $region26
    $region31: #{_forward.1} parent=1 // loop_exit
      _
    %v9650 = vadd.f32 %v4888, %v4890
    %v9651 = vadd.f32 %v9650, %v4892
    %v9652 = vadd.f32 %v9651, %v4894
    %v9653 = vadd.f32 %v9652, %v4896
    %v9654 = vadd.f32 %v9653, %v4898
    %v9655 = vadd.f32 %v9654, %v4900
    %v9656 = vadd.f32 %v9655, %v4902
    %v9657 = vadd.f32 %v9656, %v4904
    %v9658 = vadd.f32 %v9657, %v4906
    %v9659 = vadd.f32 %v9658, %v4908
    %v9660 = vadd.f32 %v9659, %v4910
    %v9661 = vadd.f32 %v9660, %v4912
    %v9662 = vadd.f32 %v9661, %v4914
    %v9663 = vadd.f32 %v9662, %v4916
    %v9664 = vadd.f32 %v9663, %v4918
    %v9665 = vrot.slane %v9664, 4
    %v9666 = vadd.f32 %v9664, %v9665
    %v9667 = vrot.slane %v9666, 2
    %v9668 = vadd.f32 %v9666, %v9667
    %v9669 = vrot.slane %v9668, 1
    %v9670 = vadd.f32 %v9668, %v9669
    %v9671 = vadd.f32 %v4889, %v4891
    %v9672 = vadd.f32 %v9671, %v4893
    %v9673 = vadd.f32 %v9672, %v4895
    %v9674 = vadd.f32 %v9673, %v4897
    %v9675 = vadd.f32 %v9674, %v4899
    %v9676 = vadd.f32 %v9675, %v4901
    %v9677 = vadd.f32 %v9676, %v4903
    %v9678 = vadd.f32 %v9677, %v4905
    %v9679 = vadd.f32 %v9678, %v4907
    %v9680 = vadd.f32 %v9679, %v4909
    %v9681 = vadd.f32 %v9680, %v4911
    %v9682 = vadd.f32 %v9681, %v4913
    %v9683 = vadd.f32 %v9682, %v4915
    %v9684 = vadd.f32 %v9683, %v4917
    %v9685 = vadd.f32 %v9684, %v4919
    %v9686 = vrot.slane %v9685, 4
    %v9687 = vadd.f32 %v9685, %v9686
    %v9688 = vrot.slane %v9687, 2
    %v9689 = vadd.f32 %v9687, %v9688
    %v9690 = vrot.slane %v9689, 1
    %v9691 = vadd.f32 %v9689, %v9690
    %v9692 = vand.u32 2147483647, %v9670
    %v9693 = vand.u32 2147483647, %v9691
    %v9694 = vmul.f32 %v9692, 0.0625
    %v9695 = vmul.f32 %v9693, 0.0625
    %v9698 = vcombine.low %v9694, %v9695
    %v9700 = vunpack.c.l.s4 1966171168
    %v9701 = vunpack.c.0.s8 %v9700
    %v9702 = vlaneseq
    %v9703 = vshrl.u32 %v9702, 7
    %v9704 = vsub.s32 %v9701, %v9703
    %v9705 = vrot.slane %v9698, %v9704
    %v9707 = vunpack.c.l.s4 1966171168
    %v9708 = vunpack.c.0.s8 %v9707
    %v9709 = vlaneseq
    %v9710 = vshrl.u32 %v9709, 7
    %v9711 = vsub.s32 %v9708, %v9710
    %v9712 = vrot.slane %v9705, %v9711
    %s9714 = scalar_lea.vmem %s3, 1
    %9715 = vst.msk [vmem:[%s9714] ss:$2 sm:$0x3] %vm4879, %v9712
    // Predicated region
    $region32: #{_forward.1} parent=1 // pred_check
      _
    $region33: #{_forward.1} parent=1 // pred_check_branch
      %9717 = sbr.rel (0) target = $region35
    $region34: #{_forward.1} parent=1 // pred_region
      _
    $region35: #{_forward.1} parent=1 // pred_fallthru
      _
    // Predicated region
    $region36: #{_forward.1} parent=1 // pred_check
      _
    $region37: #{_forward.1} parent=1 // pred_check_branch
      %9719 = sbr.rel (0) target = $region39
    $region38: #{_forward.1} parent=1 // pred_region
      _
    $region39: #{_forward.1} parent=1 // pred_fallthru
      _
    %9720 = vsyncpa [#allocation3], 1

</llo_original>
